<compile_context>
chip_gen: v7x
topology: tpu7x:2x2x1
jax: 0.10.0
libtpu: 0.0.40
codegen_flags: <defaults>
</compile_context>

<pallas_src>
import functools

import jax
import jax.numpy as jnp
from jax.experimental import pallas as pl
from jax.experimental.pallas import tpu as pltpu

PANEL = 128  # lane-dense panel width for weight / bias packing


def _round_up(x, m):
    return (x + m - 1) // m * m


def _cdiv(a, b):
    return (a + b - 1) // b


# ---------------------------------------------------------------------------
# Replicate the size-schedule logic of Autoencoder.__init__ exactly.
# ---------------------------------------------------------------------------
def compute_sizes(in_dim, out_dim, factor=4):
    first_dim = 1024
    while in_dim < first_dim:
        first_dim /= 2
    sizes = [in_dim]
    i = 0
    while first_dim / pow(factor, i) - first_dim / pow(factor, i) / 4 > out_dim:
        sizes.append(int(first_dim / pow(factor, i)))
        i += 1
    sizes.append(out_dim)
    return sizes


def build_layer_specs(in_dim, out_dim, factor=4):
    """Returns (encoder, decoder, classifier) lists of (fan_in, fan_out, bn_relu)."""
    sizes = compute_sizes(in_dim, out_dim, factor)
    encoder = [(sizes[i], sizes[i + 1], True) for i in range(len(sizes) - 1)]
    decoder = [(sizes[i], sizes[i - 1], i != 1) for i in range(len(sizes) - 1, 0, -1)]
    classifier = [(out_dim, 512, True), (512, 128, True), (128, 32, True), (32, 4, False)]
    return encoder, decoder, classifier


# ---------------------------------------------------------------------------
# Dense panel packing.
#   Layer (fi, fo) is split into k = ceil(fo/128) column panels of width 128.
#   Weight panel p of layer l lives at rows [wrow_l + p*stride_l, ... + fi),
#   cols [0,128) of the bf16 weight pack (stride_l = round_up(fi, 16)).
#   Bias panel p of layer l is row (brow_l + p) of the f32 bias pack.
# ---------------------------------------------------------------------------
def build_packing(enc_spec, dec_spec, cls_spec, panel=PANEL):
    all_layers = list(enc_spec) + list(dec_spec) + list(cls_spec)
    meta = []
    wrow = 0
    brow = 0
    for (fi, fo, bn) in all_layers:
        k = _cdiv(fo, panel)
        meta.append((wrow, brow, fi, fo, bn))
        wrow += k * _round_up(fi, 16)   # bf16 sublane-aligned panel stride
        brow += k
    n_enc, n_dec = len(enc_spec), len(dec_spec)
    metas = (tuple(meta[:n_enc]),
             tuple(meta[n_enc:n_enc + n_dec]),
             tuple(meta[n_enc + n_dec:]))
    return metas, _round_up(wrow, 16), _round_up(brow, 8), panel


def init_packed_params(key, metas, w_rows, b_rows, panel=PANEL):
    """PyTorch-default uniform(-1/sqrt(fan_in), 1/sqrt(fan_in)) init, panel-packed."""
    wpack = jnp.zeros((w_rows, panel), jnp.float32)
    bpack = jnp.zeros((b_rows, panel), jnp.float32)
    for (wrow, brow, fi, fo, _) in metas[0] + metas[1] + metas[2]:
        key, kw, kb = jax.random.split(key, 3)
        bound = 1.0 / float(fi) ** 0.5
        w = jax.random.uniform(kw, (fi, fo), jnp.float32, -bound, bound)
        b = jax.random.uniform(kb, (fo,), jnp.float32, -bound, bound)
        stride = _round_up(fi, 16)
        for p in range(_cdiv(fo, panel)):
            c0 = p * panel
            cols = min(panel, fo - c0)
            wpack = wpack.at[wrow + p * stride: wrow + p * stride + fi, :cols].set(
                w[:, c0:c0 + cols])
            bpack = bpack.at[brow + p, :cols].set(b[c0:c0 + cols])
    return wpack.astype(jnp.bfloat16), bpack, key


# ---------------------------------------------------------------------------
# Pallas kernel: full forward in one block (no grid) so BN batch statistics
# stay exact.  bf16 x bf16 -> f32 MXU matmuls; BN / softmax math in f32.
# ---------------------------------------------------------------------------
def autoencoder_kernel(metas, panel, x_ref, w_ref, b_ref, x_out_ref, y_out_ref):
    enc_m, dec_m, cls_m = metas
    eps = jnp.float32(1e-5)

    def linear(h_bf16, spec, keep_pad=False):
        """h_bf16 (B, fi) bf16 -> f32 (B, fo)  (or (B, k*128) if keep_pad)."""
        wrow, brow, fi, fo, _ = spec
        k = _cdiv(fo, panel)
        stride = _round_up(fi, 16)
        outs = []
        for p in range(k):
            w = w_ref[pl.ds(wrow + p * stride, fi), :]        # bf16 (fi, 128)
            b = b_ref[pl.ds(brow + p, 1), :]                  # f32  (1, 128)
            outs.append(jnp.dot(h_bf16, w, preferred_element_type=jnp.float32) + b)
        h = jnp.concatenate(outs, axis=1) if k > 1 else outs[0]
        if (not keep_pad) and fo < k * panel:
            h = h[:, :fo]         # drop zero-padded panel columns
        return h

    def bn_relu(h):
        # training-mode BatchNorm1d: batch mean, biased var, gamma=1, beta=0
        mean = jnp.mean(h, axis=0, keepdims=True)
        var = jnp.mean((h - mean) * (h - mean), axis=0, keepdims=True)
        return jnp.maximum((h - mean) * jax.lax.rsqrt(var + eps), 0.0)

    def apply(h_bf16, spec):
        h = linear(h_bf16, spec)
        if spec[4]:
            # cast once here (instead of before the next dot): same cast count,
            # lower vreg/VMEM pressure for the wide classifier activation.
            h = bn_relu(h).astype(jnp.bfloat16)
        return h

    # --- encoder ---
    h = x_ref[...]                                # bf16 (B, in_dim)
    for spec in enc_m:
        h = apply(h, spec)
    encoded = h                                   # bf16 (B, out_dim)

    # --- decoder (last layer has no BN/ReLU -> raw f32 output) ---
    d = encoded
    for spec in dec_m:
        d = apply(d, spec)
    x_out_ref[...] = d.astype(x_out_ref.dtype)

    # --- classifier (last layer computed lane-dense at width 128) ---
    c = encoded
    for spec in cls_m[:-1]:
        c = apply(c, spec)
    last = cls_m[-1]
    n_cls = last[3]
    logits = linear(c, last, keep_pad=True)       # (B, 128) f32; pad cols are 0
    col = jax.lax.broadcasted_iota(jnp.int32, logits.shape, 1)
    logits = jnp.where(col < n_cls, logits, jnp.float32(-1e30))
    # Softmax(dim=1) over the real classes; padded lanes exp to 0.
    logits = logits - jnp.max(logits, axis=1, keepdims=True)
    e = jnp.exp(logits)
    y_out_ref[...] = (e / jnp.sum(e, axis=1, keepdims=True)).astype(y_out_ref.dtype)


# ---------------------------------------------------------------------------
# Wrapper: pallas_call plumbing (glue in plain JAX).
# ---------------------------------------------------------------------------
def autoencoder_forward(x, wpack, bpack, metas, in_dim, n_classes,
                        panel=PANEL, y_pad=PANEL):
    batch = x.shape[0]
    kernel = functools.partial(autoencoder_kernel, metas, panel)
    vmem = pl.BlockSpec(memory_space=pltpu.MemorySpace.VMEM)

    all_layers = metas[0] + metas[1] + metas[2]
    flops = 2 * batch * sum(fi * fo for _, _, fi, fo, _ in all_layers)
    bn_cols = sum(fo for _, _, _, fo, bn in all_layers if bn)
    bytes_accessed = (batch * in_dim * 2          # x (bf16 in)
                      + wpack.size * 2            # bf16 weight panels
                      + bpack.size * 4            # f32 bias panels
                      + batch * in_dim * 4        # reconstructed x (f32 out)
                      + batch * y_pad * 4)        # padded probs (f32 out)

    fn = pl.pallas_call(
        kernel,
        out_shape=(jax.ShapeDtypeStruct((batch, in_dim), jnp.float32),  # decoded x
                   jax.ShapeDtypeStruct((batch, y_pad), jnp.float32)),  # padded probs
        in_specs=[vmem, vmem, vmem],
        out_specs=(vmem, vmem),
        compiler_params=pltpu.CompilerParams(vmem_limit_bytes=16 * 1024 * 1024),
        cost_estimate=pl.CostEstimate(
            flops=flops,
            transcendentals=bn_cols + batch * y_pad,
            bytes_accessed=bytes_accessed),
    )
    x_rec, y_padded = fn(x.astype(jnp.bfloat16), wpack, bpack)
    return x_rec, y_padded[:, :n_classes]


if __name__ == "__main__":
    IN_DIM = 256
    OUT_DIM = 16
    BATCH = 256  # fills the 256-row MXU on v6e/v7x; the whole batch stays in
                 # one block so BatchNorm batch statistics match PyTorch.

    enc_spec, dec_spec, cls_spec = build_layer_specs(IN_DIM, OUT_DIM)
    n_classes = cls_spec[-1][1]
    metas, w_rows, b_rows, panel = build_packing(enc_spec, dec_spec, cls_spec)

    key = jax.random.PRNGKey(0)
    key, kx = jax.random.split(key)
    x = jax.random.normal(kx, (BATCH, IN_DIM), jnp.float32)

    wpack, bpack, key = init_packed_params(key, metas, w_rows, b_rows, panel)

    x_rec, y_prob = autoencoder_forward(x, wpack, bpack, metas, IN_DIM, n_classes,
                                        panel=panel)
    jax.block_until_ready((x_rec, y_prob))

    assert x_rec.shape == (BATCH, IN_DIM)
    assert y_prob.shape == (BATCH, n_classes)
    assert bool(jnp.all(jnp.isfinite(x_rec))) and bool(jnp.all(jnp.isfinite(y_prob)))
    # softmax rows sum to 1
    assert bool(jnp.allclose(jnp.sum(y_prob, axis=1), 1.0, atol=1e-5))
    print("KERNEL_OK")
</pallas_src>

<mosaic_0001>
module attributes {stable_mosaic.version = 11 : i64} {
  func.func @autoencoder_kernel(%arg0: memref<256x256xbf16, #tpu.memory_space<vmem>>, %arg1: memref<2224x128xbf16, #tpu.memory_space<vmem>>, %arg2: memref<16x128xf32, #tpu.memory_space<vmem>>, %arg3: memref<256x256xf32, #tpu.memory_space<vmem>>, %arg4: memref<256x128xf32, #tpu.memory_space<vmem>>) attributes {dimension_semantics = [], scalar_prefetch = 0 : i64, scratch_operands = 0 : i64, tpu.core_type = #tpu.core_type<tc>} {
    %c0 = arith.constant 0 : index
    %c0_0 = arith.constant 0 : index
    %0 = vector.load %arg0[%c0, %c0_0] : memref<256x256xbf16, #tpu.memory_space<vmem>>, vector<256x256xbf16>
    %c0_1 = arith.constant 0 : index
    %c0_2 = arith.constant 0 : index
    %1 = vector.load %arg1[%c0_1, %c0_2] : memref<2224x128xbf16, #tpu.memory_space<vmem>>, vector<256x128xbf16>
    %c0_3 = arith.constant 0 : index
    %c0_4 = arith.constant 0 : index
    %2 = vector.load %arg2[%c0_3, %c0_4] : memref<16x128xf32, #tpu.memory_space<vmem>>, vector<1x128xf32>
    %cst = arith.constant dense<0.000000e+00> : vector<256x128xf32>
    %3 = tpu.matmul %0, %1, %cst {dimension_numbers = #tpu.dot_dimension_numbers<[1], [0], [0], [1], [0, 0, 1, 1], [], []>} : vector<256x256xbf16>, vector<256x128xbf16>, vector<256x128xf32> -> vector<256x128xf32>
    %4 = vector.broadcast %2 : vector<1x128xf32> to vector<256x128xf32>
    %5 = arith.addf %3, %4 : vector<256x128xf32>
    %c256 = arith.constant 256 : index
    %c0_5 = arith.constant 0 : index
    %6 = vector.load %arg1[%c256, %c0_5] : memref<2224x128xbf16, #tpu.memory_space<vmem>>, vector<256x128xbf16>
    %c1 = arith.constant 1 : index
    %c0_6 = arith.constant 0 : index
    %7 = vector.load %arg2[%c1, %c0_6] : memref<16x128xf32, #tpu.memory_space<vmem>>, vector<1x128xf32>
    %cst_7 = arith.constant dense<0.000000e+00> : vector<256x128xf32>
    %8 = tpu.matmul %0, %6, %cst_7 {dimension_numbers = #tpu.dot_dimension_numbers<[1], [0], [0], [1], [0, 0, 1, 1], [], []>} : vector<256x256xbf16>, vector<256x128xbf16>, vector<256x128xf32> -> vector<256x128xf32>
    %9 = vector.broadcast %7 : vector<1x128xf32> to vector<256x128xf32>
    %10 = arith.addf %8, %9 : vector<256x128xf32>
    %11 = tpu.concatenate %5, %10 in 1 : vector<256x128xf32>, vector<256x128xf32> -> vector<256x256xf32>
    %cst_8 = arith.constant dense<0.000000e+00> : vector<256xf32>
    %12 = vector.multi_reduction <add>, %11, %cst_8 [0] : vector<256x256xf32> to vector<256xf32>
    %13 = vector.shape_cast %12 : vector<256xf32> to vector<1x256xf32>
    %cst_9 = arith.constant 2.560000e+02 : f32
    %14 = vector.broadcast %cst_9 : f32 to vector<1x256xf32>
    %15 = arith.divf %13, %14 : vector<1x256xf32>
    %16 = vector.broadcast %15 : vector<1x256xf32> to vector<256x256xf32>
    %17 = arith.subf %11, %16 : vector<256x256xf32>
    %18 = vector.broadcast %15 : vector<1x256xf32> to vector<256x256xf32>
    %19 = arith.subf %11, %18 : vector<256x256xf32>
    %20 = arith.mulf %17, %19 : vector<256x256xf32>
    %cst_10 = arith.constant dense<0.000000e+00> : vector<256xf32>
    %21 = vector.multi_reduction <add>, %20, %cst_10 [0] : vector<256x256xf32> to vector<256xf32>
    %22 = vector.shape_cast %21 : vector<256xf32> to vector<1x256xf32>
    %cst_11 = arith.constant 2.560000e+02 : f32
    %23 = vector.broadcast %cst_11 : f32 to vector<1x256xf32>
    %24 = arith.divf %22, %23 : vector<1x256xf32>
    %25 = vector.broadcast %15 : vector<1x256xf32> to vector<256x256xf32>
    %26 = arith.subf %11, %25 : vector<256x256xf32>
    %cst_12 = arith.constant 9.99999974E-6 : f32
    %27 = vector.broadcast %cst_12 : f32 to vector<1x256xf32>
    %28 = arith.addf %24, %27 : vector<1x256xf32>
    %29 = math.rsqrt %28 : vector<1x256xf32>
    %30 = vector.broadcast %29 : vector<1x256xf32> to vector<256x256xf32>
    %31 = arith.mulf %26, %30 : vector<256x256xf32>
    %cst_13 = arith.constant 0.000000e+00 : f32
    %32 = vector.broadcast %cst_13 : f32 to vector<256x256xf32>
    %33 = arith.maximumf %31, %32 : vector<256x256xf32>
    %34 = arith.truncf %33 : vector<256x256xf32> to vector<256x256xbf16>
    %c512 = arith.constant 512 : index
    %c0_14 = arith.constant 0 : index
    %35 = vector.load %arg1[%c512, %c0_14] : memref<2224x128xbf16, #tpu.memory_space<vmem>>, vector<256x128xbf16>
    %c2 = arith.constant 2 : index
    %c0_15 = arith.constant 0 : index
    %36 = vector.load %arg2[%c2, %c0_15] : memref<16x128xf32, #tpu.memory_space<vmem>>, vector<1x128xf32>
    %cst_16 = arith.constant dense<0.000000e+00> : vector<256x128xf32>
    %37 = tpu.matmul %34, %35, %cst_16 {dimension_numbers = #tpu.dot_dimension_numbers<[1], [0], [0], [1], [0, 0, 1, 1], [], []>} : vector<256x256xbf16>, vector<256x128xbf16>, vector<256x128xf32> -> vector<256x128xf32>
    %38 = vector.broadcast %36 : vector<1x128xf32> to vector<256x128xf32>
    %39 = arith.addf %37, %38 : vector<256x128xf32>
    %40 = vector.extract_strided_slice %39 {offsets = [0, 0], sizes = [256, 64], strides = [1, 1]} : vector<256x128xf32> to vector<256x64xf32>
    %cst_17 = arith.constant dense<0.000000e+00> : vector<64xf32>
    %41 = vector.multi_reduction <add>, %40, %cst_17 [0] : vector<256x64xf32> to vector<64xf32>
    %42 = vector.shape_cast %41 : vector<64xf32> to vector<1x64xf32>
    %cst_18 = arith.constant 2.560000e+02 : f32
    %43 = vector.broadcast %cst_18 : f32 to vector<1x64xf32>
    %44 = arith.divf %42, %43 : vector<1x64xf32>
    %45 = vector.broadcast %44 : vector<1x64xf32> to vector<256x64xf32>
    %46 = arith.subf %40, %45 : vector<256x64xf32>
    %47 = vector.broadcast %44 : vector<1x64xf32> to vector<256x64xf32>
    %48 = arith.subf %40, %47 : vector<256x64xf32>
    %49 = arith.mulf %46, %48 : vector<256x64xf32>
    %cst_19 = arith.constant dense<0.000000e+00> : vector<64xf32>
    %50 = vector.multi_reduction <add>, %49, %cst_19 [0] : vector<256x64xf32> to vector<64xf32>
    %51 = vector.shape_cast %50 : vector<64xf32> to vector<1x64xf32>
    %cst_20 = arith.constant 2.560000e+02 : f32
    %52 = vector.broadcast %cst_20 : f32 to vector<1x64xf32>
    %53 = arith.divf %51, %52 : vector<1x64xf32>
    %54 = vector.broadcast %44 : vector<1x64xf32> to vector<256x64xf32>
    %55 = arith.subf %40, %54 : vector<256x64xf32>
    %cst_21 = arith.constant 9.99999974E-6 : f32
    %56 = vector.broadcast %cst_21 : f32 to vector<1x64xf32>
    %57 = arith.addf %53, %56 : vector<1x64xf32>
    %58 = math.rsqrt %57 : vector<1x64xf32>
    %59 = vector.broadcast %58 : vector<1x64xf32> to vector<256x64xf32>
    %60 = arith.mulf %55, %59 : vector<256x64xf32>
    %cst_22 = arith.constant 0.000000e+00 : f32
    %61 = vector.broadcast %cst_22 : f32 to vector<256x64xf32>
    %62 = arith.maximumf %60, %61 : vector<256x64xf32>
    %63 = arith.truncf %62 : vector<256x64xf32> to vector<256x64xbf16>
    %c768 = arith.constant 768 : index
    %c0_23 = arith.constant 0 : index
    %64 = vector.load %arg1[%c768, %c0_23] : memref<2224x128xbf16, #tpu.memory_space<vmem>>, vector<64x128xbf16>
    %c3 = arith.constant 3 : index
    %c0_24 = arith.constant 0 : index
    %65 = vector.load %arg2[%c3, %c0_24] : memref<16x128xf32, #tpu.memory_space<vmem>>, vector<1x128xf32>
    %cst_25 = arith.constant dense<0.000000e+00> : vector<256x128xf32>
    %66 = tpu.matmul %63, %64, %cst_25 {dimension_numbers = #tpu.dot_dimension_numbers<[1], [0], [0], [1], [0, 0, 1, 1], [], []>} : vector<256x64xbf16>, vector<64x128xbf16>, vector<256x128xf32> -> vector<256x128xf32>
    %67 = vector.broadcast %65 : vector<1x128xf32> to vector<256x128xf32>
    %68 = arith.addf %66, %67 : vector<256x128xf32>
    %69 = vector.extract_strided_slice %68 {offsets = [0, 0], sizes = [256, 16], strides = [1, 1]} : vector<256x128xf32> to vector<256x16xf32>
    %cst_26 = arith.constant dense<0.000000e+00> : vector<16xf32>
    %70 = vector.multi_reduction <add>, %69, %cst_26 [0] : vector<256x16xf32> to vector<16xf32>
    %71 = vector.shape_cast %70 : vector<16xf32> to vector<1x16xf32>
    %cst_27 = arith.constant 2.560000e+02 : f32
    %72 = vector.broadcast %cst_27 : f32 to vector<1x16xf32>
    %73 = arith.divf %71, %72 : vector<1x16xf32>
    %74 = vector.broadcast %73 : vector<1x16xf32> to vector<256x16xf32>
    %75 = arith.subf %69, %74 : vector<256x16xf32>
    %76 = vector.broadcast %73 : vector<1x16xf32> to vector<256x16xf32>
    %77 = arith.subf %69, %76 : vector<256x16xf32>
    %78 = arith.mulf %75, %77 : vector<256x16xf32>
    %cst_28 = arith.constant dense<0.000000e+00> : vector<16xf32>
    %79 = vector.multi_reduction <add>, %78, %cst_28 [0] : vector<256x16xf32> to vector<16xf32>
    %80 = vector.shape_cast %79 : vector<16xf32> to vector<1x16xf32>
    %cst_29 = arith.constant 2.560000e+02 : f32
    %81 = vector.broadcast %cst_29 : f32 to vector<1x16xf32>
    %82 = arith.divf %80, %81 : vector<1x16xf32>
    %83 = vector.broadcast %73 : vector<1x16xf32> to vector<256x16xf32>
    %84 = arith.subf %69, %83 : vector<256x16xf32>
    %cst_30 = arith.constant 9.99999974E-6 : f32
    %85 = vector.broadcast %cst_30 : f32 to vector<1x16xf32>
    %86 = arith.addf %82, %85 : vector<1x16xf32>
    %87 = math.rsqrt %86 : vector<1x16xf32>
    %88 = vector.broadcast %87 : vector<1x16xf32> to vector<256x16xf32>
    %89 = arith.mulf %84, %88 : vector<256x16xf32>
    %cst_31 = arith.constant 0.000000e+00 : f32
    %90 = vector.broadcast %cst_31 : f32 to vector<256x16xf32>
    %91 = arith.maximumf %89, %90 : vector<256x16xf32>
    %92 = arith.truncf %91 : vector<256x16xf32> to vector<256x16xbf16>
    %c832 = arith.constant 832 : index
    %c0_32 = arith.constant 0 : index
    %93 = vector.load %arg1[%c832, %c0_32] : memref<2224x128xbf16, #tpu.memory_space<vmem>>, vector<16x128xbf16>
    %c4 = arith.constant 4 : index
    %c0_33 = arith.constant 0 : index
    %94 = vector.load %arg2[%c4, %c0_33] : memref<16x128xf32, #tpu.memory_space<vmem>>, vector<1x128xf32>
    %cst_34 = arith.constant dense<0.000000e+00> : vector<256x128xf32>
    %95 = tpu.matmul %92, %93, %cst_34 {dimension_numbers = #tpu.dot_dimension_numbers<[1], [0], [0], [1], [0, 0, 1, 1], [], []>} : vector<256x16xbf16>, vector<16x128xbf16>, vector<256x128xf32> -> vector<256x128xf32>
    %96 = vector.broadcast %94 : vector<1x128xf32> to vector<256x128xf32>
    %97 = arith.addf %95, %96 : vector<256x128xf32>
    %98 = vector.extract_strided_slice %97 {offsets = [0, 0], sizes = [256, 64], strides = [1, 1]} : vector<256x128xf32> to vector<256x64xf32>
    %cst_35 = arith.constant dense<0.000000e+00> : vector<64xf32>
    %99 = vector.multi_reduction <add>, %98, %cst_35 [0] : vector<256x64xf32> to vector<64xf32>
    %100 = vector.shape_cast %99 : vector<64xf32> to vector<1x64xf32>
    %cst_36 = arith.constant 2.560000e+02 : f32
    %101 = vector.broadcast %cst_36 : f32 to vector<1x64xf32>
    %102 = arith.divf %100, %101 : vector<1x64xf32>
    %103 = vector.broadcast %102 : vector<1x64xf32> to vector<256x64xf32>
    %104 = arith.subf %98, %103 : vector<256x64xf32>
    %105 = vector.broadcast %102 : vector<1x64xf32> to vector<256x64xf32>
    %106 = arith.subf %98, %105 : vector<256x64xf32>
    %107 = arith.mulf %104, %106 : vector<256x64xf32>
    %cst_37 = arith.constant dense<0.000000e+00> : vector<64xf32>
    %108 = vector.multi_reduction <add>, %107, %cst_37 [0] : vector<256x64xf32> to vector<64xf32>
    %109 = vector.shape_cast %108 : vector<64xf32> to vector<1x64xf32>
    %cst_38 = arith.constant 2.560000e+02 : f32
    %110 = vector.broadcast %cst_38 : f32 to vector<1x64xf32>
    %111 = arith.divf %109, %110 : vector<1x64xf32>
    %112 = vector.broadcast %102 : vector<1x64xf32> to vector<256x64xf32>
    %113 = arith.subf %98, %112 : vector<256x64xf32>
    %cst_39 = arith.constant 9.99999974E-6 : f32
    %114 = vector.broadcast %cst_39 : f32 to vector<1x64xf32>
    %115 = arith.addf %111, %114 : vector<1x64xf32>
    %116 = math.rsqrt %115 : vector<1x64xf32>
    %117 = vector.broadcast %116 : vector<1x64xf32> to vector<256x64xf32>
    %118 = arith.mulf %113, %117 : vector<256x64xf32>
    %cst_40 = arith.constant 0.000000e+00 : f32
    %119 = vector.broadcast %cst_40 : f32 to vector<256x64xf32>
    %120 = arith.maximumf %118, %119 : vector<256x64xf32>
    %121 = arith.truncf %120 : vector<256x64xf32> to vector<256x64xbf16>
    %c848 = arith.constant 848 : index
    %c0_41 = arith.constant 0 : index
    %122 = vector.load %arg1[%c848, %c0_41] : memref<2224x128xbf16, #tpu.memory_space<vmem>>, vector<64x128xbf16>
    %c5 = arith.constant 5 : index
    %c0_42 = arith.constant 0 : index
    %123 = vector.load %arg2[%c5, %c0_42] : memref<16x128xf32, #tpu.memory_space<vmem>>, vector<1x128xf32>
    %cst_43 = arith.constant dense<0.000000e+00> : vector<256x128xf32>
    %124 = tpu.matmul %121, %122, %cst_43 {dimension_numbers = #tpu.dot_dimension_numbers<[1], [0], [0], [1], [0, 0, 1, 1], [], []>} : vector<256x64xbf16>, vector<64x128xbf16>, vector<256x128xf32> -> vector<256x128xf32>
    %125 = vector.broadcast %123 : vector<1x128xf32> to vector<256x128xf32>
    %126 = arith.addf %124, %125 : vector<256x128xf32>
    %c912 = arith.constant 912 : index
    %c0_44 = arith.constant 0 : index
    %127 = vector.load %arg1[%c912, %c0_44] : memref<2224x128xbf16, #tpu.memory_space<vmem>>, vector<64x128xbf16>
    %c6 = arith.constant 6 : index
    %c0_45 = arith.constant 0 : index
    %128 = vector.load %arg2[%c6, %c0_45] : memref<16x128xf32, #tpu.memory_space<vmem>>, vector<1x128xf32>
    %cst_46 = arith.constant dense<0.000000e+00> : vector<256x128xf32>
    %129 = tpu.matmul %121, %127, %cst_46 {dimension_numbers = #tpu.dot_dimension_numbers<[1], [0], [0], [1], [0, 0, 1, 1], [], []>} : vector<256x64xbf16>, vector<64x128xbf16>, vector<256x128xf32> -> vector<256x128xf32>
    %130 = vector.broadcast %128 : vector<1x128xf32> to vector<256x128xf32>
    %131 = arith.addf %129, %130 : vector<256x128xf32>
    %132 = tpu.concatenate %126, %131 in 1 : vector<256x128xf32>, vector<256x128xf32> -> vector<256x256xf32>
    %cst_47 = arith.constant dense<0.000000e+00> : vector<256xf32>
    %133 = vector.multi_reduction <add>, %132, %cst_47 [0] : vector<256x256xf32> to vector<256xf32>
    %134 = vector.shape_cast %133 : vector<256xf32> to vector<1x256xf32>
    %cst_48 = arith.constant 2.560000e+02 : f32
    %135 = vector.broadcast %cst_48 : f32 to vector<1x256xf32>
    %136 = arith.divf %134, %135 : vector<1x256xf32>
    %137 = vector.broadcast %136 : vector<1x256xf32> to vector<256x256xf32>
    %138 = arith.subf %132, %137 : vector<256x256xf32>
    %139 = vector.broadcast %136 : vector<1x256xf32> to vector<256x256xf32>
    %140 = arith.subf %132, %139 : vector<256x256xf32>
    %141 = arith.mulf %138, %140 : vector<256x256xf32>
    %cst_49 = arith.constant dense<0.000000e+00> : vector<256xf32>
    %142 = vector.multi_reduction <add>, %141, %cst_49 [0] : vector<256x256xf32> to vector<256xf32>
    %143 = vector.shape_cast %142 : vector<256xf32> to vector<1x256xf32>
    %cst_50 = arith.constant 2.560000e+02 : f32
    %144 = vector.broadcast %cst_50 : f32 to vector<1x256xf32>
    %145 = arith.divf %143, %144 : vector<1x256xf32>
    %146 = vector.broadcast %136 : vector<1x256xf32> to vector<256x256xf32>
    %147 = arith.subf %132, %146 : vector<256x256xf32>
    %cst_51 = arith.constant 9.99999974E-6 : f32
    %148 = vector.broadcast %cst_51 : f32 to vector<1x256xf32>
    %149 = arith.addf %145, %148 : vector<1x256xf32>
    %150 = math.rsqrt %149 : vector<1x256xf32>
    %151 = vector.broadcast %150 : vector<1x256xf32> to vector<256x256xf32>
    %152 = arith.mulf %147, %151 : vector<256x256xf32>
    %cst_52 = arith.constant 0.000000e+00 : f32
    %153 = vector.broadcast %cst_52 : f32 to vector<256x256xf32>
    %154 = arith.maximumf %152, %153 : vector<256x256xf32>
    %155 = arith.truncf %154 : vector<256x256xf32> to vector<256x256xbf16>
    %c976 = arith.constant 976 : index
    %c0_53 = arith.constant 0 : index
    %156 = vector.load %arg1[%c976, %c0_53] : memref<2224x128xbf16, #tpu.memory_space<vmem>>, vector<256x128xbf16>
    %c7 = arith.constant 7 : index
    %c0_54 = arith.constant 0 : index
    %157 = vector.load %arg2[%c7, %c0_54] : memref<16x128xf32, #tpu.memory_space<vmem>>, vector<1x128xf32>
    %cst_55 = arith.constant dense<0.000000e+00> : vector<256x128xf32>
    %158 = tpu.matmul %155, %156, %cst_55 {dimension_numbers = #tpu.dot_dimension_numbers<[1], [0], [0], [1], [0, 0, 1, 1], [], []>} : vector<256x256xbf16>, vector<256x128xbf16>, vector<256x128xf32> -> vector<256x128xf32>
    %159 = vector.broadcast %157 : vector<1x128xf32> to vector<256x128xf32>
    %160 = arith.addf %158, %159 : vector<256x128xf32>
    %c1232 = arith.constant 1232 : index
    %c0_56 = arith.constant 0 : index
    %161 = vector.load %arg1[%c1232, %c0_56] : memref<2224x128xbf16, #tpu.memory_space<vmem>>, vector<256x128xbf16>
    %c8 = arith.constant 8 : index
    %c0_57 = arith.constant 0 : index
    %162 = vector.load %arg2[%c8, %c0_57] : memref<16x128xf32, #tpu.memory_space<vmem>>, vector<1x128xf32>
    %cst_58 = arith.constant dense<0.000000e+00> : vector<256x128xf32>
    %163 = tpu.matmul %155, %161, %cst_58 {dimension_numbers = #tpu.dot_dimension_numbers<[1], [0], [0], [1], [0, 0, 1, 1], [], []>} : vector<256x256xbf16>, vector<256x128xbf16>, vector<256x128xf32> -> vector<256x128xf32>
    %164 = vector.broadcast %162 : vector<1x128xf32> to vector<256x128xf32>
    %165 = arith.addf %163, %164 : vector<256x128xf32>
    %166 = tpu.concatenate %160, %165 in 1 : vector<256x128xf32>, vector<256x128xf32> -> vector<256x256xf32>
    %c0_59 = arith.constant 0 : index
    %c0_60 = arith.constant 0 : index
    %167 = vector.load %arg3[%c0_59, %c0_60] : memref<256x256xf32, #tpu.memory_space<vmem>>, vector<256x256xf32>
    tpu.vector_store %arg3[%c0_59, %c0_60], %166 {strides = array<i32>} : memref<256x256xf32, #tpu.memory_space<vmem>>, vector<256x256xf32>,
    %c1488 = arith.constant 1488 : index
    %c0_61 = arith.constant 0 : index
    %168 = vector.load %arg1[%c1488, %c0_61] : memref<2224x128xbf16, #tpu.memory_space<vmem>>, vector<16x128xbf16>
    %c9 = arith.constant 9 : index
    %c0_62 = arith.constant 0 : index
    %169 = vector.load %arg2[%c9, %c0_62] : memref<16x128xf32, #tpu.memory_space<vmem>>, vector<1x128xf32>
    %cst_63 = arith.constant dense<0.000000e+00> : vector<256x128xf32>
    %170 = tpu.matmul %92, %168, %cst_63 {dimension_numbers = #tpu.dot_dimension_numbers<[1], [0], [0], [1], [0, 0, 1, 1], [], []>} : vector<256x16xbf16>, vector<16x128xbf16>, vector<256x128xf32> -> vector<256x128xf32>
    %171 = vector.broadcast %169 : vector<1x128xf32> to vector<256x128xf32>
    %172 = arith.addf %170, %171 : vector<256x128xf32>
    %c1504 = arith.constant 1504 : index
    %c0_64 = arith.constant 0 : index
    %173 = vector.load %arg1[%c1504, %c0_64] : memref<2224x128xbf16, #tpu.memory_space<vmem>>, vector<16x128xbf16>
    %c10 = arith.constant 10 : index
    %c0_65 = arith.constant 0 : index
    %174 = vector.load %arg2[%c10, %c0_65] : memref<16x128xf32, #tpu.memory_space<vmem>>, vector<1x128xf32>
    %cst_66 = arith.constant dense<0.000000e+00> : vector<256x128xf32>
    %175 = tpu.matmul %92, %173, %cst_66 {dimension_numbers = #tpu.dot_dimension_numbers<[1], [0], [0], [1], [0, 0, 1, 1], [], []>} : vector<256x16xbf16>, vector<16x128xbf16>, vector<256x128xf32> -> vector<256x128xf32>
    %176 = vector.broadcast %174 : vector<1x128xf32> to vector<256x128xf32>
    %177 = arith.addf %175, %176 : vector<256x128xf32>
    %c1520 = arith.constant 1520 : index
    %c0_67 = arith.constant 0 : index
    %178 = vector.load %arg1[%c1520, %c0_67] : memref<2224x128xbf16, #tpu.memory_space<vmem>>, vector<16x128xbf16>
    %c11 = arith.constant 11 : index
    %c0_68 = arith.constant 0 : index
    %179 = vector.load %arg2[%c11, %c0_68] : memref<16x128xf32, #tpu.memory_space<vmem>>, vector<1x128xf32>
    %cst_69 = arith.constant dense<0.000000e+00> : vector<256x128xf32>
    %180 = tpu.matmul %92, %178, %cst_69 {dimension_numbers = #tpu.dot_dimension_numbers<[1], [0], [0], [1], [0, 0, 1, 1], [], []>} : vector<256x16xbf16>, vector<16x128xbf16>, vector<256x128xf32> -> vector<256x128xf32>
    %181 = vector.broadcast %179 : vector<1x128xf32> to vector<256x128xf32>
    %182 = arith.addf %180, %181 : vector<256x128xf32>
    %c1536 = arith.constant 1536 : index
    %c0_70 = arith.constant 0 : index
    %183 = vector.load %arg1[%c1536, %c0_70] : memref<2224x128xbf16, #tpu.memory_space<vmem>>, vector<16x128xbf16>
    %c12 = arith.constant 12 : index
    %c0_71 = arith.constant 0 : index
    %184 = vector.load %arg2[%c12, %c0_71] : memref<16x128xf32, #tpu.memory_space<vmem>>, vector<1x128xf32>
    %cst_72 = arith.constant dense<0.000000e+00> : vector<256x128xf32>
    %185 = tpu.matmul %92, %183, %cst_72 {dimension_numbers = #tpu.dot_dimension_numbers<[1], [0], [0], [1], [0, 0, 1, 1], [], []>} : vector<256x16xbf16>, vector<16x128xbf16>, vector<256x128xf32> -> vector<256x128xf32>
    %186 = vector.broadcast %184 : vector<1x128xf32> to vector<256x128xf32>
    %187 = arith.addf %185, %186 : vector<256x128xf32>
    %188 = tpu.concatenate %172, %177, %182, %187 in 1 : vector<256x128xf32>, vector<256x128xf32>, vector<256x128xf32>, vector<256x128xf32> -> vector<256x512xf32>
    %cst_73 = arith.constant dense<0.000000e+00> : vector<512xf32>
    %189 = vector.multi_reduction <add>, %188, %cst_73 [0] : vector<256x512xf32> to vector<512xf32>
    %190 = vector.shape_cast %189 : vector<512xf32> to vector<1x512xf32>
    %cst_74 = arith.constant 2.560000e+02 : f32
    %191 = vector.broadcast %cst_74 : f32 to vector<1x512xf32>
    %192 = arith.divf %190, %191 : vector<1x512xf32>
    %193 = vector.broadcast %192 : vector<1x512xf32> to vector<256x512xf32>
    %194 = arith.subf %188, %193 : vector<256x512xf32>
    %195 = vector.broadcast %192 : vector<1x512xf32> to vector<256x512xf32>
    %196 = arith.subf %188, %195 : vector<256x512xf32>
    %197 = arith.mulf %194, %196 : vector<256x512xf32>
    %cst_75 = arith.constant dense<0.000000e+00> : vector<512xf32>
    %198 = vector.multi_reduction <add>, %197, %cst_75 [0] : vector<256x512xf32> to vector<512xf32>
    %199 = vector.shape_cast %198 : vector<512xf32> to vector<1x512xf32>
    %cst_76 = arith.constant 2.560000e+02 : f32
    %200 = vector.broadcast %cst_76 : f32 to vector<1x512xf32>
    %201 = arith.divf %199, %200 : vector<1x512xf32>
    %202 = vector.broadcast %192 : vector<1x512xf32> to vector<256x512xf32>
    %203 = arith.subf %188, %202 : vector<256x512xf32>
    %cst_77 = arith.constant 9.99999974E-6 : f32
    %204 = vector.broadcast %cst_77 : f32 to vector<1x512xf32>
    %205 = arith.addf %201, %204 : vector<1x512xf32>
    %206 = math.rsqrt %205 : vector<1x512xf32>
    %207 = vector.broadcast %206 : vector<1x512xf32> to vector<256x512xf32>
    %208 = arith.mulf %203, %207 : vector<256x512xf32>
    %cst_78 = arith.constant 0.000000e+00 : f32
    %209 = vector.broadcast %cst_78 : f32 to vector<256x512xf32>
    %210 = arith.maximumf %208, %209 : vector<256x512xf32>
    %211 = arith.truncf %210 : vector<256x512xf32> to vector<256x512xbf16>
    %c1552 = arith.constant 1552 : index
    %c0_79 = arith.constant 0 : index
    %212 = vector.load %arg1[%c1552, %c0_79] : memref<2224x128xbf16, #tpu.memory_space<vmem>>, vector<512x128xbf16>
    %c13 = arith.constant 13 : index
    %c0_80 = arith.constant 0 : index
    %213 = vector.load %arg2[%c13, %c0_80] : memref<16x128xf32, #tpu.memory_space<vmem>>, vector<1x128xf32>
    %cst_81 = arith.constant dense<0.000000e+00> : vector<256x128xf32>
    %214 = tpu.matmul %211, %212, %cst_81 {dimension_numbers = #tpu.dot_dimension_numbers<[1], [0], [0], [1], [0, 0, 1, 1], [], []>} : vector<256x512xbf16>, vector<512x128xbf16>, vector<256x128xf32> -> vector<256x128xf32>
    %215 = vector.broadcast %213 : vector<1x128xf32> to vector<256x128xf32>
    %216 = arith.addf %214, %215 : vector<256x128xf32>
    %cst_82 = arith.constant dense<0.000000e+00> : vector<128xf32>
    %217 = vector.multi_reduction <add>, %216, %cst_82 [0] : vector<256x128xf32> to vector<128xf32>
    %218 = vector.shape_cast %217 : vector<128xf32> to vector<1x128xf32>
    %cst_83 = arith.constant 2.560000e+02 : f32
    %219 = vector.broadcast %cst_83 : f32 to vector<1x128xf32>
    %220 = arith.divf %218, %219 : vector<1x128xf32>
    %221 = vector.broadcast %220 : vector<1x128xf32> to vector<256x128xf32>
    %222 = arith.subf %216, %221 : vector<256x128xf32>
    %223 = vector.broadcast %220 : vector<1x128xf32> to vector<256x128xf32>
    %224 = arith.subf %216, %223 : vector<256x128xf32>
    %225 = arith.mulf %222, %224 : vector<256x128xf32>
    %cst_84 = arith.constant dense<0.000000e+00> : vector<128xf32>
    %226 = vector.multi_reduction <add>, %225, %cst_84 [0] : vector<256x128xf32> to vector<128xf32>
    %227 = vector.shape_cast %226 : vector<128xf32> to vector<1x128xf32>
    %cst_85 = arith.constant 2.560000e+02 : f32
    %228 = vector.broadcast %cst_85 : f32 to vector<1x128xf32>
    %229 = arith.divf %227, %228 : vector<1x128xf32>
    %230 = vector.broadcast %220 : vector<1x128xf32> to vector<256x128xf32>
    %231 = arith.subf %216, %230 : vector<256x128xf32>
    %cst_86 = arith.constant 9.99999974E-6 : f32
    %232 = vector.broadcast %cst_86 : f32 to vector<1x128xf32>
    %233 = arith.addf %229, %232 : vector<1x128xf32>
    %234 = math.rsqrt %233 : vector<1x128xf32>
    %235 = vector.broadcast %234 : vector<1x128xf32> to vector<256x128xf32>
    %236 = arith.mulf %231, %235 : vector<256x128xf32>
    %cst_87 = arith.constant 0.000000e+00 : f32
    %237 = vector.broadcast %cst_87 : f32 to vector<256x128xf32>
    %238 = arith.maximumf %236, %237 : vector<256x128xf32>
    %239 = arith.truncf %238 : vector<256x128xf32> to vector<256x128xbf16>
    %c2064 = arith.constant 2064 : index
    %c0_88 = arith.constant 0 : index
    %240 = vector.load %arg1[%c2064, %c0_88] : memref<2224x128xbf16, #tpu.memory_space<vmem>>, vector<128x128xbf16>
    %c14 = arith.constant 14 : index
    %c0_89 = arith.constant 0 : index
    %241 = vector.load %arg2[%c14, %c0_89] : memref<16x128xf32, #tpu.memory_space<vmem>>, vector<1x128xf32>
    %cst_90 = arith.constant dense<0.000000e+00> : vector<256x128xf32>
    %242 = tpu.matmul %239, %240, %cst_90 {dimension_numbers = #tpu.dot_dimension_numbers<[1], [0], [0], [1], [0, 0, 1, 1], [], []>} : vector<256x128xbf16>, vector<128x128xbf16>, vector<256x128xf32> -> vector<256x128xf32>
    %243 = vector.broadcast %241 : vector<1x128xf32> to vector<256x128xf32>
    %244 = arith.addf %242, %243 : vector<256x128xf32>
    %245 = vector.extract_strided_slice %244 {offsets = [0, 0], sizes = [256, 32], strides = [1, 1]} : vector<256x128xf32> to vector<256x32xf32>
    %cst_91 = arith.constant dense<0.000000e+00> : vector<32xf32>
    %246 = vector.multi_reduction <add>, %245, %cst_91 [0] : vector<256x32xf32> to vector<32xf32>
    %247 = vector.shape_cast %246 : vector<32xf32> to vector<1x32xf32>
    %cst_92 = arith.constant 2.560000e+02 : f32
    %248 = vector.broadcast %cst_92 : f32 to vector<1x32xf32>
    %249 = arith.divf %247, %248 : vector<1x32xf32>
    %250 = vector.broadcast %249 : vector<1x32xf32> to vector<256x32xf32>
    %251 = arith.subf %245, %250 : vector<256x32xf32>
    %252 = vector.broadcast %249 : vector<1x32xf32> to vector<256x32xf32>
    %253 = arith.subf %245, %252 : vector<256x32xf32>
    %254 = arith.mulf %251, %253 : vector<256x32xf32>
    %cst_93 = arith.constant dense<0.000000e+00> : vector<32xf32>
    %255 = vector.multi_reduction <add>, %254, %cst_93 [0] : vector<256x32xf32> to vector<32xf32>
    %256 = vector.shape_cast %255 : vector<32xf32> to vector<1x32xf32>
    %cst_94 = arith.constant 2.560000e+02 : f32
    %257 = vector.broadcast %cst_94 : f32 to vector<1x32xf32>
    %258 = arith.divf %256, %257 : vector<1x32xf32>
    %259 = vector.broadcast %249 : vector<1x32xf32> to vector<256x32xf32>
    %260 = arith.subf %245, %259 : vector<256x32xf32>
    %cst_95 = arith.constant 9.99999974E-6 : f32
    %261 = vector.broadcast %cst_95 : f32 to vector<1x32xf32>
    %262 = arith.addf %258, %261 : vector<1x32xf32>
    %263 = math.rsqrt %262 : vector<1x32xf32>
    %264 = vector.broadcast %263 : vector<1x32xf32> to vector<256x32xf32>
    %265 = arith.mulf %260, %264 : vector<256x32xf32>
    %cst_96 = arith.constant 0.000000e+00 : f32
    %266 = vector.broadcast %cst_96 : f32 to vector<256x32xf32>
    %267 = arith.maximumf %265, %266 : vector<256x32xf32>
    %268 = arith.truncf %267 : vector<256x32xf32> to vector<256x32xbf16>
    %c2192 = arith.constant 2192 : index
    %c0_97 = arith.constant 0 : index
    %269 = vector.load %arg1[%c2192, %c0_97] : memref<2224x128xbf16, #tpu.memory_space<vmem>>, vector<32x128xbf16>
    %c15 = arith.constant 15 : index
    %c0_98 = arith.constant 0 : index
    %270 = vector.load %arg2[%c15, %c0_98] : memref<16x128xf32, #tpu.memory_space<vmem>>, vector<1x128xf32>
    %cst_99 = arith.constant dense<0.000000e+00> : vector<256x128xf32>
    %271 = tpu.matmul %268, %269, %cst_99 {dimension_numbers = #tpu.dot_dimension_numbers<[1], [0], [0], [1], [0, 0, 1, 1], [], []>} : vector<256x32xbf16>, vector<32x128xbf16>, vector<256x128xf32> -> vector<256x128xf32>
    %272 = vector.broadcast %270 : vector<1x128xf32> to vector<256x128xf32>
    %273 = arith.addf %271, %272 : vector<256x128xf32>
    %274 = tpu.iota {dimensions = array<i32: 1>} : vector<256x128xi32>
    %c4_i32 = arith.constant 4 : i32
    %275 = vector.broadcast %c4_i32 : i32 to vector<256x128xi32>
    %276 = arith.cmpi slt, %274, %275 : vector<256x128xi32>
    %cst_100 = arith.constant -1.000000e+30 : f32
    %277 = vector.broadcast %cst_100 : f32 to vector<256x128xf32>
    %278 = arith.select %276, %273, %277 : vector<256x128xi1>, vector<256x128xf32>
    %cst_101 = arith.constant dense<0xFF800000> : vector<256xf32>
    %279 = vector.multi_reduction <maximumf>, %278, %cst_101 [1] : vector<256x128xf32> to vector<256xf32>
    %280 = vector.shape_cast %279 : vector<256xf32> to vector<256x1xf32>
    %281 = vector.broadcast %280 : vector<256x1xf32> to vector<256x128xf32>
    %282 = arith.subf %278, %281 : vector<256x128xf32>
    %283 = math.exp %282 : vector<256x128xf32>
    %cst_102 = arith.constant dense<0.000000e+00> : vector<256xf32>
    %284 = vector.multi_reduction <add>, %283, %cst_102 [1] : vector<256x128xf32> to vector<256xf32>
    %285 = vector.shape_cast %284 : vector<256xf32> to vector<256x1xf32>
    %286 = vector.broadcast %285 : vector<256x1xf32> to vector<256x128xf32>
    %287 = arith.divf %283, %286 : vector<256x128xf32>
    %c0_103 = arith.constant 0 : index
    %c0_104 = arith.constant 0 : index
    %288 = vector.load %arg4[%c0_103, %c0_104] : memref<256x128xf32, #tpu.memory_space<vmem>>, vector<256x128xf32>
    tpu.vector_store %arg4[%c0_103, %c0_104], %287 {strides = array<i32>} : memref<256x128xf32, #tpu.memory_space<vmem>>, vector<256x128xf32>,
    return
  }
}

</mosaic_0001>

<llo_original>
// kernel: tpu_custom_call.1
$region0: #{tpu_custom_call.1}
  #allocation0 [shape = 'u32[]', space=smem, size = 0x4, offset = 0x4, fixed_abs, tag = 'smem constant byte address 0x4 - core index']
  #allocation1 [shape = 'u32[144,128]{1,0:T(1,128)}', space=vmem, size = 0x12000, scoped, tag = 'internal scratch']
  %s0 = inlined_call_operand.hbm [shape: bf16[256,256], index: 0, kind: input, shape index: {}]
  %s1 = inlined_call_operand.hbm [shape: bf16[2224,128], index: 1, kind: input, shape index: {}]
  %s2 = inlined_call_operand.hbm [shape: f32[16,128], index: 2, kind: input, shape index: {}]
  %s3 = inlined_call_operand.hbm [shape: f32[256,256], index: 3, kind: output, shape index: {0}]
  %s4 = inlined_call_operand.hbm [shape: f32[256,128], index: 4, kind: output, shape index: {1}]
  %5 = xla_tuple %s3, %s4
  %s6 = sld [smem:[#allocation0]]
  $region42: #{tpu_custom_call.1} parent=0
    _
  %s8 = ssub.s32 1, %s6
  %s9 = scalar_select 0, %s8, %s6
  $region1: #{tpu_custom_call.1} parent=0
    #allocation2 [shape = 'u8[131072]{0}', space=vmem, size = 0x20000, scoped, tag = 'input window, operand 0, single buffered']
    #allocation3 [shape = 's32[1]{0}', space=sflag, size = 0x4, scoped, tag = 'scoped memory for tpu_custom_call.1']
    #allocation4 [shape = 's32[1]{0}', space=sflag, size = 0x4, scoped, tag = 'scoped memory for tpu_custom_call.1']
    #allocation5 [shape = 'u8[569344]{0}', space=vmem, size = 0x8b000, scoped, tag = 'input window, operand 1, single buffered']
    #allocation6 [shape = 's32[1]{0}', space=sflag, size = 0x4, scoped, tag = 'scoped memory for tpu_custom_call.1']
    #allocation7 [shape = 'u8[8192]{0}', space=vmem, size = 0x2000, scoped, tag = 'input window, operand 2, single buffered']
    #allocation8 [shape = 'u8[262144]{0}', space=vmem, size = 0x40000, scoped, tag = 'output window, operand 0, single buffered']
    #allocation9 [shape = 'u8[131072]{0}', space=vmem, size = 0x20000, scoped, tag = 'output window, operand 1, single buffered']
    #allocation10 [shape = 's32[1]{0}', space=sflag, size = 0x4, scoped, tag = 'scoped memory for tpu_custom_call.1']
    %10 = vsyncpa [#allocation3], 0
    %11 = vsyncpa [#allocation6], 0
    %12 = vsyncpa [#allocation4], 0
    %13 = vsyncpa [#allocation10], 0
    // Predicated region
    $region2: #{tpu_custom_call.1} parent=1 // pred_check
      _
    $region3: #{tpu_custom_call.1} parent=1 // pred_check_branch
      %15 = sbr.rel (0) target = $region5
    $region4: #{tpu_custom_call.1} parent=1 // pred_region
      %s17 = ssub.s32 4096, 4096
      %18 = vsyncadd [#allocation3], %s17
      %s19 = sshll.u32 [#allocation2], 4
      %s20 = int_to_ptr.vmem [resolvable:$true] %s19
      %25 = dma.hbm_to_vmem [thread:$0]  %s0, 4096, %s20, [#allocation3], 128, 128, 8
    $region5: #{tpu_custom_call.1} parent=1 // pred_fallthru
      _
    // Predicated region
    $region6: #{tpu_custom_call.1} parent=1 // pred_check
      _
    $region7: #{tpu_custom_call.1} parent=1 // pred_check_branch
      %27 = sbr.rel (0) target = $region9
    $region8: #{tpu_custom_call.1} parent=1 // pred_region
      %s29 = ssub.s32 17792, 17792
      %30 = vsyncadd [#allocation6], %s29
      %s31 = sshll.u32 [#allocation5], 4
      %s32 = int_to_ptr.vmem [resolvable:$true] %s31
      %37 = dma.hbm_to_vmem [thread:$0]  %s1, 17792, %s32, [#allocation6], 64, 64, 4
    $region9: #{tpu_custom_call.1} parent=1 // pred_fallthru
      _
    // Predicated region
    $region10: #{tpu_custom_call.1} parent=1 // pred_check
      _
    $region11: #{tpu_custom_call.1} parent=1 // pred_check_branch
      %39 = sbr.rel (0) target = $region13
    $region12: #{tpu_custom_call.1} parent=1 // pred_region
      %s41 = ssub.s32 256, 256
      %42 = vsyncadd [#allocation6], %s41
      %s43 = sshll.u32 [#allocation7], 4
      %s44 = int_to_ptr.vmem [resolvable:$true] %s43
      %49 = dma.hbm_to_vmem [thread:$0]  %s2, 256, %s44, [#allocation6], 128, 128, 8
    $region13: #{tpu_custom_call.1} parent=1 // pred_fallthru
      _
    // Predicated region
    $region14: #{tpu_custom_call.1} parent=1 // pred_check
      _
    $region15: #{tpu_custom_call.1} parent=1 // pred_check_branch
      %51 = sbr.rel (0) target = $region17
    $region16: #{tpu_custom_call.1} parent=1 // pred_region
      %52 = dma.done [#allocation3], 4096
    $region17: #{tpu_custom_call.1} parent=1 // pred_fallthru
      _
    // Predicated region
    $region18: #{tpu_custom_call.1} parent=1 // pred_check
      _
    $region19: #{tpu_custom_call.1} parent=1 // pred_check_branch
      %54 = sbr.rel (0) target = $region21
    $region20: #{tpu_custom_call.1} parent=1 // pred_region
      %55 = dma.done [#allocation6], 17792
    $region21: #{tpu_custom_call.1} parent=1 // pred_fallthru
      _
    // Predicated region
    $region22: #{tpu_custom_call.1} parent=1 // pred_check
      _
    $region23: #{tpu_custom_call.1} parent=1 // pred_check_branch
      %57 = sbr.rel (0) target = $region25
    $region24: #{tpu_custom_call.1} parent=1 // pred_region
      %58 = dma.done [#allocation6], 256
    $region25: #{tpu_custom_call.1} parent=1 // pred_fallthru
      _
    %v60 = vld [vmem:[#allocation2] sm:$0xff]
    %v61 = vld [vmem:[#allocation2 + $0x8] sm:$0xff]
    %v62 = vld [vmem:[#allocation2 + $0x10] sm:$0xff]
    %v63 = vld [vmem:[#allocation2 + $0x18] sm:$0xff]
    %v64 = vld [vmem:[#allocation2 + $0x20] sm:$0xff]
    %v65 = vld [vmem:[#allocation2 + $0x28] sm:$0xff]
    %v66 = vld [vmem:[#allocation2 + $0x30] sm:$0xff]
    %v67 = vld [vmem:[#allocation2 + $0x38] sm:$0xff]
    %v68 = vld [vmem:[#allocation2 + $0x40] sm:$0xff]
    %v69 = vld [vmem:[#allocation2 + $0x48] sm:$0xff]
    %v70 = vld [vmem:[#allocation2 + $0x50] sm:$0xff]
    %v71 = vld [vmem:[#allocation2 + $0x58] sm:$0xff]
    %v72 = vld [vmem:[#allocation2 + $0x60] sm:$0xff]
    %v73 = vld [vmem:[#allocation2 + $0x68] sm:$0xff]
    %v74 = vld [vmem:[#allocation2 + $0x70] sm:$0xff]
    %v75 = vld [vmem:[#allocation2 + $0x78] sm:$0xff]
    %v76 = vld [vmem:[#allocation2 + $0x80] sm:$0xff]
    %v77 = vld [vmem:[#allocation2 + $0x88] sm:$0xff]
    %v78 = vld [vmem:[#allocation2 + $0x90] sm:$0xff]
    %v79 = vld [vmem:[#allocation2 + $0x98] sm:$0xff]
    %v80 = vld [vmem:[#allocation2 + $0xa0] sm:$0xff]
    %v81 = vld [vmem:[#allocation2 + $0xa8] sm:$0xff]
    %v82 = vld [vmem:[#allocation2 + $0xb0] sm:$0xff]
    %v83 = vld [vmem:[#allocation2 + $0xb8] sm:$0xff]
    %v84 = vld [vmem:[#allocation2 + $0xc0] sm:$0xff]
    %v85 = vld [vmem:[#allocation2 + $0xc8] sm:$0xff]
    %v86 = vld [vmem:[#allocation2 + $0xd0] sm:$0xff]
    %v87 = vld [vmem:[#allocation2 + $0xd8] sm:$0xff]
    %v88 = vld [vmem:[#allocation2 + $0xe0] sm:$0xff]
    %v89 = vld [vmem:[#allocation2 + $0xe8] sm:$0xff]
    %v90 = vld [vmem:[#allocation2 + $0xf0] sm:$0xff]
    %v91 = vld [vmem:[#allocation2 + $0xf8] sm:$0xff]
    %v92 = vld [vmem:[#allocation5] sm:$0xf]
    %v93 = vld [vmem:[#allocation5 + $0x4] sm:$0xf]
    %v94 = vld [vmem:[#allocation5 + $0x8] sm:$0xf]
    %v95 = vld [vmem:[#allocation5 + $0xc] sm:$0xf]
    %v96 = vld [vmem:[#allocation5 + $0x10] sm:$0xf]
    %v97 = vld [vmem:[#allocation5 + $0x14] sm:$0xf]
    %v98 = vld [vmem:[#allocation5 + $0x18] sm:$0xf]
    %v99 = vld [vmem:[#allocation5 + $0x1c] sm:$0xf]
    %v100 = vld [vmem:[#allocation5 + $0x20] sm:$0xf]
    %v101 = vld [vmem:[#allocation5 + $0x24] sm:$0xf]
    %v102 = vld [vmem:[#allocation5 + $0x28] sm:$0xf]
    %v103 = vld [vmem:[#allocation5 + $0x2c] sm:$0xf]
    %v104 = vld [vmem:[#allocation5 + $0x30] sm:$0xf]
    %v105 = vld [vmem:[#allocation5 + $0x34] sm:$0xf]
    %v106 = vld [vmem:[#allocation5 + $0x38] sm:$0xf]
    %v107 = vld [vmem:[#allocation5 + $0x3c] sm:$0xf]
    %v108 = vld [vmem:[#allocation5 + $0x40] sm:$0xf]
    %v109 = vld [vmem:[#allocation5 + $0x44] sm:$0xf]
    %v110 = vld [vmem:[#allocation5 + $0x48] sm:$0xf]
    %v111 = vld [vmem:[#allocation5 + $0x4c] sm:$0xf]
    %v112 = vld [vmem:[#allocation5 + $0x50] sm:$0xf]
    %v113 = vld [vmem:[#allocation5 + $0x54] sm:$0xf]
    %v114 = vld [vmem:[#allocation5 + $0x58] sm:$0xf]
    %v115 = vld [vmem:[#allocation5 + $0x5c] sm:$0xf]
    %v116 = vld [vmem:[#allocation5 + $0x60] sm:$0xf]
    %v117 = vld [vmem:[#allocation5 + $0x64] sm:$0xf]
    %v118 = vld [vmem:[#allocation5 + $0x68] sm:$0xf]
    %v119 = vld [vmem:[#allocation5 + $0x6c] sm:$0xf]
    %v120 = vld [vmem:[#allocation5 + $0x70] sm:$0xf]
    %v121 = vld [vmem:[#allocation5 + $0x74] sm:$0xf]
    %v122 = vld [vmem:[#allocation5 + $0x78] sm:$0xf]
    %v123 = vld [vmem:[#allocation5 + $0x7c] sm:$0xf]
    %v124 = vld [vmem:[#allocation7] sm:$0x1]
    %v125 = vlaneseq
    %v126 = vshrl.u32 %v125, 7
    %v127 = vsub.s32 0, %v126
    %v128 = vrot.slane %v124, %v127
    %v161 = vunpack.c.l.b16 %v60
    %v162 = vunpack.c.h.b16 %v60
    %v163 = vunpack.c.l.b16 %v61
    %v164 = vunpack.c.h.b16 %v61
    %v165 = vunpack.c.l.b16 %v62
    %v166 = vunpack.c.h.b16 %v62
    %v167 = vunpack.c.l.b16 %v63
    %v168 = vunpack.c.h.b16 %v63
    %v169 = vunpack.c.l.b16 %v64
    %v170 = vunpack.c.h.b16 %v64
    %v171 = vunpack.c.l.b16 %v65
    %v172 = vunpack.c.h.b16 %v65
    %v173 = vunpack.c.l.b16 %v66
    %v174 = vunpack.c.h.b16 %v66
    %v175 = vunpack.c.l.b16 %v67
    %v176 = vunpack.c.h.b16 %v67
    %v177 = vunpack.c.l.b16 %v68
    %v178 = vunpack.c.h.b16 %v68
    %v179 = vunpack.c.l.b16 %v69
    %v180 = vunpack.c.h.b16 %v69
    %v181 = vunpack.c.l.b16 %v70
    %v182 = vunpack.c.h.b16 %v70
    %v183 = vunpack.c.l.b16 %v71
    %v184 = vunpack.c.h.b16 %v71
    %v185 = vunpack.c.l.b16 %v72
    %v186 = vunpack.c.h.b16 %v72
    %v187 = vunpack.c.l.b16 %v73
    %v188 = vunpack.c.h.b16 %v73
    %v189 = vunpack.c.l.b16 %v74
    %v190 = vunpack.c.h.b16 %v74
    %v191 = vunpack.c.l.b16 %v75
    %v192 = vunpack.c.h.b16 %v75
    %v193 = vunpack.c.l.b16 %v76
    %v194 = vunpack.c.h.b16 %v76
    %v195 = vunpack.c.l.b16 %v77
    %v196 = vunpack.c.h.b16 %v77
    %v197 = vunpack.c.l.b16 %v78
    %v198 = vunpack.c.h.b16 %v78
    %v199 = vunpack.c.l.b16 %v79
    %v200 = vunpack.c.h.b16 %v79
    %v201 = vunpack.c.l.b16 %v80
    %v202 = vunpack.c.h.b16 %v80
    %v203 = vunpack.c.l.b16 %v81
    %v204 = vunpack.c.h.b16 %v81
    %v205 = vunpack.c.l.b16 %v82
    %v206 = vunpack.c.h.b16 %v82
    %v207 = vunpack.c.l.b16 %v83
    %v208 = vunpack.c.h.b16 %v83
    %v209 = vunpack.c.l.b16 %v84
    %v210 = vunpack.c.h.b16 %v84
    %v211 = vunpack.c.l.b16 %v85
    %v212 = vunpack.c.h.b16 %v85
    %v213 = vunpack.c.l.b16 %v86
    %v214 = vunpack.c.h.b16 %v86
    %v215 = vunpack.c.l.b16 %v87
    %v216 = vunpack.c.h.b16 %v87
    %v217 = vunpack.c.l.b16 %v88
    %v218 = vunpack.c.h.b16 %v88
    %v219 = vunpack.c.l.b16 %v89
    %v220 = vunpack.c.h.b16 %v89
    %v221 = vunpack.c.l.b16 %v90
    %v222 = vunpack.c.h.b16 %v90
    %v223 = vunpack.c.l.b16 %v91
    %v224 = vunpack.c.h.b16 %v91
    %v225 = vpack.c.b16 %v163, %v161
    %v226 = vpack.c.b16 %v164, %v162
    %v227 = vpack.c.b16 %v167, %v165
    %v228 = vpack.c.b16 %v168, %v166
    %v229 = vpack.c.b16 %v171, %v169
    %v230 = vpack.c.b16 %v172, %v170
    %v231 = vpack.c.b16 %v175, %v173
    %v232 = vpack.c.b16 %v176, %v174
    %v233 = vpack.c.b16 %v179, %v177
    %v234 = vpack.c.b16 %v180, %v178
    %v235 = vpack.c.b16 %v183, %v181
    %v236 = vpack.c.b16 %v184, %v182
    %v237 = vpack.c.b16 %v187, %v185
    %v238 = vpack.c.b16 %v188, %v186
    %v239 = vpack.c.b16 %v191, %v189
    %v240 = vpack.c.b16 %v192, %v190
    %v241 = vpack.c.b16 %v195, %v193
    %v242 = vpack.c.b16 %v196, %v194
    %v243 = vpack.c.b16 %v199, %v197
    %v244 = vpack.c.b16 %v200, %v198
    %v245 = vpack.c.b16 %v203, %v201
    %v246 = vpack.c.b16 %v204, %v202
    %v247 = vpack.c.b16 %v207, %v205
    %v248 = vpack.c.b16 %v208, %v206
    %v249 = vpack.c.b16 %v211, %v209
    %v250 = vpack.c.b16 %v212, %v210
    %v251 = vpack.c.b16 %v215, %v213
    %v252 = vpack.c.b16 %v216, %v214
    %v253 = vpack.c.b16 %v219, %v217
    %v254 = vpack.c.b16 %v220, %v218
    %v255 = vpack.c.b16 %v223, %v221
    %v256 = vpack.c.b16 %v224, %v222
    %v321 = vunpack.c.l.b16 %v92
    %v322 = vunpack.c.l.b16 %v93
    %v323 = vunpack.c.l.b16 %v94
    %v324 = vunpack.c.l.b16 %v95
    %v325 = vunpack.c.l.b16 %v96
    %v326 = vunpack.c.l.b16 %v97
    %v327 = vunpack.c.l.b16 %v98
    %v328 = vunpack.c.l.b16 %v99
    %v329 = vunpack.c.l.b16 %v100
    %v330 = vunpack.c.l.b16 %v101
    %v331 = vunpack.c.l.b16 %v102
    %v332 = vunpack.c.l.b16 %v103
    %v333 = vunpack.c.l.b16 %v104
    %v334 = vunpack.c.l.b16 %v105
    %v335 = vunpack.c.l.b16 %v106
    %v336 = vunpack.c.l.b16 %v107
    %v337 = vunpack.c.l.b16 %v108
    %v338 = vunpack.c.l.b16 %v109
    %v339 = vunpack.c.l.b16 %v110
    %v340 = vunpack.c.l.b16 %v111
    %v341 = vunpack.c.l.b16 %v112
    %v342 = vunpack.c.l.b16 %v113
    %v343 = vunpack.c.l.b16 %v114
    %v344 = vunpack.c.l.b16 %v115
    %v345 = vunpack.c.l.b16 %v116
    %v346 = vunpack.c.l.b16 %v117
    %v347 = vunpack.c.l.b16 %v118
    %v348 = vunpack.c.l.b16 %v119
    %v349 = vunpack.c.l.b16 %v120
    %v350 = vunpack.c.l.b16 %v121
    %v351 = vunpack.c.l.b16 %v122
    %v352 = vunpack.c.l.b16 %v123
    %v353 = vpack.c.b16 %v322, %v321
    %v354 = vpack.c.b16 %v324, %v323
    %v355 = vpack.c.b16 %v326, %v325
    %v356 = vpack.c.b16 %v328, %v327
    %v357 = vpack.c.b16 %v330, %v329
    %v358 = vpack.c.b16 %v332, %v331
    %v359 = vpack.c.b16 %v334, %v333
    %v360 = vpack.c.b16 %v336, %v335
    %v361 = vpack.c.b16 %v338, %v337
    %v362 = vpack.c.b16 %v340, %v339
    %v363 = vpack.c.b16 %v342, %v341
    %v364 = vpack.c.b16 %v344, %v343
    %v365 = vpack.c.b16 %v346, %v345
    %v366 = vpack.c.b16 %v348, %v347
    %v367 = vpack.c.b16 %v350, %v349
    %v368 = vpack.c.b16 %v352, %v351
    %385 = vmatprep.subr.bf16.mxu0 0
    %386 = vmatpush1.bf16.msra.mxu0 %v353
    %387 = vmatprep.subr.bf16.mxu0 0
    %388 = vmatpush1.bf16.msra.mxu0 %v354
    %389 = vmatprep.subr.bf16.mxu0 0
    %390 = vmatpush1.bf16.msra.mxu0 %v355
    %391 = vmatprep.subr.bf16.mxu0 0
    %392 = vmatpush1.bf16.msra.mxu0 %v356
    %393 = vmatprep.subr.bf16.mxu0 0
    %394 = vmatpush1.bf16.msra.mxu0 %v357
    %395 = vmatprep.subr.bf16.mxu0 0
    %396 = vmatpush1.bf16.msra.mxu0 %v358
    %397 = vmatprep.subr.bf16.mxu0 0
    %398 = vmatpush1.bf16.msra.mxu0 %v359
    %399 = vmatprep.subr.bf16.mxu0 0
    %400 = vmatpush1.bf16.msra.mxu0 %v360
    %401 = vmatprep.subr.bf16.mxu0 0
    %402 = vmatpush1.bf16.msra.mxu0 %v361
    %403 = vmatprep.subr.bf16.mxu0 0
    %404 = vmatpush1.bf16.msra.mxu0 %v362
    %405 = vmatprep.subr.bf16.mxu0 0
    %406 = vmatpush1.bf16.msra.mxu0 %v363
    %407 = vmatprep.subr.bf16.mxu0 0
    %408 = vmatpush1.bf16.msra.mxu0 %v364
    %409 = vmatprep.subr.bf16.mxu0 0
    %410 = vmatpush1.bf16.msra.mxu0 %v365
    %411 = vmatprep.subr.bf16.mxu0 0
    %412 = vmatpush1.bf16.msra.mxu0 %v366
    %413 = vmatprep.subr.bf16.mxu0 0
    %414 = vmatpush1.bf16.msra.mxu0 %v367
    %415 = vmatprep.subr.bf16.mxu0 0
    %416 = vmatpush1.bf16.msra.mxu0 %v368
    %417 = vmatprep.mubr.bf16.mxu0 %v226
    %418 = vmatmul.mubr.bf16.gmra.mrb[0].mxu0 %v225
    %v419 = vpop.f32.mrb[0].mxu0
    %v420 = vadd.f32 %v128, %v419
    %v421 = vpop.f32.mrb[0].mxu0
    %v422 = vpop.f32.mrb[0].mxu0
    %v423 = vadd.f32 %v128, %v422
    %v424 = vpop.f32.mrb[0].mxu0
    %425 = vmatprep.mubr.bf16.mxu0 %v228
    %426 = vmatmul.mubr.bf16.gmra.mrb[0].mxu0 %v227
    %v427 = vpop.f32.mrb[0].mxu0
    %v428 = vadd.f32 %v128, %v427
    %v429 = vpop.f32.mrb[0].mxu0
    %v430 = vpop.f32.mrb[0].mxu0
    %v431 = vadd.f32 %v128, %v430
    %v432 = vpop.f32.mrb[0].mxu0
    %433 = vmatprep.mubr.bf16.mxu0 %v230
    %434 = vmatmul.mubr.bf16.gmra.mrb[0].mxu0 %v229
    %v435 = vpop.f32.mrb[0].mxu0
    %v436 = vadd.f32 %v128, %v435
    %v437 = vpop.f32.mrb[0].mxu0
    %v438 = vpop.f32.mrb[0].mxu0
    %v439 = vadd.f32 %v128, %v438
    %v440 = vpop.f32.mrb[0].mxu0
    %441 = vmatprep.mubr.bf16.mxu0 %v232
    %442 = vmatmul.mubr.bf16.gmra.mrb[0].mxu0 %v231
    %v443 = vpop.f32.mrb[0].mxu0
    %v444 = vadd.f32 %v128, %v443
    %v445 = vpop.f32.mrb[0].mxu0
    %v446 = vpop.f32.mrb[0].mxu0
    %v447 = vadd.f32 %v128, %v446
    %v448 = vpop.f32.mrb[0].mxu0
    %449 = vmatprep.mubr.bf16.mxu0 %v234
    %450 = vmatmul.mubr.bf16.gmra.mrb[0].mxu0 %v233
    %v451 = vpop.f32.mrb[0].mxu0
    %v452 = vadd.f32 %v128, %v451
    %v453 = vpop.f32.mrb[0].mxu0
    %v454 = vpop.f32.mrb[0].mxu0
    %v455 = vadd.f32 %v128, %v454
    %v456 = vpop.f32.mrb[0].mxu0
    %457 = vmatprep.mubr.bf16.mxu0 %v236
    %458 = vmatmul.mubr.bf16.gmra.mrb[0].mxu0 %v235
    %v459 = vpop.f32.mrb[0].mxu0
    %v460 = vadd.f32 %v128, %v459
    %v461 = vpop.f32.mrb[0].mxu0
    %v462 = vpop.f32.mrb[0].mxu0
    %v463 = vadd.f32 %v128, %v462
    %v464 = vpop.f32.mrb[0].mxu0
    %465 = vmatprep.mubr.bf16.mxu0 %v238
    %466 = vmatmul.mubr.bf16.gmra.mrb[0].mxu0 %v237
    %v467 = vpop.f32.mrb[0].mxu0
    %v468 = vadd.f32 %v128, %v467
    %v469 = vpop.f32.mrb[0].mxu0
    %v470 = vpop.f32.mrb[0].mxu0
    %v471 = vadd.f32 %v128, %v470
    %v472 = vpop.f32.mrb[0].mxu0
    %473 = vmatprep.mubr.bf16.mxu0 %v240
    %474 = vmatmul.mubr.bf16.gmra.mrb[0].mxu0 %v239
    %v475 = vpop.f32.mrb[0].mxu0
    %v476 = vadd.f32 %v128, %v475
    %v477 = vpop.f32.mrb[0].mxu0
    %v478 = vpop.f32.mrb[0].mxu0
    %v479 = vadd.f32 %v128, %v478
    %v480 = vpop.f32.mrb[0].mxu0
    %481 = vmatprep.mubr.bf16.mxu0 %v242
    %482 = vmatmul.mubr.bf16.gmra.mrb[0].mxu0 %v241
    %v483 = vpop.f32.mrb[0].mxu0
    %v484 = vadd.f32 %v128, %v483
    %v485 = vpop.f32.mrb[0].mxu0
    %v486 = vpop.f32.mrb[0].mxu0
    %v487 = vadd.f32 %v128, %v486
    %v488 = vpop.f32.mrb[0].mxu0
    %489 = vmatprep.mubr.bf16.mxu0 %v244
    %490 = vmatmul.mubr.bf16.gmra.mrb[0].mxu0 %v243
    %v491 = vpop.f32.mrb[0].mxu0
    %v492 = vadd.f32 %v128, %v491
    %v493 = vpop.f32.mrb[0].mxu0
    %v494 = vpop.f32.mrb[0].mxu0
    %v495 = vadd.f32 %v128, %v494
    %v496 = vpop.f32.mrb[0].mxu0
    %497 = vmatprep.mubr.bf16.mxu0 %v246
    %498 = vmatmul.mubr.bf16.gmra.mrb[0].mxu0 %v245
    %v499 = vpop.f32.mrb[0].mxu0
    %v500 = vadd.f32 %v128, %v499
    %v501 = vpop.f32.mrb[0].mxu0
    %v502 = vpop.f32.mrb[0].mxu0
    %v503 = vadd.f32 %v128, %v502
    %v504 = vpop.f32.mrb[0].mxu0
    %505 = vmatprep.mubr.bf16.mxu0 %v248
    %506 = vmatmul.mubr.bf16.gmra.mrb[0].mxu0 %v247
    %v507 = vpop.f32.mrb[0].mxu0
    %v508 = vadd.f32 %v128, %v507
    %v509 = vpop.f32.mrb[0].mxu0
    %v510 = vpop.f32.mrb[0].mxu0
    %v511 = vadd.f32 %v128, %v510
    %v512 = vpop.f32.mrb[0].mxu0
    %513 = vmatprep.mubr.bf16.mxu0 %v250
    %514 = vmatmul.mubr.bf16.gmra.mrb[0].mxu0 %v249
    %v515 = vpop.f32.mrb[0].mxu0
    %v516 = vadd.f32 %v128, %v515
    %v517 = vpop.f32.mrb[0].mxu0
    %v518 = vpop.f32.mrb[0].mxu0
    %v519 = vadd.f32 %v128, %v518
    %v520 = vpop.f32.mrb[0].mxu0
    %521 = vmatprep.mubr.bf16.mxu0 %v252
    %522 = vmatmul.mubr.bf16.gmra.mrb[0].mxu0 %v251
    %v523 = vpop.f32.mrb[0].mxu0
    %v524 = vadd.f32 %v128, %v523
    %v525 = vpop.f32.mrb[0].mxu0
    %v526 = vpop.f32.mrb[0].mxu0
    %v527 = vadd.f32 %v128, %v526
    %v528 = vpop.f32.mrb[0].mxu0
    %529 = vmatprep.mubr.bf16.mxu0 %v254
    %530 = vmatmul.mubr.bf16.gmra.mrb[0].mxu0 %v253
    %v531 = vpop.f32.mrb[0].mxu0
    %v532 = vadd.f32 %v128, %v531
    %v533 = vpop.f32.mrb[0].mxu0
    %v534 = vpop.f32.mrb[0].mxu0
    %v535 = vadd.f32 %v128, %v534
    %v536 = vpop.f32.mrb[0].mxu0
    %537 = vmatprep.mubr.bf16.mxu0 %v256
    %538 = vmatmul.mubr.bf16.gmra.mrb[0].mxu0 %v255
    %v539 = vpop.f32.mrb[0].mxu0
    %v540 = vadd.f32 %v128, %v539
    %v541 = vpop.f32.mrb[0].mxu0
    %v542 = vpop.f32.mrb[0].mxu0
    %v543 = vadd.f32 %v128, %v542
    %v544 = vpop.f32.mrb[0].mxu0
    %545 = vdwg.mxu0
    %v546 = vld [vmem:[#allocation5 + $0x80] sm:$0xf]
    %v547 = vld [vmem:[#allocation5 + $0x84] sm:$0xf]
    %v548 = vld [vmem:[#allocation5 + $0x88] sm:$0xf]
    %v549 = vld [vmem:[#allocation5 + $0x8c] sm:$0xf]
    %v550 = vld [vmem:[#allocation5 + $0x90] sm:$0xf]
    %v551 = vld [vmem:[#allocation5 + $0x94] sm:$0xf]
    %v552 = vld [vmem:[#allocation5 + $0x98] sm:$0xf]
    %v553 = vld [vmem:[#allocation5 + $0x9c] sm:$0xf]
    %v554 = vld [vmem:[#allocation5 + $0xa0] sm:$0xf]
    %v555 = vld [vmem:[#allocation5 + $0xa4] sm:$0xf]
    %v556 = vld [vmem:[#allocation5 + $0xa8] sm:$0xf]
    %v557 = vld [vmem:[#allocation5 + $0xac] sm:$0xf]
    %v558 = vld [vmem:[#allocation5 + $0xb0] sm:$0xf]
    %v559 = vld [vmem:[#allocation5 + $0xb4] sm:$0xf]
    %v560 = vld [vmem:[#allocation5 + $0xb8] sm:$0xf]
    %v561 = vld [vmem:[#allocation5 + $0xbc] sm:$0xf]
    %v562 = vld [vmem:[#allocation5 + $0xc0] sm:$0xf]
    %v563 = vld [vmem:[#allocation5 + $0xc4] sm:$0xf]
    %v564 = vld [vmem:[#allocation5 + $0xc8] sm:$0xf]
    %v565 = vld [vmem:[#allocation5 + $0xcc] sm:$0xf]
    %v566 = vld [vmem:[#allocation5 + $0xd0] sm:$0xf]
    %v567 = vld [vmem:[#allocation5 + $0xd4] sm:$0xf]
    %v568 = vld [vmem:[#allocation5 + $0xd8] sm:$0xf]
    %v569 = vld [vmem:[#allocation5 + $0xdc] sm:$0xf]
    %v570 = vld [vmem:[#allocation5 + $0xe0] sm:$0xf]
    %v571 = vld [vmem:[#allocation5 + $0xe4] sm:$0xf]
    %v572 = vld [vmem:[#allocation5 + $0xe8] sm:$0xf]
    %v573 = vld [vmem:[#allocation5 + $0xec] sm:$0xf]
    %v574 = vld [vmem:[#allocation5 + $0xf0] sm:$0xf]
    %v575 = vld [vmem:[#allocation5 + $0xf4] sm:$0xf]
    %v576 = vld [vmem:[#allocation5 + $0xf8] sm:$0xf]
    %v577 = vld [vmem:[#allocation5 + $0xfc] sm:$0xf]
    %v578 = vld [vmem:[#allocation7 + $0x1] sm:$0x1]
    %v579 = vlaneseq
    %v580 = vshrl.u32 %v579, 7
    %v581 = vsub.s32 0, %v580
    %v582 = vrot.slane %v578, %v581
    %v615 = vunpack.c.l.b16 %v546
    %v616 = vunpack.c.l.b16 %v547
    %v617 = vunpack.c.l.b16 %v548
    %v618 = vunpack.c.l.b16 %v549
    %v619 = vunpack.c.l.b16 %v550
    %v620 = vunpack.c.l.b16 %v551
    %v621 = vunpack.c.l.b16 %v552
    %v622 = vunpack.c.l.b16 %v553
    %v623 = vunpack.c.l.b16 %v554
    %v624 = vunpack.c.l.b16 %v555
    %v625 = vunpack.c.l.b16 %v556
    %v626 = vunpack.c.l.b16 %v557
    %v627 = vunpack.c.l.b16 %v558
    %v628 = vunpack.c.l.b16 %v559
    %v629 = vunpack.c.l.b16 %v560
    %v630 = vunpack.c.l.b16 %v561
    %v631 = vunpack.c.l.b16 %v562
    %v632 = vunpack.c.l.b16 %v563
    %v633 = vunpack.c.l.b16 %v564
    %v634 = vunpack.c.l.b16 %v565
    %v635 = vunpack.c.l.b16 %v566
    %v636 = vunpack.c.l.b16 %v567
    %v637 = vunpack.c.l.b16 %v568
    %v638 = vunpack.c.l.b16 %v569
    %v639 = vunpack.c.l.b16 %v570
    %v640 = vunpack.c.l.b16 %v571
    %v641 = vunpack.c.l.b16 %v572
    %v642 = vunpack.c.l.b16 %v573
    %v643 = vunpack.c.l.b16 %v574
    %v644 = vunpack.c.l.b16 %v575
    %v645 = vunpack.c.l.b16 %v576
    %v646 = vunpack.c.l.b16 %v577
    %v647 = vpack.c.b16 %v616, %v615
    %v648 = vpack.c.b16 %v618, %v617
    %v649 = vpack.c.b16 %v620, %v619
    %v650 = vpack.c.b16 %v622, %v621
    %v651 = vpack.c.b16 %v624, %v623
    %v652 = vpack.c.b16 %v626, %v625
    %v653 = vpack.c.b16 %v628, %v627
    %v654 = vpack.c.b16 %v630, %v629
    %v655 = vpack.c.b16 %v632, %v631
    %v656 = vpack.c.b16 %v634, %v633
    %v657 = vpack.c.b16 %v636, %v635
    %v658 = vpack.c.b16 %v638, %v637
    %v659 = vpack.c.b16 %v640, %v639
    %v660 = vpack.c.b16 %v642, %v641
    %v661 = vpack.c.b16 %v644, %v643
    %v662 = vpack.c.b16 %v646, %v645
    %679 = vmatprep.subr.bf16.mxu0 0
    %680 = vmatpush1.bf16.msra.mxu0 %v647
    %681 = vmatprep.subr.bf16.mxu0 0
    %682 = vmatpush1.bf16.msra.mxu0 %v648
    %683 = vmatprep.subr.bf16.mxu0 0
    %684 = vmatpush1.bf16.msra.mxu0 %v649
    %685 = vmatprep.subr.bf16.mxu0 0
    %686 = vmatpush1.bf16.msra.mxu0 %v650
    %687 = vmatprep.subr.bf16.mxu0 0
    %688 = vmatpush1.bf16.msra.mxu0 %v651
    %689 = vmatprep.subr.bf16.mxu0 0
    %690 = vmatpush1.bf16.msra.mxu0 %v652
    %691 = vmatprep.subr.bf16.mxu0 0
    %692 = vmatpush1.bf16.msra.mxu0 %v653
    %693 = vmatprep.subr.bf16.mxu0 0
    %694 = vmatpush1.bf16.msra.mxu0 %v654
    %695 = vmatprep.subr.bf16.mxu0 0
    %696 = vmatpush1.bf16.msra.mxu0 %v655
    %697 = vmatprep.subr.bf16.mxu0 0
    %698 = vmatpush1.bf16.msra.mxu0 %v656
    %699 = vmatprep.subr.bf16.mxu0 0
    %700 = vmatpush1.bf16.msra.mxu0 %v657
    %701 = vmatprep.subr.bf16.mxu0 0
    %702 = vmatpush1.bf16.msra.mxu0 %v658
    %703 = vmatprep.subr.bf16.mxu0 0
    %704 = vmatpush1.bf16.msra.mxu0 %v659
    %705 = vmatprep.subr.bf16.mxu0 0
    %706 = vmatpush1.bf16.msra.mxu0 %v660
    %707 = vmatprep.subr.bf16.mxu0 0
    %708 = vmatpush1.bf16.msra.mxu0 %v661
    %709 = vmatprep.subr.bf16.mxu0 0
    %710 = vmatpush1.bf16.msra.mxu0 %v662
    %711 = vmatprep.mubr.bf16.mxu0 %v226
    %712 = vmatmul.mubr.bf16.gmra.mrb[0].mxu0 %v225
    %v713 = vpop.f32.mrb[0].mxu0
    %v714 = vadd.f32 %v582, %v713
    %v715 = vpop.f32.mrb[0].mxu0
    %v716 = vpop.f32.mrb[0].mxu0
    %v717 = vadd.f32 %v582, %v716
    %v718 = vpop.f32.mrb[0].mxu0
    %719 = vmatprep.mubr.bf16.mxu0 %v228
    %720 = vmatmul.mubr.bf16.gmra.mrb[0].mxu0 %v227
    %v721 = vpop.f32.mrb[0].mxu0
    %v722 = vadd.f32 %v582, %v721
    %v723 = vpop.f32.mrb[0].mxu0
    %v724 = vpop.f32.mrb[0].mxu0
    %v725 = vadd.f32 %v582, %v724
    %v726 = vpop.f32.mrb[0].mxu0
    %727 = vmatprep.mubr.bf16.mxu0 %v230
    %728 = vmatmul.mubr.bf16.gmra.mrb[0].mxu0 %v229
    %v729 = vpop.f32.mrb[0].mxu0
    %v730 = vadd.f32 %v582, %v729
    %v731 = vpop.f32.mrb[0].mxu0
    %v732 = vpop.f32.mrb[0].mxu0
    %v733 = vadd.f32 %v582, %v732
    %v734 = vpop.f32.mrb[0].mxu0
    %735 = vmatprep.mubr.bf16.mxu0 %v232
    %736 = vmatmul.mubr.bf16.gmra.mrb[0].mxu0 %v231
    %v737 = vpop.f32.mrb[0].mxu0
    %v738 = vadd.f32 %v582, %v737
    %v739 = vpop.f32.mrb[0].mxu0
    %v740 = vpop.f32.mrb[0].mxu0
    %v741 = vadd.f32 %v582, %v740
    %v742 = vpop.f32.mrb[0].mxu0
    %743 = vmatprep.mubr.bf16.mxu0 %v234
    %744 = vmatmul.mubr.bf16.gmra.mrb[0].mxu0 %v233
    %v745 = vpop.f32.mrb[0].mxu0
    %v746 = vadd.f32 %v582, %v745
    %v747 = vpop.f32.mrb[0].mxu0
    %v748 = vpop.f32.mrb[0].mxu0
    %v749 = vadd.f32 %v582, %v748
    %v750 = vpop.f32.mrb[0].mxu0
    %751 = vmatprep.mubr.bf16.mxu0 %v236
    %752 = vmatmul.mubr.bf16.gmra.mrb[0].mxu0 %v235
    %v753 = vpop.f32.mrb[0].mxu0
    %v754 = vadd.f32 %v582, %v753
    %v755 = vpop.f32.mrb[0].mxu0
    %v756 = vpop.f32.mrb[0].mxu0
    %v757 = vadd.f32 %v582, %v756
    %v758 = vpop.f32.mrb[0].mxu0
    %759 = vmatprep.mubr.bf16.mxu0 %v238
    %760 = vmatmul.mubr.bf16.gmra.mrb[0].mxu0 %v237
    %v761 = vpop.f32.mrb[0].mxu0
    %v762 = vadd.f32 %v582, %v761
    %v763 = vpop.f32.mrb[0].mxu0
    %v764 = vpop.f32.mrb[0].mxu0
    %v765 = vadd.f32 %v582, %v764
    %v766 = vpop.f32.mrb[0].mxu0
    %767 = vmatprep.mubr.bf16.mxu0 %v240
    %768 = vmatmul.mubr.bf16.gmra.mrb[0].mxu0 %v239
    %v769 = vpop.f32.mrb[0].mxu0
    %v770 = vadd.f32 %v582, %v769
    %v771 = vpop.f32.mrb[0].mxu0
    %v772 = vpop.f32.mrb[0].mxu0
    %v773 = vadd.f32 %v582, %v772
    %v774 = vpop.f32.mrb[0].mxu0
    %775 = vmatprep.mubr.bf16.mxu0 %v242
    %776 = vmatmul.mubr.bf16.gmra.mrb[0].mxu0 %v241
    %v777 = vpop.f32.mrb[0].mxu0
    %v778 = vadd.f32 %v582, %v777
    %v779 = vpop.f32.mrb[0].mxu0
    %v780 = vpop.f32.mrb[0].mxu0
    %v781 = vadd.f32 %v582, %v780
    %v782 = vpop.f32.mrb[0].mxu0
    %783 = vmatprep.mubr.bf16.mxu0 %v244
    %784 = vmatmul.mubr.bf16.gmra.mrb[0].mxu0 %v243
    %v785 = vpop.f32.mrb[0].mxu0
    %v786 = vadd.f32 %v582, %v785
    %v787 = vpop.f32.mrb[0].mxu0
    %v788 = vpop.f32.mrb[0].mxu0
    %v789 = vadd.f32 %v582, %v788
    %v790 = vpop.f32.mrb[0].mxu0
    %791 = vmatprep.mubr.bf16.mxu0 %v246
    %792 = vmatmul.mubr.bf16.gmra.mrb[0].mxu0 %v245
    %v793 = vpop.f32.mrb[0].mxu0
    %v794 = vadd.f32 %v582, %v793
    %v795 = vpop.f32.mrb[0].mxu0
    %v796 = vpop.f32.mrb[0].mxu0
    %v797 = vadd.f32 %v582, %v796
    %v798 = vpop.f32.mrb[0].mxu0
    %799 = vmatprep.mubr.bf16.mxu0 %v248
    %800 = vmatmul.mubr.bf16.gmra.mrb[0].mxu0 %v247
    %v801 = vpop.f32.mrb[0].mxu0
    %v802 = vadd.f32 %v582, %v801
    %v803 = vpop.f32.mrb[0].mxu0
    %v804 = vpop.f32.mrb[0].mxu0
    %v805 = vadd.f32 %v582, %v804
    %v806 = vpop.f32.mrb[0].mxu0
    %807 = vmatprep.mubr.bf16.mxu0 %v250
    %808 = vmatmul.mubr.bf16.gmra.mrb[0].mxu0 %v249
    %v809 = vpop.f32.mrb[0].mxu0
    %v810 = vadd.f32 %v582, %v809
    %v811 = vpop.f32.mrb[0].mxu0
    %v812 = vpop.f32.mrb[0].mxu0
    %v813 = vadd.f32 %v582, %v812
    %v814 = vpop.f32.mrb[0].mxu0
    %815 = vmatprep.mubr.bf16.mxu0 %v252
    %816 = vmatmul.mubr.bf16.gmra.mrb[0].mxu0 %v251
    %v817 = vpop.f32.mrb[0].mxu0
    %v818 = vadd.f32 %v582, %v817
    %v819 = vpop.f32.mrb[0].mxu0
    %v820 = vpop.f32.mrb[0].mxu0
    %v821 = vadd.f32 %v582, %v820
    %v822 = vpop.f32.mrb[0].mxu0
    %823 = vmatprep.mubr.bf16.mxu0 %v254
    %824 = vmatmul.mubr.bf16.gmra.mrb[0].mxu0 %v253
    %v825 = vpop.f32.mrb[0].mxu0
    %v826 = vadd.f32 %v582, %v825
    %v827 = vpop.f32.mrb[0].mxu0
    %v828 = vpop.f32.mrb[0].mxu0
    %v829 = vadd.f32 %v582, %v828
    %v830 = vpop.f32.mrb[0].mxu0
    %831 = vmatprep.mubr.bf16.mxu0 %v256
    %832 = vmatmul.mubr.bf16.gmra.mrb[0].mxu0 %v255
    %v833 = vpop.f32.mrb[0].mxu0
    %v834 = vadd.f32 %v582, %v833
    %v835 = vpop.f32.mrb[0].mxu0
    %v836 = vpop.f32.mrb[0].mxu0
    %v837 = vadd.f32 %v582, %v836
    %v838 = vpop.f32.mrb[0].mxu0
    %839 = vdwg.mxu0
    %v840 = vadd.f32 %v420, %v423
    %v841 = vadd.f32 %v840, %v428
    %v842 = vadd.f32 %v841, %v431
    %v843 = vadd.f32 %v842, %v436
    %v844 = vadd.f32 %v843, %v439
    %v845 = vadd.f32 %v844, %v444
    %v846 = vadd.f32 %v845, %v447
    %v847 = vadd.f32 %v846, %v452
    %v848 = vadd.f32 %v847, %v455
    %v849 = vadd.f32 %v848, %v460
    %v850 = vadd.f32 %v849, %v463
    %v851 = vadd.f32 %v850, %v468
    %v852 = vadd.f32 %v851, %v471
    %v853 = vadd.f32 %v852, %v476
    %v854 = vadd.f32 %v853, %v479
    %v855 = vadd.f32 %v854, %v484
    %v856 = vadd.f32 %v855, %v487
    %v857 = vadd.f32 %v856, %v492
    %v858 = vadd.f32 %v857, %v495
    %v859 = vadd.f32 %v858, %v500
    %v860 = vadd.f32 %v859, %v503
    %v861 = vadd.f32 %v860, %v508
    %v862 = vadd.f32 %v861, %v511
    %v863 = vadd.f32 %v862, %v516
    %v864 = vadd.f32 %v863, %v519
    %v865 = vadd.f32 %v864, %v524
    %v866 = vadd.f32 %v865, %v527
    %v867 = vadd.f32 %v866, %v532
    %v868 = vadd.f32 %v867, %v535
    %v869 = vadd.f32 %v868, %v540
    %v870 = vadd.f32 %v869, %v543
    %v871 = vrot.slane %v870, 4
    %v872 = vadd.f32 %v870, %v871
    %v873 = vrot.slane %v872, 2
    %v874 = vadd.f32 %v872, %v873
    %v875 = vrot.slane %v874, 1
    %v876 = vadd.f32 %v874, %v875
    %v877 = vadd.f32 %v714, %v717
    %v878 = vadd.f32 %v877, %v722
    %v879 = vadd.f32 %v878, %v725
    %v880 = vadd.f32 %v879, %v730
    %v881 = vadd.f32 %v880, %v733
    %v882 = vadd.f32 %v881, %v738
    %v883 = vadd.f32 %v882, %v741
    %v884 = vadd.f32 %v883, %v746
    %v885 = vadd.f32 %v884, %v749
    %v886 = vadd.f32 %v885, %v754
    %v887 = vadd.f32 %v886, %v757
    %v888 = vadd.f32 %v887, %v762
    %v889 = vadd.f32 %v888, %v765
    %v890 = vadd.f32 %v889, %v770
    %v891 = vadd.f32 %v890, %v773
    %v892 = vadd.f32 %v891, %v778
    %v893 = vadd.f32 %v892, %v781
    %v894 = vadd.f32 %v893, %v786
    %v895 = vadd.f32 %v894, %v789
    %v896 = vadd.f32 %v895, %v794
    %v897 = vadd.f32 %v896, %v797
    %v898 = vadd.f32 %v897, %v802
    %v899 = vadd.f32 %v898, %v805
    %v900 = vadd.f32 %v899, %v810
    %v901 = vadd.f32 %v900, %v813
    %v902 = vadd.f32 %v901, %v818
    %v903 = vadd.f32 %v902, %v821
    %v904 = vadd.f32 %v903, %v826
    %v905 = vadd.f32 %v904, %v829
    %v906 = vadd.f32 %v905, %v834
    %v907 = vadd.f32 %v906, %v837
    %v908 = vrot.slane %v907, 4
    %v909 = vadd.f32 %v907, %v908
    %v910 = vrot.slane %v909, 2
    %v911 = vadd.f32 %v909, %v910
    %v912 = vrot.slane %v911, 1
    %v913 = vadd.f32 %v911, %v912
    %v914 = vrcp.pop 256.0
    %v915 = vmul.f32 %v876, %v914
    %v916 = vmul.f32 %v913, %v914
    %v917 = vsub.f32 %v420, %v915
    %v918 = vsub.f32 %v714, %v916
    %v919 = vsub.f32 %v423, %v915
    %v920 = vsub.f32 %v717, %v916
    %v921 = vsub.f32 %v428, %v915
    %v922 = vsub.f32 %v722, %v916
    %v923 = vsub.f32 %v431, %v915
    %v924 = vsub.f32 %v725, %v916
    %v925 = vsub.f32 %v436, %v915
    %v926 = vsub.f32 %v730, %v916
    %v927 = vsub.f32 %v439, %v915
    %v928 = vsub.f32 %v733, %v916
    %v929 = vsub.f32 %v444, %v915
    %v930 = vsub.f32 %v738, %v916
    %v931 = vsub.f32 %v447, %v915
    %v932 = vsub.f32 %v741, %v916
    %v933 = vsub.f32 %v452, %v915
    %v934 = vsub.f32 %v746, %v916
    %v935 = vsub.f32 %v455, %v915
    %v936 = vsub.f32 %v749, %v916
    %v937 = vsub.f32 %v460, %v915
    %v938 = vsub.f32 %v754, %v916
    %v939 = vsub.f32 %v463, %v915
    %v940 = vsub.f32 %v757, %v916
    %v941 = vsub.f32 %v468, %v915
    %v942 = vsub.f32 %v762, %v916
    %v943 = vsub.f32 %v471, %v915
    %v944 = vsub.f32 %v765, %v916
    %v945 = vsub.f32 %v476, %v915
    %v946 = vsub.f32 %v770, %v916
    %v947 = vsub.f32 %v479, %v915
    %v948 = vsub.f32 %v773, %v916
    %v949 = vsub.f32 %v484, %v915
    %v950 = vsub.f32 %v778, %v916
    %v951 = vsub.f32 %v487, %v915
    %v952 = vsub.f32 %v781, %v916
    %v953 = vsub.f32 %v492, %v915
    %v954 = vsub.f32 %v786, %v916
    %v955 = vsub.f32 %v495, %v915
    %v956 = vsub.f32 %v789, %v916
    %v957 = vsub.f32 %v500, %v915
    %v958 = vsub.f32 %v794, %v916
    %v959 = vsub.f32 %v503, %v915
    %v960 = vsub.f32 %v797, %v916
    %v961 = vsub.f32 %v508, %v915
    %v962 = vsub.f32 %v802, %v916
    %v963 = vsub.f32 %v511, %v915
    %v964 = vsub.f32 %v805, %v916
    %v965 = vsub.f32 %v516, %v915
    %v966 = vsub.f32 %v810, %v916
    %v967 = vsub.f32 %v519, %v915
    %v968 = vsub.f32 %v813, %v916
    %v969 = vsub.f32 %v524, %v915
    %v970 = vsub.f32 %v818, %v916
    %v971 = vsub.f32 %v527, %v915
    %v972 = vsub.f32 %v821, %v916
    %v973 = vsub.f32 %v532, %v915
    %v974 = vsub.f32 %v826, %v916
    %v975 = vsub.f32 %v535, %v915
    %v976 = vsub.f32 %v829, %v916
    %v977 = vsub.f32 %v540, %v915
    %v978 = vsub.f32 %v834, %v916
    %v979 = vsub.f32 %v543, %v915
    %v980 = vsub.f32 %v837, %v916
    %v981 = vmul.f32 %v917, %v917
    %v982 = vmul.f32 %v918, %v918
    %v983 = vmul.f32 %v919, %v919
    %v984 = vmul.f32 %v920, %v920
    %v985 = vmul.f32 %v921, %v921
    %v986 = vmul.f32 %v922, %v922
    %v987 = vmul.f32 %v923, %v923
    %v988 = vmul.f32 %v924, %v924
    %v989 = vmul.f32 %v925, %v925
    %v990 = vmul.f32 %v926, %v926
    %v991 = vmul.f32 %v927, %v927
    %v992 = vmul.f32 %v928, %v928
    %v993 = vmul.f32 %v929, %v929
    %v994 = vmul.f32 %v930, %v930
    %v995 = vmul.f32 %v931, %v931
    %v996 = vmul.f32 %v932, %v932
    %v997 = vmul.f32 %v933, %v933
    %v998 = vmul.f32 %v934, %v934
    %v999 = vmul.f32 %v935, %v935
    %v1000 = vmul.f32 %v936, %v936
    %v1001 = vmul.f32 %v937, %v937
    %v1002 = vmul.f32 %v938, %v938
    %v1003 = vmul.f32 %v939, %v939
    %v1004 = vmul.f32 %v940, %v940
    %v1005 = vmul.f32 %v941, %v941
    %v1006 = vmul.f32 %v942, %v942
    %v1007 = vmul.f32 %v943, %v943
    %v1008 = vmul.f32 %v944, %v944
    %v1009 = vmul.f32 %v945, %v945
    %v1010 = vmul.f32 %v946, %v946
    %v1011 = vmul.f32 %v947, %v947
    %v1012 = vmul.f32 %v948, %v948
    %v1013 = vmul.f32 %v949, %v949
    %v1014 = vmul.f32 %v950, %v950
    %v1015 = vmul.f32 %v951, %v951
    %v1016 = vmul.f32 %v952, %v952
    %v1017 = vmul.f32 %v953, %v953
    %v1018 = vmul.f32 %v954, %v954
    %v1019 = vmul.f32 %v955, %v955
    %v1020 = vmul.f32 %v956, %v956
    %v1021 = vmul.f32 %v957, %v957
    %v1022 = vmul.f32 %v958, %v958
    %v1023 = vmul.f32 %v959, %v959
    %v1024 = vmul.f32 %v960, %v960
    %v1025 = vmul.f32 %v961, %v961
    %v1026 = vmul.f32 %v962, %v962
    %v1027 = vmul.f32 %v963, %v963
    %v1028 = vmul.f32 %v964, %v964
    %v1029 = vmul.f32 %v965, %v965
    %v1030 = vmul.f32 %v966, %v966
    %v1031 = vmul.f32 %v967, %v967
    %v1032 = vmul.f32 %v968, %v968
    %v1033 = vmul.f32 %v969, %v969
    %v1034 = vmul.f32 %v970, %v970
    %v1035 = vmul.f32 %v971, %v971
    %v1036 = vmul.f32 %v972, %v972
    %v1037 = vmul.f32 %v973, %v973
    %v1038 = vmul.f32 %v974, %v974
    %v1039 = vmul.f32 %v975, %v975
    %v1040 = vmul.f32 %v976, %v976
    %v1041 = vmul.f32 %v977, %v977
    %v1042 = vmul.f32 %v978, %v978
    %v1043 = vmul.f32 %v979, %v979
    %v1044 = vmul.f32 %v980, %v980
    %v1045 = vadd.f32 %v981, %v983
    %v1046 = vadd.f32 %v1045, %v985
    %v1047 = vadd.f32 %v1046, %v987
    %v1048 = vadd.f32 %v1047, %v989
    %v1049 = vadd.f32 %v1048, %v991
    %v1050 = vadd.f32 %v1049, %v993
    %v1051 = vadd.f32 %v1050, %v995
    %v1052 = vadd.f32 %v1051, %v997
    %v1053 = vadd.f32 %v1052, %v999
    %v1054 = vadd.f32 %v1053, %v1001
    %v1055 = vadd.f32 %v1054, %v1003
    %v1056 = vadd.f32 %v1055, %v1005
    %v1057 = vadd.f32 %v1056, %v1007
    %v1058 = vadd.f32 %v1057, %v1009
    %v1059 = vadd.f32 %v1058, %v1011
    %v1060 = vadd.f32 %v1059, %v1013
    %v1061 = vadd.f32 %v1060, %v1015
    %v1062 = vadd.f32 %v1061, %v1017
    %v1063 = vadd.f32 %v1062, %v1019
    %v1064 = vadd.f32 %v1063, %v1021
    %v1065 = vadd.f32 %v1064, %v1023
    %v1066 = vadd.f32 %v1065, %v1025
    %v1067 = vadd.f32 %v1066, %v1027
    %v1068 = vadd.f32 %v1067, %v1029
    %v1069 = vadd.f32 %v1068, %v1031
    %v1070 = vadd.f32 %v1069, %v1033
    %v1071 = vadd.f32 %v1070, %v1035
    %v1072 = vadd.f32 %v1071, %v1037
    %v1073 = vadd.f32 %v1072, %v1039
    %v1074 = vadd.f32 %v1073, %v1041
    %v1075 = vadd.f32 %v1074, %v1043
    %v1076 = vrot.slane %v1075, 4
    %v1077 = vadd.f32 %v1075, %v1076
    %v1078 = vrot.slane %v1077, 2
    %v1079 = vadd.f32 %v1077, %v1078
    %v1080 = vrot.slane %v1079, 1
    %v1081 = vadd.f32 %v1079, %v1080
    %v1082 = vadd.f32 %v982, %v984
    %v1083 = vadd.f32 %v1082, %v986
    %v1084 = vadd.f32 %v1083, %v988
    %v1085 = vadd.f32 %v1084, %v990
    %v1086 = vadd.f32 %v1085, %v992
    %v1087 = vadd.f32 %v1086, %v994
    %v1088 = vadd.f32 %v1087, %v996
    %v1089 = vadd.f32 %v1088, %v998
    %v1090 = vadd.f32 %v1089, %v1000
    %v1091 = vadd.f32 %v1090, %v1002
    %v1092 = vadd.f32 %v1091, %v1004
    %v1093 = vadd.f32 %v1092, %v1006
    %v1094 = vadd.f32 %v1093, %v1008
    %v1095 = vadd.f32 %v1094, %v1010
    %v1096 = vadd.f32 %v1095, %v1012
    %v1097 = vadd.f32 %v1096, %v1014
    %v1098 = vadd.f32 %v1097, %v1016
    %v1099 = vadd.f32 %v1098, %v1018
    %v1100 = vadd.f32 %v1099, %v1020
    %v1101 = vadd.f32 %v1100, %v1022
    %v1102 = vadd.f32 %v1101, %v1024
    %v1103 = vadd.f32 %v1102, %v1026
    %v1104 = vadd.f32 %v1103, %v1028
    %v1105 = vadd.f32 %v1104, %v1030
    %v1106 = vadd.f32 %v1105, %v1032
    %v1107 = vadd.f32 %v1106, %v1034
    %v1108 = vadd.f32 %v1107, %v1036
    %v1109 = vadd.f32 %v1108, %v1038
    %v1110 = vadd.f32 %v1109, %v1040
    %v1111 = vadd.f32 %v1110, %v1042
    %v1112 = vadd.f32 %v1111, %v1044
    %v1113 = vrot.slane %v1112, 4
    %v1114 = vadd.f32 %v1112, %v1113
    %v1115 = vrot.slane %v1114, 2
    %v1116 = vadd.f32 %v1114, %v1115
    %v1117 = vrot.slane %v1116, 1
    %v1118 = vadd.f32 %v1116, %v1117
    %v1119 = vmul.f32 %v1081, %v914
    %v1120 = vmul.f32 %v1118, %v914
    %v1121 = vadd.f32 %v1119, 1e-05
    %v1122 = vadd.f32 %v1120, 1e-05
    %v1123 = vrsqrt.pop %v1121
    %v1124 = vrsqrt.pop %v1122
    %v1125 = vmul.f32 %v917, %v1123
    %v1126 = vmul.f32 %v918, %v1124
    %v1127 = vmul.f32 %v919, %v1123
    %v1128 = vmul.f32 %v920, %v1124
    %v1129 = vmul.f32 %v921, %v1123
    %v1130 = vmul.f32 %v922, %v1124
    %v1131 = vmul.f32 %v923, %v1123
    %v1132 = vmul.f32 %v924, %v1124
    %v1133 = vmul.f32 %v925, %v1123
    %v1134 = vmul.f32 %v926, %v1124
    %v1135 = vmul.f32 %v927, %v1123
    %v1136 = vmul.f32 %v928, %v1124
    %v1137 = vmul.f32 %v929, %v1123
    %v1138 = vmul.f32 %v930, %v1124
    %v1139 = vmul.f32 %v931, %v1123
    %v1140 = vmul.f32 %v932, %v1124
    %v1141 = vmul.f32 %v933, %v1123
    %v1142 = vmul.f32 %v934, %v1124
    %v1143 = vmul.f32 %v935, %v1123
    %v1144 = vmul.f32 %v936, %v1124
    %v1145 = vmul.f32 %v937, %v1123
    %v1146 = vmul.f32 %v938, %v1124
    %v1147 = vmul.f32 %v939, %v1123
    %v1148 = vmul.f32 %v940, %v1124
    %v1149 = vmul.f32 %v941, %v1123
    %v1150 = vmul.f32 %v942, %v1124
    %v1151 = vmul.f32 %v943, %v1123
    %v1152 = vmul.f32 %v944, %v1124
    %v1153 = vmul.f32 %v945, %v1123
    %v1154 = vmul.f32 %v946, %v1124
    %v1155 = vmul.f32 %v947, %v1123
    %v1156 = vmul.f32 %v948, %v1124
    %v1157 = vmul.f32 %v949, %v1123
    %v1158 = vmul.f32 %v950, %v1124
    %v1159 = vmul.f32 %v951, %v1123
    %v1160 = vmul.f32 %v952, %v1124
    %v1161 = vmul.f32 %v953, %v1123
    %v1162 = vmul.f32 %v954, %v1124
    %v1163 = vmul.f32 %v955, %v1123
    %v1164 = vmul.f32 %v956, %v1124
    %v1165 = vmul.f32 %v957, %v1123
    %v1166 = vmul.f32 %v958, %v1124
    %v1167 = vmul.f32 %v959, %v1123
    %v1168 = vmul.f32 %v960, %v1124
    %v1169 = vmul.f32 %v961, %v1123
    %v1170 = vmul.f32 %v962, %v1124
    %v1171 = vmul.f32 %v963, %v1123
    %v1172 = vmul.f32 %v964, %v1124
    %v1173 = vmul.f32 %v965, %v1123
    %v1174 = vmul.f32 %v966, %v1124
    %v1175 = vmul.f32 %v967, %v1123
    %v1176 = vmul.f32 %v968, %v1124
    %v1177 = vmul.f32 %v969, %v1123
    %v1178 = vmul.f32 %v970, %v1124
    %v1179 = vmul.f32 %v971, %v1123
    %v1180 = vmul.f32 %v972, %v1124
    %v1181 = vmul.f32 %v973, %v1123
    %v1182 = vmul.f32 %v974, %v1124
    %v1183 = vmul.f32 %v975, %v1123
    %v1184 = vmul.f32 %v976, %v1124
    %v1185 = vmul.f32 %v977, %v1123
    %v1186 = vmul.f32 %v978, %v1124
    %v1187 = vmul.f32 %v979, %v1123
    %v1188 = vmul.f32 %v980, %v1124
    %v1189 = vmax.f32 %v1125, 0.0
    %v1190 = vmax.f32 %v1126, 0.0
    %v1191 = vmax.f32 %v1127, 0.0
    %v1192 = vmax.f32 %v1128, 0.0
    %v1193 = vmax.f32 %v1129, 0.0
    %v1194 = vmax.f32 %v1130, 0.0
    %v1195 = vmax.f32 %v1131, 0.0
    %v1196 = vmax.f32 %v1132, 0.0
    %v1197 = vmax.f32 %v1133, 0.0
    %v1198 = vmax.f32 %v1134, 0.0
    %v1199 = vmax.f32 %v1135, 0.0
    %v1200 = vmax.f32 %v1136, 0.0
    %v1201 = vmax.f32 %v1137, 0.0
    %v1202 = vmax.f32 %v1138, 0.0
    %v1203 = vmax.f32 %v1139, 0.0
    %v1204 = vmax.f32 %v1140, 0.0
    %v1205 = vmax.f32 %v1141, 0.0
    %v1206 = vmax.f32 %v1142, 0.0
    %v1207 = vmax.f32 %v1143, 0.0
    %v1208 = vmax.f32 %v1144, 0.0
    %v1209 = vmax.f32 %v1145, 0.0
    %v1210 = vmax.f32 %v1146, 0.0
    %v1211 = vmax.f32 %v1147, 0.0
    %v1212 = vmax.f32 %v1148, 0.0
    %v1213 = vmax.f32 %v1149, 0.0
    %v1214 = vmax.f32 %v1150, 0.0
    %v1215 = vmax.f32 %v1151, 0.0
    %v1216 = vmax.f32 %v1152, 0.0
    %v1217 = vmax.f32 %v1153, 0.0
    %v1218 = vmax.f32 %v1154, 0.0
    %v1219 = vmax.f32 %v1155, 0.0
    %v1220 = vmax.f32 %v1156, 0.0
    %v1221 = vmax.f32 %v1157, 0.0
    %v1222 = vmax.f32 %v1158, 0.0
    %v1223 = vmax.f32 %v1159, 0.0
    %v1224 = vmax.f32 %v1160, 0.0
    %v1225 = vmax.f32 %v1161, 0.0
    %v1226 = vmax.f32 %v1162, 0.0
    %v1227 = vmax.f32 %v1163, 0.0
    %v1228 = vmax.f32 %v1164, 0.0
    %v1229 = vmax.f32 %v1165, 0.0
    %v1230 = vmax.f32 %v1166, 0.0
    %v1231 = vmax.f32 %v1167, 0.0
    %v1232 = vmax.f32 %v1168, 0.0
    %v1233 = vmax.f32 %v1169, 0.0
    %v1234 = vmax.f32 %v1170, 0.0
    %v1235 = vmax.f32 %v1171, 0.0
    %v1236 = vmax.f32 %v1172, 0.0
    %v1237 = vmax.f32 %v1173, 0.0
    %v1238 = vmax.f32 %v1174, 0.0
    %v1239 = vmax.f32 %v1175, 0.0
    %v1240 = vmax.f32 %v1176, 0.0
    %v1241 = vmax.f32 %v1177, 0.0
    %v1242 = vmax.f32 %v1178, 0.0
    %v1243 = vmax.f32 %v1179, 0.0
    %v1244 = vmax.f32 %v1180, 0.0
    %v1245 = vmax.f32 %v1181, 0.0
    %v1246 = vmax.f32 %v1182, 0.0
    %v1247 = vmax.f32 %v1183, 0.0
    %v1248 = vmax.f32 %v1184, 0.0
    %v1249 = vmax.f32 %v1185, 0.0
    %v1250 = vmax.f32 %v1186, 0.0
    %v1251 = vmax.f32 %v1187, 0.0
    %v1252 = vmax.f32 %v1188, 0.0
    %v1253 = vpack.c.bf16 %v1191, %v1189
    %v1254 = vpack.c.bf16 %v1192, %v1190
    %v1255 = vpack.c.bf16 %v1195, %v1193
    %v1256 = vpack.c.bf16 %v1196, %v1194
    %v1257 = vpack.c.bf16 %v1199, %v1197
    %v1258 = vpack.c.bf16 %v1200, %v1198
    %v1259 = vpack.c.bf16 %v1203, %v1201
    %v1260 = vpack.c.bf16 %v1204, %v1202
    %v1261 = vpack.c.bf16 %v1207, %v1205
    %v1262 = vpack.c.bf16 %v1208, %v1206
    %v1263 = vpack.c.bf16 %v1211, %v1209
    %v1264 = vpack.c.bf16 %v1212, %v1210
    %v1265 = vpack.c.bf16 %v1215, %v1213
    %v1266 = vpack.c.bf16 %v1216, %v1214
    %v1267 = vpack.c.bf16 %v1219, %v1217
    %v1268 = vpack.c.bf16 %v1220, %v1218
    %v1269 = vpack.c.bf16 %v1223, %v1221
    %v1270 = vpack.c.bf16 %v1224, %v1222
    %v1271 = vpack.c.bf16 %v1227, %v1225
    %v1272 = vpack.c.bf16 %v1228, %v1226
    %v1273 = vpack.c.bf16 %v1231, %v1229
    %v1274 = vpack.c.bf16 %v1232, %v1230
    %v1275 = vpack.c.bf16 %v1235, %v1233
    %v1276 = vpack.c.bf16 %v1236, %v1234
    %v1277 = vpack.c.bf16 %v1239, %v1237
    %v1278 = vpack.c.bf16 %v1240, %v1238
    %v1279 = vpack.c.bf16 %v1243, %v1241
    %v1280 = vpack.c.bf16 %v1244, %v1242
    %v1281 = vpack.c.bf16 %v1247, %v1245
    %v1282 = vpack.c.bf16 %v1248, %v1246
    %v1283 = vpack.c.bf16 %v1251, %v1249
    %v1284 = vpack.c.bf16 %v1252, %v1250
    %v1285 = vld [vmem:[#allocation5 + $0x100] sm:$0xf]
    %v1286 = vld [vmem:[#allocation5 + $0x104] sm:$0xf]
    %v1287 = vld [vmem:[#allocation5 + $0x108] sm:$0xf]
    %v1288 = vld [vmem:[#allocation5 + $0x10c] sm:$0xf]
    %v1289 = vld [vmem:[#allocation5 + $0x110] sm:$0xf]
    %v1290 = vld [vmem:[#allocation5 + $0x114] sm:$0xf]
    %v1291 = vld [vmem:[#allocation5 + $0x118] sm:$0xf]
    %v1292 = vld [vmem:[#allocation5 + $0x11c] sm:$0xf]
    %v1293 = vld [vmem:[#allocation5 + $0x120] sm:$0xf]
    %v1294 = vld [vmem:[#allocation5 + $0x124] sm:$0xf]
    %v1295 = vld [vmem:[#allocation5 + $0x128] sm:$0xf]
    %v1296 = vld [vmem:[#allocation5 + $0x12c] sm:$0xf]
    %v1297 = vld [vmem:[#allocation5 + $0x130] sm:$0xf]
    %v1298 = vld [vmem:[#allocation5 + $0x134] sm:$0xf]
    %v1299 = vld [vmem:[#allocation5 + $0x138] sm:$0xf]
    %v1300 = vld [vmem:[#allocation5 + $0x13c] sm:$0xf]
    %v1301 = vld [vmem:[#allocation5 + $0x140] sm:$0xf]
    %v1302 = vld [vmem:[#allocation5 + $0x144] sm:$0xf]
    %v1303 = vld [vmem:[#allocation5 + $0x148] sm:$0xf]
    %v1304 = vld [vmem:[#allocation5 + $0x14c] sm:$0xf]
    %v1305 = vld [vmem:[#allocation5 + $0x150] sm:$0xf]
    %v1306 = vld [vmem:[#allocation5 + $0x154] sm:$0xf]
    %v1307 = vld [vmem:[#allocation5 + $0x158] sm:$0xf]
    %v1308 = vld [vmem:[#allocation5 + $0x15c] sm:$0xf]
    %v1309 = vld [vmem:[#allocation5 + $0x160] sm:$0xf]
    %v1310 = vld [vmem:[#allocation5 + $0x164] sm:$0xf]
    %v1311 = vld [vmem:[#allocation5 + $0x168] sm:$0xf]
    %v1312 = vld [vmem:[#allocation5 + $0x16c] sm:$0xf]
    %v1313 = vld [vmem:[#allocation5 + $0x170] sm:$0xf]
    %v1314 = vld [vmem:[#allocation5 + $0x174] sm:$0xf]
    %v1315 = vld [vmem:[#allocation5 + $0x178] sm:$0xf]
    %v1316 = vld [vmem:[#allocation5 + $0x17c] sm:$0xf]
    %v1317 = vld [vmem:[#allocation7 + $0x2] sm:$0x1]
    %v1318 = vlaneseq
    %v1319 = vshrl.u32 %v1318, 7
    %v1320 = vsub.s32 0, %v1319
    %v1321 = vrot.slane %v1317, %v1320
    %v1354 = vunpack.c.l.b16 %v1285
    %v1355 = vunpack.c.l.b16 %v1286
    %v1356 = vunpack.c.l.b16 %v1287
    %v1357 = vunpack.c.l.b16 %v1288
    %v1358 = vunpack.c.l.b16 %v1289
    %v1359 = vunpack.c.l.b16 %v1290
    %v1360 = vunpack.c.l.b16 %v1291
    %v1361 = vunpack.c.l.b16 %v1292
    %v1362 = vunpack.c.l.b16 %v1293
    %v1363 = vunpack.c.l.b16 %v1294
    %v1364 = vunpack.c.l.b16 %v1295
    %v1365 = vunpack.c.l.b16 %v1296
    %v1366 = vunpack.c.l.b16 %v1297
    %v1367 = vunpack.c.l.b16 %v1298
    %v1368 = vunpack.c.l.b16 %v1299
    %v1369 = vunpack.c.l.b16 %v1300
    %v1370 = vunpack.c.l.b16 %v1301
    %v1371 = vunpack.c.l.b16 %v1302
    %v1372 = vunpack.c.l.b16 %v1303
    %v1373 = vunpack.c.l.b16 %v1304
    %v1374 = vunpack.c.l.b16 %v1305
    %v1375 = vunpack.c.l.b16 %v1306
    %v1376 = vunpack.c.l.b16 %v1307
    %v1377 = vunpack.c.l.b16 %v1308
    %v1378 = vunpack.c.l.b16 %v1309
    %v1379 = vunpack.c.l.b16 %v1310
    %v1380 = vunpack.c.l.b16 %v1311
    %v1381 = vunpack.c.l.b16 %v1312
    %v1382 = vunpack.c.l.b16 %v1313
    %v1383 = vunpack.c.l.b16 %v1314
    %v1384 = vunpack.c.l.b16 %v1315
    %v1385 = vunpack.c.l.b16 %v1316
    %v1386 = vpack.c.b16 %v1355, %v1354
    %v1387 = vpack.c.b16 %v1357, %v1356
    %v1388 = vpack.c.b16 %v1359, %v1358
    %v1389 = vpack.c.b16 %v1361, %v1360
    %v1390 = vpack.c.b16 %v1363, %v1362
    %v1391 = vpack.c.b16 %v1365, %v1364
    %v1392 = vpack.c.b16 %v1367, %v1366
    %v1393 = vpack.c.b16 %v1369, %v1368
    %v1394 = vpack.c.b16 %v1371, %v1370
    %v1395 = vpack.c.b16 %v1373, %v1372
    %v1396 = vpack.c.b16 %v1375, %v1374
    %v1397 = vpack.c.b16 %v1377, %v1376
    %v1398 = vpack.c.b16 %v1379, %v1378
    %v1399 = vpack.c.b16 %v1381, %v1380
    %v1400 = vpack.c.b16 %v1383, %v1382
    %v1401 = vpack.c.b16 %v1385, %v1384
    %1418 = vmatprep.subr.bf16.mxu0 0
    %1419 = vmatpush1.bf16.msra.mxu0 %v1386
    %1420 = vmatprep.subr.bf16.mxu0 0
    %1421 = vmatpush1.bf16.msra.mxu0 %v1387
    %1422 = vmatprep.subr.bf16.mxu0 0
    %1423 = vmatpush1.bf16.msra.mxu0 %v1388
    %1424 = vmatprep.subr.bf16.mxu0 0
    %1425 = vmatpush1.bf16.msra.mxu0 %v1389
    %1426 = vmatprep.subr.bf16.mxu0 0
    %1427 = vmatpush1.bf16.msra.mxu0 %v1390
    %1428 = vmatprep.subr.bf16.mxu0 0
    %1429 = vmatpush1.bf16.msra.mxu0 %v1391
    %1430 = vmatprep.subr.bf16.mxu0 0
    %1431 = vmatpush1.bf16.msra.mxu0 %v1392
    %1432 = vmatprep.subr.bf16.mxu0 0
    %1433 = vmatpush1.bf16.msra.mxu0 %v1393
    %1434 = vmatprep.subr.bf16.mxu0 0
    %1435 = vmatpush1.bf16.msra.mxu0 %v1394
    %1436 = vmatprep.subr.bf16.mxu0 0
    %1437 = vmatpush1.bf16.msra.mxu0 %v1395
    %1438 = vmatprep.subr.bf16.mxu0 0
    %1439 = vmatpush1.bf16.msra.mxu0 %v1396
    %1440 = vmatprep.subr.bf16.mxu0 0
    %1441 = vmatpush1.bf16.msra.mxu0 %v1397
    %1442 = vmatprep.subr.bf16.mxu0 0
    %1443 = vmatpush1.bf16.msra.mxu0 %v1398
    %1444 = vmatprep.subr.bf16.mxu0 0
    %1445 = vmatpush1.bf16.msra.mxu0 %v1399
    %1446 = vmatprep.subr.bf16.mxu0 0
    %1447 = vmatpush1.bf16.msra.mxu0 %v1400
    %1448 = vmatprep.subr.bf16.mxu0 0
    %1449 = vmatpush1.bf16.msra.mxu0 %v1401
    %1450 = vmatprep.mubr.bf16.mxu0 %v1254
    %1451 = vmatmul.mubr.bf16.gmra.mrb[0].mxu0 %v1253
    %v1452 = vpop.f32.mrb[0].mxu0
    %v1453 = vadd.f32 %v1321, %v1452
    %v1454 = vpop.f32.mrb[0].mxu0
    %v1455 = vpop.f32.mrb[0].mxu0
    %v1456 = vadd.f32 %v1321, %v1455
    %v1457 = vpop.f32.mrb[0].mxu0
    %1458 = vmatprep.mubr.bf16.mxu0 %v1256
    %1459 = vmatmul.mubr.bf16.gmra.mrb[0].mxu0 %v1255
    %v1460 = vpop.f32.mrb[0].mxu0
    %v1461 = vadd.f32 %v1321, %v1460
    %v1462 = vpop.f32.mrb[0].mxu0
    %v1463 = vpop.f32.mrb[0].mxu0
    %v1464 = vadd.f32 %v1321, %v1463
    %v1465 = vpop.f32.mrb[0].mxu0
    %1466 = vmatprep.mubr.bf16.mxu0 %v1258
    %1467 = vmatmul.mubr.bf16.gmra.mrb[0].mxu0 %v1257
    %v1468 = vpop.f32.mrb[0].mxu0
    %v1469 = vadd.f32 %v1321, %v1468
    %v1470 = vpop.f32.mrb[0].mxu0
    %v1471 = vpop.f32.mrb[0].mxu0
    %v1472 = vadd.f32 %v1321, %v1471
    %v1473 = vpop.f32.mrb[0].mxu0
    %1474 = vmatprep.mubr.bf16.mxu0 %v1260
    %1475 = vmatmul.mubr.bf16.gmra.mrb[0].mxu0 %v1259
    %v1476 = vpop.f32.mrb[0].mxu0
    %v1477 = vadd.f32 %v1321, %v1476
    %v1478 = vpop.f32.mrb[0].mxu0
    %v1479 = vpop.f32.mrb[0].mxu0
    %v1480 = vadd.f32 %v1321, %v1479
    %v1481 = vpop.f32.mrb[0].mxu0
    %1482 = vmatprep.mubr.bf16.mxu0 %v1262
    %1483 = vmatmul.mubr.bf16.gmra.mrb[0].mxu0 %v1261
    %v1484 = vpop.f32.mrb[0].mxu0
    %v1485 = vadd.f32 %v1321, %v1484
    %v1486 = vpop.f32.mrb[0].mxu0
    %v1487 = vpop.f32.mrb[0].mxu0
    %v1488 = vadd.f32 %v1321, %v1487
    %v1489 = vpop.f32.mrb[0].mxu0
    %1490 = vmatprep.mubr.bf16.mxu0 %v1264
    %1491 = vmatmul.mubr.bf16.gmra.mrb[0].mxu0 %v1263
    %v1492 = vpop.f32.mrb[0].mxu0
    %v1493 = vadd.f32 %v1321, %v1492
    %v1494 = vpop.f32.mrb[0].mxu0
    %v1495 = vpop.f32.mrb[0].mxu0
    %v1496 = vadd.f32 %v1321, %v1495
    %v1497 = vpop.f32.mrb[0].mxu0
    %1498 = vmatprep.mubr.bf16.mxu0 %v1266
    %1499 = vmatmul.mubr.bf16.gmra.mrb[0].mxu0 %v1265
    %v1500 = vpop.f32.mrb[0].mxu0
    %v1501 = vadd.f32 %v1321, %v1500
    %v1502 = vpop.f32.mrb[0].mxu0
    %v1503 = vpop.f32.mrb[0].mxu0
    %v1504 = vadd.f32 %v1321, %v1503
    %v1505 = vpop.f32.mrb[0].mxu0
    %1506 = vmatprep.mubr.bf16.mxu0 %v1268
    %1507 = vmatmul.mubr.bf16.gmra.mrb[0].mxu0 %v1267
    %v1508 = vpop.f32.mrb[0].mxu0
    %v1509 = vadd.f32 %v1321, %v1508
    %v1510 = vpop.f32.mrb[0].mxu0
    %v1511 = vpop.f32.mrb[0].mxu0
    %v1512 = vadd.f32 %v1321, %v1511
    %v1513 = vpop.f32.mrb[0].mxu0
    %1514 = vmatprep.mubr.bf16.mxu0 %v1270
    %1515 = vmatmul.mubr.bf16.gmra.mrb[0].mxu0 %v1269
    %v1516 = vpop.f32.mrb[0].mxu0
    %v1517 = vadd.f32 %v1321, %v1516
    %v1518 = vpop.f32.mrb[0].mxu0
    %v1519 = vpop.f32.mrb[0].mxu0
    %v1520 = vadd.f32 %v1321, %v1519
    %v1521 = vpop.f32.mrb[0].mxu0
    %1522 = vmatprep.mubr.bf16.mxu0 %v1272
    %1523 = vmatmul.mubr.bf16.gmra.mrb[0].mxu0 %v1271
    %v1524 = vpop.f32.mrb[0].mxu0
    %v1525 = vadd.f32 %v1321, %v1524
    %v1526 = vpop.f32.mrb[0].mxu0
    %v1527 = vpop.f32.mrb[0].mxu0
    %v1528 = vadd.f32 %v1321, %v1527
    %v1529 = vpop.f32.mrb[0].mxu0
    %1530 = vmatprep.mubr.bf16.mxu0 %v1274
    %1531 = vmatmul.mubr.bf16.gmra.mrb[0].mxu0 %v1273
    %v1532 = vpop.f32.mrb[0].mxu0
    %v1533 = vadd.f32 %v1321, %v1532
    %v1534 = vpop.f32.mrb[0].mxu0
    %v1535 = vpop.f32.mrb[0].mxu0
    %v1536 = vadd.f32 %v1321, %v1535
    %v1537 = vpop.f32.mrb[0].mxu0
    %1538 = vmatprep.mubr.bf16.mxu0 %v1276
    %1539 = vmatmul.mubr.bf16.gmra.mrb[0].mxu0 %v1275
    %v1540 = vpop.f32.mrb[0].mxu0
    %v1541 = vadd.f32 %v1321, %v1540
    %v1542 = vpop.f32.mrb[0].mxu0
    %v1543 = vpop.f32.mrb[0].mxu0
    %v1544 = vadd.f32 %v1321, %v1543
    %v1545 = vpop.f32.mrb[0].mxu0
    %1546 = vmatprep.mubr.bf16.mxu0 %v1278
    %1547 = vmatmul.mubr.bf16.gmra.mrb[0].mxu0 %v1277
    %v1548 = vpop.f32.mrb[0].mxu0
    %v1549 = vadd.f32 %v1321, %v1548
    %v1550 = vpop.f32.mrb[0].mxu0
    %v1551 = vpop.f32.mrb[0].mxu0
    %v1552 = vadd.f32 %v1321, %v1551
    %v1553 = vpop.f32.mrb[0].mxu0
    %1554 = vmatprep.mubr.bf16.mxu0 %v1280
    %1555 = vmatmul.mubr.bf16.gmra.mrb[0].mxu0 %v1279
    %v1556 = vpop.f32.mrb[0].mxu0
    %v1557 = vadd.f32 %v1321, %v1556
    %v1558 = vpop.f32.mrb[0].mxu0
    %v1559 = vpop.f32.mrb[0].mxu0
    %v1560 = vadd.f32 %v1321, %v1559
    %v1561 = vpop.f32.mrb[0].mxu0
    %1562 = vmatprep.mubr.bf16.mxu0 %v1282
    %1563 = vmatmul.mubr.bf16.gmra.mrb[0].mxu0 %v1281
    %v1564 = vpop.f32.mrb[0].mxu0
    %v1565 = vadd.f32 %v1321, %v1564
    %v1566 = vpop.f32.mrb[0].mxu0
    %v1567 = vpop.f32.mrb[0].mxu0
    %v1568 = vadd.f32 %v1321, %v1567
    %v1569 = vpop.f32.mrb[0].mxu0
    %1570 = vmatprep.mubr.bf16.mxu0 %v1284
    %1571 = vmatmul.mubr.bf16.gmra.mrb[0].mxu0 %v1283
    %v1572 = vpop.f32.mrb[0].mxu0
    %v1573 = vadd.f32 %v1321, %v1572
    %v1574 = vpop.f32.mrb[0].mxu0
    %v1575 = vpop.f32.mrb[0].mxu0
    %v1576 = vadd.f32 %v1321, %v1575
    %v1577 = vpop.f32.mrb[0].mxu0
    %1578 = vdwg.mxu0
    %vm1579 = vcmask 523264
    %v1580 = vsel %vm1579, %v1453, 0.0
    %v1581 = vsel %vm1579, %v1456, 0.0
    %v1582 = vadd.f32 %v1580, %v1581
    %v1583 = vsel %vm1579, %v1461, 0.0
    %v1584 = vadd.f32 %v1582, %v1583
    %v1585 = vsel %vm1579, %v1464, 0.0
    %v1586 = vadd.f32 %v1584, %v1585
    %v1587 = vsel %vm1579, %v1469, 0.0
    %v1588 = vadd.f32 %v1586, %v1587
    %v1589 = vsel %vm1579, %v1472, 0.0
    %v1590 = vadd.f32 %v1588, %v1589
    %v1591 = vsel %vm1579, %v1477, 0.0
    %v1592 = vadd.f32 %v1590, %v1591
    %v1593 = vsel %vm1579, %v1480, 0.0
    %v1594 = vadd.f32 %v1592, %v1593
    %v1595 = vsel %vm1579, %v1485, 0.0
    %v1596 = vadd.f32 %v1594, %v1595
    %v1597 = vsel %vm1579, %v1488, 0.0
    %v1598 = vadd.f32 %v1596, %v1597
    %v1599 = vsel %vm1579, %v1493, 0.0
    %v1600 = vadd.f32 %v1598, %v1599
    %v1601 = vsel %vm1579, %v1496, 0.0
    %v1602 = vadd.f32 %v1600, %v1601
    %v1603 = vsel %vm1579, %v1501, 0.0
    %v1604 = vadd.f32 %v1602, %v1603
    %v1605 = vsel %vm1579, %v1504, 0.0
    %v1606 = vadd.f32 %v1604, %v1605
    %v1607 = vsel %vm1579, %v1509, 0.0
    %v1608 = vadd.f32 %v1606, %v1607
    %v1609 = vsel %vm1579, %v1512, 0.0
    %v1610 = vadd.f32 %v1608, %v1609
    %v1611 = vsel %vm1579, %v1517, 0.0
    %v1612 = vadd.f32 %v1610, %v1611
    %v1613 = vsel %vm1579, %v1520, 0.0
    %v1614 = vadd.f32 %v1612, %v1613
    %v1615 = vsel %vm1579, %v1525, 0.0
    %v1616 = vadd.f32 %v1614, %v1615
    %v1617 = vsel %vm1579, %v1528, 0.0
    %v1618 = vadd.f32 %v1616, %v1617
    %v1619 = vsel %vm1579, %v1533, 0.0
    %v1620 = vadd.f32 %v1618, %v1619
    %v1621 = vsel %vm1579, %v1536, 0.0
    %v1622 = vadd.f32 %v1620, %v1621
    %v1623 = vsel %vm1579, %v1541, 0.0
    %v1624 = vadd.f32 %v1622, %v1623
    %v1625 = vsel %vm1579, %v1544, 0.0
    %v1626 = vadd.f32 %v1624, %v1625
    %v1627 = vsel %vm1579, %v1549, 0.0
    %v1628 = vadd.f32 %v1626, %v1627
    %v1629 = vsel %vm1579, %v1552, 0.0
    %v1630 = vadd.f32 %v1628, %v1629
    %v1631 = vsel %vm1579, %v1557, 0.0
    %v1632 = vadd.f32 %v1630, %v1631
    %v1633 = vsel %vm1579, %v1560, 0.0
    %v1634 = vadd.f32 %v1632, %v1633
    %v1635 = vsel %vm1579, %v1565, 0.0
    %v1636 = vadd.f32 %v1634, %v1635
    %v1637 = vsel %vm1579, %v1568, 0.0
    %v1638 = vadd.f32 %v1636, %v1637
    %v1639 = vsel %vm1579, %v1573, 0.0
    %v1640 = vadd.f32 %v1638, %v1639
    %v1641 = vsel %vm1579, %v1576, 0.0
    %v1642 = vadd.f32 %v1640, %v1641
    %v1643 = vrot.slane %v1642, 4
    %v1644 = vadd.f32 %v1642, %v1643
    %v1645 = vrot.slane %v1644, 2
    %v1646 = vadd.f32 %v1644, %v1645
    %v1647 = vrot.slane %v1646, 1
    %v1648 = vadd.f32 %v1646, %v1647
    %v1649 = vmul.f32 %v1648, %v914
    %v1650 = vsub.f32 %v1453, %v1649
    %v1651 = vsub.f32 %v1456, %v1649
    %v1652 = vsub.f32 %v1461, %v1649
    %v1653 = vsub.f32 %v1464, %v1649
    %v1654 = vsub.f32 %v1469, %v1649
    %v1655 = vsub.f32 %v1472, %v1649
    %v1656 = vsub.f32 %v1477, %v1649
    %v1657 = vsub.f32 %v1480, %v1649
    %v1658 = vsub.f32 %v1485, %v1649
    %v1659 = vsub.f32 %v1488, %v1649
    %v1660 = vsub.f32 %v1493, %v1649
    %v1661 = vsub.f32 %v1496, %v1649
    %v1662 = vsub.f32 %v1501, %v1649
    %v1663 = vsub.f32 %v1504, %v1649
    %v1664 = vsub.f32 %v1509, %v1649
    %v1665 = vsub.f32 %v1512, %v1649
    %v1666 = vsub.f32 %v1517, %v1649
    %v1667 = vsub.f32 %v1520, %v1649
    %v1668 = vsub.f32 %v1525, %v1649
    %v1669 = vsub.f32 %v1528, %v1649
    %v1670 = vsub.f32 %v1533, %v1649
    %v1671 = vsub.f32 %v1536, %v1649
    %v1672 = vsub.f32 %v1541, %v1649
    %v1673 = vsub.f32 %v1544, %v1649
    %v1674 = vsub.f32 %v1549, %v1649
    %v1675 = vsub.f32 %v1552, %v1649
    %v1676 = vsub.f32 %v1557, %v1649
    %v1677 = vsub.f32 %v1560, %v1649
    %v1678 = vsub.f32 %v1565, %v1649
    %v1679 = vsub.f32 %v1568, %v1649
    %v1680 = vsub.f32 %v1573, %v1649
    %v1681 = vsub.f32 %v1576, %v1649
    %v1682 = vmul.f32 %v1650, %v1650
    %v1683 = vmul.f32 %v1651, %v1651
    %v1684 = vmul.f32 %v1652, %v1652
    %v1685 = vmul.f32 %v1653, %v1653
    %v1686 = vmul.f32 %v1654, %v1654
    %v1687 = vmul.f32 %v1655, %v1655
    %v1688 = vmul.f32 %v1656, %v1656
    %v1689 = vmul.f32 %v1657, %v1657
    %v1690 = vmul.f32 %v1658, %v1658
    %v1691 = vmul.f32 %v1659, %v1659
    %v1692 = vmul.f32 %v1660, %v1660
    %v1693 = vmul.f32 %v1661, %v1661
    %v1694 = vmul.f32 %v1662, %v1662
    %v1695 = vmul.f32 %v1663, %v1663
    %v1696 = vmul.f32 %v1664, %v1664
    %v1697 = vmul.f32 %v1665, %v1665
    %v1698 = vmul.f32 %v1666, %v1666
    %v1699 = vmul.f32 %v1667, %v1667
    %v1700 = vmul.f32 %v1668, %v1668
    %v1701 = vmul.f32 %v1669, %v1669
    %v1702 = vmul.f32 %v1670, %v1670
    %v1703 = vmul.f32 %v1671, %v1671
    %v1704 = vmul.f32 %v1672, %v1672
    %v1705 = vmul.f32 %v1673, %v1673
    %v1706 = vmul.f32 %v1674, %v1674
    %v1707 = vmul.f32 %v1675, %v1675
    %v1708 = vmul.f32 %v1676, %v1676
    %v1709 = vmul.f32 %v1677, %v1677
    %v1710 = vmul.f32 %v1678, %v1678
    %v1711 = vmul.f32 %v1679, %v1679
    %v1712 = vmul.f32 %v1680, %v1680
    %v1713 = vmul.f32 %v1681, %v1681
    %v1714 = vsel %vm1579, %v1682, 0.0
    %v1715 = vsel %vm1579, %v1683, 0.0
    %v1716 = vadd.f32 %v1714, %v1715
    %v1717 = vsel %vm1579, %v1684, 0.0
    %v1718 = vadd.f32 %v1716, %v1717
    %v1719 = vsel %vm1579, %v1685, 0.0
    %v1720 = vadd.f32 %v1718, %v1719
    %v1721 = vsel %vm1579, %v1686, 0.0
    %v1722 = vadd.f32 %v1720, %v1721
    %v1723 = vsel %vm1579, %v1687, 0.0
    %v1724 = vadd.f32 %v1722, %v1723
    %v1725 = vsel %vm1579, %v1688, 0.0
    %v1726 = vadd.f32 %v1724, %v1725
    %v1727 = vsel %vm1579, %v1689, 0.0
    %v1728 = vadd.f32 %v1726, %v1727
    %v1729 = vsel %vm1579, %v1690, 0.0
    %v1730 = vadd.f32 %v1728, %v1729
    %v1731 = vsel %vm1579, %v1691, 0.0
    %v1732 = vadd.f32 %v1730, %v1731
    %v1733 = vsel %vm1579, %v1692, 0.0
    %v1734 = vadd.f32 %v1732, %v1733
    %v1735 = vsel %vm1579, %v1693, 0.0
    %v1736 = vadd.f32 %v1734, %v1735
    %v1737 = vsel %vm1579, %v1694, 0.0
    %v1738 = vadd.f32 %v1736, %v1737
    %v1739 = vsel %vm1579, %v1695, 0.0
    %v1740 = vadd.f32 %v1738, %v1739
    %v1741 = vsel %vm1579, %v1696, 0.0
    %v1742 = vadd.f32 %v1740, %v1741
    %v1743 = vsel %vm1579, %v1697, 0.0
    %v1744 = vadd.f32 %v1742, %v1743
    %v1745 = vsel %vm1579, %v1698, 0.0
    %v1746 = vadd.f32 %v1744, %v1745
    %v1747 = vsel %vm1579, %v1699, 0.0
    %v1748 = vadd.f32 %v1746, %v1747
    %v1749 = vsel %vm1579, %v1700, 0.0
    %v1750 = vadd.f32 %v1748, %v1749
    %v1751 = vsel %vm1579, %v1701, 0.0
    %v1752 = vadd.f32 %v1750, %v1751
    %v1753 = vsel %vm1579, %v1702, 0.0
    %v1754 = vadd.f32 %v1752, %v1753
    %v1755 = vsel %vm1579, %v1703, 0.0
    %v1756 = vadd.f32 %v1754, %v1755
    %v1757 = vsel %vm1579, %v1704, 0.0
    %v1758 = vadd.f32 %v1756, %v1757
    %v1759 = vsel %vm1579, %v1705, 0.0
    %v1760 = vadd.f32 %v1758, %v1759
    %v1761 = vsel %vm1579, %v1706, 0.0
    %v1762 = vadd.f32 %v1760, %v1761
    %v1763 = vsel %vm1579, %v1707, 0.0
    %v1764 = vadd.f32 %v1762, %v1763
    %v1765 = vsel %vm1579, %v1708, 0.0
    %v1766 = vadd.f32 %v1764, %v1765
    %v1767 = vsel %vm1579, %v1709, 0.0
    %v1768 = vadd.f32 %v1766, %v1767
    %v1769 = vsel %vm1579, %v1710, 0.0
    %v1770 = vadd.f32 %v1768, %v1769
    %v1771 = vsel %vm1579, %v1711, 0.0
    %v1772 = vadd.f32 %v1770, %v1771
    %v1773 = vsel %vm1579, %v1712, 0.0
    %v1774 = vadd.f32 %v1772, %v1773
    %v1775 = vsel %vm1579, %v1713, 0.0
    %v1776 = vadd.f32 %v1774, %v1775
    %v1777 = vrot.slane %v1776, 4
    %v1778 = vadd.f32 %v1776, %v1777
    %v1779 = vrot.slane %v1778, 2
    %v1780 = vadd.f32 %v1778, %v1779
    %v1781 = vrot.slane %v1780, 1
    %v1782 = vadd.f32 %v1780, %v1781
    %v1783 = vmul.f32 %v1782, %v914
    %v1784 = vadd.f32 %v1783, 1e-05
    %v1785 = vrsqrt.pop %v1784
    %v1786 = vmul.f32 %v1650, %v1785
    %v1787 = vmul.f32 %v1651, %v1785
    %v1788 = vmul.f32 %v1652, %v1785
    %v1789 = vmul.f32 %v1653, %v1785
    %v1790 = vmul.f32 %v1654, %v1785
    %v1791 = vmul.f32 %v1655, %v1785
    %v1792 = vmul.f32 %v1656, %v1785
    %v1793 = vmul.f32 %v1657, %v1785
    %v1794 = vmul.f32 %v1658, %v1785
    %v1795 = vmul.f32 %v1659, %v1785
    %v1796 = vmul.f32 %v1660, %v1785
    %v1797 = vmul.f32 %v1661, %v1785
    %v1798 = vmul.f32 %v1662, %v1785
    %v1799 = vmul.f32 %v1663, %v1785
    %v1800 = vmul.f32 %v1664, %v1785
    %v1801 = vmul.f32 %v1665, %v1785
    %v1802 = vmul.f32 %v1666, %v1785
    %v1803 = vmul.f32 %v1667, %v1785
    %v1804 = vmul.f32 %v1668, %v1785
    %v1805 = vmul.f32 %v1669, %v1785
    %v1806 = vmul.f32 %v1670, %v1785
    %v1807 = vmul.f32 %v1671, %v1785
    %v1808 = vmul.f32 %v1672, %v1785
    %v1809 = vmul.f32 %v1673, %v1785
    %v1810 = vmul.f32 %v1674, %v1785
    %v1811 = vmul.f32 %v1675, %v1785
    %v1812 = vmul.f32 %v1676, %v1785
    %v1813 = vmul.f32 %v1677, %v1785
    %v1814 = vmul.f32 %v1678, %v1785
    %v1815 = vmul.f32 %v1679, %v1785
    %v1816 = vmul.f32 %v1680, %v1785
    %v1817 = vmul.f32 %v1681, %v1785
    %v1818 = vmax.f32 %v1786, 0.0
    %v1819 = vmax.f32 %v1787, 0.0
    %v1820 = vmax.f32 %v1788, 0.0
    %v1821 = vmax.f32 %v1789, 0.0
    %v1822 = vmax.f32 %v1790, 0.0
    %v1823 = vmax.f32 %v1791, 0.0
    %v1824 = vmax.f32 %v1792, 0.0
    %v1825 = vmax.f32 %v1793, 0.0
    %v1826 = vmax.f32 %v1794, 0.0
    %v1827 = vmax.f32 %v1795, 0.0
    %v1828 = vmax.f32 %v1796, 0.0
    %v1829 = vmax.f32 %v1797, 0.0
    %v1830 = vmax.f32 %v1798, 0.0
    %v1831 = vmax.f32 %v1799, 0.0
    %v1832 = vmax.f32 %v1800, 0.0
    %v1833 = vmax.f32 %v1801, 0.0
    %v1834 = vmax.f32 %v1802, 0.0
    %v1835 = vmax.f32 %v1803, 0.0
    %v1836 = vmax.f32 %v1804, 0.0
    %v1837 = vmax.f32 %v1805, 0.0
    %v1838 = vmax.f32 %v1806, 0.0
    %v1839 = vmax.f32 %v1807, 0.0
    %v1840 = vmax.f32 %v1808, 0.0
    %v1841 = vmax.f32 %v1809, 0.0
    %v1842 = vmax.f32 %v1810, 0.0
    %v1843 = vmax.f32 %v1811, 0.0
    %v1844 = vmax.f32 %v1812, 0.0
    %v1845 = vmax.f32 %v1813, 0.0
    %v1846 = vmax.f32 %v1814, 0.0
    %v1847 = vmax.f32 %v1815, 0.0
    %v1848 = vmax.f32 %v1816, 0.0
    %v1849 = vmax.f32 %v1817, 0.0
    %v1850 = vpack.c.bf16 %v1819, %v1818
    %v1851 = vpack.c.bf16 %v1821, %v1820
    %v1852 = vpack.c.bf16 %v1823, %v1822
    %v1853 = vpack.c.bf16 %v1825, %v1824
    %v1854 = vpack.c.bf16 %v1827, %v1826
    %v1855 = vpack.c.bf16 %v1829, %v1828
    %v1856 = vpack.c.bf16 %v1831, %v1830
    %v1857 = vpack.c.bf16 %v1833, %v1832
    %v1858 = vpack.c.bf16 %v1835, %v1834
    %v1859 = vpack.c.bf16 %v1837, %v1836
    %v1860 = vpack.c.bf16 %v1839, %v1838
    %v1861 = vpack.c.bf16 %v1841, %v1840
    %v1862 = vpack.c.bf16 %v1843, %v1842
    %v1863 = vpack.c.bf16 %v1845, %v1844
    %v1864 = vpack.c.bf16 %v1847, %v1846
    %v1865 = vpack.c.bf16 %v1849, %v1848
    %v1866 = vld [vmem:[#allocation5 + $0x180] sm:$0xf]
    %v1867 = vld [vmem:[#allocation5 + $0x184] sm:$0xf]
    %v1868 = vld [vmem:[#allocation5 + $0x188] sm:$0xf]
    %v1869 = vld [vmem:[#allocation5 + $0x18c] sm:$0xf]
    %v1870 = vld [vmem:[#allocation5 + $0x190] sm:$0xf]
    %v1871 = vld [vmem:[#allocation5 + $0x194] sm:$0xf]
    %v1872 = vld [vmem:[#allocation5 + $0x198] sm:$0xf]
    %v1873 = vld [vmem:[#allocation5 + $0x19c] sm:$0xf]
    %v1874 = vld [vmem:[#allocation7 + $0x3] sm:$0x1]
    %v1875 = vlaneseq
    %v1876 = vshrl.u32 %v1875, 7
    %v1877 = vsub.s32 0, %v1876
    %v1878 = vrot.slane %v1874, %v1877
    %v1887 = vunpack.c.l.b16 %v1866
    %v1888 = vunpack.c.l.b16 %v1867
    %v1889 = vunpack.c.l.b16 %v1868
    %v1890 = vunpack.c.l.b16 %v1869
    %v1891 = vunpack.c.l.b16 %v1870
    %v1892 = vunpack.c.l.b16 %v1871
    %v1893 = vunpack.c.l.b16 %v1872
    %v1894 = vunpack.c.l.b16 %v1873
    %v1895 = vpack.c.b16 %v1888, %v1887
    %v1896 = vpack.c.b16 %v1890, %v1889
    %v1897 = vpack.c.b16 %v1892, %v1891
    %v1898 = vpack.c.b16 %v1894, %v1893
    %v1904 = vsel %vm1579, %v1850, 0
    %v1907 = vsel %vm1579, %v1851, 0
    %v1910 = vsel %vm1579, %v1852, 0
    %v1913 = vsel %vm1579, %v1853, 0
    %v1916 = vsel %vm1579, %v1854, 0
    %v1919 = vsel %vm1579, %v1855, 0
    %v1922 = vsel %vm1579, %v1856, 0
    %v1925 = vsel %vm1579, %v1857, 0
    %v1928 = vsel %vm1579, %v1858, 0
    %v1931 = vsel %vm1579, %v1859, 0
    %v1934 = vsel %vm1579, %v1860, 0
    %v1937 = vsel %vm1579, %v1861, 0
    %v1940 = vsel %vm1579, %v1862, 0
    %v1943 = vsel %vm1579, %v1863, 0
    %v1946 = vsel %vm1579, %v1864, 0
    %v1949 = vsel %vm1579, %v1865, 0
    %1951 = vmatprep.subr.bf16.mxu0 0
    %1952 = vmatpush1.bf16.msra.mxu0 %v1895
    %1953 = vmatprep.subr.bf16.mxu0 0
    %1954 = vmatpush1.bf16.msra.mxu0 %v1896
    %1955 = vmatprep.subr.bf16.mxu0 0
    %1956 = vmatpush1.bf16.msra.mxu0 %v1897
    %1957 = vmatprep.subr.bf16.mxu0 0
    %1958 = vmatpush1.bf16.msra.mxu0 %v1898
    %1959 = vmatprep.subr.bf16.mxu0 0
    %1960 = vmatpush1.bf16.msra.mxu0 0
    %1961 = vmatprep.subr.bf16.mxu0 0
    %1962 = vmatpush1.bf16.msra.mxu0 0
    %1963 = vmatprep.subr.bf16.mxu0 0
    %1964 = vmatpush1.bf16.msra.mxu0 0
    %1965 = vmatprep.subr.bf16.mxu0 0
    %1966 = vmatpush1.bf16.msra.mxu0 0
    %1967 = vmatprep.subr.bf16.mxu0 0
    %1968 = vmatpush1.bf16.msra.mxu0 0
    %1969 = vmatprep.subr.bf16.mxu0 0
    %1970 = vmatpush1.bf16.msra.mxu0 0
    %1971 = vmatprep.subr.bf16.mxu0 0
    %1972 = vmatpush1.bf16.msra.mxu0 0
    %1973 = vmatprep.subr.bf16.mxu0 0
    %1974 = vmatpush1.bf16.msra.mxu0 0
    %1975 = vmatprep.subr.bf16.mxu0 0
    %1976 = vmatpush1.bf16.msra.mxu0 0
    %1977 = vmatprep.subr.bf16.mxu0 0
    %1978 = vmatpush1.bf16.msra.mxu0 0
    %1979 = vmatprep.subr.bf16.mxu0 0
    %1980 = vmatpush1.bf16.msra.mxu0 0
    %1981 = vmatprep.subr.bf16.mxu0 0
    %1982 = vmatpush1.bf16.msra.mxu0 0
    %1983 = vmatprep.mubr.bf16.mxu0 0
    %1984 = vmatmul.mubr.bf16.gmra.mrb[0].mxu0 %v1904
    %v1985 = vpop.f32.mrb[0].mxu0
    %v1986 = vadd.f32 %v1878, %v1985
    %v1987 = vpop.f32.mrb[0].mxu0
    %v1988 = vpop.f32.mrb[0].mxu0
    %v1989 = vadd.f32 %v1878, %v1988
    %v1990 = vpop.f32.mrb[0].mxu0
    %1991 = vmatprep.mubr.bf16.mxu0 0
    %1992 = vmatmul.mubr.bf16.gmra.mrb[0].mxu0 %v1907
    %v1993 = vpop.f32.mrb[0].mxu0
    %v1994 = vadd.f32 %v1878, %v1993
    %v1995 = vpop.f32.mrb[0].mxu0
    %v1996 = vpop.f32.mrb[0].mxu0
    %v1997 = vadd.f32 %v1878, %v1996
    %v1998 = vpop.f32.mrb[0].mxu0
    %1999 = vmatprep.mubr.bf16.mxu0 0
    %2000 = vmatmul.mubr.bf16.gmra.mrb[0].mxu0 %v1910
    %v2001 = vpop.f32.mrb[0].mxu0
    %v2002 = vadd.f32 %v1878, %v2001
    %v2003 = vpop.f32.mrb[0].mxu0
    %v2004 = vpop.f32.mrb[0].mxu0
    %v2005 = vadd.f32 %v1878, %v2004
    %v2006 = vpop.f32.mrb[0].mxu0
    %2007 = vmatprep.mubr.bf16.mxu0 0
    %2008 = vmatmul.mubr.bf16.gmra.mrb[0].mxu0 %v1913
    %v2009 = vpop.f32.mrb[0].mxu0
    %v2010 = vadd.f32 %v1878, %v2009
    %v2011 = vpop.f32.mrb[0].mxu0
    %v2012 = vpop.f32.mrb[0].mxu0
    %v2013 = vadd.f32 %v1878, %v2012
    %v2014 = vpop.f32.mrb[0].mxu0
    %2015 = vmatprep.mubr.bf16.mxu0 0
    %2016 = vmatmul.mubr.bf16.gmra.mrb[0].mxu0 %v1916
    %v2017 = vpop.f32.mrb[0].mxu0
    %v2018 = vadd.f32 %v1878, %v2017
    %v2019 = vpop.f32.mrb[0].mxu0
    %v2020 = vpop.f32.mrb[0].mxu0
    %v2021 = vadd.f32 %v1878, %v2020
    %v2022 = vpop.f32.mrb[0].mxu0
    %2023 = vmatprep.mubr.bf16.mxu0 0
    %2024 = vmatmul.mubr.bf16.gmra.mrb[0].mxu0 %v1919
    %v2025 = vpop.f32.mrb[0].mxu0
    %v2026 = vadd.f32 %v1878, %v2025
    %v2027 = vpop.f32.mrb[0].mxu0
    %v2028 = vpop.f32.mrb[0].mxu0
    %v2029 = vadd.f32 %v1878, %v2028
    %v2030 = vpop.f32.mrb[0].mxu0
    %2031 = vmatprep.mubr.bf16.mxu0 0
    %2032 = vmatmul.mubr.bf16.gmra.mrb[0].mxu0 %v1922
    %v2033 = vpop.f32.mrb[0].mxu0
    %v2034 = vadd.f32 %v1878, %v2033
    %v2035 = vpop.f32.mrb[0].mxu0
    %v2036 = vpop.f32.mrb[0].mxu0
    %v2037 = vadd.f32 %v1878, %v2036
    %v2038 = vpop.f32.mrb[0].mxu0
    %2039 = vmatprep.mubr.bf16.mxu0 0
    %2040 = vmatmul.mubr.bf16.gmra.mrb[0].mxu0 %v1925
    %v2041 = vpop.f32.mrb[0].mxu0
    %v2042 = vadd.f32 %v1878, %v2041
    %v2043 = vpop.f32.mrb[0].mxu0
    %v2044 = vpop.f32.mrb[0].mxu0
    %v2045 = vadd.f32 %v1878, %v2044
    %v2046 = vpop.f32.mrb[0].mxu0
    %2047 = vmatprep.mubr.bf16.mxu0 0
    %2048 = vmatmul.mubr.bf16.gmra.mrb[0].mxu0 %v1928
    %v2049 = vpop.f32.mrb[0].mxu0
    %v2050 = vadd.f32 %v1878, %v2049
    %v2051 = vpop.f32.mrb[0].mxu0
    %v2052 = vpop.f32.mrb[0].mxu0
    %v2053 = vadd.f32 %v1878, %v2052
    %v2054 = vpop.f32.mrb[0].mxu0
    %2055 = vmatprep.mubr.bf16.mxu0 0
    %2056 = vmatmul.mubr.bf16.gmra.mrb[0].mxu0 %v1931
    %v2057 = vpop.f32.mrb[0].mxu0
    %v2058 = vadd.f32 %v1878, %v2057
    %v2059 = vpop.f32.mrb[0].mxu0
    %v2060 = vpop.f32.mrb[0].mxu0
    %v2061 = vadd.f32 %v1878, %v2060
    %v2062 = vpop.f32.mrb[0].mxu0
    %2063 = vmatprep.mubr.bf16.mxu0 0
    %2064 = vmatmul.mubr.bf16.gmra.mrb[0].mxu0 %v1934
    %v2065 = vpop.f32.mrb[0].mxu0
    %v2066 = vadd.f32 %v1878, %v2065
    %v2067 = vpop.f32.mrb[0].mxu0
    %v2068 = vpop.f32.mrb[0].mxu0
    %v2069 = vadd.f32 %v1878, %v2068
    %v2070 = vpop.f32.mrb[0].mxu0
    %2071 = vmatprep.mubr.bf16.mxu0 0
    %2072 = vmatmul.mubr.bf16.gmra.mrb[0].mxu0 %v1937
    %v2073 = vpop.f32.mrb[0].mxu0
    %v2074 = vadd.f32 %v1878, %v2073
    %v2075 = vpop.f32.mrb[0].mxu0
    %v2076 = vpop.f32.mrb[0].mxu0
    %v2077 = vadd.f32 %v1878, %v2076
    %v2078 = vpop.f32.mrb[0].mxu0
    %2079 = vmatprep.mubr.bf16.mxu0 0
    %2080 = vmatmul.mubr.bf16.gmra.mrb[0].mxu0 %v1940
    %v2081 = vpop.f32.mrb[0].mxu0
    %v2082 = vadd.f32 %v1878, %v2081
    %v2083 = vpop.f32.mrb[0].mxu0
    %v2084 = vpop.f32.mrb[0].mxu0
    %v2085 = vadd.f32 %v1878, %v2084
    %v2086 = vpop.f32.mrb[0].mxu0
    %2087 = vmatprep.mubr.bf16.mxu0 0
    %2088 = vmatmul.mubr.bf16.gmra.mrb[0].mxu0 %v1943
    %v2089 = vpop.f32.mrb[0].mxu0
    %v2090 = vadd.f32 %v1878, %v2089
    %v2091 = vpop.f32.mrb[0].mxu0
    %v2092 = vpop.f32.mrb[0].mxu0
    %v2093 = vadd.f32 %v1878, %v2092
    %v2094 = vpop.f32.mrb[0].mxu0
    %2095 = vmatprep.mubr.bf16.mxu0 0
    %2096 = vmatmul.mubr.bf16.gmra.mrb[0].mxu0 %v1946
    %v2097 = vpop.f32.mrb[0].mxu0
    %v2098 = vadd.f32 %v1878, %v2097
    %v2099 = vpop.f32.mrb[0].mxu0
    %v2100 = vpop.f32.mrb[0].mxu0
    %v2101 = vadd.f32 %v1878, %v2100
    %v2102 = vpop.f32.mrb[0].mxu0
    %2103 = vmatprep.mubr.bf16.mxu0 0
    %2104 = vmatmul.mubr.bf16.gmra.mrb[0].mxu0 %v1949
    %v2105 = vpop.f32.mrb[0].mxu0
    %v2106 = vadd.f32 %v1878, %v2105
    %v2107 = vpop.f32.mrb[0].mxu0
    %v2108 = vpop.f32.mrb[0].mxu0
    %v2109 = vadd.f32 %v1878, %v2108
    %v2110 = vpop.f32.mrb[0].mxu0
    %2111 = vdwg.mxu0
    %vm2112 = vcmask 130048
    %v2113 = vsel %vm2112, %v1986, 0.0
    %v2114 = vsel %vm2112, %v1989, 0.0
    %v2115 = vadd.f32 %v2113, %v2114
    %v2116 = vsel %vm2112, %v1994, 0.0
    %v2117 = vadd.f32 %v2115, %v2116
    %v2118 = vsel %vm2112, %v1997, 0.0
    %v2119 = vadd.f32 %v2117, %v2118
    %v2120 = vsel %vm2112, %v2002, 0.0
    %v2121 = vadd.f32 %v2119, %v2120
    %v2122 = vsel %vm2112, %v2005, 0.0
    %v2123 = vadd.f32 %v2121, %v2122
    %v2124 = vsel %vm2112, %v2010, 0.0
    %v2125 = vadd.f32 %v2123, %v2124
    %v2126 = vsel %vm2112, %v2013, 0.0
    %v2127 = vadd.f32 %v2125, %v2126
    %v2128 = vsel %vm2112, %v2018, 0.0
    %v2129 = vadd.f32 %v2127, %v2128
    %v2130 = vsel %vm2112, %v2021, 0.0
    %v2131 = vadd.f32 %v2129, %v2130
    %v2132 = vsel %vm2112, %v2026, 0.0
    %v2133 = vadd.f32 %v2131, %v2132
    %v2134 = vsel %vm2112, %v2029, 0.0
    %v2135 = vadd.f32 %v2133, %v2134
    %v2136 = vsel %vm2112, %v2034, 0.0
    %v2137 = vadd.f32 %v2135, %v2136
    %v2138 = vsel %vm2112, %v2037, 0.0
    %v2139 = vadd.f32 %v2137, %v2138
    %v2140 = vsel %vm2112, %v2042, 0.0
    %v2141 = vadd.f32 %v2139, %v2140
    %v2142 = vsel %vm2112, %v2045, 0.0
    %v2143 = vadd.f32 %v2141, %v2142
    %v2144 = vsel %vm2112, %v2050, 0.0
    %v2145 = vadd.f32 %v2143, %v2144
    %v2146 = vsel %vm2112, %v2053, 0.0
    %v2147 = vadd.f32 %v2145, %v2146
    %v2148 = vsel %vm2112, %v2058, 0.0
    %v2149 = vadd.f32 %v2147, %v2148
    %v2150 = vsel %vm2112, %v2061, 0.0
    %v2151 = vadd.f32 %v2149, %v2150
    %v2152 = vsel %vm2112, %v2066, 0.0
    %v2153 = vadd.f32 %v2151, %v2152
    %v2154 = vsel %vm2112, %v2069, 0.0
    %v2155 = vadd.f32 %v2153, %v2154
    %v2156 = vsel %vm2112, %v2074, 0.0
    %v2157 = vadd.f32 %v2155, %v2156
    %v2158 = vsel %vm2112, %v2077, 0.0
    %v2159 = vadd.f32 %v2157, %v2158
    %v2160 = vsel %vm2112, %v2082, 0.0
    %v2161 = vadd.f32 %v2159, %v2160
    %v2162 = vsel %vm2112, %v2085, 0.0
    %v2163 = vadd.f32 %v2161, %v2162
    %v2164 = vsel %vm2112, %v2090, 0.0
    %v2165 = vadd.f32 %v2163, %v2164
    %v2166 = vsel %vm2112, %v2093, 0.0
    %v2167 = vadd.f32 %v2165, %v2166
    %v2168 = vsel %vm2112, %v2098, 0.0
    %v2169 = vadd.f32 %v2167, %v2168
    %v2170 = vsel %vm2112, %v2101, 0.0
    %v2171 = vadd.f32 %v2169, %v2170
    %v2172 = vsel %vm2112, %v2106, 0.0
    %v2173 = vadd.f32 %v2171, %v2172
    %v2174 = vsel %vm2112, %v2109, 0.0
    %v2175 = vadd.f32 %v2173, %v2174
    %v2176 = vrot.slane %v2175, 4
    %v2177 = vadd.f32 %v2175, %v2176
    %v2178 = vrot.slane %v2177, 2
    %v2179 = vadd.f32 %v2177, %v2178
    %v2180 = vrot.slane %v2179, 1
    %v2181 = vadd.f32 %v2179, %v2180
    %v2182 = vmul.f32 %v2181, %v914
    %v2183 = vsub.f32 %v1986, %v2182
    %v2184 = vsub.f32 %v1989, %v2182
    %v2185 = vsub.f32 %v1994, %v2182
    %v2186 = vsub.f32 %v1997, %v2182
    %v2187 = vsub.f32 %v2002, %v2182
    %v2188 = vsub.f32 %v2005, %v2182
    %v2189 = vsub.f32 %v2010, %v2182
    %v2190 = vsub.f32 %v2013, %v2182
    %v2191 = vsub.f32 %v2018, %v2182
    %v2192 = vsub.f32 %v2021, %v2182
    %v2193 = vsub.f32 %v2026, %v2182
    %v2194 = vsub.f32 %v2029, %v2182
    %v2195 = vsub.f32 %v2034, %v2182
    %v2196 = vsub.f32 %v2037, %v2182
    %v2197 = vsub.f32 %v2042, %v2182
    %v2198 = vsub.f32 %v2045, %v2182
    %v2199 = vsub.f32 %v2050, %v2182
    %v2200 = vsub.f32 %v2053, %v2182
    %v2201 = vsub.f32 %v2058, %v2182
    %v2202 = vsub.f32 %v2061, %v2182
    %v2203 = vsub.f32 %v2066, %v2182
    %v2204 = vsub.f32 %v2069, %v2182
    %v2205 = vsub.f32 %v2074, %v2182
    %v2206 = vsub.f32 %v2077, %v2182
    %v2207 = vsub.f32 %v2082, %v2182
    %v2208 = vsub.f32 %v2085, %v2182
    %v2209 = vsub.f32 %v2090, %v2182
    %v2210 = vsub.f32 %v2093, %v2182
    %v2211 = vsub.f32 %v2098, %v2182
    %v2212 = vsub.f32 %v2101, %v2182
    %v2213 = vsub.f32 %v2106, %v2182
    %v2214 = vsub.f32 %v2109, %v2182
    %v2215 = vmul.f32 %v2183, %v2183
    %v2216 = vmul.f32 %v2184, %v2184
    %v2217 = vmul.f32 %v2185, %v2185
    %v2218 = vmul.f32 %v2186, %v2186
    %v2219 = vmul.f32 %v2187, %v2187
    %v2220 = vmul.f32 %v2188, %v2188
    %v2221 = vmul.f32 %v2189, %v2189
    %v2222 = vmul.f32 %v2190, %v2190
    %v2223 = vmul.f32 %v2191, %v2191
    %v2224 = vmul.f32 %v2192, %v2192
    %v2225 = vmul.f32 %v2193, %v2193
    %v2226 = vmul.f32 %v2194, %v2194
    %v2227 = vmul.f32 %v2195, %v2195
    %v2228 = vmul.f32 %v2196, %v2196
    %v2229 = vmul.f32 %v2197, %v2197
    %v2230 = vmul.f32 %v2198, %v2198
    %v2231 = vmul.f32 %v2199, %v2199
    %v2232 = vmul.f32 %v2200, %v2200
    %v2233 = vmul.f32 %v2201, %v2201
    %v2234 = vmul.f32 %v2202, %v2202
    %v2235 = vmul.f32 %v2203, %v2203
    %v2236 = vmul.f32 %v2204, %v2204
    %v2237 = vmul.f32 %v2205, %v2205
    %v2238 = vmul.f32 %v2206, %v2206
    %v2239 = vmul.f32 %v2207, %v2207
    %v2240 = vmul.f32 %v2208, %v2208
    %v2241 = vmul.f32 %v2209, %v2209
    %v2242 = vmul.f32 %v2210, %v2210
    %v2243 = vmul.f32 %v2211, %v2211
    %v2244 = vmul.f32 %v2212, %v2212
    %v2245 = vmul.f32 %v2213, %v2213
    %v2246 = vmul.f32 %v2214, %v2214
    %v2247 = vsel %vm2112, %v2215, 0.0
    %v2248 = vsel %vm2112, %v2216, 0.0
    %v2249 = vadd.f32 %v2247, %v2248
    %v2250 = vsel %vm2112, %v2217, 0.0
    %v2251 = vadd.f32 %v2249, %v2250
    %v2252 = vsel %vm2112, %v2218, 0.0
    %v2253 = vadd.f32 %v2251, %v2252
    %v2254 = vsel %vm2112, %v2219, 0.0
    %v2255 = vadd.f32 %v2253, %v2254
    %v2256 = vsel %vm2112, %v2220, 0.0
    %v2257 = vadd.f32 %v2255, %v2256
    %v2258 = vsel %vm2112, %v2221, 0.0
    %v2259 = vadd.f32 %v2257, %v2258
    %v2260 = vsel %vm2112, %v2222, 0.0
    %v2261 = vadd.f32 %v2259, %v2260
    %v2262 = vsel %vm2112, %v2223, 0.0
    %v2263 = vadd.f32 %v2261, %v2262
    %v2264 = vsel %vm2112, %v2224, 0.0
    %v2265 = vadd.f32 %v2263, %v2264
    %v2266 = vsel %vm2112, %v2225, 0.0
    %v2267 = vadd.f32 %v2265, %v2266
    %v2268 = vsel %vm2112, %v2226, 0.0
    %v2269 = vadd.f32 %v2267, %v2268
    %v2270 = vsel %vm2112, %v2227, 0.0
    %v2271 = vadd.f32 %v2269, %v2270
    %v2272 = vsel %vm2112, %v2228, 0.0
    %v2273 = vadd.f32 %v2271, %v2272
    %v2274 = vsel %vm2112, %v2229, 0.0
    %v2275 = vadd.f32 %v2273, %v2274
    %v2276 = vsel %vm2112, %v2230, 0.0
    %v2277 = vadd.f32 %v2275, %v2276
    %v2278 = vsel %vm2112, %v2231, 0.0
    %v2279 = vadd.f32 %v2277, %v2278
    %v2280 = vsel %vm2112, %v2232, 0.0
    %v2281 = vadd.f32 %v2279, %v2280
    %v2282 = vsel %vm2112, %v2233, 0.0
    %v2283 = vadd.f32 %v2281, %v2282
    %v2284 = vsel %vm2112, %v2234, 0.0
    %v2285 = vadd.f32 %v2283, %v2284
    %v2286 = vsel %vm2112, %v2235, 0.0
    %v2287 = vadd.f32 %v2285, %v2286
    %v2288 = vsel %vm2112, %v2236, 0.0
    %v2289 = vadd.f32 %v2287, %v2288
    %v2290 = vsel %vm2112, %v2237, 0.0
    %v2291 = vadd.f32 %v2289, %v2290
    %v2292 = vsel %vm2112, %v2238, 0.0
    %v2293 = vadd.f32 %v2291, %v2292
    %v2294 = vsel %vm2112, %v2239, 0.0
    %v2295 = vadd.f32 %v2293, %v2294
    %v2296 = vsel %vm2112, %v2240, 0.0
    %v2297 = vadd.f32 %v2295, %v2296
    %v2298 = vsel %vm2112, %v2241, 0.0
    %v2299 = vadd.f32 %v2297, %v2298
    %v2300 = vsel %vm2112, %v2242, 0.0
    %v2301 = vadd.f32 %v2299, %v2300
    %v2302 = vsel %vm2112, %v2243, 0.0
    %v2303 = vadd.f32 %v2301, %v2302
    %v2304 = vsel %vm2112, %v2244, 0.0
    %v2305 = vadd.f32 %v2303, %v2304
    %v2306 = vsel %vm2112, %v2245, 0.0
    %v2307 = vadd.f32 %v2305, %v2306
    %v2308 = vsel %vm2112, %v2246, 0.0
    %v2309 = vadd.f32 %v2307, %v2308
    %v2310 = vrot.slane %v2309, 4
    %v2311 = vadd.f32 %v2309, %v2310
    %v2312 = vrot.slane %v2311, 2
    %v2313 = vadd.f32 %v2311, %v2312
    %v2314 = vrot.slane %v2313, 1
    %v2315 = vadd.f32 %v2313, %v2314
    %v2316 = vmul.f32 %v2315, %v914
    %v2317 = vadd.f32 %v2316, 1e-05
    %v2318 = vrsqrt.pop %v2317
    %v2319 = vmul.f32 %v2183, %v2318
    %v2320 = vmul.f32 %v2184, %v2318
    %v2321 = vmul.f32 %v2185, %v2318
    %v2322 = vmul.f32 %v2186, %v2318
    %v2323 = vmul.f32 %v2187, %v2318
    %v2324 = vmul.f32 %v2188, %v2318
    %v2325 = vmul.f32 %v2189, %v2318
    %v2326 = vmul.f32 %v2190, %v2318
    %v2327 = vmul.f32 %v2191, %v2318
    %v2328 = vmul.f32 %v2192, %v2318
    %v2329 = vmul.f32 %v2193, %v2318
    %v2330 = vmul.f32 %v2194, %v2318
    %v2331 = vmul.f32 %v2195, %v2318
    %v2332 = vmul.f32 %v2196, %v2318
    %v2333 = vmul.f32 %v2197, %v2318
    %v2334 = vmul.f32 %v2198, %v2318
    %v2335 = vmul.f32 %v2199, %v2318
    %v2336 = vmul.f32 %v2200, %v2318
    %v2337 = vmul.f32 %v2201, %v2318
    %v2338 = vmul.f32 %v2202, %v2318
    %v2339 = vmul.f32 %v2203, %v2318
    %v2340 = vmul.f32 %v2204, %v2318
    %v2341 = vmul.f32 %v2205, %v2318
    %v2342 = vmul.f32 %v2206, %v2318
    %v2343 = vmul.f32 %v2207, %v2318
    %v2344 = vmul.f32 %v2208, %v2318
    %v2345 = vmul.f32 %v2209, %v2318
    %v2346 = vmul.f32 %v2210, %v2318
    %v2347 = vmul.f32 %v2211, %v2318
    %v2348 = vmul.f32 %v2212, %v2318
    %v2349 = vmul.f32 %v2213, %v2318
    %v2350 = vmul.f32 %v2214, %v2318
    %v2351 = vmax.f32 %v2319, 0.0
    %v2352 = vmax.f32 %v2320, 0.0
    %v2353 = vmax.f32 %v2321, 0.0
    %v2354 = vmax.f32 %v2322, 0.0
    %v2355 = vmax.f32 %v2323, 0.0
    %v2356 = vmax.f32 %v2324, 0.0
    %v2357 = vmax.f32 %v2325, 0.0
    %v2358 = vmax.f32 %v2326, 0.0
    %v2359 = vmax.f32 %v2327, 0.0
    %v2360 = vmax.f32 %v2328, 0.0
    %v2361 = vmax.f32 %v2329, 0.0
    %v2362 = vmax.f32 %v2330, 0.0
    %v2363 = vmax.f32 %v2331, 0.0
    %v2364 = vmax.f32 %v2332, 0.0
    %v2365 = vmax.f32 %v2333, 0.0
    %v2366 = vmax.f32 %v2334, 0.0
    %v2367 = vmax.f32 %v2335, 0.0
    %v2368 = vmax.f32 %v2336, 0.0
    %v2369 = vmax.f32 %v2337, 0.0
    %v2370 = vmax.f32 %v2338, 0.0
    %v2371 = vmax.f32 %v2339, 0.0
    %v2372 = vmax.f32 %v2340, 0.0
    %v2373 = vmax.f32 %v2341, 0.0
    %v2374 = vmax.f32 %v2342, 0.0
    %v2375 = vmax.f32 %v2343, 0.0
    %v2376 = vmax.f32 %v2344, 0.0
    %v2377 = vmax.f32 %v2345, 0.0
    %v2378 = vmax.f32 %v2346, 0.0
    %v2379 = vmax.f32 %v2347, 0.0
    %v2380 = vmax.f32 %v2348, 0.0
    %v2381 = vmax.f32 %v2349, 0.0
    %v2382 = vmax.f32 %v2350, 0.0
    %v2383 = vpack.c.bf16 %v2352, %v2351
    %v2384 = vpack.c.bf16 %v2354, %v2353
    %v2385 = vpack.c.bf16 %v2356, %v2355
    %v2386 = vpack.c.bf16 %v2358, %v2357
    %v2387 = vpack.c.bf16 %v2360, %v2359
    %v2388 = vpack.c.bf16 %v2362, %v2361
    %v2389 = vpack.c.bf16 %v2364, %v2363
    %v2390 = vpack.c.bf16 %v2366, %v2365
    %v2391 = vpack.c.bf16 %v2368, %v2367
    %v2392 = vpack.c.bf16 %v2370, %v2369
    %v2393 = vpack.c.bf16 %v2372, %v2371
    %v2394 = vpack.c.bf16 %v2374, %v2373
    %v2395 = vpack.c.bf16 %v2376, %v2375
    %v2396 = vpack.c.bf16 %v2378, %v2377
    %v2397 = vpack.c.bf16 %v2380, %v2379
    %v2398 = vpack.c.bf16 %v2382, %v2381
    %v2399 = vld [vmem:[#allocation5 + $0x1a0] sm:$0xf]
    %v2400 = vld [vmem:[#allocation5 + $0x1a4] sm:$0xf]
    %v2401 = vld [vmem:[#allocation7 + $0x4] sm:$0x1]
    %v2402 = vlaneseq
    %v2403 = vshrl.u32 %v2402, 7
    %v2404 = vsub.s32 0, %v2403
    %v2405 = vrot.slane %v2401, %v2404
    %v2408 = vunpack.c.l.b16 %v2399
    %v2409 = vunpack.c.l.b16 %v2400
    %v2410 = vpack.c.b16 %v2409, %v2408
    %v2413 = vsel %vm2112, %v2383, 0
    %v2416 = vsel %vm2112, %v2384, 0
    %v2419 = vsel %vm2112, %v2385, 0
    %v2422 = vsel %vm2112, %v2386, 0
    %v2425 = vsel %vm2112, %v2387, 0
    %v2428 = vsel %vm2112, %v2388, 0
    %v2431 = vsel %vm2112, %v2389, 0
    %v2434 = vsel %vm2112, %v2390, 0
    %v2437 = vsel %vm2112, %v2391, 0
    %v2440 = vsel %vm2112, %v2392, 0
    %v2443 = vsel %vm2112, %v2393, 0
    %v2446 = vsel %vm2112, %v2394, 0
    %v2449 = vsel %vm2112, %v2395, 0
    %v2452 = vsel %vm2112, %v2396, 0
    %v2455 = vsel %vm2112, %v2397, 0
    %v2458 = vsel %vm2112, %v2398, 0
    %2460 = vmatprep.subr.bf16.mxu0 0
    %2461 = vmatpush1.bf16.msra.mxu0 %v2410
    %2462 = vmatprep.subr.bf16.mxu0 0
    %2463 = vmatpush1.bf16.msra.mxu0 0
    %2464 = vmatprep.subr.bf16.mxu0 0
    %2465 = vmatpush1.bf16.msra.mxu0 0
    %2466 = vmatprep.subr.bf16.mxu0 0
    %2467 = vmatpush1.bf16.msra.mxu0 0
    %2468 = vmatprep.subr.bf16.mxu0 0
    %2469 = vmatpush1.bf16.msra.mxu0 0
    %2470 = vmatprep.subr.bf16.mxu0 0
    %2471 = vmatpush1.bf16.msra.mxu0 0
    %2472 = vmatprep.subr.bf16.mxu0 0
    %2473 = vmatpush1.bf16.msra.mxu0 0
    %2474 = vmatprep.subr.bf16.mxu0 0
    %2475 = vmatpush1.bf16.msra.mxu0 0
    %2476 = vmatprep.subr.bf16.mxu0 0
    %2477 = vmatpush1.bf16.msra.mxu0 0
    %2478 = vmatprep.subr.bf16.mxu0 0
    %2479 = vmatpush1.bf16.msra.mxu0 0
    %2480 = vmatprep.subr.bf16.mxu0 0
    %2481 = vmatpush1.bf16.msra.mxu0 0
    %2482 = vmatprep.subr.bf16.mxu0 0
    %2483 = vmatpush1.bf16.msra.mxu0 0
    %2484 = vmatprep.subr.bf16.mxu0 0
    %2485 = vmatpush1.bf16.msra.mxu0 0
    %2486 = vmatprep.subr.bf16.mxu0 0
    %2487 = vmatpush1.bf16.msra.mxu0 0
    %2488 = vmatprep.subr.bf16.mxu0 0
    %2489 = vmatpush1.bf16.msra.mxu0 0
    %2490 = vmatprep.subr.bf16.mxu0 0
    %2491 = vmatpush1.bf16.msra.mxu0 0
    %2492 = vmatprep.mubr.bf16.mxu0 0
    %2493 = vmatmul.mubr.bf16.gmra.mrb[0].mxu0 %v2413
    %v2494 = vpop.f32.mrb[0].mxu0
    %v2495 = vadd.f32 %v2405, %v2494
    %v2496 = vpop.f32.mrb[0].mxu0
    %v2497 = vpop.f32.mrb[0].mxu0
    %v2498 = vadd.f32 %v2405, %v2497
    %v2499 = vpop.f32.mrb[0].mxu0
    %2500 = vmatprep.mubr.bf16.mxu0 0
    %2501 = vmatmul.mubr.bf16.gmra.mrb[0].mxu0 %v2416
    %v2502 = vpop.f32.mrb[0].mxu0
    %v2503 = vadd.f32 %v2405, %v2502
    %v2504 = vpop.f32.mrb[0].mxu0
    %v2505 = vpop.f32.mrb[0].mxu0
    %v2506 = vadd.f32 %v2405, %v2505
    %v2507 = vpop.f32.mrb[0].mxu0
    %2508 = vmatprep.mubr.bf16.mxu0 0
    %2509 = vmatmul.mubr.bf16.gmra.mrb[0].mxu0 %v2419
    %v2510 = vpop.f32.mrb[0].mxu0
    %v2511 = vadd.f32 %v2405, %v2510
    %v2512 = vpop.f32.mrb[0].mxu0
    %v2513 = vpop.f32.mrb[0].mxu0
    %v2514 = vadd.f32 %v2405, %v2513
    %v2515 = vpop.f32.mrb[0].mxu0
    %2516 = vmatprep.mubr.bf16.mxu0 0
    %2517 = vmatmul.mubr.bf16.gmra.mrb[0].mxu0 %v2422
    %v2518 = vpop.f32.mrb[0].mxu0
    %v2519 = vadd.f32 %v2405, %v2518
    %v2520 = vpop.f32.mrb[0].mxu0
    %v2521 = vpop.f32.mrb[0].mxu0
    %v2522 = vadd.f32 %v2405, %v2521
    %v2523 = vpop.f32.mrb[0].mxu0
    %2524 = vmatprep.mubr.bf16.mxu0 0
    %2525 = vmatmul.mubr.bf16.gmra.mrb[0].mxu0 %v2425
    %v2526 = vpop.f32.mrb[0].mxu0
    %v2527 = vadd.f32 %v2405, %v2526
    %v2528 = vpop.f32.mrb[0].mxu0
    %v2529 = vpop.f32.mrb[0].mxu0
    %v2530 = vadd.f32 %v2405, %v2529
    %v2531 = vpop.f32.mrb[0].mxu0
    %2532 = vmatprep.mubr.bf16.mxu0 0
    %2533 = vmatmul.mubr.bf16.gmra.mrb[0].mxu0 %v2428
    %v2534 = vpop.f32.mrb[0].mxu0
    %v2535 = vadd.f32 %v2405, %v2534
    %v2536 = vpop.f32.mrb[0].mxu0
    %v2537 = vpop.f32.mrb[0].mxu0
    %v2538 = vadd.f32 %v2405, %v2537
    %v2539 = vpop.f32.mrb[0].mxu0
    %2540 = vmatprep.mubr.bf16.mxu0 0
    %2541 = vmatmul.mubr.bf16.gmra.mrb[0].mxu0 %v2431
    %v2542 = vpop.f32.mrb[0].mxu0
    %v2543 = vadd.f32 %v2405, %v2542
    %v2544 = vpop.f32.mrb[0].mxu0
    %v2545 = vpop.f32.mrb[0].mxu0
    %v2546 = vadd.f32 %v2405, %v2545
    %v2547 = vpop.f32.mrb[0].mxu0
    %2548 = vmatprep.mubr.bf16.mxu0 0
    %2549 = vmatmul.mubr.bf16.gmra.mrb[0].mxu0 %v2434
    %v2550 = vpop.f32.mrb[0].mxu0
    %v2551 = vadd.f32 %v2405, %v2550
    %v2552 = vpop.f32.mrb[0].mxu0
    %v2553 = vpop.f32.mrb[0].mxu0
    %v2554 = vadd.f32 %v2405, %v2553
    %v2555 = vpop.f32.mrb[0].mxu0
    %2556 = vmatprep.mubr.bf16.mxu0 0
    %2557 = vmatmul.mubr.bf16.gmra.mrb[0].mxu0 %v2437
    %v2558 = vpop.f32.mrb[0].mxu0
    %v2559 = vadd.f32 %v2405, %v2558
    %v2560 = vpop.f32.mrb[0].mxu0
    %v2561 = vpop.f32.mrb[0].mxu0
    %v2562 = vadd.f32 %v2405, %v2561
    %v2563 = vpop.f32.mrb[0].mxu0
    %2564 = vmatprep.mubr.bf16.mxu0 0
    %2565 = vmatmul.mubr.bf16.gmra.mrb[0].mxu0 %v2440
    %v2566 = vpop.f32.mrb[0].mxu0
    %v2567 = vadd.f32 %v2405, %v2566
    %v2568 = vpop.f32.mrb[0].mxu0
    %v2569 = vpop.f32.mrb[0].mxu0
    %v2570 = vadd.f32 %v2405, %v2569
    %v2571 = vpop.f32.mrb[0].mxu0
    %2572 = vmatprep.mubr.bf16.mxu0 0
    %2573 = vmatmul.mubr.bf16.gmra.mrb[0].mxu0 %v2443
    %v2574 = vpop.f32.mrb[0].mxu0
    %v2575 = vadd.f32 %v2405, %v2574
    %v2576 = vpop.f32.mrb[0].mxu0
    %v2577 = vpop.f32.mrb[0].mxu0
    %v2578 = vadd.f32 %v2405, %v2577
    %v2579 = vpop.f32.mrb[0].mxu0
    %2580 = vmatprep.mubr.bf16.mxu0 0
    %2581 = vmatmul.mubr.bf16.gmra.mrb[0].mxu0 %v2446
    %v2582 = vpop.f32.mrb[0].mxu0
    %v2583 = vadd.f32 %v2405, %v2582
    %v2584 = vpop.f32.mrb[0].mxu0
    %v2585 = vpop.f32.mrb[0].mxu0
    %v2586 = vadd.f32 %v2405, %v2585
    %v2587 = vpop.f32.mrb[0].mxu0
    %2588 = vmatprep.mubr.bf16.mxu0 0
    %2589 = vmatmul.mubr.bf16.gmra.mrb[0].mxu0 %v2449
    %v2590 = vpop.f32.mrb[0].mxu0
    %v2591 = vadd.f32 %v2405, %v2590
    %v2592 = vpop.f32.mrb[0].mxu0
    %v2593 = vpop.f32.mrb[0].mxu0
    %v2594 = vadd.f32 %v2405, %v2593
    %v2595 = vpop.f32.mrb[0].mxu0
    %2596 = vmatprep.mubr.bf16.mxu0 0
    %2597 = vmatmul.mubr.bf16.gmra.mrb[0].mxu0 %v2452
    %v2598 = vpop.f32.mrb[0].mxu0
    %v2599 = vadd.f32 %v2405, %v2598
    %v2600 = vpop.f32.mrb[0].mxu0
    %v2601 = vpop.f32.mrb[0].mxu0
    %v2602 = vadd.f32 %v2405, %v2601
    %v2603 = vpop.f32.mrb[0].mxu0
    %2604 = vmatprep.mubr.bf16.mxu0 0
    %2605 = vmatmul.mubr.bf16.gmra.mrb[0].mxu0 %v2455
    %v2606 = vpop.f32.mrb[0].mxu0
    %v2607 = vadd.f32 %v2405, %v2606
    %v2608 = vpop.f32.mrb[0].mxu0
    %v2609 = vpop.f32.mrb[0].mxu0
    %v2610 = vadd.f32 %v2405, %v2609
    %v2611 = vpop.f32.mrb[0].mxu0
    %2612 = vmatprep.mubr.bf16.mxu0 0
    %2613 = vmatmul.mubr.bf16.gmra.mrb[0].mxu0 %v2458
    %v2614 = vpop.f32.mrb[0].mxu0
    %v2615 = vadd.f32 %v2405, %v2614
    %v2616 = vpop.f32.mrb[0].mxu0
    %v2617 = vpop.f32.mrb[0].mxu0
    %v2618 = vadd.f32 %v2405, %v2617
    %v2619 = vpop.f32.mrb[0].mxu0
    %2620 = vdwg.mxu0
    %v2621 = vsel %vm1579, %v2495, 0.0
    %v2622 = vsel %vm1579, %v2498, 0.0
    %v2623 = vadd.f32 %v2621, %v2622
    %v2624 = vsel %vm1579, %v2503, 0.0
    %v2625 = vadd.f32 %v2623, %v2624
    %v2626 = vsel %vm1579, %v2506, 0.0
    %v2627 = vadd.f32 %v2625, %v2626
    %v2628 = vsel %vm1579, %v2511, 0.0
    %v2629 = vadd.f32 %v2627, %v2628
    %v2630 = vsel %vm1579, %v2514, 0.0
    %v2631 = vadd.f32 %v2629, %v2630
    %v2632 = vsel %vm1579, %v2519, 0.0
    %v2633 = vadd.f32 %v2631, %v2632
    %v2634 = vsel %vm1579, %v2522, 0.0
    %v2635 = vadd.f32 %v2633, %v2634
    %v2636 = vsel %vm1579, %v2527, 0.0
    %v2637 = vadd.f32 %v2635, %v2636
    %v2638 = vsel %vm1579, %v2530, 0.0
    %v2639 = vadd.f32 %v2637, %v2638
    %v2640 = vsel %vm1579, %v2535, 0.0
    %v2641 = vadd.f32 %v2639, %v2640
    %v2642 = vsel %vm1579, %v2538, 0.0
    %v2643 = vadd.f32 %v2641, %v2642
    %v2644 = vsel %vm1579, %v2543, 0.0
    %v2645 = vadd.f32 %v2643, %v2644
    %v2646 = vsel %vm1579, %v2546, 0.0
    %v2647 = vadd.f32 %v2645, %v2646
    %v2648 = vsel %vm1579, %v2551, 0.0
    %v2649 = vadd.f32 %v2647, %v2648
    %v2650 = vsel %vm1579, %v2554, 0.0
    %v2651 = vadd.f32 %v2649, %v2650
    %v2652 = vsel %vm1579, %v2559, 0.0
    %v2653 = vadd.f32 %v2651, %v2652
    %v2654 = vsel %vm1579, %v2562, 0.0
    %v2655 = vadd.f32 %v2653, %v2654
    %v2656 = vsel %vm1579, %v2567, 0.0
    %v2657 = vadd.f32 %v2655, %v2656
    %v2658 = vsel %vm1579, %v2570, 0.0
    %v2659 = vadd.f32 %v2657, %v2658
    %v2660 = vsel %vm1579, %v2575, 0.0
    %v2661 = vadd.f32 %v2659, %v2660
    %v2662 = vsel %vm1579, %v2578, 0.0
    %v2663 = vadd.f32 %v2661, %v2662
    %v2664 = vsel %vm1579, %v2583, 0.0
    %v2665 = vadd.f32 %v2663, %v2664
    %v2666 = vsel %vm1579, %v2586, 0.0
    %v2667 = vadd.f32 %v2665, %v2666
    %v2668 = vsel %vm1579, %v2591, 0.0
    %v2669 = vadd.f32 %v2667, %v2668
    %v2670 = vsel %vm1579, %v2594, 0.0
    %v2671 = vadd.f32 %v2669, %v2670
    %v2672 = vsel %vm1579, %v2599, 0.0
    %v2673 = vadd.f32 %v2671, %v2672
    %v2674 = vsel %vm1579, %v2602, 0.0
    %v2675 = vadd.f32 %v2673, %v2674
    %v2676 = vsel %vm1579, %v2607, 0.0
    %v2677 = vadd.f32 %v2675, %v2676
    %v2678 = vsel %vm1579, %v2610, 0.0
    %v2679 = vadd.f32 %v2677, %v2678
    %v2680 = vsel %vm1579, %v2615, 0.0
    %v2681 = vadd.f32 %v2679, %v2680
    %v2682 = vsel %vm1579, %v2618, 0.0
    %v2683 = vadd.f32 %v2681, %v2682
    %v2684 = vrot.slane %v2683, 4
    %v2685 = vadd.f32 %v2683, %v2684
    %v2686 = vrot.slane %v2685, 2
    %v2687 = vadd.f32 %v2685, %v2686
    %v2688 = vrot.slane %v2687, 1
    %v2689 = vadd.f32 %v2687, %v2688
    %v2690 = vmul.f32 %v2689, %v914
    %v2691 = vsub.f32 %v2495, %v2690
    %v2692 = vsub.f32 %v2498, %v2690
    %v2693 = vsub.f32 %v2503, %v2690
    %v2694 = vsub.f32 %v2506, %v2690
    %v2695 = vsub.f32 %v2511, %v2690
    %v2696 = vsub.f32 %v2514, %v2690
    %v2697 = vsub.f32 %v2519, %v2690
    %v2698 = vsub.f32 %v2522, %v2690
    %v2699 = vsub.f32 %v2527, %v2690
    %v2700 = vsub.f32 %v2530, %v2690
    %v2701 = vsub.f32 %v2535, %v2690
    %v2702 = vsub.f32 %v2538, %v2690
    %v2703 = vsub.f32 %v2543, %v2690
    %v2704 = vsub.f32 %v2546, %v2690
    %v2705 = vsub.f32 %v2551, %v2690
    %v2706 = vsub.f32 %v2554, %v2690
    %v2707 = vsub.f32 %v2559, %v2690
    %v2708 = vsub.f32 %v2562, %v2690
    %v2709 = vsub.f32 %v2567, %v2690
    %v2710 = vsub.f32 %v2570, %v2690
    %v2711 = vsub.f32 %v2575, %v2690
    %v2712 = vsub.f32 %v2578, %v2690
    %v2713 = vsub.f32 %v2583, %v2690
    %v2714 = vsub.f32 %v2586, %v2690
    %v2715 = vsub.f32 %v2591, %v2690
    %v2716 = vsub.f32 %v2594, %v2690
    %v2717 = vsub.f32 %v2599, %v2690
    %v2718 = vsub.f32 %v2602, %v2690
    %v2719 = vsub.f32 %v2607, %v2690
    %v2720 = vsub.f32 %v2610, %v2690
    %v2721 = vsub.f32 %v2615, %v2690
    %v2722 = vsub.f32 %v2618, %v2690
    %v2723 = vmul.f32 %v2691, %v2691
    %v2724 = vmul.f32 %v2692, %v2692
    %v2725 = vmul.f32 %v2693, %v2693
    %v2726 = vmul.f32 %v2694, %v2694
    %v2727 = vmul.f32 %v2695, %v2695
    %v2728 = vmul.f32 %v2696, %v2696
    %v2729 = vmul.f32 %v2697, %v2697
    %v2730 = vmul.f32 %v2698, %v2698
    %v2731 = vmul.f32 %v2699, %v2699
    %v2732 = vmul.f32 %v2700, %v2700
    %v2733 = vmul.f32 %v2701, %v2701
    %v2734 = vmul.f32 %v2702, %v2702
    %v2735 = vmul.f32 %v2703, %v2703
    %v2736 = vmul.f32 %v2704, %v2704
    %v2737 = vmul.f32 %v2705, %v2705
    %v2738 = vmul.f32 %v2706, %v2706
    %v2739 = vmul.f32 %v2707, %v2707
    %v2740 = vmul.f32 %v2708, %v2708
    %v2741 = vmul.f32 %v2709, %v2709
    %v2742 = vmul.f32 %v2710, %v2710
    %v2743 = vmul.f32 %v2711, %v2711
    %v2744 = vmul.f32 %v2712, %v2712
    %v2745 = vmul.f32 %v2713, %v2713
    %v2746 = vmul.f32 %v2714, %v2714
    %v2747 = vmul.f32 %v2715, %v2715
    %v2748 = vmul.f32 %v2716, %v2716
    %v2749 = vmul.f32 %v2717, %v2717
    %v2750 = vmul.f32 %v2718, %v2718
    %v2751 = vmul.f32 %v2719, %v2719
    %v2752 = vmul.f32 %v2720, %v2720
    %v2753 = vmul.f32 %v2721, %v2721
    %v2754 = vmul.f32 %v2722, %v2722
    %v2755 = vsel %vm1579, %v2723, 0.0
    %v2756 = vsel %vm1579, %v2724, 0.0
    %v2757 = vadd.f32 %v2755, %v2756
    %v2758 = vsel %vm1579, %v2725, 0.0
    %v2759 = vadd.f32 %v2757, %v2758
    %v2760 = vsel %vm1579, %v2726, 0.0
    %v2761 = vadd.f32 %v2759, %v2760
    %v2762 = vsel %vm1579, %v2727, 0.0
    %v2763 = vadd.f32 %v2761, %v2762
    %v2764 = vsel %vm1579, %v2728, 0.0
    %v2765 = vadd.f32 %v2763, %v2764
    %v2766 = vsel %vm1579, %v2729, 0.0
    %v2767 = vadd.f32 %v2765, %v2766
    %v2768 = vsel %vm1579, %v2730, 0.0
    %v2769 = vadd.f32 %v2767, %v2768
    %v2770 = vsel %vm1579, %v2731, 0.0
    %v2771 = vadd.f32 %v2769, %v2770
    %v2772 = vsel %vm1579, %v2732, 0.0
    %v2773 = vadd.f32 %v2771, %v2772
    %v2774 = vsel %vm1579, %v2733, 0.0
    %v2775 = vadd.f32 %v2773, %v2774
    %v2776 = vsel %vm1579, %v2734, 0.0
    %v2777 = vadd.f32 %v2775, %v2776
    %v2778 = vsel %vm1579, %v2735, 0.0
    %v2779 = vadd.f32 %v2777, %v2778
    %v2780 = vsel %vm1579, %v2736, 0.0
    %v2781 = vadd.f32 %v2779, %v2780
    %v2782 = vsel %vm1579, %v2737, 0.0
    %v2783 = vadd.f32 %v2781, %v2782
    %v2784 = vsel %vm1579, %v2738, 0.0
    %v2785 = vadd.f32 %v2783, %v2784
    %v2786 = vsel %vm1579, %v2739, 0.0
    %v2787 = vadd.f32 %v2785, %v2786
    %v2788 = vsel %vm1579, %v2740, 0.0
    %v2789 = vadd.f32 %v2787, %v2788
    %v2790 = vsel %vm1579, %v2741, 0.0
    %v2791 = vadd.f32 %v2789, %v2790
    %v2792 = vsel %vm1579, %v2742, 0.0
    %v2793 = vadd.f32 %v2791, %v2792
    %v2794 = vsel %vm1579, %v2743, 0.0
    %v2795 = vadd.f32 %v2793, %v2794
    %v2796 = vsel %vm1579, %v2744, 0.0
    %v2797 = vadd.f32 %v2795, %v2796
    %v2798 = vsel %vm1579, %v2745, 0.0
    %v2799 = vadd.f32 %v2797, %v2798
    %v2800 = vsel %vm1579, %v2746, 0.0
    %v2801 = vadd.f32 %v2799, %v2800
    %v2802 = vsel %vm1579, %v2747, 0.0
    %v2803 = vadd.f32 %v2801, %v2802
    %v2804 = vsel %vm1579, %v2748, 0.0
    %v2805 = vadd.f32 %v2803, %v2804
    %v2806 = vsel %vm1579, %v2749, 0.0
    %v2807 = vadd.f32 %v2805, %v2806
    %v2808 = vsel %vm1579, %v2750, 0.0
    %v2809 = vadd.f32 %v2807, %v2808
    %v2810 = vsel %vm1579, %v2751, 0.0
    %v2811 = vadd.f32 %v2809, %v2810
    %v2812 = vsel %vm1579, %v2752, 0.0
    %v2813 = vadd.f32 %v2811, %v2812
    %v2814 = vsel %vm1579, %v2753, 0.0
    %v2815 = vadd.f32 %v2813, %v2814
    %v2816 = vsel %vm1579, %v2754, 0.0
    %v2817 = vadd.f32 %v2815, %v2816
    %v2818 = vrot.slane %v2817, 4
    %v2819 = vadd.f32 %v2817, %v2818
    %v2820 = vrot.slane %v2819, 2
    %v2821 = vadd.f32 %v2819, %v2820
    %v2822 = vrot.slane %v2821, 1
    %v2823 = vadd.f32 %v2821, %v2822
    %v2824 = vmul.f32 %v2823, %v914
    %v2825 = vadd.f32 %v2824, 1e-05
    %v2826 = vrsqrt.pop %v2825
    %v2827 = vmul.f32 %v2691, %v2826
    %v2828 = vmul.f32 %v2692, %v2826
    %v2829 = vmul.f32 %v2693, %v2826
    %v2830 = vmul.f32 %v2694, %v2826
    %v2831 = vmul.f32 %v2695, %v2826
    %v2832 = vmul.f32 %v2696, %v2826
    %v2833 = vmul.f32 %v2697, %v2826
    %v2834 = vmul.f32 %v2698, %v2826
    %v2835 = vmul.f32 %v2699, %v2826
    %v2836 = vmul.f32 %v2700, %v2826
    %v2837 = vmul.f32 %v2701, %v2826
    %v2838 = vmul.f32 %v2702, %v2826
    %v2839 = vmul.f32 %v2703, %v2826
    %v2840 = vmul.f32 %v2704, %v2826
    %v2841 = vmul.f32 %v2705, %v2826
    %v2842 = vmul.f32 %v2706, %v2826
    %v2843 = vmul.f32 %v2707, %v2826
    %v2844 = vmul.f32 %v2708, %v2826
    %v2845 = vmul.f32 %v2709, %v2826
    %v2846 = vmul.f32 %v2710, %v2826
    %v2847 = vmul.f32 %v2711, %v2826
    %v2848 = vmul.f32 %v2712, %v2826
    %v2849 = vmul.f32 %v2713, %v2826
    %v2850 = vmul.f32 %v2714, %v2826
    %v2851 = vmul.f32 %v2715, %v2826
    %v2852 = vmul.f32 %v2716, %v2826
    %v2853 = vmul.f32 %v2717, %v2826
    %v2854 = vmul.f32 %v2718, %v2826
    %v2855 = vmul.f32 %v2719, %v2826
    %v2856 = vmul.f32 %v2720, %v2826
    %v2857 = vmul.f32 %v2721, %v2826
    %v2858 = vmul.f32 %v2722, %v2826
    %v2859 = vmax.f32 %v2827, 0.0
    %v2860 = vmax.f32 %v2828, 0.0
    %v2861 = vmax.f32 %v2829, 0.0
    %v2862 = vmax.f32 %v2830, 0.0
    %v2863 = vmax.f32 %v2831, 0.0
    %v2864 = vmax.f32 %v2832, 0.0
    %v2865 = vmax.f32 %v2833, 0.0
    %v2866 = vmax.f32 %v2834, 0.0
    %v2867 = vmax.f32 %v2835, 0.0
    %v2868 = vmax.f32 %v2836, 0.0
    %v2869 = vmax.f32 %v2837, 0.0
    %v2870 = vmax.f32 %v2838, 0.0
    %v2871 = vmax.f32 %v2839, 0.0
    %v2872 = vmax.f32 %v2840, 0.0
    %v2873 = vmax.f32 %v2841, 0.0
    %v2874 = vmax.f32 %v2842, 0.0
    %v2875 = vmax.f32 %v2843, 0.0
    %v2876 = vmax.f32 %v2844, 0.0
    %v2877 = vmax.f32 %v2845, 0.0
    %v2878 = vmax.f32 %v2846, 0.0
    %v2879 = vmax.f32 %v2847, 0.0
    %v2880 = vmax.f32 %v2848, 0.0
    %v2881 = vmax.f32 %v2849, 0.0
    %v2882 = vmax.f32 %v2850, 0.0
    %v2883 = vmax.f32 %v2851, 0.0
    %v2884 = vmax.f32 %v2852, 0.0
    %v2885 = vmax.f32 %v2853, 0.0
    %v2886 = vmax.f32 %v2854, 0.0
    %v2887 = vmax.f32 %v2855, 0.0
    %v2888 = vmax.f32 %v2856, 0.0
    %v2889 = vmax.f32 %v2857, 0.0
    %v2890 = vmax.f32 %v2858, 0.0
    %v2891 = vpack.c.bf16 %v2860, %v2859
    %v2892 = vpack.c.bf16 %v2862, %v2861
    %v2893 = vpack.c.bf16 %v2864, %v2863
    %v2894 = vpack.c.bf16 %v2866, %v2865
    %v2895 = vpack.c.bf16 %v2868, %v2867
    %v2896 = vpack.c.bf16 %v2870, %v2869
    %v2897 = vpack.c.bf16 %v2872, %v2871
    %v2898 = vpack.c.bf16 %v2874, %v2873
    %v2899 = vpack.c.bf16 %v2876, %v2875
    %v2900 = vpack.c.bf16 %v2878, %v2877
    %v2901 = vpack.c.bf16 %v2880, %v2879
    %v2902 = vpack.c.bf16 %v2882, %v2881
    %v2903 = vpack.c.bf16 %v2884, %v2883
    %v2904 = vpack.c.bf16 %v2886, %v2885
    %v2905 = vpack.c.bf16 %v2888, %v2887
    %v2906 = vpack.c.bf16 %v2890, %v2889
    %v2907 = vld [vmem:[#allocation5 + $0x1a8] sm:$0xf]
    %v2908 = vld [vmem:[#allocation5 + $0x1ac] sm:$0xf]
    %v2909 = vld [vmem:[#allocation5 + $0x1b0] sm:$0xf]
    %v2910 = vld [vmem:[#allocation5 + $0x1b4] sm:$0xf]
    %v2911 = vld [vmem:[#allocation5 + $0x1b8] sm:$0xf]
    %v2912 = vld [vmem:[#allocation5 + $0x1bc] sm:$0xf]
    %v2913 = vld [vmem:[#allocation5 + $0x1c0] sm:$0xf]
    %v2914 = vld [vmem:[#allocation5 + $0x1c4] sm:$0xf]
    %v2915 = vld [vmem:[#allocation7 + $0x5] sm:$0x1]
    %v2916 = vlaneseq
    %v2917 = vshrl.u32 %v2916, 7
    %v2918 = vsub.s32 0, %v2917
    %v2919 = vrot.slane %v2915, %v2918
    %v2928 = vunpack.c.l.b16 %v2907
    %v2929 = vunpack.c.l.b16 %v2908
    %v2930 = vunpack.c.l.b16 %v2909
    %v2931 = vunpack.c.l.b16 %v2910
    %v2932 = vunpack.c.l.b16 %v2911
    %v2933 = vunpack.c.l.b16 %v2912
    %v2934 = vunpack.c.l.b16 %v2913
    %v2935 = vunpack.c.l.b16 %v2914
    %v2936 = vpack.c.b16 %v2929, %v2928
    %v2937 = vpack.c.b16 %v2931, %v2930
    %v2938 = vpack.c.b16 %v2933, %v2932
    %v2939 = vpack.c.b16 %v2935, %v2934
    %v2945 = vsel %vm1579, %v2891, 0
    %v2948 = vsel %vm1579, %v2892, 0
    %v2951 = vsel %vm1579, %v2893, 0
    %v2954 = vsel %vm1579, %v2894, 0
    %v2957 = vsel %vm1579, %v2895, 0
    %v2960 = vsel %vm1579, %v2896, 0
    %v2963 = vsel %vm1579, %v2897, 0
    %v2966 = vsel %vm1579, %v2898, 0
    %v2969 = vsel %vm1579, %v2899, 0
    %v2972 = vsel %vm1579, %v2900, 0
    %v2975 = vsel %vm1579, %v2901, 0
    %v2978 = vsel %vm1579, %v2902, 0
    %v2981 = vsel %vm1579, %v2903, 0
    %v2984 = vsel %vm1579, %v2904, 0
    %v2987 = vsel %vm1579, %v2905, 0
    %v2990 = vsel %vm1579, %v2906, 0
    %2992 = vmatprep.subr.bf16.mxu0 0
    %2993 = vmatpush1.bf16.msra.mxu0 %v2936
    %2994 = vmatprep.subr.bf16.mxu0 0
    %2995 = vmatpush1.bf16.msra.mxu0 %v2937
    %2996 = vmatprep.subr.bf16.mxu0 0
    %2997 = vmatpush1.bf16.msra.mxu0 %v2938
    %2998 = vmatprep.subr.bf16.mxu0 0
    %2999 = vmatpush1.bf16.msra.mxu0 %v2939
    %3000 = vmatprep.subr.bf16.mxu0 0
    %3001 = vmatpush1.bf16.msra.mxu0 0
    %3002 = vmatprep.subr.bf16.mxu0 0
    %3003 = vmatpush1.bf16.msra.mxu0 0
    %3004 = vmatprep.subr.bf16.mxu0 0
    %3005 = vmatpush1.bf16.msra.mxu0 0
    %3006 = vmatprep.subr.bf16.mxu0 0
    %3007 = vmatpush1.bf16.msra.mxu0 0
    %3008 = vmatprep.subr.bf16.mxu0 0
    %3009 = vmatpush1.bf16.msra.mxu0 0
    %3010 = vmatprep.subr.bf16.mxu0 0
    %3011 = vmatpush1.bf16.msra.mxu0 0
    %3012 = vmatprep.subr.bf16.mxu0 0
    %3013 = vmatpush1.bf16.msra.mxu0 0
    %3014 = vmatprep.subr.bf16.mxu0 0
    %3015 = vmatpush1.bf16.msra.mxu0 0
    %3016 = vmatprep.subr.bf16.mxu0 0
    %3017 = vmatpush1.bf16.msra.mxu0 0
    %3018 = vmatprep.subr.bf16.mxu0 0
    %3019 = vmatpush1.bf16.msra.mxu0 0
    %3020 = vmatprep.subr.bf16.mxu0 0
    %3021 = vmatpush1.bf16.msra.mxu0 0
    %3022 = vmatprep.subr.bf16.mxu0 0
    %3023 = vmatpush1.bf16.msra.mxu0 0
    %3024 = vmatprep.mubr.bf16.mxu0 0
    %3025 = vmatmul.mubr.bf16.gmra.mrb[0].mxu0 %v2945
    %v3026 = vpop.f32.mrb[0].mxu0
    %v3027 = vadd.f32 %v2919, %v3026
    %v3028 = vpop.f32.mrb[0].mxu0
    %v3029 = vpop.f32.mrb[0].mxu0
    %v3030 = vadd.f32 %v2919, %v3029
    %v3031 = vpop.f32.mrb[0].mxu0
    %3032 = vmatprep.mubr.bf16.mxu0 0
    %3033 = vmatmul.mubr.bf16.gmra.mrb[0].mxu0 %v2948
    %v3034 = vpop.f32.mrb[0].mxu0
    %v3035 = vadd.f32 %v2919, %v3034
    %v3036 = vpop.f32.mrb[0].mxu0
    %v3037 = vpop.f32.mrb[0].mxu0
    %v3038 = vadd.f32 %v2919, %v3037
    %v3039 = vpop.f32.mrb[0].mxu0
    %3040 = vmatprep.mubr.bf16.mxu0 0
    %3041 = vmatmul.mubr.bf16.gmra.mrb[0].mxu0 %v2951
    %v3042 = vpop.f32.mrb[0].mxu0
    %v3043 = vadd.f32 %v2919, %v3042
    %v3044 = vpop.f32.mrb[0].mxu0
    %v3045 = vpop.f32.mrb[0].mxu0
    %v3046 = vadd.f32 %v2919, %v3045
    %v3047 = vpop.f32.mrb[0].mxu0
    %3048 = vmatprep.mubr.bf16.mxu0 0
    %3049 = vmatmul.mubr.bf16.gmra.mrb[0].mxu0 %v2954
    %v3050 = vpop.f32.mrb[0].mxu0
    %v3051 = vadd.f32 %v2919, %v3050
    %v3052 = vpop.f32.mrb[0].mxu0
    %v3053 = vpop.f32.mrb[0].mxu0
    %v3054 = vadd.f32 %v2919, %v3053
    %v3055 = vpop.f32.mrb[0].mxu0
    %3056 = vmatprep.mubr.bf16.mxu0 0
    %3057 = vmatmul.mubr.bf16.gmra.mrb[0].mxu0 %v2957
    %v3058 = vpop.f32.mrb[0].mxu0
    %v3059 = vadd.f32 %v2919, %v3058
    %v3060 = vpop.f32.mrb[0].mxu0
    %v3061 = vpop.f32.mrb[0].mxu0
    %v3062 = vadd.f32 %v2919, %v3061
    %v3063 = vpop.f32.mrb[0].mxu0
    %3064 = vmatprep.mubr.bf16.mxu0 0
    %3065 = vmatmul.mubr.bf16.gmra.mrb[0].mxu0 %v2960
    %v3066 = vpop.f32.mrb[0].mxu0
    %v3067 = vadd.f32 %v2919, %v3066
    %v3068 = vpop.f32.mrb[0].mxu0
    %v3069 = vpop.f32.mrb[0].mxu0
    %v3070 = vadd.f32 %v2919, %v3069
    %v3071 = vpop.f32.mrb[0].mxu0
    %3072 = vmatprep.mubr.bf16.mxu0 0
    %3073 = vmatmul.mubr.bf16.gmra.mrb[0].mxu0 %v2963
    %v3074 = vpop.f32.mrb[0].mxu0
    %v3075 = vadd.f32 %v2919, %v3074
    %v3076 = vpop.f32.mrb[0].mxu0
    %v3077 = vpop.f32.mrb[0].mxu0
    %v3078 = vadd.f32 %v2919, %v3077
    %v3079 = vpop.f32.mrb[0].mxu0
    %3080 = vmatprep.mubr.bf16.mxu0 0
    %3081 = vmatmul.mubr.bf16.gmra.mrb[0].mxu0 %v2966
    %v3082 = vpop.f32.mrb[0].mxu0
    %v3083 = vadd.f32 %v2919, %v3082
    %v3084 = vpop.f32.mrb[0].mxu0
    %v3085 = vpop.f32.mrb[0].mxu0
    %v3086 = vadd.f32 %v2919, %v3085
    %v3087 = vpop.f32.mrb[0].mxu0
    %3088 = vmatprep.mubr.bf16.mxu0 0
    %3089 = vmatmul.mubr.bf16.gmra.mrb[0].mxu0 %v2969
    %v3090 = vpop.f32.mrb[0].mxu0
    %v3091 = vadd.f32 %v2919, %v3090
    %v3092 = vpop.f32.mrb[0].mxu0
    %v3093 = vpop.f32.mrb[0].mxu0
    %v3094 = vadd.f32 %v2919, %v3093
    %v3095 = vpop.f32.mrb[0].mxu0
    %3096 = vmatprep.mubr.bf16.mxu0 0
    %3097 = vmatmul.mubr.bf16.gmra.mrb[0].mxu0 %v2972
    %v3098 = vpop.f32.mrb[0].mxu0
    %v3099 = vadd.f32 %v2919, %v3098
    %v3100 = vpop.f32.mrb[0].mxu0
    %v3101 = vpop.f32.mrb[0].mxu0
    %v3102 = vadd.f32 %v2919, %v3101
    %v3103 = vpop.f32.mrb[0].mxu0
    %3104 = vmatprep.mubr.bf16.mxu0 0
    %3105 = vmatmul.mubr.bf16.gmra.mrb[0].mxu0 %v2975
    %v3106 = vpop.f32.mrb[0].mxu0
    %v3107 = vadd.f32 %v2919, %v3106
    %v3108 = vpop.f32.mrb[0].mxu0
    %v3109 = vpop.f32.mrb[0].mxu0
    %v3110 = vadd.f32 %v2919, %v3109
    %v3111 = vpop.f32.mrb[0].mxu0
    %3112 = vmatprep.mubr.bf16.mxu0 0
    %3113 = vmatmul.mubr.bf16.gmra.mrb[0].mxu0 %v2978
    %v3114 = vpop.f32.mrb[0].mxu0
    %v3115 = vadd.f32 %v2919, %v3114
    %v3116 = vpop.f32.mrb[0].mxu0
    %v3117 = vpop.f32.mrb[0].mxu0
    %v3118 = vadd.f32 %v2919, %v3117
    %v3119 = vpop.f32.mrb[0].mxu0
    %3120 = vmatprep.mubr.bf16.mxu0 0
    %3121 = vmatmul.mubr.bf16.gmra.mrb[0].mxu0 %v2981
    %v3122 = vpop.f32.mrb[0].mxu0
    %v3123 = vadd.f32 %v2919, %v3122
    %v3124 = vpop.f32.mrb[0].mxu0
    %v3125 = vpop.f32.mrb[0].mxu0
    %v3126 = vadd.f32 %v2919, %v3125
    %v3127 = vpop.f32.mrb[0].mxu0
    %3128 = vmatprep.mubr.bf16.mxu0 0
    %3129 = vmatmul.mubr.bf16.gmra.mrb[0].mxu0 %v2984
    %v3130 = vpop.f32.mrb[0].mxu0
    %v3131 = vadd.f32 %v2919, %v3130
    %v3132 = vpop.f32.mrb[0].mxu0
    %v3133 = vpop.f32.mrb[0].mxu0
    %v3134 = vadd.f32 %v2919, %v3133
    %v3135 = vpop.f32.mrb[0].mxu0
    %3136 = vmatprep.mubr.bf16.mxu0 0
    %3137 = vmatmul.mubr.bf16.gmra.mrb[0].mxu0 %v2987
    %v3138 = vpop.f32.mrb[0].mxu0
    %v3139 = vadd.f32 %v2919, %v3138
    %v3140 = vpop.f32.mrb[0].mxu0
    %v3141 = vpop.f32.mrb[0].mxu0
    %v3142 = vadd.f32 %v2919, %v3141
    %v3143 = vpop.f32.mrb[0].mxu0
    %3144 = vmatprep.mubr.bf16.mxu0 0
    %3145 = vmatmul.mubr.bf16.gmra.mrb[0].mxu0 %v2990
    %v3146 = vpop.f32.mrb[0].mxu0
    %v3147 = vadd.f32 %v2919, %v3146
    %v3148 = vpop.f32.mrb[0].mxu0
    %v3149 = vpop.f32.mrb[0].mxu0
    %v3150 = vadd.f32 %v2919, %v3149
    %v3151 = vpop.f32.mrb[0].mxu0
    %3152 = vdwg.mxu0
    %v3153 = vld [vmem:[#allocation5 + $0x1c8] sm:$0xf]
    %v3154 = vld [vmem:[#allocation5 + $0x1cc] sm:$0xf]
    %v3155 = vld [vmem:[#allocation5 + $0x1d0] sm:$0xf]
    %v3156 = vld [vmem:[#allocation5 + $0x1d4] sm:$0xf]
    %v3157 = vld [vmem:[#allocation5 + $0x1d8] sm:$0xf]
    %v3158 = vld [vmem:[#allocation5 + $0x1dc] sm:$0xf]
    %v3159 = vld [vmem:[#allocation5 + $0x1e0] sm:$0xf]
    %v3160 = vld [vmem:[#allocation5 + $0x1e4] sm:$0xf]
    %v3161 = vld [vmem:[#allocation7 + $0x6] sm:$0x1]
    %v3162 = vlaneseq
    %v3163 = vshrl.u32 %v3162, 7
    %v3164 = vsub.s32 0, %v3163
    %v3165 = vrot.slane %v3161, %v3164
    %v3174 = vunpack.c.l.b16 %v3153
    %v3175 = vunpack.c.l.b16 %v3154
    %v3176 = vunpack.c.l.b16 %v3155
    %v3177 = vunpack.c.l.b16 %v3156
    %v3178 = vunpack.c.l.b16 %v3157
    %v3179 = vunpack.c.l.b16 %v3158
    %v3180 = vunpack.c.l.b16 %v3159
    %v3181 = vunpack.c.l.b16 %v3160
    %v3182 = vpack.c.b16 %v3175, %v3174
    %v3183 = vpack.c.b16 %v3177, %v3176
    %v3184 = vpack.c.b16 %v3179, %v3178
    %v3185 = vpack.c.b16 %v3181, %v3180
    %3190 = vmatprep.subr.bf16.mxu0 0
    %3191 = vmatpush1.bf16.msra.mxu0 %v3182
    %3192 = vmatprep.subr.bf16.mxu0 0
    %3193 = vmatpush1.bf16.msra.mxu0 %v3183
    %3194 = vmatprep.subr.bf16.mxu0 0
    %3195 = vmatpush1.bf16.msra.mxu0 %v3184
    %3196 = vmatprep.subr.bf16.mxu0 0
    %3197 = vmatpush1.bf16.msra.mxu0 %v3185
    %3198 = vmatprep.subr.bf16.mxu0 0
    %3199 = vmatpush1.bf16.msra.mxu0 0
    %3200 = vmatprep.subr.bf16.mxu0 0
    %3201 = vmatpush1.bf16.msra.mxu0 0
    %3202 = vmatprep.subr.bf16.mxu0 0
    %3203 = vmatpush1.bf16.msra.mxu0 0
    %3204 = vmatprep.subr.bf16.mxu0 0
    %3205 = vmatpush1.bf16.msra.mxu0 0
    %3206 = vmatprep.subr.bf16.mxu0 0
    %3207 = vmatpush1.bf16.msra.mxu0 0
    %3208 = vmatprep.subr.bf16.mxu0 0
    %3209 = vmatpush1.bf16.msra.mxu0 0
    %3210 = vmatprep.subr.bf16.mxu0 0
    %3211 = vmatpush1.bf16.msra.mxu0 0
    %3212 = vmatprep.subr.bf16.mxu0 0
    %3213 = vmatpush1.bf16.msra.mxu0 0
    %3214 = vmatprep.subr.bf16.mxu0 0
    %3215 = vmatpush1.bf16.msra.mxu0 0
    %3216 = vmatprep.subr.bf16.mxu0 0
    %3217 = vmatpush1.bf16.msra.mxu0 0
    %3218 = vmatprep.subr.bf16.mxu0 0
    %3219 = vmatpush1.bf16.msra.mxu0 0
    %3220 = vmatprep.subr.bf16.mxu0 0
    %3221 = vmatpush1.bf16.msra.mxu0 0
    %3222 = vmatprep.mubr.bf16.mxu0 0
    %3223 = vmatmul.mubr.bf16.gmra.mrb[0].mxu0 %v2945
    %v3224 = vpop.f32.mrb[0].mxu0
    %v3225 = vadd.f32 %v3165, %v3224
    %v3226 = vpop.f32.mrb[0].mxu0
    %v3227 = vpop.f32.mrb[0].mxu0
    %v3228 = vadd.f32 %v3165, %v3227
    %v3229 = vpop.f32.mrb[0].mxu0
    %3230 = vmatprep.mubr.bf16.mxu0 0
    %3231 = vmatmul.mubr.bf16.gmra.mrb[0].mxu0 %v2948
    %v3232 = vpop.f32.mrb[0].mxu0
    %v3233 = vadd.f32 %v3165, %v3232
    %v3234 = vpop.f32.mrb[0].mxu0
    %v3235 = vpop.f32.mrb[0].mxu0
    %v3236 = vadd.f32 %v3165, %v3235
    %v3237 = vpop.f32.mrb[0].mxu0
    %3238 = vmatprep.mubr.bf16.mxu0 0
    %3239 = vmatmul.mubr.bf16.gmra.mrb[0].mxu0 %v2951
    %v3240 = vpop.f32.mrb[0].mxu0
    %v3241 = vadd.f32 %v3165, %v3240
    %v3242 = vpop.f32.mrb[0].mxu0
    %v3243 = vpop.f32.mrb[0].mxu0
    %v3244 = vadd.f32 %v3165, %v3243
    %v3245 = vpop.f32.mrb[0].mxu0
    %3246 = vmatprep.mubr.bf16.mxu0 0
    %3247 = vmatmul.mubr.bf16.gmra.mrb[0].mxu0 %v2954
    %v3248 = vpop.f32.mrb[0].mxu0
    %v3249 = vadd.f32 %v3165, %v3248
    %v3250 = vpop.f32.mrb[0].mxu0
    %v3251 = vpop.f32.mrb[0].mxu0
    %v3252 = vadd.f32 %v3165, %v3251
    %v3253 = vpop.f32.mrb[0].mxu0
    %3254 = vmatprep.mubr.bf16.mxu0 0
    %3255 = vmatmul.mubr.bf16.gmra.mrb[0].mxu0 %v2957
    %v3256 = vpop.f32.mrb[0].mxu0
    %v3257 = vadd.f32 %v3165, %v3256
    %v3258 = vpop.f32.mrb[0].mxu0
    %v3259 = vpop.f32.mrb[0].mxu0
    %v3260 = vadd.f32 %v3165, %v3259
    %v3261 = vpop.f32.mrb[0].mxu0
    %3262 = vmatprep.mubr.bf16.mxu0 0
    %3263 = vmatmul.mubr.bf16.gmra.mrb[0].mxu0 %v2960
    %v3264 = vpop.f32.mrb[0].mxu0
    %v3265 = vadd.f32 %v3165, %v3264
    %v3266 = vpop.f32.mrb[0].mxu0
    %v3267 = vpop.f32.mrb[0].mxu0
    %v3268 = vadd.f32 %v3165, %v3267
    %v3269 = vpop.f32.mrb[0].mxu0
    %3270 = vmatprep.mubr.bf16.mxu0 0
    %3271 = vmatmul.mubr.bf16.gmra.mrb[0].mxu0 %v2963
    %v3272 = vpop.f32.mrb[0].mxu0
    %v3273 = vadd.f32 %v3165, %v3272
    %v3274 = vpop.f32.mrb[0].mxu0
    %v3275 = vpop.f32.mrb[0].mxu0
    %v3276 = vadd.f32 %v3165, %v3275
    %v3277 = vpop.f32.mrb[0].mxu0
    %3278 = vmatprep.mubr.bf16.mxu0 0
    %3279 = vmatmul.mubr.bf16.gmra.mrb[0].mxu0 %v2966
    %v3280 = vpop.f32.mrb[0].mxu0
    %v3281 = vadd.f32 %v3165, %v3280
    %v3282 = vpop.f32.mrb[0].mxu0
    %v3283 = vpop.f32.mrb[0].mxu0
    %v3284 = vadd.f32 %v3165, %v3283
    %v3285 = vpop.f32.mrb[0].mxu0
    %3286 = vmatprep.mubr.bf16.mxu0 0
    %3287 = vmatmul.mubr.bf16.gmra.mrb[0].mxu0 %v2969
    %v3288 = vpop.f32.mrb[0].mxu0
    %v3289 = vadd.f32 %v3165, %v3288
    %v3290 = vpop.f32.mrb[0].mxu0
    %v3291 = vpop.f32.mrb[0].mxu0
    %v3292 = vadd.f32 %v3165, %v3291
    %v3293 = vpop.f32.mrb[0].mxu0
    %3294 = vmatprep.mubr.bf16.mxu0 0
    %3295 = vmatmul.mubr.bf16.gmra.mrb[0].mxu0 %v2972
    %v3296 = vpop.f32.mrb[0].mxu0
    %v3297 = vadd.f32 %v3165, %v3296
    %v3298 = vpop.f32.mrb[0].mxu0
    %v3299 = vpop.f32.mrb[0].mxu0
    %v3300 = vadd.f32 %v3165, %v3299
    %v3301 = vpop.f32.mrb[0].mxu0
    %3302 = vmatprep.mubr.bf16.mxu0 0
    %3303 = vmatmul.mubr.bf16.gmra.mrb[0].mxu0 %v2975
    %v3304 = vpop.f32.mrb[0].mxu0
    %v3305 = vadd.f32 %v3165, %v3304
    %v3306 = vpop.f32.mrb[0].mxu0
    %v3307 = vpop.f32.mrb[0].mxu0
    %v3308 = vadd.f32 %v3165, %v3307
    %v3309 = vpop.f32.mrb[0].mxu0
    %3310 = vmatprep.mubr.bf16.mxu0 0
    %3311 = vmatmul.mubr.bf16.gmra.mrb[0].mxu0 %v2978
    %v3312 = vpop.f32.mrb[0].mxu0
    %v3313 = vadd.f32 %v3165, %v3312
    %v3314 = vpop.f32.mrb[0].mxu0
    %v3315 = vpop.f32.mrb[0].mxu0
    %v3316 = vadd.f32 %v3165, %v3315
    %v3317 = vpop.f32.mrb[0].mxu0
    %3318 = vmatprep.mubr.bf16.mxu0 0
    %3319 = vmatmul.mubr.bf16.gmra.mrb[0].mxu0 %v2981
    %v3320 = vpop.f32.mrb[0].mxu0
    %v3321 = vadd.f32 %v3165, %v3320
    %v3322 = vpop.f32.mrb[0].mxu0
    %v3323 = vpop.f32.mrb[0].mxu0
    %v3324 = vadd.f32 %v3165, %v3323
    %v3325 = vpop.f32.mrb[0].mxu0
    %3326 = vmatprep.mubr.bf16.mxu0 0
    %3327 = vmatmul.mubr.bf16.gmra.mrb[0].mxu0 %v2984
    %v3328 = vpop.f32.mrb[0].mxu0
    %v3329 = vadd.f32 %v3165, %v3328
    %v3330 = vpop.f32.mrb[0].mxu0
    %v3331 = vpop.f32.mrb[0].mxu0
    %v3332 = vadd.f32 %v3165, %v3331
    %v3333 = vpop.f32.mrb[0].mxu0
    %3334 = vmatprep.mubr.bf16.mxu0 0
    %3335 = vmatmul.mubr.bf16.gmra.mrb[0].mxu0 %v2987
    %v3336 = vpop.f32.mrb[0].mxu0
    %v3337 = vadd.f32 %v3165, %v3336
    %v3338 = vpop.f32.mrb[0].mxu0
    %v3339 = vpop.f32.mrb[0].mxu0
    %v3340 = vadd.f32 %v3165, %v3339
    %v3341 = vpop.f32.mrb[0].mxu0
    %3342 = vmatprep.mubr.bf16.mxu0 0
    %3343 = vmatmul.mubr.bf16.gmra.mrb[0].mxu0 %v2990
    %v3344 = vpop.f32.mrb[0].mxu0
    %v3345 = vadd.f32 %v3165, %v3344
    %v3346 = vpop.f32.mrb[0].mxu0
    %v3347 = vpop.f32.mrb[0].mxu0
    %v3348 = vadd.f32 %v3165, %v3347
    %v3349 = vpop.f32.mrb[0].mxu0
    %3350 = vdwg.mxu0
    %v3351 = vadd.f32 %v3027, %v3030
    %v3352 = vadd.f32 %v3351, %v3035
    %v3353 = vadd.f32 %v3352, %v3038
    %v3354 = vadd.f32 %v3353, %v3043
    %v3355 = vadd.f32 %v3354, %v3046
    %v3356 = vadd.f32 %v3355, %v3051
    %v3357 = vadd.f32 %v3356, %v3054
    %v3358 = vadd.f32 %v3357, %v3059
    %v3359 = vadd.f32 %v3358, %v3062
    %v3360 = vadd.f32 %v3359, %v3067
    %v3361 = vadd.f32 %v3360, %v3070
    %v3362 = vadd.f32 %v3361, %v3075
    %v3363 = vadd.f32 %v3362, %v3078
    %v3364 = vadd.f32 %v3363, %v3083
    %v3365 = vadd.f32 %v3364, %v3086
    %v3366 = vadd.f32 %v3365, %v3091
    %v3367 = vadd.f32 %v3366, %v3094
    %v3368 = vadd.f32 %v3367, %v3099
    %v3369 = vadd.f32 %v3368, %v3102
    %v3370 = vadd.f32 %v3369, %v3107
    %v3371 = vadd.f32 %v3370, %v3110
    %v3372 = vadd.f32 %v3371, %v3115
    %v3373 = vadd.f32 %v3372, %v3118
    %v3374 = vadd.f32 %v3373, %v3123
    %v3375 = vadd.f32 %v3374, %v3126
    %v3376 = vadd.f32 %v3375, %v3131
    %v3377 = vadd.f32 %v3376, %v3134
    %v3378 = vadd.f32 %v3377, %v3139
    %v3379 = vadd.f32 %v3378, %v3142
    %v3380 = vadd.f32 %v3379, %v3147
    %v3381 = vadd.f32 %v3380, %v3150
    %v3382 = vrot.slane %v3381, 4
    %v3383 = vadd.f32 %v3381, %v3382
    %v3384 = vrot.slane %v3383, 2
    %v3385 = vadd.f32 %v3383, %v3384
    %v3386 = vrot.slane %v3385, 1
    %v3387 = vadd.f32 %v3385, %v3386
    %v3388 = vadd.f32 %v3225, %v3228
    %v3389 = vadd.f32 %v3388, %v3233
    %v3390 = vadd.f32 %v3389, %v3236
    %v3391 = vadd.f32 %v3390, %v3241
    %v3392 = vadd.f32 %v3391, %v3244
    %v3393 = vadd.f32 %v3392, %v3249
    %v3394 = vadd.f32 %v3393, %v3252
    %v3395 = vadd.f32 %v3394, %v3257
    %v3396 = vadd.f32 %v3395, %v3260
    %v3397 = vadd.f32 %v3396, %v3265
    %v3398 = vadd.f32 %v3397, %v3268
    %v3399 = vadd.f32 %v3398, %v3273
    %v3400 = vadd.f32 %v3399, %v3276
    %v3401 = vadd.f32 %v3400, %v3281
    %v3402 = vadd.f32 %v3401, %v3284
    %v3403 = vadd.f32 %v3402, %v3289
    %v3404 = vadd.f32 %v3403, %v3292
    %v3405 = vadd.f32 %v3404, %v3297
    %v3406 = vadd.f32 %v3405, %v3300
    %v3407 = vadd.f32 %v3406, %v3305
    %v3408 = vadd.f32 %v3407, %v3308
    %v3409 = vadd.f32 %v3408, %v3313
    %v3410 = vadd.f32 %v3409, %v3316
    %v3411 = vadd.f32 %v3410, %v3321
    %v3412 = vadd.f32 %v3411, %v3324
    %v3413 = vadd.f32 %v3412, %v3329
    %v3414 = vadd.f32 %v3413, %v3332
    %v3415 = vadd.f32 %v3414, %v3337
    %v3416 = vadd.f32 %v3415, %v3340
    %v3417 = vadd.f32 %v3416, %v3345
    %v3418 = vadd.f32 %v3417, %v3348
    %v3419 = vrot.slane %v3418, 4
    %v3420 = vadd.f32 %v3418, %v3419
    %v3421 = vrot.slane %v3420, 2
    %v3422 = vadd.f32 %v3420, %v3421
    %v3423 = vrot.slane %v3422, 1
    %v3424 = vadd.f32 %v3422, %v3423
    %v3425 = vmul.f32 %v3387, %v914
    %v3426 = vmul.f32 %v3424, %v914
    %v3427 = vsub.f32 %v3027, %v3425
    %v3428 = vsub.f32 %v3225, %v3426
    %v3429 = vsub.f32 %v3030, %v3425
    %v3430 = vsub.f32 %v3228, %v3426
    %v3431 = vsub.f32 %v3035, %v3425
    %v3432 = vsub.f32 %v3233, %v3426
    %v3433 = vsub.f32 %v3038, %v3425
    %v3434 = vsub.f32 %v3236, %v3426
    %v3435 = vsub.f32 %v3043, %v3425
    %v3436 = vsub.f32 %v3241, %v3426
    %v3437 = vsub.f32 %v3046, %v3425
    %v3438 = vsub.f32 %v3244, %v3426
    %v3439 = vsub.f32 %v3051, %v3425
    %v3440 = vsub.f32 %v3249, %v3426
    %v3441 = vsub.f32 %v3054, %v3425
    %v3442 = vsub.f32 %v3252, %v3426
    %v3443 = vsub.f32 %v3059, %v3425
    %v3444 = vsub.f32 %v3257, %v3426
    %v3445 = vsub.f32 %v3062, %v3425
    %v3446 = vsub.f32 %v3260, %v3426
    %v3447 = vsub.f32 %v3067, %v3425
    %v3448 = vsub.f32 %v3265, %v3426
    %v3449 = vsub.f32 %v3070, %v3425
    %v3450 = vsub.f32 %v3268, %v3426
    %v3451 = vsub.f32 %v3075, %v3425
    %v3452 = vsub.f32 %v3273, %v3426
    %v3453 = vsub.f32 %v3078, %v3425
    %v3454 = vsub.f32 %v3276, %v3426
    %v3455 = vsub.f32 %v3083, %v3425
    %v3456 = vsub.f32 %v3281, %v3426
    %v3457 = vsub.f32 %v3086, %v3425
    %v3458 = vsub.f32 %v3284, %v3426
    %v3459 = vsub.f32 %v3091, %v3425
    %v3460 = vsub.f32 %v3289, %v3426
    %v3461 = vsub.f32 %v3094, %v3425
    %v3462 = vsub.f32 %v3292, %v3426
    %v3463 = vsub.f32 %v3099, %v3425
    %v3464 = vsub.f32 %v3297, %v3426
    %v3465 = vsub.f32 %v3102, %v3425
    %v3466 = vsub.f32 %v3300, %v3426
    %v3467 = vsub.f32 %v3107, %v3425
    %v3468 = vsub.f32 %v3305, %v3426
    %v3469 = vsub.f32 %v3110, %v3425
    %v3470 = vsub.f32 %v3308, %v3426
    %v3471 = vsub.f32 %v3115, %v3425
    %v3472 = vsub.f32 %v3313, %v3426
    %v3473 = vsub.f32 %v3118, %v3425
    %v3474 = vsub.f32 %v3316, %v3426
    %v3475 = vsub.f32 %v3123, %v3425
    %v3476 = vsub.f32 %v3321, %v3426
    %v3477 = vsub.f32 %v3126, %v3425
    %v3478 = vsub.f32 %v3324, %v3426
    %v3479 = vsub.f32 %v3131, %v3425
    %v3480 = vsub.f32 %v3329, %v3426
    %v3481 = vsub.f32 %v3134, %v3425
    %v3482 = vsub.f32 %v3332, %v3426
    %v3483 = vsub.f32 %v3139, %v3425
    %v3484 = vsub.f32 %v3337, %v3426
    %v3485 = vsub.f32 %v3142, %v3425
    %v3486 = vsub.f32 %v3340, %v3426
    %v3487 = vsub.f32 %v3147, %v3425
    %v3488 = vsub.f32 %v3345, %v3426
    %v3489 = vsub.f32 %v3150, %v3425
    %v3490 = vsub.f32 %v3348, %v3426
    %v3491 = vmul.f32 %v3427, %v3427
    %v3492 = vmul.f32 %v3428, %v3428
    %v3493 = vmul.f32 %v3429, %v3429
    %v3494 = vmul.f32 %v3430, %v3430
    %v3495 = vmul.f32 %v3431, %v3431
    %v3496 = vmul.f32 %v3432, %v3432
    %v3497 = vmul.f32 %v3433, %v3433
    %v3498 = vmul.f32 %v3434, %v3434
    %v3499 = vmul.f32 %v3435, %v3435
    %v3500 = vmul.f32 %v3436, %v3436
    %v3501 = vmul.f32 %v3437, %v3437
    %v3502 = vmul.f32 %v3438, %v3438
    %v3503 = vmul.f32 %v3439, %v3439
    %v3504 = vmul.f32 %v3440, %v3440
    %v3505 = vmul.f32 %v3441, %v3441
    %v3506 = vmul.f32 %v3442, %v3442
    %v3507 = vmul.f32 %v3443, %v3443
    %v3508 = vmul.f32 %v3444, %v3444
    %v3509 = vmul.f32 %v3445, %v3445
    %v3510 = vmul.f32 %v3446, %v3446
    %v3511 = vmul.f32 %v3447, %v3447
    %v3512 = vmul.f32 %v3448, %v3448
    %v3513 = vmul.f32 %v3449, %v3449
    %v3514 = vmul.f32 %v3450, %v3450
    %v3515 = vmul.f32 %v3451, %v3451
    %v3516 = vmul.f32 %v3452, %v3452
    %v3517 = vmul.f32 %v3453, %v3453
    %v3518 = vmul.f32 %v3454, %v3454
    %v3519 = vmul.f32 %v3455, %v3455
    %v3520 = vmul.f32 %v3456, %v3456
    %v3521 = vmul.f32 %v3457, %v3457
    %v3522 = vmul.f32 %v3458, %v3458
    %v3523 = vmul.f32 %v3459, %v3459
    %v3524 = vmul.f32 %v3460, %v3460
    %v3525 = vmul.f32 %v3461, %v3461
    %v3526 = vmul.f32 %v3462, %v3462
    %v3527 = vmul.f32 %v3463, %v3463
    %v3528 = vmul.f32 %v3464, %v3464
    %v3529 = vmul.f32 %v3465, %v3465
    %v3530 = vmul.f32 %v3466, %v3466
    %v3531 = vmul.f32 %v3467, %v3467
    %v3532 = vmul.f32 %v3468, %v3468
    %v3533 = vmul.f32 %v3469, %v3469
    %v3534 = vmul.f32 %v3470, %v3470
    %v3535 = vmul.f32 %v3471, %v3471
    %v3536 = vmul.f32 %v3472, %v3472
    %v3537 = vmul.f32 %v3473, %v3473
    %v3538 = vmul.f32 %v3474, %v3474
    %v3539 = vmul.f32 %v3475, %v3475
    %v3540 = vmul.f32 %v3476, %v3476
    %v3541 = vmul.f32 %v3477, %v3477
    %v3542 = vmul.f32 %v3478, %v3478
    %v3543 = vmul.f32 %v3479, %v3479
    %v3544 = vmul.f32 %v3480, %v3480
    %v3545 = vmul.f32 %v3481, %v3481
    %v3546 = vmul.f32 %v3482, %v3482
    %v3547 = vmul.f32 %v3483, %v3483
    %v3548 = vmul.f32 %v3484, %v3484
    %v3549 = vmul.f32 %v3485, %v3485
    %v3550 = vmul.f32 %v3486, %v3486
    %v3551 = vmul.f32 %v3487, %v3487
    %v3552 = vmul.f32 %v3488, %v3488
    %v3553 = vmul.f32 %v3489, %v3489
    %v3554 = vmul.f32 %v3490, %v3490
    %v3555 = vadd.f32 %v3491, %v3493
    %v3556 = vadd.f32 %v3555, %v3495
    %v3557 = vadd.f32 %v3556, %v3497
    %v3558 = vadd.f32 %v3557, %v3499
    %v3559 = vadd.f32 %v3558, %v3501
    %v3560 = vadd.f32 %v3559, %v3503
    %v3561 = vadd.f32 %v3560, %v3505
    %v3562 = vadd.f32 %v3561, %v3507
    %v3563 = vadd.f32 %v3562, %v3509
    %v3564 = vadd.f32 %v3563, %v3511
    %v3565 = vadd.f32 %v3564, %v3513
    %v3566 = vadd.f32 %v3565, %v3515
    %v3567 = vadd.f32 %v3566, %v3517
    %v3568 = vadd.f32 %v3567, %v3519
    %v3569 = vadd.f32 %v3568, %v3521
    %v3570 = vadd.f32 %v3569, %v3523
    %v3571 = vadd.f32 %v3570, %v3525
    %v3572 = vadd.f32 %v3571, %v3527
    %v3573 = vadd.f32 %v3572, %v3529
    %v3574 = vadd.f32 %v3573, %v3531
    %v3575 = vadd.f32 %v3574, %v3533
    %v3576 = vadd.f32 %v3575, %v3535
    %v3577 = vadd.f32 %v3576, %v3537
    %v3578 = vadd.f32 %v3577, %v3539
    %v3579 = vadd.f32 %v3578, %v3541
    %v3580 = vadd.f32 %v3579, %v3543
    %v3581 = vadd.f32 %v3580, %v3545
    %v3582 = vadd.f32 %v3581, %v3547
    %v3583 = vadd.f32 %v3582, %v3549
    %v3584 = vadd.f32 %v3583, %v3551
    %v3585 = vadd.f32 %v3584, %v3553
    %v3586 = vrot.slane %v3585, 4
    %v3587 = vadd.f32 %v3585, %v3586
    %v3588 = vrot.slane %v3587, 2
    %v3589 = vadd.f32 %v3587, %v3588
    %v3590 = vrot.slane %v3589, 1
    %v3591 = vadd.f32 %v3589, %v3590
    %v3592 = vadd.f32 %v3492, %v3494
    %v3593 = vadd.f32 %v3592, %v3496
    %v3594 = vadd.f32 %v3593, %v3498
    %v3595 = vadd.f32 %v3594, %v3500
    %v3596 = vadd.f32 %v3595, %v3502
    %v3597 = vadd.f32 %v3596, %v3504
    %v3598 = vadd.f32 %v3597, %v3506
    %v3599 = vadd.f32 %v3598, %v3508
    %v3600 = vadd.f32 %v3599, %v3510
    %v3601 = vadd.f32 %v3600, %v3512
    %v3602 = vadd.f32 %v3601, %v3514
    %v3603 = vadd.f32 %v3602, %v3516
    %v3604 = vadd.f32 %v3603, %v3518
    %v3605 = vadd.f32 %v3604, %v3520
    %v3606 = vadd.f32 %v3605, %v3522
    %v3607 = vadd.f32 %v3606, %v3524
    %v3608 = vadd.f32 %v3607, %v3526
    %v3609 = vadd.f32 %v3608, %v3528
    %v3610 = vadd.f32 %v3609, %v3530
    %v3611 = vadd.f32 %v3610, %v3532
    %v3612 = vadd.f32 %v3611, %v3534
    %v3613 = vadd.f32 %v3612, %v3536
    %v3614 = vadd.f32 %v3613, %v3538
    %v3615 = vadd.f32 %v3614, %v3540
    %v3616 = vadd.f32 %v3615, %v3542
    %v3617 = vadd.f32 %v3616, %v3544
    %v3618 = vadd.f32 %v3617, %v3546
    %v3619 = vadd.f32 %v3618, %v3548
    %v3620 = vadd.f32 %v3619, %v3550
    %v3621 = vadd.f32 %v3620, %v3552
    %v3622 = vadd.f32 %v3621, %v3554
    %v3623 = vrot.slane %v3622, 4
    %v3624 = vadd.f32 %v3622, %v3623
    %v3625 = vrot.slane %v3624, 2
    %v3626 = vadd.f32 %v3624, %v3625
    %v3627 = vrot.slane %v3626, 1
    %v3628 = vadd.f32 %v3626, %v3627
    %v3629 = vmul.f32 %v3591, %v914
    %v3630 = vmul.f32 %v3628, %v914
    %v3631 = vadd.f32 %v3629, 1e-05
    %v3632 = vadd.f32 %v3630, 1e-05
    %v3633 = vrsqrt.pop %v3631
    %v3634 = vrsqrt.pop %v3632
    %v3635 = vmul.f32 %v3427, %v3633
    %v3636 = vmul.f32 %v3428, %v3634
    %v3637 = vmul.f32 %v3429, %v3633
    %v3638 = vmul.f32 %v3430, %v3634
    %v3639 = vmul.f32 %v3431, %v3633
    %v3640 = vmul.f32 %v3432, %v3634
    %v3641 = vmul.f32 %v3433, %v3633
    %v3642 = vmul.f32 %v3434, %v3634
    %v3643 = vmul.f32 %v3435, %v3633
    %v3644 = vmul.f32 %v3436, %v3634
    %v3645 = vmul.f32 %v3437, %v3633
    %v3646 = vmul.f32 %v3438, %v3634
    %v3647 = vmul.f32 %v3439, %v3633
    %v3648 = vmul.f32 %v3440, %v3634
    %v3649 = vmul.f32 %v3441, %v3633
    %v3650 = vmul.f32 %v3442, %v3634
    %v3651 = vmul.f32 %v3443, %v3633
    %v3652 = vmul.f32 %v3444, %v3634
    %v3653 = vmul.f32 %v3445, %v3633
    %v3654 = vmul.f32 %v3446, %v3634
    %v3655 = vmul.f32 %v3447, %v3633
    %v3656 = vmul.f32 %v3448, %v3634
    %v3657 = vmul.f32 %v3449, %v3633
    %v3658 = vmul.f32 %v3450, %v3634
    %v3659 = vmul.f32 %v3451, %v3633
    %v3660 = vmul.f32 %v3452, %v3634
    %v3661 = vmul.f32 %v3453, %v3633
    %v3662 = vmul.f32 %v3454, %v3634
    %v3663 = vmul.f32 %v3455, %v3633
    %v3664 = vmul.f32 %v3456, %v3634
    %v3665 = vmul.f32 %v3457, %v3633
    %v3666 = vmul.f32 %v3458, %v3634
    %v3667 = vmul.f32 %v3459, %v3633
    %v3668 = vmul.f32 %v3460, %v3634
    %v3669 = vmul.f32 %v3461, %v3633
    %v3670 = vmul.f32 %v3462, %v3634
    %v3671 = vmul.f32 %v3463, %v3633
    %v3672 = vmul.f32 %v3464, %v3634
    %v3673 = vmul.f32 %v3465, %v3633
    %v3674 = vmul.f32 %v3466, %v3634
    %v3675 = vmul.f32 %v3467, %v3633
    %v3676 = vmul.f32 %v3468, %v3634
    %v3677 = vmul.f32 %v3469, %v3633
    %v3678 = vmul.f32 %v3470, %v3634
    %v3679 = vmul.f32 %v3471, %v3633
    %v3680 = vmul.f32 %v3472, %v3634
    %v3681 = vmul.f32 %v3473, %v3633
    %v3682 = vmul.f32 %v3474, %v3634
    %v3683 = vmul.f32 %v3475, %v3633
    %v3684 = vmul.f32 %v3476, %v3634
    %v3685 = vmul.f32 %v3477, %v3633
    %v3686 = vmul.f32 %v3478, %v3634
    %v3687 = vmul.f32 %v3479, %v3633
    %v3688 = vmul.f32 %v3480, %v3634
    %v3689 = vmul.f32 %v3481, %v3633
    %v3690 = vmul.f32 %v3482, %v3634
    %v3691 = vmul.f32 %v3483, %v3633
    %v3692 = vmul.f32 %v3484, %v3634
    %v3693 = vmul.f32 %v3485, %v3633
    %v3694 = vmul.f32 %v3486, %v3634
    %v3695 = vmul.f32 %v3487, %v3633
    %v3696 = vmul.f32 %v3488, %v3634
    %v3697 = vmul.f32 %v3489, %v3633
    %v3698 = vmul.f32 %v3490, %v3634
    %v3699 = vmax.f32 %v3635, 0.0
    %v3700 = vmax.f32 %v3636, 0.0
    %v3701 = vmax.f32 %v3637, 0.0
    %v3702 = vmax.f32 %v3638, 0.0
    %v3703 = vmax.f32 %v3639, 0.0
    %v3704 = vmax.f32 %v3640, 0.0
    %v3705 = vmax.f32 %v3641, 0.0
    %v3706 = vmax.f32 %v3642, 0.0
    %v3707 = vmax.f32 %v3643, 0.0
    %v3708 = vmax.f32 %v3644, 0.0
    %v3709 = vmax.f32 %v3645, 0.0
    %v3710 = vmax.f32 %v3646, 0.0
    %v3711 = vmax.f32 %v3647, 0.0
    %v3712 = vmax.f32 %v3648, 0.0
    %v3713 = vmax.f32 %v3649, 0.0
    %v3714 = vmax.f32 %v3650, 0.0
    %v3715 = vmax.f32 %v3651, 0.0
    %v3716 = vmax.f32 %v3652, 0.0
    %v3717 = vmax.f32 %v3653, 0.0
    %v3718 = vmax.f32 %v3654, 0.0
    %v3719 = vmax.f32 %v3655, 0.0
    %v3720 = vmax.f32 %v3656, 0.0
    %v3721 = vmax.f32 %v3657, 0.0
    %v3722 = vmax.f32 %v3658, 0.0
    %v3723 = vmax.f32 %v3659, 0.0
    %v3724 = vmax.f32 %v3660, 0.0
    %v3725 = vmax.f32 %v3661, 0.0
    %v3726 = vmax.f32 %v3662, 0.0
    %v3727 = vmax.f32 %v3663, 0.0
    %v3728 = vmax.f32 %v3664, 0.0
    %v3729 = vmax.f32 %v3665, 0.0
    %v3730 = vmax.f32 %v3666, 0.0
    %v3731 = vmax.f32 %v3667, 0.0
    %v3732 = vmax.f32 %v3668, 0.0
    %v3733 = vmax.f32 %v3669, 0.0
    %v3734 = vmax.f32 %v3670, 0.0
    %v3735 = vmax.f32 %v3671, 0.0
    %v3736 = vmax.f32 %v3672, 0.0
    %v3737 = vmax.f32 %v3673, 0.0
    %v3738 = vmax.f32 %v3674, 0.0
    %v3739 = vmax.f32 %v3675, 0.0
    %v3740 = vmax.f32 %v3676, 0.0
    %v3741 = vmax.f32 %v3677, 0.0
    %v3742 = vmax.f32 %v3678, 0.0
    %v3743 = vmax.f32 %v3679, 0.0
    %v3744 = vmax.f32 %v3680, 0.0
    %v3745 = vmax.f32 %v3681, 0.0
    %v3746 = vmax.f32 %v3682, 0.0
    %v3747 = vmax.f32 %v3683, 0.0
    %v3748 = vmax.f32 %v3684, 0.0
    %v3749 = vmax.f32 %v3685, 0.0
    %v3750 = vmax.f32 %v3686, 0.0
    %v3751 = vmax.f32 %v3687, 0.0
    %v3752 = vmax.f32 %v3688, 0.0
    %v3753 = vmax.f32 %v3689, 0.0
    %v3754 = vmax.f32 %v3690, 0.0
    %v3755 = vmax.f32 %v3691, 0.0
    %v3756 = vmax.f32 %v3692, 0.0
    %v3757 = vmax.f32 %v3693, 0.0
    %v3758 = vmax.f32 %v3694, 0.0
    %v3759 = vmax.f32 %v3695, 0.0
    %v3760 = vmax.f32 %v3696, 0.0
    %v3761 = vmax.f32 %v3697, 0.0
    %v3762 = vmax.f32 %v3698, 0.0
    %v3763 = vpack.c.bf16 %v3701, %v3699
    %v3764 = vpack.c.bf16 %v3702, %v3700
    %v3765 = vpack.c.bf16 %v3705, %v3703
    %v3766 = vpack.c.bf16 %v3706, %v3704
    %v3767 = vpack.c.bf16 %v3709, %v3707
    %v3768 = vpack.c.bf16 %v3710, %v3708
    %v3769 = vpack.c.bf16 %v3713, %v3711
    %v3770 = vpack.c.bf16 %v3714, %v3712
    %v3771 = vpack.c.bf16 %v3717, %v3715
    %v3772 = vpack.c.bf16 %v3718, %v3716
    %v3773 = vpack.c.bf16 %v3721, %v3719
    %v3774 = vpack.c.bf16 %v3722, %v3720
    %v3775 = vpack.c.bf16 %v3725, %v3723
    %v3776 = vpack.c.bf16 %v3726, %v3724
    %v3777 = vpack.c.bf16 %v3729, %v3727
    %v3778 = vpack.c.bf16 %v3730, %v3728
    %v3779 = vpack.c.bf16 %v3733, %v3731
    %v3780 = vpack.c.bf16 %v3734, %v3732
    %v3781 = vpack.c.bf16 %v3737, %v3735
    %v3782 = vpack.c.bf16 %v3738, %v3736
    %v3783 = vpack.c.bf16 %v3741, %v3739
    %v3784 = vpack.c.bf16 %v3742, %v3740
    %v3785 = vpack.c.bf16 %v3745, %v3743
    %v3786 = vpack.c.bf16 %v3746, %v3744
    %v3787 = vpack.c.bf16 %v3749, %v3747
    %v3788 = vpack.c.bf16 %v3750, %v3748
    %v3789 = vpack.c.bf16 %v3753, %v3751
    %v3790 = vpack.c.bf16 %v3754, %v3752
    %v3791 = vpack.c.bf16 %v3757, %v3755
    %v3792 = vpack.c.bf16 %v3758, %v3756
    %v3793 = vpack.c.bf16 %v3761, %v3759
    %v3794 = vpack.c.bf16 %v3762, %v3760
    %v3795 = vld [vmem:[#allocation5 + $0x1e8] sm:$0xf]
    %v3796 = vld [vmem:[#allocation5 + $0x1ec] sm:$0xf]
    %v3797 = vld [vmem:[#allocation5 + $0x1f0] sm:$0xf]
    %v3798 = vld [vmem:[#allocation5 + $0x1f4] sm:$0xf]
    %v3799 = vld [vmem:[#allocation5 + $0x1f8] sm:$0xf]
    %v3800 = vld [vmem:[#allocation5 + $0x1fc] sm:$0xf]
    %v3801 = vld [vmem:[#allocation5 + $0x200] sm:$0xf]
    %v3802 = vld [vmem:[#allocation5 + $0x204] sm:$0xf]
    %v3803 = vld [vmem:[#allocation5 + $0x208] sm:$0xf]
    %v3804 = vld [vmem:[#allocation5 + $0x20c] sm:$0xf]
    %v3805 = vld [vmem:[#allocation5 + $0x210] sm:$0xf]
    %v3806 = vld [vmem:[#allocation5 + $0x214] sm:$0xf]
    %v3807 = vld [vmem:[#allocation5 + $0x218] sm:$0xf]
    %v3808 = vld [vmem:[#allocation5 + $0x21c] sm:$0xf]
    %v3809 = vld [vmem:[#allocation5 + $0x220] sm:$0xf]
    %v3810 = vld [vmem:[#allocation5 + $0x224] sm:$0xf]
    %v3811 = vld [vmem:[#allocation5 + $0x228] sm:$0xf]
    %v3812 = vld [vmem:[#allocation5 + $0x22c] sm:$0xf]
    %v3813 = vld [vmem:[#allocation5 + $0x230] sm:$0xf]
    %v3814 = vld [vmem:[#allocation5 + $0x234] sm:$0xf]
    %v3815 = vld [vmem:[#allocation5 + $0x238] sm:$0xf]
    %v3816 = vld [vmem:[#allocation5 + $0x23c] sm:$0xf]
    %v3817 = vld [vmem:[#allocation5 + $0x240] sm:$0xf]
    %v3818 = vld [vmem:[#allocation5 + $0x244] sm:$0xf]
    %v3819 = vld [vmem:[#allocation5 + $0x248] sm:$0xf]
    %v3820 = vld [vmem:[#allocation5 + $0x24c] sm:$0xf]
    %v3821 = vld [vmem:[#allocation5 + $0x250] sm:$0xf]
    %v3822 = vld [vmem:[#allocation5 + $0x254] sm:$0xf]
    %v3823 = vld [vmem:[#allocation5 + $0x258] sm:$0xf]
    %v3824 = vld [vmem:[#allocation5 + $0x25c] sm:$0xf]
    %v3825 = vld [vmem:[#allocation5 + $0x260] sm:$0xf]
    %v3826 = vld [vmem:[#allocation5 + $0x264] sm:$0xf]
    %v3827 = vld [vmem:[#allocation7 + $0x7] sm:$0x1]
    %v3828 = vlaneseq
    %v3829 = vshrl.u32 %v3828, 7
    %v3830 = vsub.s32 0, %v3829
    %v3831 = vrot.slane %v3827, %v3830
    %v3864 = vunpack.c.l.b16 %v3795
    %v3865 = vunpack.c.l.b16 %v3796
    %v3866 = vunpack.c.l.b16 %v3797
    %v3867 = vunpack.c.l.b16 %v3798
    %v3868 = vunpack.c.l.b16 %v3799
    %v3869 = vunpack.c.l.b16 %v3800
    %v3870 = vunpack.c.l.b16 %v3801
    %v3871 = vunpack.c.l.b16 %v3802
    %v3872 = vunpack.c.l.b16 %v3803
    %v3873 = vunpack.c.l.b16 %v3804
    %v3874 = vunpack.c.l.b16 %v3805
    %v3875 = vunpack.c.l.b16 %v3806
    %v3876 = vunpack.c.l.b16 %v3807
    %v3877 = vunpack.c.l.b16 %v3808
    %v3878 = vunpack.c.l.b16 %v3809
    %v3879 = vunpack.c.l.b16 %v3810
    %v3880 = vunpack.c.l.b16 %v3811
    %v3881 = vunpack.c.l.b16 %v3812
    %v3882 = vunpack.c.l.b16 %v3813
    %v3883 = vunpack.c.l.b16 %v3814
    %v3884 = vunpack.c.l.b16 %v3815
    %v3885 = vunpack.c.l.b16 %v3816
    %v3886 = vunpack.c.l.b16 %v3817
    %v3887 = vunpack.c.l.b16 %v3818
    %v3888 = vunpack.c.l.b16 %v3819
    %v3889 = vunpack.c.l.b16 %v3820
    %v3890 = vunpack.c.l.b16 %v3821
    %v3891 = vunpack.c.l.b16 %v3822
    %v3892 = vunpack.c.l.b16 %v3823
    %v3893 = vunpack.c.l.b16 %v3824
    %v3894 = vunpack.c.l.b16 %v3825
    %v3895 = vunpack.c.l.b16 %v3826
    %v3896 = vpack.c.b16 %v3865, %v3864
    %v3897 = vpack.c.b16 %v3867, %v3866
    %v3898 = vpack.c.b16 %v3869, %v3868
    %v3899 = vpack.c.b16 %v3871, %v3870
    %v3900 = vpack.c.b16 %v3873, %v3872
    %v3901 = vpack.c.b16 %v3875, %v3874
    %v3902 = vpack.c.b16 %v3877, %v3876
    %v3903 = vpack.c.b16 %v3879, %v3878
    %v3904 = vpack.c.b16 %v3881, %v3880
    %v3905 = vpack.c.b16 %v3883, %v3882
    %v3906 = vpack.c.b16 %v3885, %v3884
    %v3907 = vpack.c.b16 %v3887, %v3886
    %v3908 = vpack.c.b16 %v3889, %v3888
    %v3909 = vpack.c.b16 %v3891, %v3890
    %v3910 = vpack.c.b16 %v3893, %v3892
    %v3911 = vpack.c.b16 %v3895, %v3894
    %3928 = vmatprep.subr.bf16.mxu0 0
    %3929 = vmatpush1.bf16.msra.mxu0 %v3896
    %3930 = vmatprep.subr.bf16.mxu0 0
    %3931 = vmatpush1.bf16.msra.mxu0 %v3897
    %3932 = vmatprep.subr.bf16.mxu0 0
    %3933 = vmatpush1.bf16.msra.mxu0 %v3898
    %3934 = vmatprep.subr.bf16.mxu0 0
    %3935 = vmatpush1.bf16.msra.mxu0 %v3899
    %3936 = vmatprep.subr.bf16.mxu0 0
    %3937 = vmatpush1.bf16.msra.mxu0 %v3900
    %3938 = vmatprep.subr.bf16.mxu0 0
    %3939 = vmatpush1.bf16.msra.mxu0 %v3901
    %3940 = vmatprep.subr.bf16.mxu0 0
    %3941 = vmatpush1.bf16.msra.mxu0 %v3902
    %3942 = vmatprep.subr.bf16.mxu0 0
    %3943 = vmatpush1.bf16.msra.mxu0 %v3903
    %3944 = vmatprep.subr.bf16.mxu0 0
    %3945 = vmatpush1.bf16.msra.mxu0 %v3904
    %3946 = vmatprep.subr.bf16.mxu0 0
    %3947 = vmatpush1.bf16.msra.mxu0 %v3905
    %3948 = vmatprep.subr.bf16.mxu0 0
    %3949 = vmatpush1.bf16.msra.mxu0 %v3906
    %3950 = vmatprep.subr.bf16.mxu0 0
    %3951 = vmatpush1.bf16.msra.mxu0 %v3907
    %3952 = vmatprep.subr.bf16.mxu0 0
    %3953 = vmatpush1.bf16.msra.mxu0 %v3908
    %3954 = vmatprep.subr.bf16.mxu0 0
    %3955 = vmatpush1.bf16.msra.mxu0 %v3909
    %3956 = vmatprep.subr.bf16.mxu0 0
    %3957 = vmatpush1.bf16.msra.mxu0 %v3910
    %3958 = vmatprep.subr.bf16.mxu0 0
    %3959 = vmatpush1.bf16.msra.mxu0 %v3911
    %3960 = vmatprep.mubr.bf16.mxu0 %v3764
    %3961 = vmatmul.mubr.bf16.gmra.mrb[0].mxu0 %v3763
    %v3962 = vpop.f32.mrb[0].mxu0
    %v3963 = vadd.f32 %v3831, %v3962
    %v3964 = vpop.f32.mrb[0].mxu0
    %v3965 = vpop.f32.mrb[0].mxu0
    %v3966 = vadd.f32 %v3831, %v3965
    %v3967 = vpop.f32.mrb[0].mxu0
    %3968 = vmatprep.mubr.bf16.mxu0 %v3766
    %3969 = vmatmul.mubr.bf16.gmra.mrb[0].mxu0 %v3765
    %v3970 = vpop.f32.mrb[0].mxu0
    %v3971 = vadd.f32 %v3831, %v3970
    %v3972 = vpop.f32.mrb[0].mxu0
    %v3973 = vpop.f32.mrb[0].mxu0
    %v3974 = vadd.f32 %v3831, %v3973
    %v3975 = vpop.f32.mrb[0].mxu0
    %3976 = vmatprep.mubr.bf16.mxu0 %v3768
    %3977 = vmatmul.mubr.bf16.gmra.mrb[0].mxu0 %v3767
    %v3978 = vpop.f32.mrb[0].mxu0
    %v3979 = vadd.f32 %v3831, %v3978
    %v3980 = vpop.f32.mrb[0].mxu0
    %v3981 = vpop.f32.mrb[0].mxu0
    %v3982 = vadd.f32 %v3831, %v3981
    %v3983 = vpop.f32.mrb[0].mxu0
    %3984 = vmatprep.mubr.bf16.mxu0 %v3770
    %3985 = vmatmul.mubr.bf16.gmra.mrb[0].mxu0 %v3769
    %v3986 = vpop.f32.mrb[0].mxu0
    %v3987 = vadd.f32 %v3831, %v3986
    %v3988 = vpop.f32.mrb[0].mxu0
    %v3989 = vpop.f32.mrb[0].mxu0
    %v3990 = vadd.f32 %v3831, %v3989
    %v3991 = vpop.f32.mrb[0].mxu0
    %3992 = vmatprep.mubr.bf16.mxu0 %v3772
    %3993 = vmatmul.mubr.bf16.gmra.mrb[0].mxu0 %v3771
    %v3994 = vpop.f32.mrb[0].mxu0
    %v3995 = vadd.f32 %v3831, %v3994
    %v3996 = vpop.f32.mrb[0].mxu0
    %v3997 = vpop.f32.mrb[0].mxu0
    %v3998 = vadd.f32 %v3831, %v3997
    %v3999 = vpop.f32.mrb[0].mxu0
    %4000 = vmatprep.mubr.bf16.mxu0 %v3774
    %4001 = vmatmul.mubr.bf16.gmra.mrb[0].mxu0 %v3773
    %v4002 = vpop.f32.mrb[0].mxu0
    %v4003 = vadd.f32 %v3831, %v4002
    %v4004 = vpop.f32.mrb[0].mxu0
    %v4005 = vpop.f32.mrb[0].mxu0
    %v4006 = vadd.f32 %v3831, %v4005
    %v4007 = vpop.f32.mrb[0].mxu0
    %4008 = vmatprep.mubr.bf16.mxu0 %v3776
    %4009 = vmatmul.mubr.bf16.gmra.mrb[0].mxu0 %v3775
    %v4010 = vpop.f32.mrb[0].mxu0
    %v4011 = vadd.f32 %v3831, %v4010
    %v4012 = vpop.f32.mrb[0].mxu0
    %v4013 = vpop.f32.mrb[0].mxu0
    %v4014 = vadd.f32 %v3831, %v4013
    %v4015 = vpop.f32.mrb[0].mxu0
    %4016 = vmatprep.mubr.bf16.mxu0 %v3778
    %4017 = vmatmul.mubr.bf16.gmra.mrb[0].mxu0 %v3777
    %v4018 = vpop.f32.mrb[0].mxu0
    %v4019 = vadd.f32 %v3831, %v4018
    %v4020 = vpop.f32.mrb[0].mxu0
    %v4021 = vpop.f32.mrb[0].mxu0
    %v4022 = vadd.f32 %v3831, %v4021
    %v4023 = vpop.f32.mrb[0].mxu0
    %4024 = vmatprep.mubr.bf16.mxu0 %v3780
    %4025 = vmatmul.mubr.bf16.gmra.mrb[0].mxu0 %v3779
    %v4026 = vpop.f32.mrb[0].mxu0
    %v4027 = vadd.f32 %v3831, %v4026
    %v4028 = vpop.f32.mrb[0].mxu0
    %v4029 = vpop.f32.mrb[0].mxu0
    %v4030 = vadd.f32 %v3831, %v4029
    %v4031 = vpop.f32.mrb[0].mxu0
    %4032 = vmatprep.mubr.bf16.mxu0 %v3782
    %4033 = vmatmul.mubr.bf16.gmra.mrb[0].mxu0 %v3781
    %v4034 = vpop.f32.mrb[0].mxu0
    %v4035 = vadd.f32 %v3831, %v4034
    %v4036 = vpop.f32.mrb[0].mxu0
    %v4037 = vpop.f32.mrb[0].mxu0
    %v4038 = vadd.f32 %v3831, %v4037
    %v4039 = vpop.f32.mrb[0].mxu0
    %4040 = vmatprep.mubr.bf16.mxu0 %v3784
    %4041 = vmatmul.mubr.bf16.gmra.mrb[0].mxu0 %v3783
    %v4042 = vpop.f32.mrb[0].mxu0
    %v4043 = vadd.f32 %v3831, %v4042
    %v4044 = vpop.f32.mrb[0].mxu0
    %v4045 = vpop.f32.mrb[0].mxu0
    %v4046 = vadd.f32 %v3831, %v4045
    %v4047 = vpop.f32.mrb[0].mxu0
    %4048 = vmatprep.mubr.bf16.mxu0 %v3786
    %4049 = vmatmul.mubr.bf16.gmra.mrb[0].mxu0 %v3785
    %v4050 = vpop.f32.mrb[0].mxu0
    %v4051 = vadd.f32 %v3831, %v4050
    %v4052 = vpop.f32.mrb[0].mxu0
    %v4053 = vpop.f32.mrb[0].mxu0
    %v4054 = vadd.f32 %v3831, %v4053
    %v4055 = vpop.f32.mrb[0].mxu0
    %4056 = vmatprep.mubr.bf16.mxu0 %v3788
    %4057 = vmatmul.mubr.bf16.gmra.mrb[0].mxu0 %v3787
    %v4058 = vpop.f32.mrb[0].mxu0
    %v4059 = vadd.f32 %v3831, %v4058
    %v4060 = vpop.f32.mrb[0].mxu0
    %v4061 = vpop.f32.mrb[0].mxu0
    %v4062 = vadd.f32 %v3831, %v4061
    %v4063 = vpop.f32.mrb[0].mxu0
    %4064 = vmatprep.mubr.bf16.mxu0 %v3790
    %4065 = vmatmul.mubr.bf16.gmra.mrb[0].mxu0 %v3789
    %v4066 = vpop.f32.mrb[0].mxu0
    %v4067 = vadd.f32 %v3831, %v4066
    %v4068 = vpop.f32.mrb[0].mxu0
    %v4069 = vpop.f32.mrb[0].mxu0
    %v4070 = vadd.f32 %v3831, %v4069
    %v4071 = vpop.f32.mrb[0].mxu0
    %4072 = vmatprep.mubr.bf16.mxu0 %v3792
    %4073 = vmatmul.mubr.bf16.gmra.mrb[0].mxu0 %v3791
    %v4074 = vpop.f32.mrb[0].mxu0
    %v4075 = vadd.f32 %v3831, %v4074
    %v4076 = vpop.f32.mrb[0].mxu0
    %v4077 = vpop.f32.mrb[0].mxu0
    %v4078 = vadd.f32 %v3831, %v4077
    %v4079 = vpop.f32.mrb[0].mxu0
    %4080 = vmatprep.mubr.bf16.mxu0 %v3794
    %4081 = vmatmul.mubr.bf16.gmra.mrb[0].mxu0 %v3793
    %v4082 = vpop.f32.mrb[0].mxu0
    %v4083 = vadd.f32 %v3831, %v4082
    %v4084 = vpop.f32.mrb[0].mxu0
    %v4085 = vpop.f32.mrb[0].mxu0
    %v4086 = vadd.f32 %v3831, %v4085
    %v4087 = vpop.f32.mrb[0].mxu0
    %4088 = vdwg.mxu0
    %v4089 = vld [vmem:[#allocation5 + $0x268] sm:$0xf]
    %v4090 = vld [vmem:[#allocation5 + $0x26c] sm:$0xf]
    %v4091 = vld [vmem:[#allocation5 + $0x270] sm:$0xf]
    %v4092 = vld [vmem:[#allocation5 + $0x274] sm:$0xf]
    %v4093 = vld [vmem:[#allocation5 + $0x278] sm:$0xf]
    %v4094 = vld [vmem:[#allocation5 + $0x27c] sm:$0xf]
    %v4095 = vld [vmem:[#allocation5 + $0x280] sm:$0xf]
    %v4096 = vld [vmem:[#allocation5 + $0x284] sm:$0xf]
    %v4097 = vld [vmem:[#allocation5 + $0x288] sm:$0xf]
    %v4098 = vld [vmem:[#allocation5 + $0x28c] sm:$0xf]
    %v4099 = vld [vmem:[#allocation5 + $0x290] sm:$0xf]
    %v4100 = vld [vmem:[#allocation5 + $0x294] sm:$0xf]
    %v4101 = vld [vmem:[#allocation5 + $0x298] sm:$0xf]
    %v4102 = vld [vmem:[#allocation5 + $0x29c] sm:$0xf]
    %v4103 = vld [vmem:[#allocation5 + $0x2a0] sm:$0xf]
    %v4104 = vld [vmem:[#allocation5 + $0x2a4] sm:$0xf]
    %v4105 = vld [vmem:[#allocation5 + $0x2a8] sm:$0xf]
    %v4106 = vld [vmem:[#allocation5 + $0x2ac] sm:$0xf]
    %v4107 = vld [vmem:[#allocation5 + $0x2b0] sm:$0xf]
    %v4108 = vld [vmem:[#allocation5 + $0x2b4] sm:$0xf]
    %v4109 = vld [vmem:[#allocation5 + $0x2b8] sm:$0xf]
    %v4110 = vld [vmem:[#allocation5 + $0x2bc] sm:$0xf]
    %v4111 = vld [vmem:[#allocation5 + $0x2c0] sm:$0xf]
    %v4112 = vld [vmem:[#allocation5 + $0x2c4] sm:$0xf]
    %v4113 = vld [vmem:[#allocation5 + $0x2c8] sm:$0xf]
    %v4114 = vld [vmem:[#allocation5 + $0x2cc] sm:$0xf]
    %v4115 = vld [vmem:[#allocation5 + $0x2d0] sm:$0xf]
    %v4116 = vld [vmem:[#allocation5 + $0x2d4] sm:$0xf]
    %v4117 = vld [vmem:[#allocation5 + $0x2d8] sm:$0xf]
    %v4118 = vld [vmem:[#allocation5 + $0x2dc] sm:$0xf]
    %v4119 = vld [vmem:[#allocation5 + $0x2e0] sm:$0xf]
    %v4120 = vld [vmem:[#allocation5 + $0x2e4] sm:$0xf]
    %v4121 = vld [vmem:[#allocation7 + $0x8] sm:$0x1]
    %v4122 = vlaneseq
    %v4123 = vshrl.u32 %v4122, 7
    %v4124 = vsub.s32 0, %v4123
    %v4125 = vrot.slane %v4121, %v4124
    %v4158 = vunpack.c.l.b16 %v4089
    %v4159 = vunpack.c.l.b16 %v4090
    %v4160 = vunpack.c.l.b16 %v4091
    %v4161 = vunpack.c.l.b16 %v4092
    %v4162 = vunpack.c.l.b16 %v4093
    %v4163 = vunpack.c.l.b16 %v4094
    %v4164 = vunpack.c.l.b16 %v4095
    %v4165 = vunpack.c.l.b16 %v4096
    %v4166 = vunpack.c.l.b16 %v4097
    %v4167 = vunpack.c.l.b16 %v4098
    %v4168 = vunpack.c.l.b16 %v4099
    %v4169 = vunpack.c.l.b16 %v4100
    %v4170 = vunpack.c.l.b16 %v4101
    %v4171 = vunpack.c.l.b16 %v4102
    %v4172 = vunpack.c.l.b16 %v4103
    %v4173 = vunpack.c.l.b16 %v4104
    %v4174 = vunpack.c.l.b16 %v4105
    %v4175 = vunpack.c.l.b16 %v4106
    %v4176 = vunpack.c.l.b16 %v4107
    %v4177 = vunpack.c.l.b16 %v4108
    %v4178 = vunpack.c.l.b16 %v4109
    %v4179 = vunpack.c.l.b16 %v4110
    %v4180 = vunpack.c.l.b16 %v4111
    %v4181 = vunpack.c.l.b16 %v4112
    %v4182 = vunpack.c.l.b16 %v4113
    %v4183 = vunpack.c.l.b16 %v4114
    %v4184 = vunpack.c.l.b16 %v4115
    %v4185 = vunpack.c.l.b16 %v4116
    %v4186 = vunpack.c.l.b16 %v4117
    %v4187 = vunpack.c.l.b16 %v4118
    %v4188 = vunpack.c.l.b16 %v4119
    %v4189 = vunpack.c.l.b16 %v4120
    %v4190 = vpack.c.b16 %v4159, %v4158
    %v4191 = vpack.c.b16 %v4161, %v4160
    %v4192 = vpack.c.b16 %v4163, %v4162
    %v4193 = vpack.c.b16 %v4165, %v4164
    %v4194 = vpack.c.b16 %v4167, %v4166
    %v4195 = vpack.c.b16 %v4169, %v4168
    %v4196 = vpack.c.b16 %v4171, %v4170
    %v4197 = vpack.c.b16 %v4173, %v4172
    %v4198 = vpack.c.b16 %v4175, %v4174
    %v4199 = vpack.c.b16 %v4177, %v4176
    %v4200 = vpack.c.b16 %v4179, %v4178
    %v4201 = vpack.c.b16 %v4181, %v4180
    %v4202 = vpack.c.b16 %v4183, %v4182
    %v4203 = vpack.c.b16 %v4185, %v4184
    %v4204 = vpack.c.b16 %v4187, %v4186
    %v4205 = vpack.c.b16 %v4189, %v4188
    %4222 = vmatprep.subr.bf16.mxu0 0
    %4223 = vmatpush1.bf16.msra.mxu0 %v4190
    %4224 = vmatprep.subr.bf16.mxu0 0
    %4225 = vmatpush1.bf16.msra.mxu0 %v4191
    %4226 = vmatprep.subr.bf16.mxu0 0
    %4227 = vmatpush1.bf16.msra.mxu0 %v4192
    %4228 = vmatprep.subr.bf16.mxu0 0
    %4229 = vmatpush1.bf16.msra.mxu0 %v4193
    %4230 = vmatprep.subr.bf16.mxu0 0
    %4231 = vmatpush1.bf16.msra.mxu0 %v4194
    %4232 = vmatprep.subr.bf16.mxu0 0
    %4233 = vmatpush1.bf16.msra.mxu0 %v4195
    %4234 = vmatprep.subr.bf16.mxu0 0
    %4235 = vmatpush1.bf16.msra.mxu0 %v4196
    %4236 = vmatprep.subr.bf16.mxu0 0
    %4237 = vmatpush1.bf16.msra.mxu0 %v4197
    %4238 = vmatprep.subr.bf16.mxu0 0
    %4239 = vmatpush1.bf16.msra.mxu0 %v4198
    %4240 = vmatprep.subr.bf16.mxu0 0
    %4241 = vmatpush1.bf16.msra.mxu0 %v4199
    %4242 = vmatprep.subr.bf16.mxu0 0
    %4243 = vmatpush1.bf16.msra.mxu0 %v4200
    %4244 = vmatprep.subr.bf16.mxu0 0
    %4245 = vmatpush1.bf16.msra.mxu0 %v4201
    %4246 = vmatprep.subr.bf16.mxu0 0
    %4247 = vmatpush1.bf16.msra.mxu0 %v4202
    %4248 = vmatprep.subr.bf16.mxu0 0
    %4249 = vmatpush1.bf16.msra.mxu0 %v4203
    %4250 = vmatprep.subr.bf16.mxu0 0
    %4251 = vmatpush1.bf16.msra.mxu0 %v4204
    %4252 = vmatprep.subr.bf16.mxu0 0
    %4253 = vmatpush1.bf16.msra.mxu0 %v4205
    %4254 = vmatprep.mubr.bf16.mxu0 %v3764
    %4255 = vmatmul.mubr.bf16.gmra.mrb[0].mxu0 %v3763
    %v4256 = vpop.f32.mrb[0].mxu0
    %v4257 = vadd.f32 %v4125, %v4256
    %v4258 = vpop.f32.mrb[0].mxu0
    %v4259 = vpop.f32.mrb[0].mxu0
    %v4260 = vadd.f32 %v4125, %v4259
    %v4261 = vpop.f32.mrb[0].mxu0
    %4262 = vmatprep.mubr.bf16.mxu0 %v3766
    %4263 = vmatmul.mubr.bf16.gmra.mrb[0].mxu0 %v3765
    %v4264 = vpop.f32.mrb[0].mxu0
    %v4265 = vadd.f32 %v4125, %v4264
    %v4266 = vpop.f32.mrb[0].mxu0
    %v4267 = vpop.f32.mrb[0].mxu0
    %v4268 = vadd.f32 %v4125, %v4267
    %v4269 = vpop.f32.mrb[0].mxu0
    %4270 = vmatprep.mubr.bf16.mxu0 %v3768
    %4271 = vmatmul.mubr.bf16.gmra.mrb[0].mxu0 %v3767
    %v4272 = vpop.f32.mrb[0].mxu0
    %v4273 = vadd.f32 %v4125, %v4272
    %v4274 = vpop.f32.mrb[0].mxu0
    %v4275 = vpop.f32.mrb[0].mxu0
    %v4276 = vadd.f32 %v4125, %v4275
    %v4277 = vpop.f32.mrb[0].mxu0
    %4278 = vmatprep.mubr.bf16.mxu0 %v3770
    %4279 = vmatmul.mubr.bf16.gmra.mrb[0].mxu0 %v3769
    %v4280 = vpop.f32.mrb[0].mxu0
    %v4281 = vadd.f32 %v4125, %v4280
    %v4282 = vpop.f32.mrb[0].mxu0
    %v4283 = vpop.f32.mrb[0].mxu0
    %v4284 = vadd.f32 %v4125, %v4283
    %v4285 = vpop.f32.mrb[0].mxu0
    %4286 = vmatprep.mubr.bf16.mxu0 %v3772
    %4287 = vmatmul.mubr.bf16.gmra.mrb[0].mxu0 %v3771
    %v4288 = vpop.f32.mrb[0].mxu0
    %v4289 = vadd.f32 %v4125, %v4288
    %v4290 = vpop.f32.mrb[0].mxu0
    %v4291 = vpop.f32.mrb[0].mxu0
    %v4292 = vadd.f32 %v4125, %v4291
    %v4293 = vpop.f32.mrb[0].mxu0
    %4294 = vmatprep.mubr.bf16.mxu0 %v3774
    %4295 = vmatmul.mubr.bf16.gmra.mrb[0].mxu0 %v3773
    %v4296 = vpop.f32.mrb[0].mxu0
    %v4297 = vadd.f32 %v4125, %v4296
    %v4298 = vpop.f32.mrb[0].mxu0
    %v4299 = vpop.f32.mrb[0].mxu0
    %v4300 = vadd.f32 %v4125, %v4299
    %v4301 = vpop.f32.mrb[0].mxu0
    %4302 = vmatprep.mubr.bf16.mxu0 %v3776
    %4303 = vmatmul.mubr.bf16.gmra.mrb[0].mxu0 %v3775
    %v4304 = vpop.f32.mrb[0].mxu0
    %v4305 = vadd.f32 %v4125, %v4304
    %v4306 = vpop.f32.mrb[0].mxu0
    %v4307 = vpop.f32.mrb[0].mxu0
    %v4308 = vadd.f32 %v4125, %v4307
    %v4309 = vpop.f32.mrb[0].mxu0
    %4310 = vmatprep.mubr.bf16.mxu0 %v3778
    %4311 = vmatmul.mubr.bf16.gmra.mrb[0].mxu0 %v3777
    %v4312 = vpop.f32.mrb[0].mxu0
    %v4313 = vadd.f32 %v4125, %v4312
    %v4314 = vpop.f32.mrb[0].mxu0
    %v4315 = vpop.f32.mrb[0].mxu0
    %v4316 = vadd.f32 %v4125, %v4315
    %v4317 = vpop.f32.mrb[0].mxu0
    %4318 = vmatprep.mubr.bf16.mxu0 %v3780
    %4319 = vmatmul.mubr.bf16.gmra.mrb[0].mxu0 %v3779
    %v4320 = vpop.f32.mrb[0].mxu0
    %v4321 = vadd.f32 %v4125, %v4320
    %v4322 = vpop.f32.mrb[0].mxu0
    %v4323 = vpop.f32.mrb[0].mxu0
    %v4324 = vadd.f32 %v4125, %v4323
    %v4325 = vpop.f32.mrb[0].mxu0
    %4326 = vmatprep.mubr.bf16.mxu0 %v3782
    %4327 = vmatmul.mubr.bf16.gmra.mrb[0].mxu0 %v3781
    %v4328 = vpop.f32.mrb[0].mxu0
    %v4329 = vadd.f32 %v4125, %v4328
    %v4330 = vpop.f32.mrb[0].mxu0
    %v4331 = vpop.f32.mrb[0].mxu0
    %v4332 = vadd.f32 %v4125, %v4331
    %v4333 = vpop.f32.mrb[0].mxu0
    %4334 = vmatprep.mubr.bf16.mxu0 %v3784
    %4335 = vmatmul.mubr.bf16.gmra.mrb[0].mxu0 %v3783
    %v4336 = vpop.f32.mrb[0].mxu0
    %v4337 = vadd.f32 %v4125, %v4336
    %v4338 = vpop.f32.mrb[0].mxu0
    %v4339 = vpop.f32.mrb[0].mxu0
    %v4340 = vadd.f32 %v4125, %v4339
    %v4341 = vpop.f32.mrb[0].mxu0
    %4342 = vmatprep.mubr.bf16.mxu0 %v3786
    %4343 = vmatmul.mubr.bf16.gmra.mrb[0].mxu0 %v3785
    %v4344 = vpop.f32.mrb[0].mxu0
    %v4345 = vadd.f32 %v4125, %v4344
    %v4346 = vpop.f32.mrb[0].mxu0
    %v4347 = vpop.f32.mrb[0].mxu0
    %v4348 = vadd.f32 %v4125, %v4347
    %v4349 = vpop.f32.mrb[0].mxu0
    %4350 = vmatprep.mubr.bf16.mxu0 %v3788
    %4351 = vmatmul.mubr.bf16.gmra.mrb[0].mxu0 %v3787
    %v4352 = vpop.f32.mrb[0].mxu0
    %v4353 = vadd.f32 %v4125, %v4352
    %v4354 = vpop.f32.mrb[0].mxu0
    %v4355 = vpop.f32.mrb[0].mxu0
    %v4356 = vadd.f32 %v4125, %v4355
    %v4357 = vpop.f32.mrb[0].mxu0
    %4358 = vmatprep.mubr.bf16.mxu0 %v3790
    %4359 = vmatmul.mubr.bf16.gmra.mrb[0].mxu0 %v3789
    %v4360 = vpop.f32.mrb[0].mxu0
    %v4361 = vadd.f32 %v4125, %v4360
    %v4362 = vpop.f32.mrb[0].mxu0
    %v4363 = vpop.f32.mrb[0].mxu0
    %v4364 = vadd.f32 %v4125, %v4363
    %v4365 = vpop.f32.mrb[0].mxu0
    %4366 = vmatprep.mubr.bf16.mxu0 %v3792
    %4367 = vmatmul.mubr.bf16.gmra.mrb[0].mxu0 %v3791
    %v4368 = vpop.f32.mrb[0].mxu0
    %v4369 = vadd.f32 %v4125, %v4368
    %v4370 = vpop.f32.mrb[0].mxu0
    %v4371 = vpop.f32.mrb[0].mxu0
    %v4372 = vadd.f32 %v4125, %v4371
    %v4373 = vpop.f32.mrb[0].mxu0
    %4374 = vmatprep.mubr.bf16.mxu0 %v3794
    %4375 = vmatmul.mubr.bf16.gmra.mrb[0].mxu0 %v3793
    %v4376 = vpop.f32.mrb[0].mxu0
    %v4377 = vadd.f32 %v4125, %v4376
    %v4378 = vpop.f32.mrb[0].mxu0
    %v4379 = vpop.f32.mrb[0].mxu0
    %v4380 = vadd.f32 %v4125, %v4379
    %v4381 = vpop.f32.mrb[0].mxu0
    %4382 = vdwg.mxu0
    %4383 = vst [vmem:[#allocation8] sm:$0xff] %v3963
    %4384 = vst [vmem:[#allocation8 + $0x8] sm:$0xff] %v4257
    %4385 = vst [vmem:[#allocation8 + $0x10] sm:$0xff] %v3966
    %4386 = vst [vmem:[#allocation8 + $0x18] sm:$0xff] %v4260
    %4387 = vst [vmem:[#allocation8 + $0x20] sm:$0xff] %v3971
    %4388 = vst [vmem:[#allocation8 + $0x28] sm:$0xff] %v4265
    %4389 = vst [vmem:[#allocation8 + $0x30] sm:$0xff] %v3974
    %4390 = vst [vmem:[#allocation8 + $0x38] sm:$0xff] %v4268
    %4391 = vst [vmem:[#allocation8 + $0x40] sm:$0xff] %v3979
    %4392 = vst [vmem:[#allocation8 + $0x48] sm:$0xff] %v4273
    %4393 = vst [vmem:[#allocation8 + $0x50] sm:$0xff] %v3982
    %4394 = vst [vmem:[#allocation8 + $0x58] sm:$0xff] %v4276
    %4395 = vst [vmem:[#allocation8 + $0x60] sm:$0xff] %v3987
    %4396 = vst [vmem:[#allocation8 + $0x68] sm:$0xff] %v4281
    %4397 = vst [vmem:[#allocation8 + $0x70] sm:$0xff] %v3990
    %4398 = vst [vmem:[#allocation8 + $0x78] sm:$0xff] %v4284
    %4399 = vst [vmem:[#allocation8 + $0x80] sm:$0xff] %v3995
    %4400 = vst [vmem:[#allocation8 + $0x88] sm:$0xff] %v4289
    %4401 = vst [vmem:[#allocation8 + $0x90] sm:$0xff] %v3998
    %4402 = vst [vmem:[#allocation8 + $0x98] sm:$0xff] %v4292
    %4403 = vst [vmem:[#allocation8 + $0xa0] sm:$0xff] %v4003
    %4404 = vst [vmem:[#allocation8 + $0xa8] sm:$0xff] %v4297
    %4405 = vst [vmem:[#allocation8 + $0xb0] sm:$0xff] %v4006
    %4406 = vst [vmem:[#allocation8 + $0xb8] sm:$0xff] %v4300
    %4407 = vst [vmem:[#allocation8 + $0xc0] sm:$0xff] %v4011
    %4408 = vst [vmem:[#allocation8 + $0xc8] sm:$0xff] %v4305
    %4409 = vst [vmem:[#allocation8 + $0xd0] sm:$0xff] %v4014
    %4410 = vst [vmem:[#allocation8 + $0xd8] sm:$0xff] %v4308
    %4411 = vst [vmem:[#allocation8 + $0xe0] sm:$0xff] %v4019
    %4412 = vst [vmem:[#allocation8 + $0xe8] sm:$0xff] %v4313
    %4413 = vst [vmem:[#allocation8 + $0xf0] sm:$0xff] %v4022
    %4414 = vst [vmem:[#allocation8 + $0xf8] sm:$0xff] %v4316
    %4415 = vst [vmem:[#allocation8 + $0x100] sm:$0xff] %v4027
    %4416 = vst [vmem:[#allocation8 + $0x108] sm:$0xff] %v4321
    %4417 = vst [vmem:[#allocation8 + $0x110] sm:$0xff] %v4030
    %4418 = vst [vmem:[#allocation8 + $0x118] sm:$0xff] %v4324
    %4419 = vst [vmem:[#allocation8 + $0x120] sm:$0xff] %v4035
    %4420 = vst [vmem:[#allocation8 + $0x128] sm:$0xff] %v4329
    %4421 = vst [vmem:[#allocation8 + $0x130] sm:$0xff] %v4038
    %4422 = vst [vmem:[#allocation8 + $0x138] sm:$0xff] %v4332
    %4423 = vst [vmem:[#allocation8 + $0x140] sm:$0xff] %v4043
    %4424 = vst [vmem:[#allocation8 + $0x148] sm:$0xff] %v4337
    %4425 = vst [vmem:[#allocation8 + $0x150] sm:$0xff] %v4046
    %4426 = vst [vmem:[#allocation8 + $0x158] sm:$0xff] %v4340
    %4427 = vst [vmem:[#allocation8 + $0x160] sm:$0xff] %v4051
    %4428 = vst [vmem:[#allocation8 + $0x168] sm:$0xff] %v4345
    %4429 = vst [vmem:[#allocation8 + $0x170] sm:$0xff] %v4054
    %4430 = vst [vmem:[#allocation8 + $0x178] sm:$0xff] %v4348
    %4431 = vst [vmem:[#allocation8 + $0x180] sm:$0xff] %v4059
    %4432 = vst [vmem:[#allocation8 + $0x188] sm:$0xff] %v4353
    %4433 = vst [vmem:[#allocation8 + $0x190] sm:$0xff] %v4062
    %4434 = vst [vmem:[#allocation8 + $0x198] sm:$0xff] %v4356
    %4435 = vst [vmem:[#allocation8 + $0x1a0] sm:$0xff] %v4067
    %4436 = vst [vmem:[#allocation8 + $0x1a8] sm:$0xff] %v4361
    %4437 = vst [vmem:[#allocation8 + $0x1b0] sm:$0xff] %v4070
    %4438 = vst [vmem:[#allocation8 + $0x1b8] sm:$0xff] %v4364
    %4439 = vst [vmem:[#allocation8 + $0x1c0] sm:$0xff] %v4075
    %4440 = vst [vmem:[#allocation8 + $0x1c8] sm:$0xff] %v4369
    %4441 = vst [vmem:[#allocation8 + $0x1d0] sm:$0xff] %v4078
    %4442 = vst [vmem:[#allocation8 + $0x1d8] sm:$0xff] %v4372
    %4443 = vst [vmem:[#allocation8 + $0x1e0] sm:$0xff] %v4083
    %4444 = vst [vmem:[#allocation8 + $0x1e8] sm:$0xff] %v4377
    %4445 = vst [vmem:[#allocation8 + $0x1f0] sm:$0xff] %v4086
    %4446 = vst [vmem:[#allocation8 + $0x1f8] sm:$0xff] %v4380
    %v4447 = vld [vmem:[#allocation5 + $0x2e8] sm:$0xf]
    %v4448 = vld [vmem:[#allocation5 + $0x2ec] sm:$0xf]
    %v4449 = vld [vmem:[#allocation7 + $0x9] sm:$0x1]
    %v4450 = vlaneseq
    %v4451 = vshrl.u32 %v4450, 7
    %v4452 = vsub.s32 0, %v4451
    %v4453 = vrot.slane %v4449, %v4452
    %v4456 = vunpack.c.l.b16 %v4447
    %v4457 = vunpack.c.l.b16 %v4448
    %v4458 = vpack.c.b16 %v4457, %v4456
    %4460 = vmatprep.subr.bf16.mxu0 0
    %4461 = vmatpush1.bf16.msra.mxu0 %v4458
    %4462 = vmatprep.subr.bf16.mxu0 0
    %4463 = vmatpush1.bf16.msra.mxu0 0
    %4464 = vmatprep.subr.bf16.mxu0 0
    %4465 = vmatpush1.bf16.msra.mxu0 0
    %4466 = vmatprep.subr.bf16.mxu0 0
    %4467 = vmatpush1.bf16.msra.mxu0 0
    %4468 = vmatprep.subr.bf16.mxu0 0
    %4469 = vmatpush1.bf16.msra.mxu0 0
    %4470 = vmatprep.subr.bf16.mxu0 0
    %4471 = vmatpush1.bf16.msra.mxu0 0
    %4472 = vmatprep.subr.bf16.mxu0 0
    %4473 = vmatpush1.bf16.msra.mxu0 0
    %4474 = vmatprep.subr.bf16.mxu0 0
    %4475 = vmatpush1.bf16.msra.mxu0 0
    %4476 = vmatprep.subr.bf16.mxu0 0
    %4477 = vmatpush1.bf16.msra.mxu0 0
    %4478 = vmatprep.subr.bf16.mxu0 0
    %4479 = vmatpush1.bf16.msra.mxu0 0
    %4480 = vmatprep.subr.bf16.mxu0 0
    %4481 = vmatpush1.bf16.msra.mxu0 0
    %4482 = vmatprep.subr.bf16.mxu0 0
    %4483 = vmatpush1.bf16.msra.mxu0 0
    %4484 = vmatprep.subr.bf16.mxu0 0
    %4485 = vmatpush1.bf16.msra.mxu0 0
    %4486 = vmatprep.subr.bf16.mxu0 0
    %4487 = vmatpush1.bf16.msra.mxu0 0
    %4488 = vmatprep.subr.bf16.mxu0 0
    %4489 = vmatpush1.bf16.msra.mxu0 0
    %4490 = vmatprep.subr.bf16.mxu0 0
    %4491 = vmatpush1.bf16.msra.mxu0 0
    %4492 = vmatprep.mubr.bf16.mxu0 0
    %4493 = vmatmul.mubr.bf16.gmra.mrb[0].mxu0 %v2413
    %v4494 = vpop.f32.mrb[0].mxu0
    %v4495 = vadd.f32 %v4453, %v4494
    %v4496 = vpop.f32.mrb[0].mxu0
    %v4497 = vpop.f32.mrb[0].mxu0
    %v4498 = vadd.f32 %v4453, %v4497
    %v4499 = vpop.f32.mrb[0].mxu0
    %4500 = vmatprep.mubr.bf16.mxu0 0
    %4501 = vmatmul.mubr.bf16.gmra.mrb[0].mxu0 %v2416
    %v4502 = vpop.f32.mrb[0].mxu0
    %v4503 = vadd.f32 %v4453, %v4502
    %v4504 = vpop.f32.mrb[0].mxu0
    %v4505 = vpop.f32.mrb[0].mxu0
    %v4506 = vadd.f32 %v4453, %v4505
    %v4507 = vpop.f32.mrb[0].mxu0
    %4508 = vmatprep.mubr.bf16.mxu0 0
    %4509 = vmatmul.mubr.bf16.gmra.mrb[0].mxu0 %v2419
    %v4510 = vpop.f32.mrb[0].mxu0
    %v4511 = vadd.f32 %v4453, %v4510
    %v4512 = vpop.f32.mrb[0].mxu0
    %v4513 = vpop.f32.mrb[0].mxu0
    %v4514 = vadd.f32 %v4453, %v4513
    %v4515 = vpop.f32.mrb[0].mxu0
    %4516 = vmatprep.mubr.bf16.mxu0 0
    %4517 = vmatmul.mubr.bf16.gmra.mrb[0].mxu0 %v2422
    %v4518 = vpop.f32.mrb[0].mxu0
    %v4519 = vadd.f32 %v4453, %v4518
    %v4520 = vpop.f32.mrb[0].mxu0
    %v4521 = vpop.f32.mrb[0].mxu0
    %v4522 = vadd.f32 %v4453, %v4521
    %v4523 = vpop.f32.mrb[0].mxu0
    %4524 = vmatprep.mubr.bf16.mxu0 0
    %4525 = vmatmul.mubr.bf16.gmra.mrb[0].mxu0 %v2425
    %v4526 = vpop.f32.mrb[0].mxu0
    %v4527 = vadd.f32 %v4453, %v4526
    %v4528 = vpop.f32.mrb[0].mxu0
    %v4529 = vpop.f32.mrb[0].mxu0
    %v4530 = vadd.f32 %v4453, %v4529
    %v4531 = vpop.f32.mrb[0].mxu0
    %4532 = vmatprep.mubr.bf16.mxu0 0
    %4533 = vmatmul.mubr.bf16.gmra.mrb[0].mxu0 %v2428
    %v4534 = vpop.f32.mrb[0].mxu0
    %v4535 = vadd.f32 %v4453, %v4534
    %v4536 = vpop.f32.mrb[0].mxu0
    %v4537 = vpop.f32.mrb[0].mxu0
    %v4538 = vadd.f32 %v4453, %v4537
    %v4539 = vpop.f32.mrb[0].mxu0
    %4540 = vmatprep.mubr.bf16.mxu0 0
    %4541 = vmatmul.mubr.bf16.gmra.mrb[0].mxu0 %v2431
    %v4542 = vpop.f32.mrb[0].mxu0
    %v4543 = vadd.f32 %v4453, %v4542
    %v4544 = vpop.f32.mrb[0].mxu0
    %v4545 = vpop.f32.mrb[0].mxu0
    %v4546 = vadd.f32 %v4453, %v4545
    %v4547 = vpop.f32.mrb[0].mxu0
    %4548 = vmatprep.mubr.bf16.mxu0 0
    %4549 = vmatmul.mubr.bf16.gmra.mrb[0].mxu0 %v2434
    %v4550 = vpop.f32.mrb[0].mxu0
    %v4551 = vadd.f32 %v4453, %v4550
    %v4552 = vpop.f32.mrb[0].mxu0
    %v4553 = vpop.f32.mrb[0].mxu0
    %v4554 = vadd.f32 %v4453, %v4553
    %v4555 = vpop.f32.mrb[0].mxu0
    %4556 = vmatprep.mubr.bf16.mxu0 0
    %4557 = vmatmul.mubr.bf16.gmra.mrb[0].mxu0 %v2437
    %v4558 = vpop.f32.mrb[0].mxu0
    %v4559 = vadd.f32 %v4453, %v4558
    %v4560 = vpop.f32.mrb[0].mxu0
    %v4561 = vpop.f32.mrb[0].mxu0
    %v4562 = vadd.f32 %v4453, %v4561
    %v4563 = vpop.f32.mrb[0].mxu0
    %4564 = vmatprep.mubr.bf16.mxu0 0
    %4565 = vmatmul.mubr.bf16.gmra.mrb[0].mxu0 %v2440
    %v4566 = vpop.f32.mrb[0].mxu0
    %v4567 = vadd.f32 %v4453, %v4566
    %v4568 = vpop.f32.mrb[0].mxu0
    %v4569 = vpop.f32.mrb[0].mxu0
    %v4570 = vadd.f32 %v4453, %v4569
    %v4571 = vpop.f32.mrb[0].mxu0
    %4572 = vmatprep.mubr.bf16.mxu0 0
    %4573 = vmatmul.mubr.bf16.gmra.mrb[0].mxu0 %v2443
    %v4574 = vpop.f32.mrb[0].mxu0
    %v4575 = vadd.f32 %v4453, %v4574
    %v4576 = vpop.f32.mrb[0].mxu0
    %v4577 = vpop.f32.mrb[0].mxu0
    %v4578 = vadd.f32 %v4453, %v4577
    %v4579 = vpop.f32.mrb[0].mxu0
    %4580 = vmatprep.mubr.bf16.mxu0 0
    %4581 = vmatmul.mubr.bf16.gmra.mrb[0].mxu0 %v2446
    %v4582 = vpop.f32.mrb[0].mxu0
    %v4583 = vadd.f32 %v4453, %v4582
    %v4584 = vpop.f32.mrb[0].mxu0
    %v4585 = vpop.f32.mrb[0].mxu0
    %v4586 = vadd.f32 %v4453, %v4585
    %v4587 = vpop.f32.mrb[0].mxu0
    %4588 = vmatprep.mubr.bf16.mxu0 0
    %4589 = vmatmul.mubr.bf16.gmra.mrb[0].mxu0 %v2449
    %v4590 = vpop.f32.mrb[0].mxu0
    %v4591 = vadd.f32 %v4453, %v4590
    %v4592 = vpop.f32.mrb[0].mxu0
    %v4593 = vpop.f32.mrb[0].mxu0
    %v4594 = vadd.f32 %v4453, %v4593
    %v4595 = vpop.f32.mrb[0].mxu0
    %4596 = vmatprep.mubr.bf16.mxu0 0
    %4597 = vmatmul.mubr.bf16.gmra.mrb[0].mxu0 %v2452
    %v4598 = vpop.f32.mrb[0].mxu0
    %v4599 = vadd.f32 %v4453, %v4598
    %v4600 = vpop.f32.mrb[0].mxu0
    %v4601 = vpop.f32.mrb[0].mxu0
    %v4602 = vadd.f32 %v4453, %v4601
    %v4603 = vpop.f32.mrb[0].mxu0
    %4604 = vmatprep.mubr.bf16.mxu0 0
    %4605 = vmatmul.mubr.bf16.gmra.mrb[0].mxu0 %v2455
    %v4606 = vpop.f32.mrb[0].mxu0
    %v4607 = vadd.f32 %v4453, %v4606
    %v4608 = vpop.f32.mrb[0].mxu0
    %v4609 = vpop.f32.mrb[0].mxu0
    %v4610 = vadd.f32 %v4453, %v4609
    %v4611 = vpop.f32.mrb[0].mxu0
    %4612 = vmatprep.mubr.bf16.mxu0 0
    %4613 = vmatmul.mubr.bf16.gmra.mrb[0].mxu0 %v2458
    %v4614 = vpop.f32.mrb[0].mxu0
    %v4615 = vadd.f32 %v4453, %v4614
    %v4616 = vpop.f32.mrb[0].mxu0
    %v4617 = vpop.f32.mrb[0].mxu0
    %v4618 = vadd.f32 %v4453, %v4617
    %v4619 = vpop.f32.mrb[0].mxu0
    %4620 = vdwg.mxu0
    %v4621 = vld [vmem:[#allocation5 + $0x2f0] sm:$0xf]
    %v4622 = vld [vmem:[#allocation5 + $0x2f4] sm:$0xf]
    %v4623 = vld [vmem:[#allocation7 + $0xa] sm:$0x1]
    %v4624 = vlaneseq
    %v4625 = vshrl.u32 %v4624, 7
    %v4626 = vsub.s32 0, %v4625
    %v4627 = vrot.slane %v4623, %v4626
    %v4630 = vunpack.c.l.b16 %v4621
    %v4631 = vunpack.c.l.b16 %v4622
    %v4632 = vpack.c.b16 %v4631, %v4630
    %4634 = vmatprep.subr.bf16.mxu0 0
    %4635 = vmatpush1.bf16.msra.mxu0 %v4632
    %4636 = vmatprep.subr.bf16.mxu0 0
    %4637 = vmatpush1.bf16.msra.mxu0 0
    %4638 = vmatprep.subr.bf16.mxu0 0
    %4639 = vmatpush1.bf16.msra.mxu0 0
    %4640 = vmatprep.subr.bf16.mxu0 0
    %4641 = vmatpush1.bf16.msra.mxu0 0
    %4642 = vmatprep.subr.bf16.mxu0 0
    %4643 = vmatpush1.bf16.msra.mxu0 0
    %4644 = vmatprep.subr.bf16.mxu0 0
    %4645 = vmatpush1.bf16.msra.mxu0 0
    %4646 = vmatprep.subr.bf16.mxu0 0
    %4647 = vmatpush1.bf16.msra.mxu0 0
    %4648 = vmatprep.subr.bf16.mxu0 0
    %4649 = vmatpush1.bf16.msra.mxu0 0
    %4650 = vmatprep.subr.bf16.mxu0 0
    %4651 = vmatpush1.bf16.msra.mxu0 0
    %4652 = vmatprep.subr.bf16.mxu0 0
    %4653 = vmatpush1.bf16.msra.mxu0 0
    %4654 = vmatprep.subr.bf16.mxu0 0
    %4655 = vmatpush1.bf16.msra.mxu0 0
    %4656 = vmatprep.subr.bf16.mxu0 0
    %4657 = vmatpush1.bf16.msra.mxu0 0
    %4658 = vmatprep.subr.bf16.mxu0 0
    %4659 = vmatpush1.bf16.msra.mxu0 0
    %4660 = vmatprep.subr.bf16.mxu0 0
    %4661 = vmatpush1.bf16.msra.mxu0 0
    %4662 = vmatprep.subr.bf16.mxu0 0
    %4663 = vmatpush1.bf16.msra.mxu0 0
    %4664 = vmatprep.subr.bf16.mxu0 0
    %4665 = vmatpush1.bf16.msra.mxu0 0
    %4666 = vmatprep.mubr.bf16.mxu0 0
    %4667 = vmatmul.mubr.bf16.gmra.mrb[0].mxu0 %v2413
    %v4668 = vpop.f32.mrb[0].mxu0
    %v4669 = vadd.f32 %v4627, %v4668
    %v4670 = vpop.f32.mrb[0].mxu0
    %v4671 = vpop.f32.mrb[0].mxu0
    %v4672 = vadd.f32 %v4627, %v4671
    %v4673 = vpop.f32.mrb[0].mxu0
    %4674 = vmatprep.mubr.bf16.mxu0 0
    %4675 = vmatmul.mubr.bf16.gmra.mrb[0].mxu0 %v2416
    %v4676 = vpop.f32.mrb[0].mxu0
    %v4677 = vadd.f32 %v4627, %v4676
    %v4678 = vpop.f32.mrb[0].mxu0
    %v4679 = vpop.f32.mrb[0].mxu0
    %v4680 = vadd.f32 %v4627, %v4679
    %v4681 = vpop.f32.mrb[0].mxu0
    %4682 = vmatprep.mubr.bf16.mxu0 0
    %4683 = vmatmul.mubr.bf16.gmra.mrb[0].mxu0 %v2419
    %v4684 = vpop.f32.mrb[0].mxu0
    %v4685 = vadd.f32 %v4627, %v4684
    %v4686 = vpop.f32.mrb[0].mxu0
    %v4687 = vpop.f32.mrb[0].mxu0
    %v4688 = vadd.f32 %v4627, %v4687
    %v4689 = vpop.f32.mrb[0].mxu0
    %4690 = vmatprep.mubr.bf16.mxu0 0
    %4691 = vmatmul.mubr.bf16.gmra.mrb[0].mxu0 %v2422
    %v4692 = vpop.f32.mrb[0].mxu0
    %v4693 = vadd.f32 %v4627, %v4692
    %v4694 = vpop.f32.mrb[0].mxu0
    %v4695 = vpop.f32.mrb[0].mxu0
    %v4696 = vadd.f32 %v4627, %v4695
    %v4697 = vpop.f32.mrb[0].mxu0
    %4698 = vmatprep.mubr.bf16.mxu0 0
    %4699 = vmatmul.mubr.bf16.gmra.mrb[0].mxu0 %v2425
    %v4700 = vpop.f32.mrb[0].mxu0
    %v4701 = vadd.f32 %v4627, %v4700
    %v4702 = vpop.f32.mrb[0].mxu0
    %v4703 = vpop.f32.mrb[0].mxu0
    %v4704 = vadd.f32 %v4627, %v4703
    %v4705 = vpop.f32.mrb[0].mxu0
    %4706 = vmatprep.mubr.bf16.mxu0 0
    %4707 = vmatmul.mubr.bf16.gmra.mrb[0].mxu0 %v2428
    %v4708 = vpop.f32.mrb[0].mxu0
    %v4709 = vadd.f32 %v4627, %v4708
    %v4710 = vpop.f32.mrb[0].mxu0
    %v4711 = vpop.f32.mrb[0].mxu0
    %v4712 = vadd.f32 %v4627, %v4711
    %v4713 = vpop.f32.mrb[0].mxu0
    %4714 = vmatprep.mubr.bf16.mxu0 0
    %4715 = vmatmul.mubr.bf16.gmra.mrb[0].mxu0 %v2431
    %v4716 = vpop.f32.mrb[0].mxu0
    %v4717 = vadd.f32 %v4627, %v4716
    %v4718 = vpop.f32.mrb[0].mxu0
    %v4719 = vpop.f32.mrb[0].mxu0
    %v4720 = vadd.f32 %v4627, %v4719
    %v4721 = vpop.f32.mrb[0].mxu0
    %4722 = vmatprep.mubr.bf16.mxu0 0
    %4723 = vmatmul.mubr.bf16.gmra.mrb[0].mxu0 %v2434
    %v4724 = vpop.f32.mrb[0].mxu0
    %v4725 = vadd.f32 %v4627, %v4724
    %v4726 = vpop.f32.mrb[0].mxu0
    %v4727 = vpop.f32.mrb[0].mxu0
    %v4728 = vadd.f32 %v4627, %v4727
    %v4729 = vpop.f32.mrb[0].mxu0
    %4730 = vmatprep.mubr.bf16.mxu0 0
    %4731 = vmatmul.mubr.bf16.gmra.mrb[0].mxu0 %v2437
    %v4732 = vpop.f32.mrb[0].mxu0
    %v4733 = vadd.f32 %v4627, %v4732
    %v4734 = vpop.f32.mrb[0].mxu0
    %v4735 = vpop.f32.mrb[0].mxu0
    %v4736 = vadd.f32 %v4627, %v4735
    %v4737 = vpop.f32.mrb[0].mxu0
    %4738 = vmatprep.mubr.bf16.mxu0 0
    %4739 = vmatmul.mubr.bf16.gmra.mrb[0].mxu0 %v2440
    %v4740 = vpop.f32.mrb[0].mxu0
    %v4741 = vadd.f32 %v4627, %v4740
    %v4742 = vpop.f32.mrb[0].mxu0
    %v4743 = vpop.f32.mrb[0].mxu0
    %v4744 = vadd.f32 %v4627, %v4743
    %v4745 = vpop.f32.mrb[0].mxu0
    %4746 = vmatprep.mubr.bf16.mxu0 0
    %4747 = vmatmul.mubr.bf16.gmra.mrb[0].mxu0 %v2443
    %v4748 = vpop.f32.mrb[0].mxu0
    %v4749 = vadd.f32 %v4627, %v4748
    %v4750 = vpop.f32.mrb[0].mxu0
    %v4751 = vpop.f32.mrb[0].mxu0
    %v4752 = vadd.f32 %v4627, %v4751
    %v4753 = vpop.f32.mrb[0].mxu0
    %4754 = vmatprep.mubr.bf16.mxu0 0
    %4755 = vmatmul.mubr.bf16.gmra.mrb[0].mxu0 %v2446
    %v4756 = vpop.f32.mrb[0].mxu0
    %v4757 = vadd.f32 %v4627, %v4756
    %v4758 = vpop.f32.mrb[0].mxu0
    %v4759 = vpop.f32.mrb[0].mxu0
    %v4760 = vadd.f32 %v4627, %v4759
    %v4761 = vpop.f32.mrb[0].mxu0
    %4762 = vmatprep.mubr.bf16.mxu0 0
    %4763 = vmatmul.mubr.bf16.gmra.mrb[0].mxu0 %v2449
    %v4764 = vpop.f32.mrb[0].mxu0
    %v4765 = vadd.f32 %v4627, %v4764
    %v4766 = vpop.f32.mrb[0].mxu0
    %v4767 = vpop.f32.mrb[0].mxu0
    %v4768 = vadd.f32 %v4627, %v4767
    %v4769 = vpop.f32.mrb[0].mxu0
    %4770 = vmatprep.mubr.bf16.mxu0 0
    %4771 = vmatmul.mubr.bf16.gmra.mrb[0].mxu0 %v2452
    %v4772 = vpop.f32.mrb[0].mxu0
    %v4773 = vadd.f32 %v4627, %v4772
    %v4774 = vpop.f32.mrb[0].mxu0
    %v4775 = vpop.f32.mrb[0].mxu0
    %v4776 = vadd.f32 %v4627, %v4775
    %v4777 = vpop.f32.mrb[0].mxu0
    %4778 = vmatprep.mubr.bf16.mxu0 0
    %4779 = vmatmul.mubr.bf16.gmra.mrb[0].mxu0 %v2455
    %v4780 = vpop.f32.mrb[0].mxu0
    %v4781 = vadd.f32 %v4627, %v4780
    %v4782 = vpop.f32.mrb[0].mxu0
    %v4783 = vpop.f32.mrb[0].mxu0
    %v4784 = vadd.f32 %v4627, %v4783
    %v4785 = vpop.f32.mrb[0].mxu0
    %4786 = vmatprep.mubr.bf16.mxu0 0
    %4787 = vmatmul.mubr.bf16.gmra.mrb[0].mxu0 %v2458
    %v4788 = vpop.f32.mrb[0].mxu0
    %v4789 = vadd.f32 %v4627, %v4788
    %v4790 = vpop.f32.mrb[0].mxu0
    %v4791 = vpop.f32.mrb[0].mxu0
    %v4792 = vadd.f32 %v4627, %v4791
    %v4793 = vpop.f32.mrb[0].mxu0
    %4794 = vdwg.mxu0
    %v4795 = vld [vmem:[#allocation5 + $0x2f8] sm:$0xf]
    %v4796 = vld [vmem:[#allocation5 + $0x2fc] sm:$0xf]
    %v4797 = vld [vmem:[#allocation7 + $0xb] sm:$0x1]
    %v4798 = vlaneseq
    %v4799 = vshrl.u32 %v4798, 7
    %v4800 = vsub.s32 0, %v4799
    %v4801 = vrot.slane %v4797, %v4800
    %v4804 = vunpack.c.l.b16 %v4795
    %v4805 = vunpack.c.l.b16 %v4796
    %v4806 = vpack.c.b16 %v4805, %v4804
    %4808 = vmatprep.subr.bf16.mxu0 0
    %4809 = vmatpush1.bf16.msra.mxu0 %v4806
    %4810 = vmatprep.subr.bf16.mxu0 0
    %4811 = vmatpush1.bf16.msra.mxu0 0
    %4812 = vmatprep.subr.bf16.mxu0 0
    %4813 = vmatpush1.bf16.msra.mxu0 0
    %4814 = vmatprep.subr.bf16.mxu0 0
    %4815 = vmatpush1.bf16.msra.mxu0 0
    %4816 = vmatprep.subr.bf16.mxu0 0
    %4817 = vmatpush1.bf16.msra.mxu0 0
    %4818 = vmatprep.subr.bf16.mxu0 0
    %4819 = vmatpush1.bf16.msra.mxu0 0
    %4820 = vmatprep.subr.bf16.mxu0 0
    %4821 = vmatpush1.bf16.msra.mxu0 0
    %4822 = vmatprep.subr.bf16.mxu0 0
    %4823 = vmatpush1.bf16.msra.mxu0 0
    %4824 = vmatprep.subr.bf16.mxu0 0
    %4825 = vmatpush1.bf16.msra.mxu0 0
    %4826 = vmatprep.subr.bf16.mxu0 0
    %4827 = vmatpush1.bf16.msra.mxu0 0
    %4828 = vmatprep.subr.bf16.mxu0 0
    %4829 = vmatpush1.bf16.msra.mxu0 0
    %4830 = vmatprep.subr.bf16.mxu0 0
    %4831 = vmatpush1.bf16.msra.mxu0 0
    %4832 = vmatprep.subr.bf16.mxu0 0
    %4833 = vmatpush1.bf16.msra.mxu0 0
    %4834 = vmatprep.subr.bf16.mxu0 0
    %4835 = vmatpush1.bf16.msra.mxu0 0
    %4836 = vmatprep.subr.bf16.mxu0 0
    %4837 = vmatpush1.bf16.msra.mxu0 0
    %4838 = vmatprep.subr.bf16.mxu0 0
    %4839 = vmatpush1.bf16.msra.mxu0 0
    %4840 = vmatprep.mubr.bf16.mxu0 0
    %4841 = vmatmul.mubr.bf16.gmra.mrb[0].mxu0 %v2413
    %v4842 = vpop.f32.mrb[0].mxu0
    %v4843 = vadd.f32 %v4801, %v4842
    %v4844 = vpop.f32.mrb[0].mxu0
    %v4845 = vpop.f32.mrb[0].mxu0
    %v4846 = vadd.f32 %v4801, %v4845
    %v4847 = vpop.f32.mrb[0].mxu0
    %4848 = vmatprep.mubr.bf16.mxu0 0
    %4849 = vmatmul.mubr.bf16.gmra.mrb[0].mxu0 %v2416
    %v4850 = vpop.f32.mrb[0].mxu0
    %v4851 = vadd.f32 %v4801, %v4850
    %v4852 = vpop.f32.mrb[0].mxu0
    %v4853 = vpop.f32.mrb[0].mxu0
    %v4854 = vadd.f32 %v4801, %v4853
    %v4855 = vpop.f32.mrb[0].mxu0
    %4856 = vmatprep.mubr.bf16.mxu0 0
    %4857 = vmatmul.mubr.bf16.gmra.mrb[0].mxu0 %v2419
    %v4858 = vpop.f32.mrb[0].mxu0
    %v4859 = vadd.f32 %v4801, %v4858
    %v4860 = vpop.f32.mrb[0].mxu0
    %v4861 = vpop.f32.mrb[0].mxu0
    %v4862 = vadd.f32 %v4801, %v4861
    %v4863 = vpop.f32.mrb[0].mxu0
    %4864 = vmatprep.mubr.bf16.mxu0 0
    %4865 = vmatmul.mubr.bf16.gmra.mrb[0].mxu0 %v2422
    %v4866 = vpop.f32.mrb[0].mxu0
    %v4867 = vadd.f32 %v4801, %v4866
    %v4868 = vpop.f32.mrb[0].mxu0
    %v4869 = vpop.f32.mrb[0].mxu0
    %v4870 = vadd.f32 %v4801, %v4869
    %v4871 = vpop.f32.mrb[0].mxu0
    %4872 = vmatprep.mubr.bf16.mxu0 0
    %4873 = vmatmul.mubr.bf16.gmra.mrb[0].mxu0 %v2425
    %v4874 = vpop.f32.mrb[0].mxu0
    %v4875 = vadd.f32 %v4801, %v4874
    %v4876 = vpop.f32.mrb[0].mxu0
    %v4877 = vpop.f32.mrb[0].mxu0
    %v4878 = vadd.f32 %v4801, %v4877
    %v4879 = vpop.f32.mrb[0].mxu0
    %4880 = vmatprep.mubr.bf16.mxu0 0
    %4881 = vmatmul.mubr.bf16.gmra.mrb[0].mxu0 %v2428
    %v4882 = vpop.f32.mrb[0].mxu0
    %v4883 = vadd.f32 %v4801, %v4882
    %v4884 = vpop.f32.mrb[0].mxu0
    %v4885 = vpop.f32.mrb[0].mxu0
    %v4886 = vadd.f32 %v4801, %v4885
    %v4887 = vpop.f32.mrb[0].mxu0
    %4888 = vmatprep.mubr.bf16.mxu0 0
    %4889 = vmatmul.mubr.bf16.gmra.mrb[0].mxu0 %v2431
    %v4890 = vpop.f32.mrb[0].mxu0
    %v4891 = vadd.f32 %v4801, %v4890
    %v4892 = vpop.f32.mrb[0].mxu0
    %v4893 = vpop.f32.mrb[0].mxu0
    %v4894 = vadd.f32 %v4801, %v4893
    %v4895 = vpop.f32.mrb[0].mxu0
    %4896 = vmatprep.mubr.bf16.mxu0 0
    %4897 = vmatmul.mubr.bf16.gmra.mrb[0].mxu0 %v2434
    %v4898 = vpop.f32.mrb[0].mxu0
    %v4899 = vadd.f32 %v4801, %v4898
    %v4900 = vpop.f32.mrb[0].mxu0
    %v4901 = vpop.f32.mrb[0].mxu0
    %v4902 = vadd.f32 %v4801, %v4901
    %v4903 = vpop.f32.mrb[0].mxu0
    %4904 = vmatprep.mubr.bf16.mxu0 0
    %4905 = vmatmul.mubr.bf16.gmra.mrb[0].mxu0 %v2437
    %v4906 = vpop.f32.mrb[0].mxu0
    %v4907 = vadd.f32 %v4801, %v4906
    %v4908 = vpop.f32.mrb[0].mxu0
    %v4909 = vpop.f32.mrb[0].mxu0
    %v4910 = vadd.f32 %v4801, %v4909
    %v4911 = vpop.f32.mrb[0].mxu0
    %4912 = vmatprep.mubr.bf16.mxu0 0
    %4913 = vmatmul.mubr.bf16.gmra.mrb[0].mxu0 %v2440
    %v4914 = vpop.f32.mrb[0].mxu0
    %v4915 = vadd.f32 %v4801, %v4914
    %v4916 = vpop.f32.mrb[0].mxu0
    %v4917 = vpop.f32.mrb[0].mxu0
    %v4918 = vadd.f32 %v4801, %v4917
    %v4919 = vpop.f32.mrb[0].mxu0
    %4920 = vmatprep.mubr.bf16.mxu0 0
    %4921 = vmatmul.mubr.bf16.gmra.mrb[0].mxu0 %v2443
    %v4922 = vpop.f32.mrb[0].mxu0
    %v4923 = vadd.f32 %v4801, %v4922
    %v4924 = vpop.f32.mrb[0].mxu0
    %v4925 = vpop.f32.mrb[0].mxu0
    %v4926 = vadd.f32 %v4801, %v4925
    %v4927 = vpop.f32.mrb[0].mxu0
    %4928 = vmatprep.mubr.bf16.mxu0 0
    %4929 = vmatmul.mubr.bf16.gmra.mrb[0].mxu0 %v2446
    %v4930 = vpop.f32.mrb[0].mxu0
    %v4931 = vadd.f32 %v4801, %v4930
    %v4932 = vpop.f32.mrb[0].mxu0
    %v4933 = vpop.f32.mrb[0].mxu0
    %v4934 = vadd.f32 %v4801, %v4933
    %v4935 = vpop.f32.mrb[0].mxu0
    %4936 = vmatprep.mubr.bf16.mxu0 0
    %4937 = vmatmul.mubr.bf16.gmra.mrb[0].mxu0 %v2449
    %v4938 = vpop.f32.mrb[0].mxu0
    %v4939 = vadd.f32 %v4801, %v4938
    %v4940 = vpop.f32.mrb[0].mxu0
    %v4941 = vpop.f32.mrb[0].mxu0
    %v4942 = vadd.f32 %v4801, %v4941
    %v4943 = vpop.f32.mrb[0].mxu0
    %4944 = vmatprep.mubr.bf16.mxu0 0
    %4945 = vmatmul.mubr.bf16.gmra.mrb[0].mxu0 %v2452
    %v4946 = vpop.f32.mrb[0].mxu0
    %v4947 = vadd.f32 %v4801, %v4946
    %v4948 = vpop.f32.mrb[0].mxu0
    %v4949 = vpop.f32.mrb[0].mxu0
    %v4950 = vadd.f32 %v4801, %v4949
    %v4951 = vpop.f32.mrb[0].mxu0
    %4952 = vmatprep.mubr.bf16.mxu0 0
    %4953 = vmatmul.mubr.bf16.gmra.mrb[0].mxu0 %v2455
    %v4954 = vpop.f32.mrb[0].mxu0
    %v4955 = vadd.f32 %v4801, %v4954
    %v4956 = vpop.f32.mrb[0].mxu0
    %v4957 = vpop.f32.mrb[0].mxu0
    %v4958 = vadd.f32 %v4801, %v4957
    %v4959 = vpop.f32.mrb[0].mxu0
    %4960 = vmatprep.mubr.bf16.mxu0 0
    %4961 = vmatmul.mubr.bf16.gmra.mrb[0].mxu0 %v2458
    %v4962 = vpop.f32.mrb[0].mxu0
    %v4963 = vadd.f32 %v4801, %v4962
    %v4964 = vpop.f32.mrb[0].mxu0
    %v4965 = vpop.f32.mrb[0].mxu0
    %v4966 = vadd.f32 %v4801, %v4965
    %v4967 = vpop.f32.mrb[0].mxu0
    %4968 = vdwg.mxu0
    %v4969 = vld [vmem:[#allocation5 + $0x300] sm:$0xf]
    %v4970 = vld [vmem:[#allocation5 + $0x304] sm:$0xf]
    %v4971 = vld [vmem:[#allocation7 + $0xc] sm:$0x1]
    %v4972 = vlaneseq
    %v4973 = vshrl.u32 %v4972, 7
    %v4974 = vsub.s32 0, %v4973
    %v4975 = vrot.slane %v4971, %v4974
    %v4978 = vunpack.c.l.b16 %v4969
    %v4979 = vunpack.c.l.b16 %v4970
    %v4980 = vpack.c.b16 %v4979, %v4978
    %4982 = vmatprep.subr.bf16.mxu0 0
    %4983 = vmatpush1.bf16.msra.mxu0 %v4980
    %4984 = vmatprep.subr.bf16.mxu0 0
    %4985 = vmatpush1.bf16.msra.mxu0 0
    %4986 = vmatprep.subr.bf16.mxu0 0
    %4987 = vmatpush1.bf16.msra.mxu0 0
    %4988 = vmatprep.subr.bf16.mxu0 0
    %4989 = vmatpush1.bf16.msra.mxu0 0
    %4990 = vmatprep.subr.bf16.mxu0 0
    %4991 = vmatpush1.bf16.msra.mxu0 0
    %4992 = vmatprep.subr.bf16.mxu0 0
    %4993 = vmatpush1.bf16.msra.mxu0 0
    %4994 = vmatprep.subr.bf16.mxu0 0
    %4995 = vmatpush1.bf16.msra.mxu0 0
    %4996 = vmatprep.subr.bf16.mxu0 0
    %4997 = vmatpush1.bf16.msra.mxu0 0
    %4998 = vmatprep.subr.bf16.mxu0 0
    %4999 = vmatpush1.bf16.msra.mxu0 0
    %5000 = vmatprep.subr.bf16.mxu0 0
    %5001 = vmatpush1.bf16.msra.mxu0 0
    %5002 = vmatprep.subr.bf16.mxu0 0
    %5003 = vmatpush1.bf16.msra.mxu0 0
    %5004 = vmatprep.subr.bf16.mxu0 0
    %5005 = vmatpush1.bf16.msra.mxu0 0
    %5006 = vmatprep.subr.bf16.mxu0 0
    %5007 = vmatpush1.bf16.msra.mxu0 0
    %5008 = vmatprep.subr.bf16.mxu0 0
    %5009 = vmatpush1.bf16.msra.mxu0 0
    %5010 = vmatprep.subr.bf16.mxu0 0
    %5011 = vmatpush1.bf16.msra.mxu0 0
    %5012 = vmatprep.subr.bf16.mxu0 0
    %5013 = vmatpush1.bf16.msra.mxu0 0
    %5014 = vmatprep.mubr.bf16.mxu0 0
    %5015 = vmatmul.mubr.bf16.gmra.mrb[0].mxu0 %v2413
    %v5016 = vpop.f32.mrb[0].mxu0
    %v5017 = vadd.f32 %v4975, %v5016
    %v5018 = vpop.f32.mrb[0].mxu0
    %v5019 = vpop.f32.mrb[0].mxu0
    %v5020 = vadd.f32 %v4975, %v5019
    %v5021 = vpop.f32.mrb[0].mxu0
    %5022 = vmatprep.mubr.bf16.mxu0 0
    %5023 = vmatmul.mubr.bf16.gmra.mrb[0].mxu0 %v2416
    %v5024 = vpop.f32.mrb[0].mxu0
    %v5025 = vadd.f32 %v4975, %v5024
    %v5026 = vpop.f32.mrb[0].mxu0
    %v5027 = vpop.f32.mrb[0].mxu0
    %v5028 = vadd.f32 %v4975, %v5027
    %v5029 = vpop.f32.mrb[0].mxu0
    %5030 = vmatprep.mubr.bf16.mxu0 0
    %5031 = vmatmul.mubr.bf16.gmra.mrb[0].mxu0 %v2419
    %v5032 = vpop.f32.mrb[0].mxu0
    %v5033 = vadd.f32 %v4975, %v5032
    %v5034 = vpop.f32.mrb[0].mxu0
    %v5035 = vpop.f32.mrb[0].mxu0
    %v5036 = vadd.f32 %v4975, %v5035
    %v5037 = vpop.f32.mrb[0].mxu0
    %5038 = vmatprep.mubr.bf16.mxu0 0
    %5039 = vmatmul.mubr.bf16.gmra.mrb[0].mxu0 %v2422
    %v5040 = vpop.f32.mrb[0].mxu0
    %v5041 = vadd.f32 %v4975, %v5040
    %v5042 = vpop.f32.mrb[0].mxu0
    %v5043 = vpop.f32.mrb[0].mxu0
    %v5044 = vadd.f32 %v4975, %v5043
    %v5045 = vpop.f32.mrb[0].mxu0
    %5046 = vmatprep.mubr.bf16.mxu0 0
    %5047 = vmatmul.mubr.bf16.gmra.mrb[0].mxu0 %v2425
    %v5048 = vpop.f32.mrb[0].mxu0
    %v5049 = vadd.f32 %v4975, %v5048
    %v5050 = vpop.f32.mrb[0].mxu0
    %v5051 = vpop.f32.mrb[0].mxu0
    %v5052 = vadd.f32 %v4975, %v5051
    %v5053 = vpop.f32.mrb[0].mxu0
    %5054 = vmatprep.mubr.bf16.mxu0 0
    %5055 = vmatmul.mubr.bf16.gmra.mrb[0].mxu0 %v2428
    %v5056 = vpop.f32.mrb[0].mxu0
    %v5057 = vadd.f32 %v4975, %v5056
    %v5058 = vpop.f32.mrb[0].mxu0
    %v5059 = vpop.f32.mrb[0].mxu0
    %v5060 = vadd.f32 %v4975, %v5059
    %v5061 = vpop.f32.mrb[0].mxu0
    %5062 = vmatprep.mubr.bf16.mxu0 0
    %5063 = vmatmul.mubr.bf16.gmra.mrb[0].mxu0 %v2431
    %v5064 = vpop.f32.mrb[0].mxu0
    %v5065 = vadd.f32 %v4975, %v5064
    %v5066 = vpop.f32.mrb[0].mxu0
    %v5067 = vpop.f32.mrb[0].mxu0
    %v5068 = vadd.f32 %v4975, %v5067
    %v5069 = vpop.f32.mrb[0].mxu0
    %5070 = vmatprep.mubr.bf16.mxu0 0
    %5071 = vmatmul.mubr.bf16.gmra.mrb[0].mxu0 %v2434
    %v5072 = vpop.f32.mrb[0].mxu0
    %v5073 = vadd.f32 %v4975, %v5072
    %v5074 = vpop.f32.mrb[0].mxu0
    %v5075 = vpop.f32.mrb[0].mxu0
    %v5076 = vadd.f32 %v4975, %v5075
    %v5077 = vpop.f32.mrb[0].mxu0
    %5078 = vmatprep.mubr.bf16.mxu0 0
    %5079 = vmatmul.mubr.bf16.gmra.mrb[0].mxu0 %v2437
    %v5080 = vpop.f32.mrb[0].mxu0
    %v5081 = vadd.f32 %v4975, %v5080
    %v5082 = vpop.f32.mrb[0].mxu0
    %v5083 = vpop.f32.mrb[0].mxu0
    %v5084 = vadd.f32 %v4975, %v5083
    %v5085 = vpop.f32.mrb[0].mxu0
    %5086 = vmatprep.mubr.bf16.mxu0 0
    %5087 = vmatmul.mubr.bf16.gmra.mrb[0].mxu0 %v2440
    %v5088 = vpop.f32.mrb[0].mxu0
    %v5089 = vadd.f32 %v4975, %v5088
    %v5090 = vpop.f32.mrb[0].mxu0
    %v5091 = vpop.f32.mrb[0].mxu0
    %v5092 = vadd.f32 %v4975, %v5091
    %v5093 = vpop.f32.mrb[0].mxu0
    %5094 = vmatprep.mubr.bf16.mxu0 0
    %5095 = vmatmul.mubr.bf16.gmra.mrb[0].mxu0 %v2443
    %v5096 = vpop.f32.mrb[0].mxu0
    %v5097 = vadd.f32 %v4975, %v5096
    %v5098 = vpop.f32.mrb[0].mxu0
    %v5099 = vpop.f32.mrb[0].mxu0
    %v5100 = vadd.f32 %v4975, %v5099
    %v5101 = vpop.f32.mrb[0].mxu0
    %5102 = vmatprep.mubr.bf16.mxu0 0
    %5103 = vmatmul.mubr.bf16.gmra.mrb[0].mxu0 %v2446
    %v5104 = vpop.f32.mrb[0].mxu0
    %v5105 = vadd.f32 %v4975, %v5104
    %v5106 = vpop.f32.mrb[0].mxu0
    %v5107 = vpop.f32.mrb[0].mxu0
    %v5108 = vadd.f32 %v4975, %v5107
    %v5109 = vpop.f32.mrb[0].mxu0
    %5110 = vmatprep.mubr.bf16.mxu0 0
    %5111 = vmatmul.mubr.bf16.gmra.mrb[0].mxu0 %v2449
    %v5112 = vpop.f32.mrb[0].mxu0
    %v5113 = vadd.f32 %v4975, %v5112
    %v5114 = vpop.f32.mrb[0].mxu0
    %v5115 = vpop.f32.mrb[0].mxu0
    %v5116 = vadd.f32 %v4975, %v5115
    %v5117 = vpop.f32.mrb[0].mxu0
    %5118 = vmatprep.mubr.bf16.mxu0 0
    %5119 = vmatmul.mubr.bf16.gmra.mrb[0].mxu0 %v2452
    %v5120 = vpop.f32.mrb[0].mxu0
    %v5121 = vadd.f32 %v4975, %v5120
    %v5122 = vpop.f32.mrb[0].mxu0
    %v5123 = vpop.f32.mrb[0].mxu0
    %v5124 = vadd.f32 %v4975, %v5123
    %v5125 = vpop.f32.mrb[0].mxu0
    %5126 = vmatprep.mubr.bf16.mxu0 0
    %5127 = vmatmul.mubr.bf16.gmra.mrb[0].mxu0 %v2455
    %v5128 = vpop.f32.mrb[0].mxu0
    %v5129 = vadd.f32 %v4975, %v5128
    %v5130 = vpop.f32.mrb[0].mxu0
    %v5131 = vpop.f32.mrb[0].mxu0
    %v5132 = vadd.f32 %v4975, %v5131
    %v5133 = vpop.f32.mrb[0].mxu0
    %5134 = vmatprep.mubr.bf16.mxu0 0
    %5135 = vmatmul.mubr.bf16.gmra.mrb[0].mxu0 %v2458
    %v5136 = vpop.f32.mrb[0].mxu0
    %v5137 = vadd.f32 %v4975, %v5136
    %v5138 = vpop.f32.mrb[0].mxu0
    %v5139 = vpop.f32.mrb[0].mxu0
    %v5140 = vadd.f32 %v4975, %v5139
    %v5141 = vpop.f32.mrb[0].mxu0
    %5142 = vdwg.mxu0
    %v5143 = vadd.f32 %v4495, %v4498
    %v5144 = vadd.f32 %v5143, %v4503
    %v5145 = vadd.f32 %v5144, %v4506
    %v5146 = vadd.f32 %v5145, %v4511
    %v5147 = vadd.f32 %v5146, %v4514
    %v5148 = vadd.f32 %v5147, %v4519
    %v5149 = vadd.f32 %v5148, %v4522
    %v5150 = vadd.f32 %v5149, %v4527
    %v5151 = vadd.f32 %v5150, %v4530
    %v5152 = vadd.f32 %v5151, %v4535
    %v5153 = vadd.f32 %v5152, %v4538
    %v5154 = vadd.f32 %v5153, %v4543
    %v5155 = vadd.f32 %v5154, %v4546
    %v5156 = vadd.f32 %v5155, %v4551
    %v5157 = vadd.f32 %v5156, %v4554
    %v5158 = vadd.f32 %v5157, %v4559
    %v5159 = vadd.f32 %v5158, %v4562
    %v5160 = vadd.f32 %v5159, %v4567
    %v5161 = vadd.f32 %v5160, %v4570
    %v5162 = vadd.f32 %v5161, %v4575
    %v5163 = vadd.f32 %v5162, %v4578
    %v5164 = vadd.f32 %v5163, %v4583
    %v5165 = vadd.f32 %v5164, %v4586
    %v5166 = vadd.f32 %v5165, %v4591
    %v5167 = vadd.f32 %v5166, %v4594
    %v5168 = vadd.f32 %v5167, %v4599
    %v5169 = vadd.f32 %v5168, %v4602
    %v5170 = vadd.f32 %v5169, %v4607
    %v5171 = vadd.f32 %v5170, %v4610
    %v5172 = vadd.f32 %v5171, %v4615
    %v5173 = vadd.f32 %v5172, %v4618
    %v5174 = vrot.slane %v5173, 4
    %v5175 = vadd.f32 %v5173, %v5174
    %v5176 = vrot.slane %v5175, 2
    %v5177 = vadd.f32 %v5175, %v5176
    %v5178 = vrot.slane %v5177, 1
    %v5179 = vadd.f32 %v5177, %v5178
    %v5180 = vadd.f32 %v4669, %v4672
    %v5181 = vadd.f32 %v5180, %v4677
    %v5182 = vadd.f32 %v5181, %v4680
    %v5183 = vadd.f32 %v5182, %v4685
    %v5184 = vadd.f32 %v5183, %v4688
    %v5185 = vadd.f32 %v5184, %v4693
    %v5186 = vadd.f32 %v5185, %v4696
    %v5187 = vadd.f32 %v5186, %v4701
    %v5188 = vadd.f32 %v5187, %v4704
    %v5189 = vadd.f32 %v5188, %v4709
    %v5190 = vadd.f32 %v5189, %v4712
    %v5191 = vadd.f32 %v5190, %v4717
    %v5192 = vadd.f32 %v5191, %v4720
    %v5193 = vadd.f32 %v5192, %v4725
    %v5194 = vadd.f32 %v5193, %v4728
    %v5195 = vadd.f32 %v5194, %v4733
    %v5196 = vadd.f32 %v5195, %v4736
    %v5197 = vadd.f32 %v5196, %v4741
    %v5198 = vadd.f32 %v5197, %v4744
    %v5199 = vadd.f32 %v5198, %v4749
    %v5200 = vadd.f32 %v5199, %v4752
    %v5201 = vadd.f32 %v5200, %v4757
    %v5202 = vadd.f32 %v5201, %v4760
    %v5203 = vadd.f32 %v5202, %v4765
    %v5204 = vadd.f32 %v5203, %v4768
    %v5205 = vadd.f32 %v5204, %v4773
    %v5206 = vadd.f32 %v5205, %v4776
    %v5207 = vadd.f32 %v5206, %v4781
    %v5208 = vadd.f32 %v5207, %v4784
    %v5209 = vadd.f32 %v5208, %v4789
    %v5210 = vadd.f32 %v5209, %v4792
    %v5211 = vrot.slane %v5210, 4
    %v5212 = vadd.f32 %v5210, %v5211
    %v5213 = vrot.slane %v5212, 2
    %v5214 = vadd.f32 %v5212, %v5213
    %v5215 = vrot.slane %v5214, 1
    %v5216 = vadd.f32 %v5214, %v5215
    %v5217 = vadd.f32 %v4843, %v4846
    %v5218 = vadd.f32 %v5217, %v4851
    %v5219 = vadd.f32 %v5218, %v4854
    %v5220 = vadd.f32 %v5219, %v4859
    %v5221 = vadd.f32 %v5220, %v4862
    %v5222 = vadd.f32 %v5221, %v4867
    %v5223 = vadd.f32 %v5222, %v4870
    %v5224 = vadd.f32 %v5223, %v4875
    %v5225 = vadd.f32 %v5224, %v4878
    %v5226 = vadd.f32 %v5225, %v4883
    %v5227 = vadd.f32 %v5226, %v4886
    %v5228 = vadd.f32 %v5227, %v4891
    %v5229 = vadd.f32 %v5228, %v4894
    %v5230 = vadd.f32 %v5229, %v4899
    %v5231 = vadd.f32 %v5230, %v4902
    %v5232 = vadd.f32 %v5231, %v4907
    %v5233 = vadd.f32 %v5232, %v4910
    %v5234 = vadd.f32 %v5233, %v4915
    %v5235 = vadd.f32 %v5234, %v4918
    %v5236 = vadd.f32 %v5235, %v4923
    %v5237 = vadd.f32 %v5236, %v4926
    %v5238 = vadd.f32 %v5237, %v4931
    %v5239 = vadd.f32 %v5238, %v4934
    %v5240 = vadd.f32 %v5239, %v4939
    %v5241 = vadd.f32 %v5240, %v4942
    %v5242 = vadd.f32 %v5241, %v4947
    %v5243 = vadd.f32 %v5242, %v4950
    %v5244 = vadd.f32 %v5243, %v4955
    %v5245 = vadd.f32 %v5244, %v4958
    %v5246 = vadd.f32 %v5245, %v4963
    %v5247 = vadd.f32 %v5246, %v4966
    %v5248 = vrot.slane %v5247, 4
    %v5249 = vadd.f32 %v5247, %v5248
    %v5250 = vrot.slane %v5249, 2
    %v5251 = vadd.f32 %v5249, %v5250
    %v5252 = vrot.slane %v5251, 1
    %v5253 = vadd.f32 %v5251, %v5252
    %v5254 = vadd.f32 %v5017, %v5020
    %v5255 = vadd.f32 %v5254, %v5025
    %v5256 = vadd.f32 %v5255, %v5028
    %v5257 = vadd.f32 %v5256, %v5033
    %v5258 = vadd.f32 %v5257, %v5036
    %v5259 = vadd.f32 %v5258, %v5041
    %v5260 = vadd.f32 %v5259, %v5044
    %v5261 = vadd.f32 %v5260, %v5049
    %v5262 = vadd.f32 %v5261, %v5052
    %v5263 = vadd.f32 %v5262, %v5057
    %v5264 = vadd.f32 %v5263, %v5060
    %v5265 = vadd.f32 %v5264, %v5065
    %v5266 = vadd.f32 %v5265, %v5068
    %v5267 = vadd.f32 %v5266, %v5073
    %v5268 = vadd.f32 %v5267, %v5076
    %v5269 = vadd.f32 %v5268, %v5081
    %v5270 = vadd.f32 %v5269, %v5084
    %v5271 = vadd.f32 %v5270, %v5089
    %v5272 = vadd.f32 %v5271, %v5092
    %v5273 = vadd.f32 %v5272, %v5097
    %v5274 = vadd.f32 %v5273, %v5100
    %v5275 = vadd.f32 %v5274, %v5105
    %v5276 = vadd.f32 %v5275, %v5108
    %v5277 = vadd.f32 %v5276, %v5113
    %v5278 = vadd.f32 %v5277, %v5116
    %v5279 = vadd.f32 %v5278, %v5121
    %v5280 = vadd.f32 %v5279, %v5124
    %v5281 = vadd.f32 %v5280, %v5129
    %v5282 = vadd.f32 %v5281, %v5132
    %v5283 = vadd.f32 %v5282, %v5137
    %v5284 = vadd.f32 %v5283, %v5140
    %v5285 = vrot.slane %v5284, 4
    %v5286 = vadd.f32 %v5284, %v5285
    %v5287 = vrot.slane %v5286, 2
    %v5288 = vadd.f32 %v5286, %v5287
    %v5289 = vrot.slane %v5288, 1
    %v5290 = vadd.f32 %v5288, %v5289
    %v5291 = vmul.f32 %v5179, %v914
    %v5292 = vmul.f32 %v5216, %v914
    %v5293 = vmul.f32 %v5253, %v914
    %v5294 = vmul.f32 %v5290, %v914
    %v5295 = vsub.f32 %v4495, %v5291
    %v5296 = vsub.f32 %v4669, %v5292
    %v5297 = vsub.f32 %v4843, %v5293
    %v5298 = vsub.f32 %v5017, %v5294
    %v5299 = vsub.f32 %v4498, %v5291
    %v5300 = vsub.f32 %v4672, %v5292
    %v5301 = vsub.f32 %v4846, %v5293
    %v5302 = vsub.f32 %v5020, %v5294
    %v5303 = vsub.f32 %v4503, %v5291
    %v5304 = vsub.f32 %v4677, %v5292
    %v5305 = vsub.f32 %v4851, %v5293
    %v5306 = vsub.f32 %v5025, %v5294
    %v5307 = vsub.f32 %v4506, %v5291
    %v5308 = vsub.f32 %v4680, %v5292
    %v5309 = vsub.f32 %v4854, %v5293
    %v5310 = vsub.f32 %v5028, %v5294
    %v5311 = vsub.f32 %v4511, %v5291
    %v5312 = vsub.f32 %v4685, %v5292
    %v5313 = vsub.f32 %v4859, %v5293
    %v5314 = vsub.f32 %v5033, %v5294
    %v5315 = vsub.f32 %v4514, %v5291
    %v5316 = vsub.f32 %v4688, %v5292
    %v5317 = vsub.f32 %v4862, %v5293
    %v5318 = vsub.f32 %v5036, %v5294
    %v5319 = vsub.f32 %v4519, %v5291
    %v5320 = vsub.f32 %v4693, %v5292
    %v5321 = vsub.f32 %v4867, %v5293
    %v5322 = vsub.f32 %v5041, %v5294
    %v5323 = vsub.f32 %v4522, %v5291
    %v5324 = vsub.f32 %v4696, %v5292
    %v5325 = vsub.f32 %v4870, %v5293
    %v5326 = vsub.f32 %v5044, %v5294
    %v5327 = vsub.f32 %v4527, %v5291
    %v5328 = vsub.f32 %v4701, %v5292
    %v5329 = vsub.f32 %v4875, %v5293
    %v5330 = vsub.f32 %v5049, %v5294
    %v5331 = vsub.f32 %v4530, %v5291
    %v5332 = vsub.f32 %v4704, %v5292
    %v5333 = vsub.f32 %v4878, %v5293
    %v5334 = vsub.f32 %v5052, %v5294
    %v5335 = vsub.f32 %v4535, %v5291
    %v5336 = vsub.f32 %v4709, %v5292
    %v5337 = vsub.f32 %v4883, %v5293
    %v5338 = vsub.f32 %v5057, %v5294
    %v5339 = vsub.f32 %v4538, %v5291
    %v5340 = vsub.f32 %v4712, %v5292
    %v5341 = vsub.f32 %v4886, %v5293
    %v5342 = vsub.f32 %v5060, %v5294
    %v5343 = vsub.f32 %v4543, %v5291
    %v5344 = vsub.f32 %v4717, %v5292
    %v5345 = vsub.f32 %v4891, %v5293
    %v5346 = vsub.f32 %v5065, %v5294
    %v5347 = vsub.f32 %v4546, %v5291
    %v5348 = vsub.f32 %v4720, %v5292
    %v5349 = vsub.f32 %v4894, %v5293
    %v5350 = vsub.f32 %v5068, %v5294
    %v5351 = vsub.f32 %v4551, %v5291
    %v5352 = vsub.f32 %v4725, %v5292
    %v5353 = vsub.f32 %v4899, %v5293
    %v5354 = vsub.f32 %v5073, %v5294
    %v5355 = vsub.f32 %v4554, %v5291
    %v5356 = vsub.f32 %v4728, %v5292
    %v5357 = vsub.f32 %v4902, %v5293
    %v5358 = vsub.f32 %v5076, %v5294
    %v5359 = vsub.f32 %v4559, %v5291
    %v5360 = vsub.f32 %v4733, %v5292
    %v5361 = vsub.f32 %v4907, %v5293
    %v5362 = vsub.f32 %v5081, %v5294
    %v5363 = vsub.f32 %v4562, %v5291
    %v5364 = vsub.f32 %v4736, %v5292
    %v5365 = vsub.f32 %v4910, %v5293
    %v5366 = vsub.f32 %v5084, %v5294
    %v5367 = vsub.f32 %v4567, %v5291
    %v5368 = vsub.f32 %v4741, %v5292
    %v5369 = vsub.f32 %v4915, %v5293
    %v5370 = vsub.f32 %v5089, %v5294
    %v5371 = vsub.f32 %v4570, %v5291
    %v5372 = vsub.f32 %v4744, %v5292
    %v5373 = vsub.f32 %v4918, %v5293
    %v5374 = vsub.f32 %v5092, %v5294
    %v5375 = vsub.f32 %v4575, %v5291
    %v5376 = vsub.f32 %v4749, %v5292
    %v5377 = vsub.f32 %v4923, %v5293
    %v5378 = vsub.f32 %v5097, %v5294
    %v5379 = vsub.f32 %v4578, %v5291
    %v5380 = vsub.f32 %v4752, %v5292
    %v5381 = vsub.f32 %v4926, %v5293
    %v5382 = vsub.f32 %v5100, %v5294
    %v5383 = vsub.f32 %v4583, %v5291
    %v5384 = vsub.f32 %v4757, %v5292
    %v5385 = vsub.f32 %v4931, %v5293
    %v5386 = vsub.f32 %v5105, %v5294
    %v5387 = vsub.f32 %v4586, %v5291
    %v5388 = vsub.f32 %v4760, %v5292
    %v5389 = vsub.f32 %v4934, %v5293
    %v5390 = vsub.f32 %v5108, %v5294
    %v5391 = vsub.f32 %v4591, %v5291
    %v5392 = vsub.f32 %v4765, %v5292
    %v5393 = vsub.f32 %v4939, %v5293
    %v5394 = vsub.f32 %v5113, %v5294
    %v5395 = vsub.f32 %v4594, %v5291
    %v5396 = vsub.f32 %v4768, %v5292
    %v5397 = vsub.f32 %v4942, %v5293
    %v5398 = vsub.f32 %v5116, %v5294
    %v5399 = vsub.f32 %v4599, %v5291
    %v5400 = vsub.f32 %v4773, %v5292
    %v5401 = vsub.f32 %v4947, %v5293
    %v5402 = vsub.f32 %v5121, %v5294
    %v5403 = vsub.f32 %v4602, %v5291
    %v5404 = vsub.f32 %v4776, %v5292
    %v5405 = vsub.f32 %v4950, %v5293
    %v5406 = vsub.f32 %v5124, %v5294
    %v5407 = vsub.f32 %v4607, %v5291
    %v5408 = vsub.f32 %v4781, %v5292
    %v5409 = vsub.f32 %v4955, %v5293
    %v5410 = vsub.f32 %v5129, %v5294
    %v5411 = vsub.f32 %v4610, %v5291
    %v5412 = vsub.f32 %v4784, %v5292
    %v5413 = vsub.f32 %v4958, %v5293
    %v5414 = vsub.f32 %v5132, %v5294
    %v5415 = vsub.f32 %v4615, %v5291
    %v5416 = vsub.f32 %v4789, %v5292
    %v5417 = vsub.f32 %v4963, %v5293
    %v5418 = vsub.f32 %v5137, %v5294
    %v5419 = vsub.f32 %v4618, %v5291
    %v5420 = vsub.f32 %v4792, %v5292
    %v5421 = vsub.f32 %v4966, %v5293
    %v5422 = vsub.f32 %v5140, %v5294
    %v5423 = vmul.f32 %v5295, %v5295
    %v5424 = vmul.f32 %v5296, %v5296
    %v5425 = vmul.f32 %v5297, %v5297
    %v5426 = vmul.f32 %v5298, %v5298
    %v5427 = vmul.f32 %v5299, %v5299
    %v5428 = vmul.f32 %v5300, %v5300
    %v5429 = vmul.f32 %v5301, %v5301
    %v5430 = vmul.f32 %v5302, %v5302
    %v5431 = vmul.f32 %v5303, %v5303
    %v5432 = vmul.f32 %v5304, %v5304
    %v5433 = vmul.f32 %v5305, %v5305
    %v5434 = vmul.f32 %v5306, %v5306
    %v5435 = vmul.f32 %v5307, %v5307
    %v5436 = vmul.f32 %v5308, %v5308
    %v5437 = vmul.f32 %v5309, %v5309
    %v5438 = vmul.f32 %v5310, %v5310
    %v5439 = vmul.f32 %v5311, %v5311
    %v5440 = vmul.f32 %v5312, %v5312
    %v5441 = vmul.f32 %v5313, %v5313
    %v5442 = vmul.f32 %v5314, %v5314
    %v5443 = vmul.f32 %v5315, %v5315
    %v5444 = vmul.f32 %v5316, %v5316
    %v5445 = vmul.f32 %v5317, %v5317
    %v5446 = vmul.f32 %v5318, %v5318
    %v5447 = vmul.f32 %v5319, %v5319
    %v5448 = vmul.f32 %v5320, %v5320
    %v5449 = vmul.f32 %v5321, %v5321
    %v5450 = vmul.f32 %v5322, %v5322
    %v5451 = vmul.f32 %v5323, %v5323
    %v5452 = vmul.f32 %v5324, %v5324
    %v5453 = vmul.f32 %v5325, %v5325
    %v5454 = vmul.f32 %v5326, %v5326
    %v5455 = vmul.f32 %v5327, %v5327
    %v5456 = vmul.f32 %v5328, %v5328
    %v5457 = vmul.f32 %v5329, %v5329
    %v5458 = vmul.f32 %v5330, %v5330
    %v5459 = vmul.f32 %v5331, %v5331
    %v5460 = vmul.f32 %v5332, %v5332
    %v5461 = vmul.f32 %v5333, %v5333
    %v5462 = vmul.f32 %v5334, %v5334
    %v5463 = vmul.f32 %v5335, %v5335
    %v5464 = vmul.f32 %v5336, %v5336
    %v5465 = vmul.f32 %v5337, %v5337
    %v5466 = vmul.f32 %v5338, %v5338
    %v5467 = vmul.f32 %v5339, %v5339
    %v5468 = vmul.f32 %v5340, %v5340
    %v5469 = vmul.f32 %v5341, %v5341
    %v5470 = vmul.f32 %v5342, %v5342
    %v5471 = vmul.f32 %v5343, %v5343
    %v5472 = vmul.f32 %v5344, %v5344
    %v5473 = vmul.f32 %v5345, %v5345
    %v5474 = vmul.f32 %v5346, %v5346
    %v5475 = vmul.f32 %v5347, %v5347
    %v5476 = vmul.f32 %v5348, %v5348
    %v5477 = vmul.f32 %v5349, %v5349
    %v5478 = vmul.f32 %v5350, %v5350
    %v5479 = vmul.f32 %v5351, %v5351
    %v5480 = vmul.f32 %v5352, %v5352
    %v5481 = vmul.f32 %v5353, %v5353
    %v5482 = vmul.f32 %v5354, %v5354
    %v5483 = vmul.f32 %v5355, %v5355
    %v5484 = vmul.f32 %v5356, %v5356
    %v5485 = vmul.f32 %v5357, %v5357
    %v5486 = vmul.f32 %v5358, %v5358
    %v5487 = vmul.f32 %v5359, %v5359
    %v5488 = vmul.f32 %v5360, %v5360
    %v5489 = vmul.f32 %v5361, %v5361
    %v5490 = vmul.f32 %v5362, %v5362
    %v5491 = vmul.f32 %v5363, %v5363
    %v5492 = vmul.f32 %v5364, %v5364
    %v5493 = vmul.f32 %v5365, %v5365
    %v5494 = vmul.f32 %v5366, %v5366
    %v5495 = vmul.f32 %v5367, %v5367
    %v5496 = vmul.f32 %v5368, %v5368
    %v5497 = vmul.f32 %v5369, %v5369
    %v5498 = vmul.f32 %v5370, %v5370
    %v5499 = vmul.f32 %v5371, %v5371
    %v5500 = vmul.f32 %v5372, %v5372
    %v5501 = vmul.f32 %v5373, %v5373
    %v5502 = vmul.f32 %v5374, %v5374
    %v5503 = vmul.f32 %v5375, %v5375
    %v5504 = vmul.f32 %v5376, %v5376
    %v5505 = vmul.f32 %v5377, %v5377
    %v5506 = vmul.f32 %v5378, %v5378
    %v5507 = vmul.f32 %v5379, %v5379
    %v5508 = vmul.f32 %v5380, %v5380
    %v5509 = vmul.f32 %v5381, %v5381
    %v5510 = vmul.f32 %v5382, %v5382
    %v5511 = vmul.f32 %v5383, %v5383
    %v5512 = vmul.f32 %v5384, %v5384
    %v5513 = vmul.f32 %v5385, %v5385
    %v5514 = vmul.f32 %v5386, %v5386
    %v5515 = vmul.f32 %v5387, %v5387
    %v5516 = vmul.f32 %v5388, %v5388
    %v5517 = vmul.f32 %v5389, %v5389
    %v5518 = vmul.f32 %v5390, %v5390
    %v5519 = vmul.f32 %v5391, %v5391
    %v5520 = vmul.f32 %v5392, %v5392
    %v5521 = vmul.f32 %v5393, %v5393
    %v5522 = vmul.f32 %v5394, %v5394
    %v5523 = vmul.f32 %v5395, %v5395
    %v5524 = vmul.f32 %v5396, %v5396
    %v5525 = vmul.f32 %v5397, %v5397
    %v5526 = vmul.f32 %v5398, %v5398
    %v5527 = vmul.f32 %v5399, %v5399
    %v5528 = vmul.f32 %v5400, %v5400
    %v5529 = vmul.f32 %v5401, %v5401
    %v5530 = vmul.f32 %v5402, %v5402
    %v5531 = vmul.f32 %v5403, %v5403
    %v5532 = vmul.f32 %v5404, %v5404
    %v5533 = vmul.f32 %v5405, %v5405
    %v5534 = vmul.f32 %v5406, %v5406
    %v5535 = vmul.f32 %v5407, %v5407
    %v5536 = vmul.f32 %v5408, %v5408
    %v5537 = vmul.f32 %v5409, %v5409
    %v5538 = vmul.f32 %v5410, %v5410
    %v5539 = vmul.f32 %v5411, %v5411
    %v5540 = vmul.f32 %v5412, %v5412
    %v5541 = vmul.f32 %v5413, %v5413
    %v5542 = vmul.f32 %v5414, %v5414
    %v5543 = vmul.f32 %v5415, %v5415
    %v5544 = vmul.f32 %v5416, %v5416
    %v5545 = vmul.f32 %v5417, %v5417
    %v5546 = vmul.f32 %v5418, %v5418
    %v5547 = vmul.f32 %v5419, %v5419
    %v5548 = vmul.f32 %v5420, %v5420
    %v5549 = vmul.f32 %v5421, %v5421
    %v5550 = vmul.f32 %v5422, %v5422
    %v5551 = vadd.f32 %v5423, %v5427
    %v5552 = vadd.f32 %v5551, %v5431
    %v5553 = vadd.f32 %v5552, %v5435
    %v5554 = vadd.f32 %v5553, %v5439
    %v5555 = vadd.f32 %v5554, %v5443
    %v5556 = vadd.f32 %v5555, %v5447
    %v5557 = vadd.f32 %v5556, %v5451
    %v5558 = vadd.f32 %v5557, %v5455
    %v5559 = vadd.f32 %v5558, %v5459
    %v5560 = vadd.f32 %v5559, %v5463
    %v5561 = vadd.f32 %v5560, %v5467
    %v5562 = vadd.f32 %v5561, %v5471
    %v5563 = vadd.f32 %v5562, %v5475
    %v5564 = vadd.f32 %v5563, %v5479
    %v5565 = vadd.f32 %v5564, %v5483
    %v5566 = vadd.f32 %v5565, %v5487
    %v5567 = vadd.f32 %v5566, %v5491
    %v5568 = vadd.f32 %v5567, %v5495
    %v5569 = vadd.f32 %v5568, %v5499
    %v5570 = vadd.f32 %v5569, %v5503
    %v5571 = vadd.f32 %v5570, %v5507
    %v5572 = vadd.f32 %v5571, %v5511
    %v5573 = vadd.f32 %v5572, %v5515
    %v5574 = vadd.f32 %v5573, %v5519
    %v5575 = vadd.f32 %v5574, %v5523
    %v5576 = vadd.f32 %v5575, %v5527
    %v5577 = vadd.f32 %v5576, %v5531
    %v5578 = vadd.f32 %v5577, %v5535
    %v5579 = vadd.f32 %v5578, %v5539
    %v5580 = vadd.f32 %v5579, %v5543
    %v5581 = vadd.f32 %v5580, %v5547
    %v5582 = vrot.slane %v5581, 4
    %v5583 = vadd.f32 %v5581, %v5582
    %v5584 = vrot.slane %v5583, 2
    %v5585 = vadd.f32 %v5583, %v5584
    %v5586 = vrot.slane %v5585, 1
    %v5587 = vadd.f32 %v5585, %v5586
    %v5588 = vadd.f32 %v5424, %v5428
    %v5589 = vadd.f32 %v5588, %v5432
    %v5590 = vadd.f32 %v5589, %v5436
    %v5591 = vadd.f32 %v5590, %v5440
    %v5592 = vadd.f32 %v5591, %v5444
    %v5593 = vadd.f32 %v5592, %v5448
    %v5594 = vadd.f32 %v5593, %v5452
    %v5595 = vadd.f32 %v5594, %v5456
    %v5596 = vadd.f32 %v5595, %v5460
    %v5597 = vadd.f32 %v5596, %v5464
    %v5598 = vadd.f32 %v5597, %v5468
    %v5599 = vadd.f32 %v5598, %v5472
    %v5600 = vadd.f32 %v5599, %v5476
    %v5601 = vadd.f32 %v5600, %v5480
    %v5602 = vadd.f32 %v5601, %v5484
    %v5603 = vadd.f32 %v5602, %v5488
    %v5604 = vadd.f32 %v5603, %v5492
    %v5605 = vadd.f32 %v5604, %v5496
    %v5606 = vadd.f32 %v5605, %v5500
    %v5607 = vadd.f32 %v5606, %v5504
    %v5608 = vadd.f32 %v5607, %v5508
    %v5609 = vadd.f32 %v5608, %v5512
    %v5610 = vadd.f32 %v5609, %v5516
    %v5611 = vadd.f32 %v5610, %v5520
    %v5612 = vadd.f32 %v5611, %v5524
    %v5613 = vadd.f32 %v5612, %v5528
    %v5614 = vadd.f32 %v5613, %v5532
    %v5615 = vadd.f32 %v5614, %v5536
    %v5616 = vadd.f32 %v5615, %v5540
    %v5617 = vadd.f32 %v5616, %v5544
    %v5618 = vadd.f32 %v5617, %v5548
    %v5619 = vrot.slane %v5618, 4
    %v5620 = vadd.f32 %v5618, %v5619
    %v5621 = vrot.slane %v5620, 2
    %v5622 = vadd.f32 %v5620, %v5621
    %v5623 = vrot.slane %v5622, 1
    %v5624 = vadd.f32 %v5622, %v5623
    %v5625 = vadd.f32 %v5425, %v5429
    %v5626 = vadd.f32 %v5625, %v5433
    %v5627 = vadd.f32 %v5626, %v5437
    %v5628 = vadd.f32 %v5627, %v5441
    %v5629 = vadd.f32 %v5628, %v5445
    %v5630 = vadd.f32 %v5629, %v5449
    %v5631 = vadd.f32 %v5630, %v5453
    %v5632 = vadd.f32 %v5631, %v5457
    %v5633 = vadd.f32 %v5632, %v5461
    %v5634 = vadd.f32 %v5633, %v5465
    %v5635 = vadd.f32 %v5634, %v5469
    %v5636 = vadd.f32 %v5635, %v5473
    %v5637 = vadd.f32 %v5636, %v5477
    %v5638 = vadd.f32 %v5637, %v5481
    %v5639 = vadd.f32 %v5638, %v5485
    %v5640 = vadd.f32 %v5639, %v5489
    %v5641 = vadd.f32 %v5640, %v5493
    %v5642 = vadd.f32 %v5641, %v5497
    %v5643 = vadd.f32 %v5642, %v5501
    %v5644 = vadd.f32 %v5643, %v5505
    %v5645 = vadd.f32 %v5644, %v5509
    %v5646 = vadd.f32 %v5645, %v5513
    %v5647 = vadd.f32 %v5646, %v5517
    %v5648 = vadd.f32 %v5647, %v5521
    %v5649 = vadd.f32 %v5648, %v5525
    %v5650 = vadd.f32 %v5649, %v5529
    %v5651 = vadd.f32 %v5650, %v5533
    %v5652 = vadd.f32 %v5651, %v5537
    %v5653 = vadd.f32 %v5652, %v5541
    %v5654 = vadd.f32 %v5653, %v5545
    %v5655 = vadd.f32 %v5654, %v5549
    %v5656 = vrot.slane %v5655, 4
    %v5657 = vadd.f32 %v5655, %v5656
    %v5658 = vrot.slane %v5657, 2
    %v5659 = vadd.f32 %v5657, %v5658
    %v5660 = vrot.slane %v5659, 1
    %v5661 = vadd.f32 %v5659, %v5660
    %v5662 = vadd.f32 %v5426, %v5430
    %v5663 = vadd.f32 %v5662, %v5434
    %v5664 = vadd.f32 %v5663, %v5438
    %v5665 = vadd.f32 %v5664, %v5442
    %v5666 = vadd.f32 %v5665, %v5446
    %v5667 = vadd.f32 %v5666, %v5450
    %v5668 = vadd.f32 %v5667, %v5454
    %v5669 = vadd.f32 %v5668, %v5458
    %v5670 = vadd.f32 %v5669, %v5462
    %v5671 = vadd.f32 %v5670, %v5466
    %v5672 = vadd.f32 %v5671, %v5470
    %v5673 = vadd.f32 %v5672, %v5474
    %v5674 = vadd.f32 %v5673, %v5478
    %v5675 = vadd.f32 %v5674, %v5482
    %v5676 = vadd.f32 %v5675, %v5486
    %v5677 = vadd.f32 %v5676, %v5490
    %v5678 = vadd.f32 %v5677, %v5494
    %v5679 = vadd.f32 %v5678, %v5498
    %v5680 = vadd.f32 %v5679, %v5502
    %v5681 = vadd.f32 %v5680, %v5506
    %v5682 = vadd.f32 %v5681, %v5510
    %v5683 = vadd.f32 %v5682, %v5514
    %v5684 = vadd.f32 %v5683, %v5518
    %v5685 = vadd.f32 %v5684, %v5522
    %v5686 = vadd.f32 %v5685, %v5526
    %v5687 = vadd.f32 %v5686, %v5530
    %v5688 = vadd.f32 %v5687, %v5534
    %v5689 = vadd.f32 %v5688, %v5538
    %v5690 = vadd.f32 %v5689, %v5542
    %v5691 = vadd.f32 %v5690, %v5546
    %v5692 = vadd.f32 %v5691, %v5550
    %v5693 = vrot.slane %v5692, 4
    %v5694 = vadd.f32 %v5692, %v5693
    %v5695 = vrot.slane %v5694, 2
    %v5696 = vadd.f32 %v5694, %v5695
    %v5697 = vrot.slane %v5696, 1
    %v5698 = vadd.f32 %v5696, %v5697
    %v5699 = vmul.f32 %v5587, %v914
    %v5700 = vmul.f32 %v5624, %v914
    %v5701 = vmul.f32 %v5661, %v914
    %v5702 = vmul.f32 %v5698, %v914
    %v5703 = vadd.f32 %v5699, 1e-05
    %v5704 = vadd.f32 %v5700, 1e-05
    %v5705 = vadd.f32 %v5701, 1e-05
    %v5706 = vadd.f32 %v5702, 1e-05
    %v5707 = vrsqrt.pop %v5703
    %v5708 = vrsqrt.pop %v5704
    %v5709 = vrsqrt.pop %v5705
    %v5710 = vrsqrt.pop %v5706
    %v5711 = vmul.f32 %v5295, %v5707
    %v5712 = vmul.f32 %v5296, %v5708
    %v5713 = vmul.f32 %v5297, %v5709
    %v5714 = vmul.f32 %v5298, %v5710
    %v5715 = vmul.f32 %v5299, %v5707
    %v5716 = vmul.f32 %v5300, %v5708
    %v5717 = vmul.f32 %v5301, %v5709
    %v5718 = vmul.f32 %v5302, %v5710
    %v5719 = vmul.f32 %v5303, %v5707
    %v5720 = vmul.f32 %v5304, %v5708
    %v5721 = vmul.f32 %v5305, %v5709
    %v5722 = vmul.f32 %v5306, %v5710
    %v5723 = vmul.f32 %v5307, %v5707
    %v5724 = vmul.f32 %v5308, %v5708
    %v5725 = vmul.f32 %v5309, %v5709
    %v5726 = vmul.f32 %v5310, %v5710
    %v5727 = vmul.f32 %v5311, %v5707
    %v5728 = vmul.f32 %v5312, %v5708
    %v5729 = vmul.f32 %v5313, %v5709
    %v5730 = vmul.f32 %v5314, %v5710
    %v5731 = vmul.f32 %v5315, %v5707
    %v5732 = vmul.f32 %v5316, %v5708
    %v5733 = vmul.f32 %v5317, %v5709
    %v5734 = vmul.f32 %v5318, %v5710
    %v5735 = vmul.f32 %v5319, %v5707
    %v5736 = vmul.f32 %v5320, %v5708
    %v5737 = vmul.f32 %v5321, %v5709
    %v5738 = vmul.f32 %v5322, %v5710
    %v5739 = vmul.f32 %v5323, %v5707
    %v5740 = vmul.f32 %v5324, %v5708
    %v5741 = vmul.f32 %v5325, %v5709
    %v5742 = vmul.f32 %v5326, %v5710
    %v5743 = vmul.f32 %v5327, %v5707
    %v5744 = vmul.f32 %v5328, %v5708
    %v5745 = vmul.f32 %v5329, %v5709
    %v5746 = vmul.f32 %v5330, %v5710
    %v5747 = vmul.f32 %v5331, %v5707
    %v5748 = vmul.f32 %v5332, %v5708
    %v5749 = vmul.f32 %v5333, %v5709
    %v5750 = vmul.f32 %v5334, %v5710
    %v5751 = vmul.f32 %v5335, %v5707
    %v5752 = vmul.f32 %v5336, %v5708
    %v5753 = vmul.f32 %v5337, %v5709
    %v5754 = vmul.f32 %v5338, %v5710
    %v5755 = vmul.f32 %v5339, %v5707
    %v5756 = vmul.f32 %v5340, %v5708
    %v5757 = vmul.f32 %v5341, %v5709
    %v5758 = vmul.f32 %v5342, %v5710
    %v5759 = vmul.f32 %v5343, %v5707
    %v5760 = vmul.f32 %v5344, %v5708
    %v5761 = vmul.f32 %v5345, %v5709
    %v5762 = vmul.f32 %v5346, %v5710
    %v5763 = vmul.f32 %v5347, %v5707
    %v5764 = vmul.f32 %v5348, %v5708
    %v5765 = vmul.f32 %v5349, %v5709
    %v5766 = vmul.f32 %v5350, %v5710
    %v5767 = vmul.f32 %v5351, %v5707
    %v5768 = vmul.f32 %v5352, %v5708
    %v5769 = vmul.f32 %v5353, %v5709
    %v5770 = vmul.f32 %v5354, %v5710
    %v5771 = vmul.f32 %v5355, %v5707
    %v5772 = vmul.f32 %v5356, %v5708
    %v5773 = vmul.f32 %v5357, %v5709
    %v5774 = vmul.f32 %v5358, %v5710
    %v5775 = vmul.f32 %v5359, %v5707
    %v5776 = vmul.f32 %v5360, %v5708
    %v5777 = vmul.f32 %v5361, %v5709
    %v5778 = vmul.f32 %v5362, %v5710
    %v5779 = vmul.f32 %v5363, %v5707
    %v5780 = vmul.f32 %v5364, %v5708
    %v5781 = vmul.f32 %v5365, %v5709
    %v5782 = vmul.f32 %v5366, %v5710
    %v5783 = vmul.f32 %v5367, %v5707
    %v5784 = vmul.f32 %v5368, %v5708
    %v5785 = vmul.f32 %v5369, %v5709
    %v5786 = vmul.f32 %v5370, %v5710
    %v5787 = vmul.f32 %v5371, %v5707
    %v5788 = vmul.f32 %v5372, %v5708
    %v5789 = vmul.f32 %v5373, %v5709
    %v5790 = vmul.f32 %v5374, %v5710
    %v5791 = vmul.f32 %v5375, %v5707
    %v5792 = vmul.f32 %v5376, %v5708
    %v5793 = vmul.f32 %v5377, %v5709
    %v5794 = vmul.f32 %v5378, %v5710
    %v5795 = vmul.f32 %v5379, %v5707
    %v5796 = vmul.f32 %v5380, %v5708
    %v5797 = vmul.f32 %v5381, %v5709
    %v5798 = vmul.f32 %v5382, %v5710
    %v5799 = vmul.f32 %v5383, %v5707
    %v5800 = vmul.f32 %v5384, %v5708
    %v5801 = vmul.f32 %v5385, %v5709
    %v5802 = vmul.f32 %v5386, %v5710
    %v5803 = vmul.f32 %v5387, %v5707
    %v5804 = vmul.f32 %v5388, %v5708
    %v5805 = vmul.f32 %v5389, %v5709
    %v5806 = vmul.f32 %v5390, %v5710
    %v5807 = vmul.f32 %v5391, %v5707
    %v5808 = vmul.f32 %v5392, %v5708
    %v5809 = vmul.f32 %v5393, %v5709
    %v5810 = vmul.f32 %v5394, %v5710
    %v5811 = vmul.f32 %v5395, %v5707
    %v5812 = vmul.f32 %v5396, %v5708
    %v5813 = vmul.f32 %v5397, %v5709
    %v5814 = vmul.f32 %v5398, %v5710
    %v5815 = vmul.f32 %v5399, %v5707
    %v5816 = vmul.f32 %v5400, %v5708
    %v5817 = vmul.f32 %v5401, %v5709
    %v5818 = vmul.f32 %v5402, %v5710
    %v5819 = vmul.f32 %v5403, %v5707
    %v5820 = vmul.f32 %v5404, %v5708
    %v5821 = vmul.f32 %v5405, %v5709
    %v5822 = vmul.f32 %v5406, %v5710
    %v5823 = vmul.f32 %v5407, %v5707
    %v5824 = vmul.f32 %v5408, %v5708
    %v5825 = vmul.f32 %v5409, %v5709
    %v5826 = vmul.f32 %v5410, %v5710
    %v5827 = vmul.f32 %v5411, %v5707
    %v5828 = vmul.f32 %v5412, %v5708
    %v5829 = vmul.f32 %v5413, %v5709
    %v5830 = vmul.f32 %v5414, %v5710
    %v5831 = vmul.f32 %v5415, %v5707
    %v5832 = vmul.f32 %v5416, %v5708
    %v5833 = vmul.f32 %v5417, %v5709
    %v5834 = vmul.f32 %v5418, %v5710
    %v5835 = vmul.f32 %v5419, %v5707
    %v5836 = vmul.f32 %v5420, %v5708
    %v5837 = vmul.f32 %v5421, %v5709
    %v5838 = vmul.f32 %v5422, %v5710
    %v5839 = vmax.f32 %v5711, 0.0
    %v5840 = vmax.f32 %v5712, 0.0
    %v5841 = vmax.f32 %v5713, 0.0
    %v5842 = vmax.f32 %v5714, 0.0
    %v5843 = vmax.f32 %v5715, 0.0
    %v5844 = vmax.f32 %v5716, 0.0
    %v5845 = vmax.f32 %v5717, 0.0
    %v5846 = vmax.f32 %v5718, 0.0
    %v5847 = vmax.f32 %v5719, 0.0
    %v5848 = vmax.f32 %v5720, 0.0
    %v5849 = vmax.f32 %v5721, 0.0
    %v5850 = vmax.f32 %v5722, 0.0
    %v5851 = vmax.f32 %v5723, 0.0
    %v5852 = vmax.f32 %v5724, 0.0
    %v5853 = vmax.f32 %v5725, 0.0
    %v5854 = vmax.f32 %v5726, 0.0
    %v5855 = vmax.f32 %v5727, 0.0
    %v5856 = vmax.f32 %v5728, 0.0
    %v5857 = vmax.f32 %v5729, 0.0
    %v5858 = vmax.f32 %v5730, 0.0
    %v5859 = vmax.f32 %v5731, 0.0
    %v5860 = vmax.f32 %v5732, 0.0
    %v5861 = vmax.f32 %v5733, 0.0
    %v5862 = vmax.f32 %v5734, 0.0
    %v5863 = vmax.f32 %v5735, 0.0
    %v5864 = vmax.f32 %v5736, 0.0
    %v5865 = vmax.f32 %v5737, 0.0
    %v5866 = vmax.f32 %v5738, 0.0
    %v5867 = vmax.f32 %v5739, 0.0
    %v5868 = vmax.f32 %v5740, 0.0
    %v5869 = vmax.f32 %v5741, 0.0
    %v5870 = vmax.f32 %v5742, 0.0
    %v5871 = vmax.f32 %v5743, 0.0
    %v5872 = vmax.f32 %v5744, 0.0
    %v5873 = vmax.f32 %v5745, 0.0
    %v5874 = vmax.f32 %v5746, 0.0
    %v5875 = vmax.f32 %v5747, 0.0
    %v5876 = vmax.f32 %v5748, 0.0
    %v5877 = vmax.f32 %v5749, 0.0
    %v5878 = vmax.f32 %v5750, 0.0
    %v5879 = vmax.f32 %v5751, 0.0
    %v5880 = vmax.f32 %v5752, 0.0
    %v5881 = vmax.f32 %v5753, 0.0
    %v5882 = vmax.f32 %v5754, 0.0
    %v5883 = vmax.f32 %v5755, 0.0
    %v5884 = vmax.f32 %v5756, 0.0
    %v5885 = vmax.f32 %v5757, 0.0
    %v5886 = vmax.f32 %v5758, 0.0
    %v5887 = vmax.f32 %v5759, 0.0
    %v5888 = vmax.f32 %v5760, 0.0
    %v5889 = vmax.f32 %v5761, 0.0
    %v5890 = vmax.f32 %v5762, 0.0
    %v5891 = vmax.f32 %v5763, 0.0
    %v5892 = vmax.f32 %v5764, 0.0
    %v5893 = vmax.f32 %v5765, 0.0
    %v5894 = vmax.f32 %v5766, 0.0
    %v5895 = vmax.f32 %v5767, 0.0
    %v5896 = vmax.f32 %v5768, 0.0
    %v5897 = vmax.f32 %v5769, 0.0
    %v5898 = vmax.f32 %v5770, 0.0
    %v5899 = vmax.f32 %v5771, 0.0
    %v5900 = vmax.f32 %v5772, 0.0
    %v5901 = vmax.f32 %v5773, 0.0
    %v5902 = vmax.f32 %v5774, 0.0
    %v5903 = vmax.f32 %v5775, 0.0
    %v5904 = vmax.f32 %v5776, 0.0
    %v5905 = vmax.f32 %v5777, 0.0
    %v5906 = vmax.f32 %v5778, 0.0
    %v5907 = vmax.f32 %v5779, 0.0
    %v5908 = vmax.f32 %v5780, 0.0
    %v5909 = vmax.f32 %v5781, 0.0
    %v5910 = vmax.f32 %v5782, 0.0
    %v5911 = vmax.f32 %v5783, 0.0
    %v5912 = vmax.f32 %v5784, 0.0
    %v5913 = vmax.f32 %v5785, 0.0
    %v5914 = vmax.f32 %v5786, 0.0
    %v5915 = vmax.f32 %v5787, 0.0
    %v5916 = vmax.f32 %v5788, 0.0
    %v5917 = vmax.f32 %v5789, 0.0
    %v5918 = vmax.f32 %v5790, 0.0
    %v5919 = vmax.f32 %v5791, 0.0
    %v5920 = vmax.f32 %v5792, 0.0
    %v5921 = vmax.f32 %v5793, 0.0
    %v5922 = vmax.f32 %v5794, 0.0
    %v5923 = vmax.f32 %v5795, 0.0
    %v5924 = vmax.f32 %v5796, 0.0
    %v5925 = vmax.f32 %v5797, 0.0
    %v5926 = vmax.f32 %v5798, 0.0
    %v5927 = vmax.f32 %v5799, 0.0
    %v5928 = vmax.f32 %v5800, 0.0
    %v5929 = vmax.f32 %v5801, 0.0
    %v5930 = vmax.f32 %v5802, 0.0
    %v5931 = vmax.f32 %v5803, 0.0
    %v5932 = vmax.f32 %v5804, 0.0
    %v5933 = vmax.f32 %v5805, 0.0
    %v5934 = vmax.f32 %v5806, 0.0
    %v5935 = vmax.f32 %v5807, 0.0
    %v5936 = vmax.f32 %v5808, 0.0
    %v5937 = vmax.f32 %v5809, 0.0
    %v5938 = vmax.f32 %v5810, 0.0
    %v5939 = vmax.f32 %v5811, 0.0
    %v5940 = vmax.f32 %v5812, 0.0
    %v5941 = vmax.f32 %v5813, 0.0
    %v5942 = vmax.f32 %v5814, 0.0
    %v5943 = vmax.f32 %v5815, 0.0
    %v5944 = vmax.f32 %v5816, 0.0
    %v5945 = vmax.f32 %v5817, 0.0
    %v5946 = vmax.f32 %v5818, 0.0
    %v5947 = vmax.f32 %v5819, 0.0
    %v5948 = vmax.f32 %v5820, 0.0
    %v5949 = vmax.f32 %v5821, 0.0
    %v5950 = vmax.f32 %v5822, 0.0
    %v5951 = vmax.f32 %v5823, 0.0
    %v5952 = vmax.f32 %v5824, 0.0
    %v5953 = vmax.f32 %v5825, 0.0
    %v5954 = vmax.f32 %v5826, 0.0
    %v5955 = vmax.f32 %v5827, 0.0
    %v5956 = vmax.f32 %v5828, 0.0
    %v5957 = vmax.f32 %v5829, 0.0
    %v5958 = vmax.f32 %v5830, 0.0
    %v5959 = vmax.f32 %v5831, 0.0
    %v5960 = vmax.f32 %v5832, 0.0
    %v5961 = vmax.f32 %v5833, 0.0
    %v5962 = vmax.f32 %v5834, 0.0
    %v5963 = vmax.f32 %v5835, 0.0
    %v5964 = vmax.f32 %v5836, 0.0
    %v5965 = vmax.f32 %v5837, 0.0
    %v5966 = vmax.f32 %v5838, 0.0
    %v5967 = vpack.c.bf16 %v5843, %v5839
    %v5968 = vpack.c.bf16 %v5844, %v5840
    %v5969 = vpack.c.bf16 %v5845, %v5841
    %v5970 = vpack.c.bf16 %v5846, %v5842
    %v5971 = vpack.c.bf16 %v5851, %v5847
    %v5972 = vpack.c.bf16 %v5852, %v5848
    %v5973 = vpack.c.bf16 %v5853, %v5849
    %v5974 = vpack.c.bf16 %v5854, %v5850
    %v5975 = vpack.c.bf16 %v5859, %v5855
    %v5976 = vpack.c.bf16 %v5860, %v5856
    %v5977 = vpack.c.bf16 %v5861, %v5857
    %v5978 = vpack.c.bf16 %v5862, %v5858
    %v5979 = vpack.c.bf16 %v5867, %v5863
    %v5980 = vpack.c.bf16 %v5868, %v5864
    %v5981 = vpack.c.bf16 %v5869, %v5865
    %v5982 = vpack.c.bf16 %v5870, %v5866
    %v5983 = vpack.c.bf16 %v5875, %v5871
    %v5984 = vpack.c.bf16 %v5876, %v5872
    %v5985 = vpack.c.bf16 %v5877, %v5873
    %v5986 = vpack.c.bf16 %v5878, %v5874
    %v5987 = vpack.c.bf16 %v5883, %v5879
    %v5988 = vpack.c.bf16 %v5884, %v5880
    %v5989 = vpack.c.bf16 %v5885, %v5881
    %v5990 = vpack.c.bf16 %v5886, %v5882
    %v5991 = vpack.c.bf16 %v5891, %v5887
    %v5992 = vpack.c.bf16 %v5892, %v5888
    %v5993 = vpack.c.bf16 %v5893, %v5889
    %v5994 = vpack.c.bf16 %v5894, %v5890
    %v5995 = vpack.c.bf16 %v5899, %v5895
    %v5996 = vpack.c.bf16 %v5900, %v5896
    %v5997 = vpack.c.bf16 %v5901, %v5897
    %v5998 = vpack.c.bf16 %v5902, %v5898
    %v5999 = vpack.c.bf16 %v5907, %v5903
    %v6000 = vpack.c.bf16 %v5908, %v5904
    %v6001 = vpack.c.bf16 %v5909, %v5905
    %v6002 = vpack.c.bf16 %v5910, %v5906
    %v6003 = vpack.c.bf16 %v5915, %v5911
    %v6004 = vpack.c.bf16 %v5916, %v5912
    %v6005 = vpack.c.bf16 %v5917, %v5913
    %v6006 = vpack.c.bf16 %v5918, %v5914
    %v6007 = vpack.c.bf16 %v5923, %v5919
    %v6008 = vpack.c.bf16 %v5924, %v5920
    %v6009 = vpack.c.bf16 %v5925, %v5921
    %v6010 = vpack.c.bf16 %v5926, %v5922
    %v6011 = vpack.c.bf16 %v5931, %v5927
    %v6012 = vpack.c.bf16 %v5932, %v5928
    %v6013 = vpack.c.bf16 %v5933, %v5929
    %v6014 = vpack.c.bf16 %v5934, %v5930
    %v6015 = vpack.c.bf16 %v5939, %v5935
    %v6016 = vpack.c.bf16 %v5940, %v5936
    %v6017 = vpack.c.bf16 %v5941, %v5937
    %v6018 = vpack.c.bf16 %v5942, %v5938
    %v6019 = vpack.c.bf16 %v5947, %v5943
    %v6020 = vpack.c.bf16 %v5948, %v5944
    %v6021 = vpack.c.bf16 %v5949, %v5945
    %v6022 = vpack.c.bf16 %v5950, %v5946
    %v6023 = vpack.c.bf16 %v5955, %v5951
    %v6024 = vpack.c.bf16 %v5956, %v5952
    %v6025 = vpack.c.bf16 %v5957, %v5953
    %v6026 = vpack.c.bf16 %v5958, %v5954
    %v6027 = vpack.c.bf16 %v5963, %v5959
    %v6028 = vpack.c.bf16 %v5964, %v5960
    %v6029 = vpack.c.bf16 %v5965, %v5961
    %v6030 = vpack.c.bf16 %v5966, %v5962
    %v6031 = vld [vmem:[#allocation5 + $0x308] sm:$0xf]
    %v6032 = vld [vmem:[#allocation5 + $0x30c] sm:$0xf]
    %v6033 = vld [vmem:[#allocation5 + $0x310] sm:$0xf]
    %v6034 = vld [vmem:[#allocation5 + $0x314] sm:$0xf]
    %v6035 = vld [vmem:[#allocation5 + $0x318] sm:$0xf]
    %v6036 = vld [vmem:[#allocation5 + $0x31c] sm:$0xf]
    %v6037 = vld [vmem:[#allocation5 + $0x320] sm:$0xf]
    %v6038 = vld [vmem:[#allocation5 + $0x324] sm:$0xf]
    %v6039 = vld [vmem:[#allocation5 + $0x328] sm:$0xf]
    %v6040 = vld [vmem:[#allocation5 + $0x32c] sm:$0xf]
    %v6041 = vld [vmem:[#allocation5 + $0x330] sm:$0xf]
    %v6042 = vld [vmem:[#allocation5 + $0x334] sm:$0xf]
    %v6043 = vld [vmem:[#allocation5 + $0x338] sm:$0xf]
    %v6044 = vld [vmem:[#allocation5 + $0x33c] sm:$0xf]
    %v6045 = vld [vmem:[#allocation5 + $0x340] sm:$0xf]
    %v6046 = vld [vmem:[#allocation5 + $0x344] sm:$0xf]
    %v6047 = vld [vmem:[#allocation5 + $0x348] sm:$0xf]
    %v6048 = vld [vmem:[#allocation5 + $0x34c] sm:$0xf]
    %v6049 = vld [vmem:[#allocation5 + $0x350] sm:$0xf]
    %v6050 = vld [vmem:[#allocation5 + $0x354] sm:$0xf]
    %v6051 = vld [vmem:[#allocation5 + $0x358] sm:$0xf]
    %v6052 = vld [vmem:[#allocation5 + $0x35c] sm:$0xf]
    %v6053 = vld [vmem:[#allocation5 + $0x360] sm:$0xf]
    %v6054 = vld [vmem:[#allocation5 + $0x364] sm:$0xf]
    %v6055 = vld [vmem:[#allocation5 + $0x368] sm:$0xf]
    %v6056 = vld [vmem:[#allocation5 + $0x36c] sm:$0xf]
    %v6057 = vld [vmem:[#allocation5 + $0x370] sm:$0xf]
    %v6058 = vld [vmem:[#allocation5 + $0x374] sm:$0xf]
    %v6059 = vld [vmem:[#allocation5 + $0x378] sm:$0xf]
    %v6060 = vld [vmem:[#allocation5 + $0x37c] sm:$0xf]
    %v6061 = vld [vmem:[#allocation5 + $0x380] sm:$0xf]
    %v6062 = vld [vmem:[#allocation5 + $0x384] sm:$0xf]
    %v6063 = vld [vmem:[#allocation5 + $0x388] sm:$0xf]
    %v6064 = vld [vmem:[#allocation5 + $0x38c] sm:$0xf]
    %v6065 = vld [vmem:[#allocation5 + $0x390] sm:$0xf]
    %v6066 = vld [vmem:[#allocation5 + $0x394] sm:$0xf]
    %v6067 = vld [vmem:[#allocation5 + $0x398] sm:$0xf]
    %v6068 = vld [vmem:[#allocation5 + $0x39c] sm:$0xf]
    %v6069 = vld [vmem:[#allocation5 + $0x3a0] sm:$0xf]
    %v6070 = vld [vmem:[#allocation5 + $0x3a4] sm:$0xf]
    %v6071 = vld [vmem:[#allocation5 + $0x3a8] sm:$0xf]
    %v6072 = vld [vmem:[#allocation5 + $0x3ac] sm:$0xf]
    %v6073 = vld [vmem:[#allocation5 + $0x3b0] sm:$0xf]
    %v6074 = vld [vmem:[#allocation5 + $0x3b4] sm:$0xf]
    %v6075 = vld [vmem:[#allocation5 + $0x3b8] sm:$0xf]
    %v6076 = vld [vmem:[#allocation5 + $0x3bc] sm:$0xf]
    %v6077 = vld [vmem:[#allocation5 + $0x3c0] sm:$0xf]
    %v6078 = vld [vmem:[#allocation5 + $0x3c4] sm:$0xf]
    %v6079 = vld [vmem:[#allocation5 + $0x3c8] sm:$0xf]
    %v6080 = vld [vmem:[#allocation5 + $0x3cc] sm:$0xf]
    %v6081 = vld [vmem:[#allocation5 + $0x3d0] sm:$0xf]
    %v6082 = vld [vmem:[#allocation5 + $0x3d4] sm:$0xf]
    %v6083 = vld [vmem:[#allocation5 + $0x3d8] sm:$0xf]
    %v6084 = vld [vmem:[#allocation5 + $0x3dc] sm:$0xf]
    %v6085 = vld [vmem:[#allocation5 + $0x3e0] sm:$0xf]
    %v6086 = vld [vmem:[#allocation5 + $0x3e4] sm:$0xf]
    %v6087 = vld [vmem:[#allocation5 + $0x3e8] sm:$0xf]
    %v6088 = vld [vmem:[#allocation5 + $0x3ec] sm:$0xf]
    %v6089 = vld [vmem:[#allocation5 + $0x3f0] sm:$0xf]
    %v6090 = vld [vmem:[#allocation5 + $0x3f4] sm:$0xf]
    %v6091 = vld [vmem:[#allocation5 + $0x3f8] sm:$0xf]
    %v6092 = vld [vmem:[#allocation5 + $0x3fc] sm:$0xf]
    %v6093 = vld [vmem:[#allocation5 + $0x400] sm:$0xf]
    %v6094 = vld [vmem:[#allocation5 + $0x404] sm:$0xf]
    %v6095 = vld [vmem:[#allocation7 + $0xd] sm:$0x1]
    %v6096 = vlaneseq
    %v6097 = vshrl.u32 %v6096, 7
    %v6098 = vsub.s32 0, %v6097
    %v6099 = vrot.slane %v6095, %v6098
    %v6164 = vunpack.c.l.b16 %v6031
    %v6165 = vunpack.c.l.b16 %v6032
    %v6166 = vunpack.c.l.b16 %v6033
    %v6167 = vunpack.c.l.b16 %v6034
    %v6168 = vunpack.c.l.b16 %v6035
    %v6169 = vunpack.c.l.b16 %v6036
    %v6170 = vunpack.c.l.b16 %v6037
    %v6171 = vunpack.c.l.b16 %v6038
    %v6172 = vunpack.c.l.b16 %v6039
    %v6173 = vunpack.c.l.b16 %v6040
    %v6174 = vunpack.c.l.b16 %v6041
    %v6175 = vunpack.c.l.b16 %v6042
    %v6176 = vunpack.c.l.b16 %v6043
    %v6177 = vunpack.c.l.b16 %v6044
    %v6178 = vunpack.c.l.b16 %v6045
    %v6179 = vunpack.c.l.b16 %v6046
    %v6180 = vunpack.c.l.b16 %v6047
    %v6181 = vunpack.c.l.b16 %v6048
    %v6182 = vunpack.c.l.b16 %v6049
    %v6183 = vunpack.c.l.b16 %v6050
    %v6184 = vunpack.c.l.b16 %v6051
    %v6185 = vunpack.c.l.b16 %v6052
    %v6186 = vunpack.c.l.b16 %v6053
    %v6187 = vunpack.c.l.b16 %v6054
    %v6188 = vunpack.c.l.b16 %v6055
    %v6189 = vunpack.c.l.b16 %v6056
    %v6190 = vunpack.c.l.b16 %v6057
    %v6191 = vunpack.c.l.b16 %v6058
    %v6192 = vunpack.c.l.b16 %v6059
    %v6193 = vunpack.c.l.b16 %v6060
    %v6194 = vunpack.c.l.b16 %v6061
    %v6195 = vunpack.c.l.b16 %v6062
    %v6196 = vunpack.c.l.b16 %v6063
    %v6197 = vunpack.c.l.b16 %v6064
    %v6198 = vunpack.c.l.b16 %v6065
    %v6199 = vunpack.c.l.b16 %v6066
    %v6200 = vunpack.c.l.b16 %v6067
    %v6201 = vunpack.c.l.b16 %v6068
    %v6202 = vunpack.c.l.b16 %v6069
    %v6203 = vunpack.c.l.b16 %v6070
    %v6204 = vunpack.c.l.b16 %v6071
    %v6205 = vunpack.c.l.b16 %v6072
    %v6206 = vunpack.c.l.b16 %v6073
    %v6207 = vunpack.c.l.b16 %v6074
    %v6208 = vunpack.c.l.b16 %v6075
    %v6209 = vunpack.c.l.b16 %v6076
    %v6210 = vunpack.c.l.b16 %v6077
    %v6211 = vunpack.c.l.b16 %v6078
    %v6212 = vunpack.c.l.b16 %v6079
    %v6213 = vunpack.c.l.b16 %v6080
    %v6214 = vunpack.c.l.b16 %v6081
    %v6215 = vunpack.c.l.b16 %v6082
    %v6216 = vunpack.c.l.b16 %v6083
    %v6217 = vunpack.c.l.b16 %v6084
    %v6218 = vunpack.c.l.b16 %v6085
    %v6219 = vunpack.c.l.b16 %v6086
    %v6220 = vunpack.c.l.b16 %v6087
    %v6221 = vunpack.c.l.b16 %v6088
    %v6222 = vunpack.c.l.b16 %v6089
    %v6223 = vunpack.c.l.b16 %v6090
    %v6224 = vunpack.c.l.b16 %v6091
    %v6225 = vunpack.c.l.b16 %v6092
    %v6226 = vunpack.c.l.b16 %v6093
    %v6227 = vunpack.c.l.b16 %v6094
    %v6228 = vpack.c.b16 %v6165, %v6164
    %v6229 = vpack.c.b16 %v6167, %v6166
    %v6230 = vpack.c.b16 %v6169, %v6168
    %v6231 = vpack.c.b16 %v6171, %v6170
    %v6232 = vpack.c.b16 %v6173, %v6172
    %v6233 = vpack.c.b16 %v6175, %v6174
    %v6234 = vpack.c.b16 %v6177, %v6176
    %v6235 = vpack.c.b16 %v6179, %v6178
    %v6236 = vpack.c.b16 %v6181, %v6180
    %v6237 = vpack.c.b16 %v6183, %v6182
    %v6238 = vpack.c.b16 %v6185, %v6184
    %v6239 = vpack.c.b16 %v6187, %v6186
    %v6240 = vpack.c.b16 %v6189, %v6188
    %v6241 = vpack.c.b16 %v6191, %v6190
    %v6242 = vpack.c.b16 %v6193, %v6192
    %v6243 = vpack.c.b16 %v6195, %v6194
    %v6244 = vpack.c.b16 %v6197, %v6196
    %v6245 = vpack.c.b16 %v6199, %v6198
    %v6246 = vpack.c.b16 %v6201, %v6200
    %v6247 = vpack.c.b16 %v6203, %v6202
    %v6248 = vpack.c.b16 %v6205, %v6204
    %v6249 = vpack.c.b16 %v6207, %v6206
    %v6250 = vpack.c.b16 %v6209, %v6208
    %v6251 = vpack.c.b16 %v6211, %v6210
    %v6252 = vpack.c.b16 %v6213, %v6212
    %v6253 = vpack.c.b16 %v6215, %v6214
    %v6254 = vpack.c.b16 %v6217, %v6216
    %v6255 = vpack.c.b16 %v6219, %v6218
    %v6256 = vpack.c.b16 %v6221, %v6220
    %v6257 = vpack.c.b16 %v6223, %v6222
    %v6258 = vpack.c.b16 %v6225, %v6224
    %v6259 = vpack.c.b16 %v6227, %v6226
    %6292 = vmatprep.subr.bf16.mxu0 0
    %6293 = vmatpush1.bf16.msra.mxu0 %v6228
    %6294 = vmatprep.subr.bf16.mxu0 0
    %6295 = vmatpush1.bf16.msra.mxu0 %v6229
    %6296 = vmatprep.subr.bf16.mxu0 0
    %6297 = vmatpush1.bf16.msra.mxu0 %v6230
    %6298 = vmatprep.subr.bf16.mxu0 0
    %6299 = vmatpush1.bf16.msra.mxu0 %v6231
    %6300 = vmatprep.subr.bf16.mxu0 0
    %6301 = vmatpush1.bf16.msra.mxu0 %v6232
    %6302 = vmatprep.subr.bf16.mxu0 0
    %6303 = vmatpush1.bf16.msra.mxu0 %v6233
    %6304 = vmatprep.subr.bf16.mxu0 0
    %6305 = vmatpush1.bf16.msra.mxu0 %v6234
    %6306 = vmatprep.subr.bf16.mxu0 0
    %6307 = vmatpush1.bf16.msra.mxu0 %v6235
    %6308 = vmatprep.subr.bf16.mxu0 0
    %6309 = vmatpush1.bf16.msra.mxu0 %v6236
    %6310 = vmatprep.subr.bf16.mxu0 0
    %6311 = vmatpush1.bf16.msra.mxu0 %v6237
    %6312 = vmatprep.subr.bf16.mxu0 0
    %6313 = vmatpush1.bf16.msra.mxu0 %v6238
    %6314 = vmatprep.subr.bf16.mxu0 0
    %6315 = vmatpush1.bf16.msra.mxu0 %v6239
    %6316 = vmatprep.subr.bf16.mxu0 0
    %6317 = vmatpush1.bf16.msra.mxu0 %v6240
    %6318 = vmatprep.subr.bf16.mxu0 0
    %6319 = vmatpush1.bf16.msra.mxu0 %v6241
    %6320 = vmatprep.subr.bf16.mxu0 0
    %6321 = vmatpush1.bf16.msra.mxu0 %v6242
    %6322 = vmatprep.subr.bf16.mxu0 0
    %6323 = vmatpush1.bf16.msra.mxu0 %v6243
    %6324 = vmatprep.mubr.bf16.mxu0 %v5968
    %6325 = vmatmul.mubr.bf16.gmra.mrb[0].mxu0 %v5967
    %v6326 = vpop.f32.mrb[0].mxu0
    %v6327 = vadd.f32 %v6099, %v6326
    %v6328 = vpop.f32.mrb[0].mxu0
    %v6329 = vpop.f32.mrb[0].mxu0
    %v6330 = vadd.f32 %v6099, %v6329
    %v6331 = vpop.f32.mrb[0].mxu0
    %6332 = vmatprep.mubr.bf16.mxu0 %v5972
    %6333 = vmatmul.mubr.bf16.gmra.mrb[0].mxu0 %v5971
    %v6334 = vpop.f32.mrb[0].mxu0
    %v6335 = vadd.f32 %v6099, %v6334
    %v6336 = vpop.f32.mrb[0].mxu0
    %v6337 = vpop.f32.mrb[0].mxu0
    %v6338 = vadd.f32 %v6099, %v6337
    %v6339 = vpop.f32.mrb[0].mxu0
    %6340 = vmatprep.mubr.bf16.mxu0 %v5976
    %6341 = vmatmul.mubr.bf16.gmra.mrb[0].mxu0 %v5975
    %v6342 = vpop.f32.mrb[0].mxu0
    %v6343 = vadd.f32 %v6099, %v6342
    %v6344 = vpop.f32.mrb[0].mxu0
    %v6345 = vpop.f32.mrb[0].mxu0
    %v6346 = vadd.f32 %v6099, %v6345
    %v6347 = vpop.f32.mrb[0].mxu0
    %6348 = vmatprep.mubr.bf16.mxu0 %v5980
    %6349 = vmatmul.mubr.bf16.gmra.mrb[0].mxu0 %v5979
    %v6350 = vpop.f32.mrb[0].mxu0
    %v6351 = vadd.f32 %v6099, %v6350
    %v6352 = vpop.f32.mrb[0].mxu0
    %v6353 = vpop.f32.mrb[0].mxu0
    %v6354 = vadd.f32 %v6099, %v6353
    %v6355 = vpop.f32.mrb[0].mxu0
    %6356 = vmatprep.mubr.bf16.mxu0 %v5984
    %6357 = vmatmul.mubr.bf16.gmra.mrb[0].mxu0 %v5983
    %v6358 = vpop.f32.mrb[0].mxu0
    %v6359 = vadd.f32 %v6099, %v6358
    %v6360 = vpop.f32.mrb[0].mxu0
    %v6361 = vpop.f32.mrb[0].mxu0
    %v6362 = vadd.f32 %v6099, %v6361
    %v6363 = vpop.f32.mrb[0].mxu0
    %6364 = vmatprep.mubr.bf16.mxu0 %v5988
    %6365 = vmatmul.mubr.bf16.gmra.mrb[0].mxu0 %v5987
    %v6366 = vpop.f32.mrb[0].mxu0
    %v6367 = vadd.f32 %v6099, %v6366
    %v6368 = vpop.f32.mrb[0].mxu0
    %v6369 = vpop.f32.mrb[0].mxu0
    %v6370 = vadd.f32 %v6099, %v6369
    %v6371 = vpop.f32.mrb[0].mxu0
    %6372 = vmatprep.mubr.bf16.mxu0 %v5992
    %6373 = vmatmul.mubr.bf16.gmra.mrb[0].mxu0 %v5991
    %v6374 = vpop.f32.mrb[0].mxu0
    %v6375 = vadd.f32 %v6099, %v6374
    %v6376 = vpop.f32.mrb[0].mxu0
    %v6377 = vpop.f32.mrb[0].mxu0
    %v6378 = vadd.f32 %v6099, %v6377
    %v6379 = vpop.f32.mrb[0].mxu0
    %6380 = vmatprep.mubr.bf16.mxu0 %v5996
    %6381 = vmatmul.mubr.bf16.gmra.mrb[0].mxu0 %v5995
    %v6382 = vpop.f32.mrb[0].mxu0
    %v6383 = vadd.f32 %v6099, %v6382
    %v6384 = vpop.f32.mrb[0].mxu0
    %v6385 = vpop.f32.mrb[0].mxu0
    %v6386 = vadd.f32 %v6099, %v6385
    %v6387 = vpop.f32.mrb[0].mxu0
    %6388 = vmatprep.mubr.bf16.mxu0 %v6000
    %6389 = vmatmul.mubr.bf16.gmra.mrb[0].mxu0 %v5999
    %v6390 = vpop.f32.mrb[0].mxu0
    %v6391 = vadd.f32 %v6099, %v6390
    %v6392 = vpop.f32.mrb[0].mxu0
    %v6393 = vpop.f32.mrb[0].mxu0
    %v6394 = vadd.f32 %v6099, %v6393
    %v6395 = vpop.f32.mrb[0].mxu0
    %6396 = vmatprep.mubr.bf16.mxu0 %v6004
    %6397 = vmatmul.mubr.bf16.gmra.mrb[0].mxu0 %v6003
    %v6398 = vpop.f32.mrb[0].mxu0
    %v6399 = vadd.f32 %v6099, %v6398
    %v6400 = vpop.f32.mrb[0].mxu0
    %v6401 = vpop.f32.mrb[0].mxu0
    %v6402 = vadd.f32 %v6099, %v6401
    %v6403 = vpop.f32.mrb[0].mxu0
    %6404 = vmatprep.mubr.bf16.mxu0 %v6008
    %6405 = vmatmul.mubr.bf16.gmra.mrb[0].mxu0 %v6007
    %v6406 = vpop.f32.mrb[0].mxu0
    %v6407 = vadd.f32 %v6099, %v6406
    %v6408 = vpop.f32.mrb[0].mxu0
    %v6409 = vpop.f32.mrb[0].mxu0
    %v6410 = vadd.f32 %v6099, %v6409
    %v6411 = vpop.f32.mrb[0].mxu0
    %6412 = vmatprep.mubr.bf16.mxu0 %v6012
    %6413 = vmatmul.mubr.bf16.gmra.mrb[0].mxu0 %v6011
    %v6414 = vpop.f32.mrb[0].mxu0
    %v6415 = vadd.f32 %v6099, %v6414
    %v6416 = vpop.f32.mrb[0].mxu0
    %v6417 = vpop.f32.mrb[0].mxu0
    %v6418 = vadd.f32 %v6099, %v6417
    %v6419 = vpop.f32.mrb[0].mxu0
    %6420 = vmatprep.mubr.bf16.mxu0 %v6016
    %6421 = vmatmul.mubr.bf16.gmra.mrb[0].mxu0 %v6015
    %v6422 = vpop.f32.mrb[0].mxu0
    %v6423 = vadd.f32 %v6099, %v6422
    %v6424 = vpop.f32.mrb[0].mxu0
    %v6425 = vpop.f32.mrb[0].mxu0
    %v6426 = vadd.f32 %v6099, %v6425
    %v6427 = vpop.f32.mrb[0].mxu0
    %6428 = vmatprep.mubr.bf16.mxu0 %v6020
    %6429 = vmatmul.mubr.bf16.gmra.mrb[0].mxu0 %v6019
    %v6430 = vpop.f32.mrb[0].mxu0
    %v6431 = vadd.f32 %v6099, %v6430
    %v6432 = vpop.f32.mrb[0].mxu0
    %v6433 = vpop.f32.mrb[0].mxu0
    %v6434 = vadd.f32 %v6099, %v6433
    %v6435 = vpop.f32.mrb[0].mxu0
    %6436 = vmatprep.mubr.bf16.mxu0 %v6024
    %6437 = vmatmul.mubr.bf16.gmra.mrb[0].mxu0 %v6023
    %v6438 = vpop.f32.mrb[0].mxu0
    %v6439 = vadd.f32 %v6099, %v6438
    %v6440 = vpop.f32.mrb[0].mxu0
    %v6441 = vpop.f32.mrb[0].mxu0
    %v6442 = vadd.f32 %v6099, %v6441
    %v6443 = vpop.f32.mrb[0].mxu0
    %6444 = vmatprep.mubr.bf16.mxu0 %v6028
    %6445 = vmatmul.mubr.bf16.gmra.mrb[0].mxu0 %v6027
    %v6446 = vpop.f32.mrb[0].mxu0
    %v6447 = vadd.f32 %v6099, %v6446
    %v6448 = vpop.f32.mrb[0].mxu0
    %v6449 = vpop.f32.mrb[0].mxu0
    %v6450 = vadd.f32 %v6099, %v6449
    %v6451 = vpop.f32.mrb[0].mxu0
    %6452 = vdwg.mxu0
    %6453 = vmatprep.subr.bf16.mxu0 0
    %6454 = vmatpush1.bf16.msra.mxu0 %v6244
    %6455 = vmatprep.subr.bf16.mxu0 0
    %6456 = vmatpush1.bf16.msra.mxu0 %v6245
    %6457 = vmatprep.subr.bf16.mxu0 0
    %6458 = vmatpush1.bf16.msra.mxu0 %v6246
    %6459 = vmatprep.subr.bf16.mxu0 0
    %6460 = vmatpush1.bf16.msra.mxu0 %v6247
    %6461 = vmatprep.subr.bf16.mxu0 0
    %6462 = vmatpush1.bf16.msra.mxu0 %v6248
    %6463 = vmatprep.subr.bf16.mxu0 0
    %6464 = vmatpush1.bf16.msra.mxu0 %v6249
    %6465 = vmatprep.subr.bf16.mxu0 0
    %6466 = vmatpush1.bf16.msra.mxu0 %v6250
    %6467 = vmatprep.subr.bf16.mxu0 0
    %6468 = vmatpush1.bf16.msra.mxu0 %v6251
    %6469 = vmatprep.subr.bf16.mxu0 0
    %6470 = vmatpush1.bf16.msra.mxu0 %v6252
    %6471 = vmatprep.subr.bf16.mxu0 0
    %6472 = vmatpush1.bf16.msra.mxu0 %v6253
    %6473 = vmatprep.subr.bf16.mxu0 0
    %6474 = vmatpush1.bf16.msra.mxu0 %v6254
    %6475 = vmatprep.subr.bf16.mxu0 0
    %6476 = vmatpush1.bf16.msra.mxu0 %v6255
    %6477 = vmatprep.subr.bf16.mxu0 0
    %6478 = vmatpush1.bf16.msra.mxu0 %v6256
    %6479 = vmatprep.subr.bf16.mxu0 0
    %6480 = vmatpush1.bf16.msra.mxu0 %v6257
    %6481 = vmatprep.subr.bf16.mxu0 0
    %6482 = vmatpush1.bf16.msra.mxu0 %v6258
    %6483 = vmatprep.subr.bf16.mxu0 0
    %6484 = vmatpush1.bf16.msra.mxu0 %v6259
    %6485 = vmatprep.mubr.bf16.mxu0 %v5970
    %6486 = vmatmul.mubr.bf16.gmra.mrb[0].mxu0 %v5969
    %v6487 = vpop.f32.mrb[0].mxu0
    %v6488 = vadd.f32 %v6327, %v6487
    %v6489 = vpop.f32.mrb[0].mxu0
    %v6490 = vpop.f32.mrb[0].mxu0
    %v6491 = vadd.f32 %v6330, %v6490
    %v6492 = vpop.f32.mrb[0].mxu0
    %6493 = vmatprep.mubr.bf16.mxu0 %v5974
    %6494 = vmatmul.mubr.bf16.gmra.mrb[0].mxu0 %v5973
    %v6495 = vpop.f32.mrb[0].mxu0
    %v6496 = vadd.f32 %v6335, %v6495
    %v6497 = vpop.f32.mrb[0].mxu0
    %v6498 = vpop.f32.mrb[0].mxu0
    %v6499 = vadd.f32 %v6338, %v6498
    %v6500 = vpop.f32.mrb[0].mxu0
    %6501 = vmatprep.mubr.bf16.mxu0 %v5978
    %6502 = vmatmul.mubr.bf16.gmra.mrb[0].mxu0 %v5977
    %v6503 = vpop.f32.mrb[0].mxu0
    %v6504 = vadd.f32 %v6343, %v6503
    %v6505 = vpop.f32.mrb[0].mxu0
    %v6506 = vpop.f32.mrb[0].mxu0
    %v6507 = vadd.f32 %v6346, %v6506
    %v6508 = vpop.f32.mrb[0].mxu0
    %6509 = vmatprep.mubr.bf16.mxu0 %v5982
    %6510 = vmatmul.mubr.bf16.gmra.mrb[0].mxu0 %v5981
    %v6511 = vpop.f32.mrb[0].mxu0
    %v6512 = vadd.f32 %v6351, %v6511
    %v6513 = vpop.f32.mrb[0].mxu0
    %v6514 = vpop.f32.mrb[0].mxu0
    %v6515 = vadd.f32 %v6354, %v6514
    %v6516 = vpop.f32.mrb[0].mxu0
    %6517 = vmatprep.mubr.bf16.mxu0 %v5986
    %6518 = vmatmul.mubr.bf16.gmra.mrb[0].mxu0 %v5985
    %v6519 = vpop.f32.mrb[0].mxu0
    %v6520 = vadd.f32 %v6359, %v6519
    %v6521 = vpop.f32.mrb[0].mxu0
    %v6522 = vpop.f32.mrb[0].mxu0
    %v6523 = vadd.f32 %v6362, %v6522
    %v6524 = vpop.f32.mrb[0].mxu0
    %6525 = vmatprep.mubr.bf16.mxu0 %v5990
    %6526 = vmatmul.mubr.bf16.gmra.mrb[0].mxu0 %v5989
    %v6527 = vpop.f32.mrb[0].mxu0
    %v6528 = vadd.f32 %v6367, %v6527
    %v6529 = vpop.f32.mrb[0].mxu0
    %v6530 = vpop.f32.mrb[0].mxu0
    %v6531 = vadd.f32 %v6370, %v6530
    %v6532 = vpop.f32.mrb[0].mxu0
    %6533 = vmatprep.mubr.bf16.mxu0 %v5994
    %6534 = vmatmul.mubr.bf16.gmra.mrb[0].mxu0 %v5993
    %v6535 = vpop.f32.mrb[0].mxu0
    %v6536 = vadd.f32 %v6375, %v6535
    %v6537 = vpop.f32.mrb[0].mxu0
    %v6538 = vpop.f32.mrb[0].mxu0
    %v6539 = vadd.f32 %v6378, %v6538
    %v6540 = vpop.f32.mrb[0].mxu0
    %6541 = vmatprep.mubr.bf16.mxu0 %v5998
    %6542 = vmatmul.mubr.bf16.gmra.mrb[0].mxu0 %v5997
    %v6543 = vpop.f32.mrb[0].mxu0
    %v6544 = vadd.f32 %v6383, %v6543
    %v6545 = vpop.f32.mrb[0].mxu0
    %v6546 = vpop.f32.mrb[0].mxu0
    %v6547 = vadd.f32 %v6386, %v6546
    %v6548 = vpop.f32.mrb[0].mxu0
    %6549 = vmatprep.mubr.bf16.mxu0 %v6002
    %6550 = vmatmul.mubr.bf16.gmra.mrb[0].mxu0 %v6001
    %v6551 = vpop.f32.mrb[0].mxu0
    %v6552 = vadd.f32 %v6391, %v6551
    %v6553 = vpop.f32.mrb[0].mxu0
    %v6554 = vpop.f32.mrb[0].mxu0
    %v6555 = vadd.f32 %v6394, %v6554
    %v6556 = vpop.f32.mrb[0].mxu0
    %6557 = vmatprep.mubr.bf16.mxu0 %v6006
    %6558 = vmatmul.mubr.bf16.gmra.mrb[0].mxu0 %v6005
    %v6559 = vpop.f32.mrb[0].mxu0
    %v6560 = vadd.f32 %v6399, %v6559
    %v6561 = vpop.f32.mrb[0].mxu0
    %v6562 = vpop.f32.mrb[0].mxu0
    %v6563 = vadd.f32 %v6402, %v6562
    %v6564 = vpop.f32.mrb[0].mxu0
    %6565 = vmatprep.mubr.bf16.mxu0 %v6010
    %6566 = vmatmul.mubr.bf16.gmra.mrb[0].mxu0 %v6009
    %v6567 = vpop.f32.mrb[0].mxu0
    %v6568 = vadd.f32 %v6407, %v6567
    %v6569 = vpop.f32.mrb[0].mxu0
    %v6570 = vpop.f32.mrb[0].mxu0
    %v6571 = vadd.f32 %v6410, %v6570
    %v6572 = vpop.f32.mrb[0].mxu0
    %6573 = vmatprep.mubr.bf16.mxu0 %v6014
    %6574 = vmatmul.mubr.bf16.gmra.mrb[0].mxu0 %v6013
    %v6575 = vpop.f32.mrb[0].mxu0
    %v6576 = vadd.f32 %v6415, %v6575
    %v6577 = vpop.f32.mrb[0].mxu0
    %v6578 = vpop.f32.mrb[0].mxu0
    %v6579 = vadd.f32 %v6418, %v6578
    %v6580 = vpop.f32.mrb[0].mxu0
    %6581 = vmatprep.mubr.bf16.mxu0 %v6018
    %6582 = vmatmul.mubr.bf16.gmra.mrb[0].mxu0 %v6017
    %v6583 = vpop.f32.mrb[0].mxu0
    %v6584 = vadd.f32 %v6423, %v6583
    %v6585 = vpop.f32.mrb[0].mxu0
    %v6586 = vpop.f32.mrb[0].mxu0
    %v6587 = vadd.f32 %v6426, %v6586
    %v6588 = vpop.f32.mrb[0].mxu0
    %6589 = vmatprep.mubr.bf16.mxu0 %v6022
    %6590 = vmatmul.mubr.bf16.gmra.mrb[0].mxu0 %v6021
    %v6591 = vpop.f32.mrb[0].mxu0
    %v6592 = vadd.f32 %v6431, %v6591
    %v6593 = vpop.f32.mrb[0].mxu0
    %v6594 = vpop.f32.mrb[0].mxu0
    %v6595 = vadd.f32 %v6434, %v6594
    %v6596 = vpop.f32.mrb[0].mxu0
    %6597 = vmatprep.mubr.bf16.mxu0 %v6026
    %6598 = vmatmul.mubr.bf16.gmra.mrb[0].mxu0 %v6025
    %v6599 = vpop.f32.mrb[0].mxu0
    %v6600 = vadd.f32 %v6439, %v6599
    %v6601 = vpop.f32.mrb[0].mxu0
    %v6602 = vpop.f32.mrb[0].mxu0
    %v6603 = vadd.f32 %v6442, %v6602
    %v6604 = vpop.f32.mrb[0].mxu0
    %6605 = vmatprep.mubr.bf16.mxu0 %v6030
    %6606 = vmatmul.mubr.bf16.gmra.mrb[0].mxu0 %v6029
    %v6607 = vpop.f32.mrb[0].mxu0
    %v6608 = vadd.f32 %v6447, %v6607
    %v6609 = vpop.f32.mrb[0].mxu0
    %v6610 = vpop.f32.mrb[0].mxu0
    %v6611 = vadd.f32 %v6450, %v6610
    %v6612 = vpop.f32.mrb[0].mxu0
    %6613 = vdwg.mxu0
    %v6614 = vadd.f32 %v6488, %v6491
    %v6615 = vadd.f32 %v6614, %v6496
    %v6616 = vadd.f32 %v6615, %v6499
    %v6617 = vadd.f32 %v6616, %v6504
    %v6618 = vadd.f32 %v6617, %v6507
    %v6619 = vadd.f32 %v6618, %v6512
    %v6620 = vadd.f32 %v6619, %v6515
    %v6621 = vadd.f32 %v6620, %v6520
    %v6622 = vadd.f32 %v6621, %v6523
    %v6623 = vadd.f32 %v6622, %v6528
    %v6624 = vadd.f32 %v6623, %v6531
    %v6625 = vadd.f32 %v6624, %v6536
    %v6626 = vadd.f32 %v6625, %v6539
    %v6627 = vadd.f32 %v6626, %v6544
    %v6628 = vadd.f32 %v6627, %v6547
    %v6629 = vadd.f32 %v6628, %v6552
    %v6630 = vadd.f32 %v6629, %v6555
    %v6631 = vadd.f32 %v6630, %v6560
    %v6632 = vadd.f32 %v6631, %v6563
    %v6633 = vadd.f32 %v6632, %v6568
    %v6634 = vadd.f32 %v6633, %v6571
    %v6635 = vadd.f32 %v6634, %v6576
    %v6636 = vadd.f32 %v6635, %v6579
    %v6637 = vadd.f32 %v6636, %v6584
    %v6638 = vadd.f32 %v6637, %v6587
    %v6639 = vadd.f32 %v6638, %v6592
    %v6640 = vadd.f32 %v6639, %v6595
    %v6641 = vadd.f32 %v6640, %v6600
    %v6642 = vadd.f32 %v6641, %v6603
    %v6643 = vadd.f32 %v6642, %v6608
    %v6644 = vadd.f32 %v6643, %v6611
    %v6645 = vrot.slane %v6644, 4
    %v6646 = vadd.f32 %v6644, %v6645
    %v6647 = vrot.slane %v6646, 2
    %v6648 = vadd.f32 %v6646, %v6647
    %v6649 = vrot.slane %v6648, 1
    %v6650 = vadd.f32 %v6648, %v6649
    %v6651 = vmul.f32 %v6650, %v914
    %v6652 = vsub.f32 %v6488, %v6651
    %v6653 = vsub.f32 %v6491, %v6651
    %v6654 = vsub.f32 %v6496, %v6651
    %v6655 = vsub.f32 %v6499, %v6651
    %v6656 = vsub.f32 %v6504, %v6651
    %v6657 = vsub.f32 %v6507, %v6651
    %v6658 = vsub.f32 %v6512, %v6651
    %v6659 = vsub.f32 %v6515, %v6651
    %v6660 = vsub.f32 %v6520, %v6651
    %v6661 = vsub.f32 %v6523, %v6651
    %v6662 = vsub.f32 %v6528, %v6651
    %v6663 = vsub.f32 %v6531, %v6651
    %v6664 = vsub.f32 %v6536, %v6651
    %v6665 = vsub.f32 %v6539, %v6651
    %v6666 = vsub.f32 %v6544, %v6651
    %v6667 = vsub.f32 %v6547, %v6651
    %v6668 = vsub.f32 %v6552, %v6651
    %v6669 = vsub.f32 %v6555, %v6651
    %v6670 = vsub.f32 %v6560, %v6651
    %v6671 = vsub.f32 %v6563, %v6651
    %v6672 = vsub.f32 %v6568, %v6651
    %v6673 = vsub.f32 %v6571, %v6651
    %v6674 = vsub.f32 %v6576, %v6651
    %v6675 = vsub.f32 %v6579, %v6651
    %v6676 = vsub.f32 %v6584, %v6651
    %v6677 = vsub.f32 %v6587, %v6651
    %v6678 = vsub.f32 %v6592, %v6651
    %v6679 = vsub.f32 %v6595, %v6651
    %v6680 = vsub.f32 %v6600, %v6651
    %v6681 = vsub.f32 %v6603, %v6651
    %v6682 = vsub.f32 %v6608, %v6651
    %v6683 = vsub.f32 %v6611, %v6651
    %v6684 = vmul.f32 %v6652, %v6652
    %v6685 = vmul.f32 %v6653, %v6653
    %v6686 = vmul.f32 %v6654, %v6654
    %v6687 = vmul.f32 %v6655, %v6655
    %v6688 = vmul.f32 %v6656, %v6656
    %v6689 = vmul.f32 %v6657, %v6657
    %v6690 = vmul.f32 %v6658, %v6658
    %v6691 = vmul.f32 %v6659, %v6659
    %v6692 = vmul.f32 %v6660, %v6660
    %v6693 = vmul.f32 %v6661, %v6661
    %v6694 = vmul.f32 %v6662, %v6662
    %v6695 = vmul.f32 %v6663, %v6663
    %v6696 = vmul.f32 %v6664, %v6664
    %v6697 = vmul.f32 %v6665, %v6665
    %v6698 = vmul.f32 %v6666, %v6666
    %v6699 = vmul.f32 %v6667, %v6667
    %v6700 = vmul.f32 %v6668, %v6668
    %v6701 = vmul.f32 %v6669, %v6669
    %v6702 = vmul.f32 %v6670, %v6670
    %v6703 = vmul.f32 %v6671, %v6671
    %v6704 = vmul.f32 %v6672, %v6672
    %v6705 = vmul.f32 %v6673, %v6673
    %v6706 = vmul.f32 %v6674, %v6674
    %v6707 = vmul.f32 %v6675, %v6675
    %v6708 = vmul.f32 %v6676, %v6676
    %v6709 = vmul.f32 %v6677, %v6677
    %v6710 = vmul.f32 %v6678, %v6678
    %v6711 = vmul.f32 %v6679, %v6679
    %v6712 = vmul.f32 %v6680, %v6680
    %v6713 = vmul.f32 %v6681, %v6681
    %v6714 = vmul.f32 %v6682, %v6682
    %v6715 = vmul.f32 %v6683, %v6683
    %v6716 = vadd.f32 %v6684, %v6685
    %v6717 = vadd.f32 %v6716, %v6686
    %v6718 = vadd.f32 %v6717, %v6687
    %v6719 = vadd.f32 %v6718, %v6688
    %v6720 = vadd.f32 %v6719, %v6689
    %v6721 = vadd.f32 %v6720, %v6690
    %v6722 = vadd.f32 %v6721, %v6691
    %v6723 = vadd.f32 %v6722, %v6692
    %v6724 = vadd.f32 %v6723, %v6693
    %v6725 = vadd.f32 %v6724, %v6694
    %v6726 = vadd.f32 %v6725, %v6695
    %v6727 = vadd.f32 %v6726, %v6696
    %v6728 = vadd.f32 %v6727, %v6697
    %v6729 = vadd.f32 %v6728, %v6698
    %v6730 = vadd.f32 %v6729, %v6699
    %v6731 = vadd.f32 %v6730, %v6700
    %v6732 = vadd.f32 %v6731, %v6701
    %v6733 = vadd.f32 %v6732, %v6702
    %v6734 = vadd.f32 %v6733, %v6703
    %v6735 = vadd.f32 %v6734, %v6704
    %v6736 = vadd.f32 %v6735, %v6705
    %v6737 = vadd.f32 %v6736, %v6706
    %v6738 = vadd.f32 %v6737, %v6707
    %v6739 = vadd.f32 %v6738, %v6708
    %v6740 = vadd.f32 %v6739, %v6709
    %v6741 = vadd.f32 %v6740, %v6710
    %v6742 = vadd.f32 %v6741, %v6711
    %v6743 = vadd.f32 %v6742, %v6712
    %v6744 = vadd.f32 %v6743, %v6713
    %v6745 = vadd.f32 %v6744, %v6714
    %v6746 = vadd.f32 %v6745, %v6715
    %v6747 = vrot.slane %v6746, 4
    %v6748 = vadd.f32 %v6746, %v6747
    %v6749 = vrot.slane %v6748, 2
    %v6750 = vadd.f32 %v6748, %v6749
    %v6751 = vrot.slane %v6750, 1
    %v6752 = vadd.f32 %v6750, %v6751
    %v6753 = vmul.f32 %v6752, %v914
    %v6754 = vadd.f32 %v6753, 1e-05
    %v6755 = vrsqrt.pop %v6754
    %v6756 = vmul.f32 %v6652, %v6755
    %v6757 = vmul.f32 %v6653, %v6755
    %v6758 = vmul.f32 %v6654, %v6755
    %v6759 = vmul.f32 %v6655, %v6755
    %v6760 = vmul.f32 %v6656, %v6755
    %v6761 = vmul.f32 %v6657, %v6755
    %v6762 = vmul.f32 %v6658, %v6755
    %v6763 = vmul.f32 %v6659, %v6755
    %v6764 = vmul.f32 %v6660, %v6755
    %v6765 = vmul.f32 %v6661, %v6755
    %v6766 = vmul.f32 %v6662, %v6755
    %v6767 = vmul.f32 %v6663, %v6755
    %v6768 = vmul.f32 %v6664, %v6755
    %v6769 = vmul.f32 %v6665, %v6755
    %v6770 = vmul.f32 %v6666, %v6755
    %v6771 = vmul.f32 %v6667, %v6755
    %v6772 = vmul.f32 %v6668, %v6755
    %v6773 = vmul.f32 %v6669, %v6755
    %v6774 = vmul.f32 %v6670, %v6755
    %v6775 = vmul.f32 %v6671, %v6755
    %v6776 = vmul.f32 %v6672, %v6755
    %v6777 = vmul.f32 %v6673, %v6755
    %v6778 = vmul.f32 %v6674, %v6755
    %v6779 = vmul.f32 %v6675, %v6755
    %v6780 = vmul.f32 %v6676, %v6755
    %v6781 = vmul.f32 %v6677, %v6755
    %v6782 = vmul.f32 %v6678, %v6755
    %v6783 = vmul.f32 %v6679, %v6755
    %v6784 = vmul.f32 %v6680, %v6755
    %v6785 = vmul.f32 %v6681, %v6755
    %v6786 = vmul.f32 %v6682, %v6755
    %v6787 = vmul.f32 %v6683, %v6755
    %v6788 = vmax.f32 %v6756, 0.0
    %v6789 = vmax.f32 %v6757, 0.0
    %v6790 = vmax.f32 %v6758, 0.0
    %v6791 = vmax.f32 %v6759, 0.0
    %v6792 = vmax.f32 %v6760, 0.0
    %v6793 = vmax.f32 %v6761, 0.0
    %v6794 = vmax.f32 %v6762, 0.0
    %v6795 = vmax.f32 %v6763, 0.0
    %v6796 = vmax.f32 %v6764, 0.0
    %v6797 = vmax.f32 %v6765, 0.0
    %v6798 = vmax.f32 %v6766, 0.0
    %v6799 = vmax.f32 %v6767, 0.0
    %v6800 = vmax.f32 %v6768, 0.0
    %v6801 = vmax.f32 %v6769, 0.0
    %v6802 = vmax.f32 %v6770, 0.0
    %v6803 = vmax.f32 %v6771, 0.0
    %v6804 = vmax.f32 %v6772, 0.0
    %v6805 = vmax.f32 %v6773, 0.0
    %v6806 = vmax.f32 %v6774, 0.0
    %v6807 = vmax.f32 %v6775, 0.0
    %v6808 = vmax.f32 %v6776, 0.0
    %v6809 = vmax.f32 %v6777, 0.0
    %v6810 = vmax.f32 %v6778, 0.0
    %v6811 = vmax.f32 %v6779, 0.0
    %v6812 = vmax.f32 %v6780, 0.0
    %v6813 = vmax.f32 %v6781, 0.0
    %v6814 = vmax.f32 %v6782, 0.0
    %v6815 = vmax.f32 %v6783, 0.0
    %v6816 = vmax.f32 %v6784, 0.0
    %v6817 = vmax.f32 %v6785, 0.0
    %v6818 = vmax.f32 %v6786, 0.0
    %v6819 = vmax.f32 %v6787, 0.0
    %v6820 = vpack.c.bf16 %v6789, %v6788
    %v6821 = vpack.c.bf16 %v6791, %v6790
    %v6822 = vpack.c.bf16 %v6793, %v6792
    %v6823 = vpack.c.bf16 %v6795, %v6794
    %v6824 = vpack.c.bf16 %v6797, %v6796
    %v6825 = vpack.c.bf16 %v6799, %v6798
    %v6826 = vpack.c.bf16 %v6801, %v6800
    %v6827 = vpack.c.bf16 %v6803, %v6802
    %v6828 = vpack.c.bf16 %v6805, %v6804
    %v6829 = vpack.c.bf16 %v6807, %v6806
    %v6830 = vpack.c.bf16 %v6809, %v6808
    %v6831 = vpack.c.bf16 %v6811, %v6810
    %v6832 = vpack.c.bf16 %v6813, %v6812
    %v6833 = vpack.c.bf16 %v6815, %v6814
    %v6834 = vpack.c.bf16 %v6817, %v6816
    %v6835 = vpack.c.bf16 %v6819, %v6818
    %v6836 = vld [vmem:[#allocation5 + $0x408] sm:$0xf]
    %v6837 = vld [vmem:[#allocation5 + $0x40c] sm:$0xf]
    %v6838 = vld [vmem:[#allocation5 + $0x410] sm:$0xf]
    %v6839 = vld [vmem:[#allocation5 + $0x414] sm:$0xf]
    %v6840 = vld [vmem:[#allocation5 + $0x418] sm:$0xf]
    %v6841 = vld [vmem:[#allocation5 + $0x41c] sm:$0xf]
    %v6842 = vld [vmem:[#allocation5 + $0x420] sm:$0xf]
    %v6843 = vld [vmem:[#allocation5 + $0x424] sm:$0xf]
    %v6844 = vld [vmem:[#allocation5 + $0x428] sm:$0xf]
    %v6845 = vld [vmem:[#allocation5 + $0x42c] sm:$0xf]
    %v6846 = vld [vmem:[#allocation5 + $0x430] sm:$0xf]
    %v6847 = vld [vmem:[#allocation5 + $0x434] sm:$0xf]
    %v6848 = vld [vmem:[#allocation5 + $0x438] sm:$0xf]
    %v6849 = vld [vmem:[#allocation5 + $0x43c] sm:$0xf]
    %v6850 = vld [vmem:[#allocation5 + $0x440] sm:$0xf]
    %v6851 = vld [vmem:[#allocation5 + $0x444] sm:$0xf]
    %v6852 = vld [vmem:[#allocation7 + $0xe] sm:$0x1]
    %v6853 = vlaneseq
    %v6854 = vshrl.u32 %v6853, 7
    %v6855 = vsub.s32 0, %v6854
    %v6856 = vrot.slane %v6852, %v6855
    %v6873 = vunpack.c.l.b16 %v6836
    %v6874 = vunpack.c.l.b16 %v6837
    %v6875 = vunpack.c.l.b16 %v6838
    %v6876 = vunpack.c.l.b16 %v6839
    %v6877 = vunpack.c.l.b16 %v6840
    %v6878 = vunpack.c.l.b16 %v6841
    %v6879 = vunpack.c.l.b16 %v6842
    %v6880 = vunpack.c.l.b16 %v6843
    %v6881 = vunpack.c.l.b16 %v6844
    %v6882 = vunpack.c.l.b16 %v6845
    %v6883 = vunpack.c.l.b16 %v6846
    %v6884 = vunpack.c.l.b16 %v6847
    %v6885 = vunpack.c.l.b16 %v6848
    %v6886 = vunpack.c.l.b16 %v6849
    %v6887 = vunpack.c.l.b16 %v6850
    %v6888 = vunpack.c.l.b16 %v6851
    %v6889 = vpack.c.b16 %v6874, %v6873
    %v6890 = vpack.c.b16 %v6876, %v6875
    %v6891 = vpack.c.b16 %v6878, %v6877
    %v6892 = vpack.c.b16 %v6880, %v6879
    %v6893 = vpack.c.b16 %v6882, %v6881
    %v6894 = vpack.c.b16 %v6884, %v6883
    %v6895 = vpack.c.b16 %v6886, %v6885
    %v6896 = vpack.c.b16 %v6888, %v6887
    %6905 = vmatprep.subr.bf16.mxu0 0
    %6906 = vmatpush1.bf16.msra.mxu0 %v6889
    %6907 = vmatprep.subr.bf16.mxu0 0
    %6908 = vmatpush1.bf16.msra.mxu0 %v6890
    %6909 = vmatprep.subr.bf16.mxu0 0
    %6910 = vmatpush1.bf16.msra.mxu0 %v6891
    %6911 = vmatprep.subr.bf16.mxu0 0
    %6912 = vmatpush1.bf16.msra.mxu0 %v6892
    %6913 = vmatprep.subr.bf16.mxu0 0
    %6914 = vmatpush1.bf16.msra.mxu0 %v6893
    %6915 = vmatprep.subr.bf16.mxu0 0
    %6916 = vmatpush1.bf16.msra.mxu0 %v6894
    %6917 = vmatprep.subr.bf16.mxu0 0
    %6918 = vmatpush1.bf16.msra.mxu0 %v6895
    %6919 = vmatprep.subr.bf16.mxu0 0
    %6920 = vmatpush1.bf16.msra.mxu0 %v6896
    %6921 = vmatprep.subr.bf16.mxu0 0
    %6922 = vmatpush1.bf16.msra.mxu0 0
    %6923 = vmatprep.subr.bf16.mxu0 0
    %6924 = vmatpush1.bf16.msra.mxu0 0
    %6925 = vmatprep.subr.bf16.mxu0 0
    %6926 = vmatpush1.bf16.msra.mxu0 0
    %6927 = vmatprep.subr.bf16.mxu0 0
    %6928 = vmatpush1.bf16.msra.mxu0 0
    %6929 = vmatprep.subr.bf16.mxu0 0
    %6930 = vmatpush1.bf16.msra.mxu0 0
    %6931 = vmatprep.subr.bf16.mxu0 0
    %6932 = vmatpush1.bf16.msra.mxu0 0
    %6933 = vmatprep.subr.bf16.mxu0 0
    %6934 = vmatpush1.bf16.msra.mxu0 0
    %6935 = vmatprep.subr.bf16.mxu0 0
    %6936 = vmatpush1.bf16.msra.mxu0 0
    %6937 = vmatprep.mubr.bf16.mxu0 0
    %6938 = vmatmul.mubr.bf16.gmra.mrb[0].mxu0 %v6820
    %v6939 = vpop.f32.mrb[0].mxu0
    %v6940 = vadd.f32 %v6856, %v6939
    %v6941 = vpop.f32.mrb[0].mxu0
    %v6942 = vpop.f32.mrb[0].mxu0
    %v6943 = vadd.f32 %v6856, %v6942
    %v6944 = vpop.f32.mrb[0].mxu0
    %6945 = vmatprep.mubr.bf16.mxu0 0
    %6946 = vmatmul.mubr.bf16.gmra.mrb[0].mxu0 %v6821
    %v6947 = vpop.f32.mrb[0].mxu0
    %v6948 = vadd.f32 %v6856, %v6947
    %v6949 = vpop.f32.mrb[0].mxu0
    %v6950 = vpop.f32.mrb[0].mxu0
    %v6951 = vadd.f32 %v6856, %v6950
    %v6952 = vpop.f32.mrb[0].mxu0
    %6953 = vmatprep.mubr.bf16.mxu0 0
    %6954 = vmatmul.mubr.bf16.gmra.mrb[0].mxu0 %v6822
    %v6955 = vpop.f32.mrb[0].mxu0
    %v6956 = vadd.f32 %v6856, %v6955
    %v6957 = vpop.f32.mrb[0].mxu0
    %v6958 = vpop.f32.mrb[0].mxu0
    %v6959 = vadd.f32 %v6856, %v6958
    %v6960 = vpop.f32.mrb[0].mxu0
    %6961 = vmatprep.mubr.bf16.mxu0 0
    %6962 = vmatmul.mubr.bf16.gmra.mrb[0].mxu0 %v6823
    %v6963 = vpop.f32.mrb[0].mxu0
    %v6964 = vadd.f32 %v6856, %v6963
    %v6965 = vpop.f32.mrb[0].mxu0
    %v6966 = vpop.f32.mrb[0].mxu0
    %v6967 = vadd.f32 %v6856, %v6966
    %v6968 = vpop.f32.mrb[0].mxu0
    %6969 = vmatprep.mubr.bf16.mxu0 0
    %6970 = vmatmul.mubr.bf16.gmra.mrb[0].mxu0 %v6824
    %v6971 = vpop.f32.mrb[0].mxu0
    %v6972 = vadd.f32 %v6856, %v6971
    %v6973 = vpop.f32.mrb[0].mxu0
    %v6974 = vpop.f32.mrb[0].mxu0
    %v6975 = vadd.f32 %v6856, %v6974
    %v6976 = vpop.f32.mrb[0].mxu0
    %6977 = vmatprep.mubr.bf16.mxu0 0
    %6978 = vmatmul.mubr.bf16.gmra.mrb[0].mxu0 %v6825
    %v6979 = vpop.f32.mrb[0].mxu0
    %v6980 = vadd.f32 %v6856, %v6979
    %v6981 = vpop.f32.mrb[0].mxu0
    %v6982 = vpop.f32.mrb[0].mxu0
    %v6983 = vadd.f32 %v6856, %v6982
    %v6984 = vpop.f32.mrb[0].mxu0
    %6985 = vmatprep.mubr.bf16.mxu0 0
    %6986 = vmatmul.mubr.bf16.gmra.mrb[0].mxu0 %v6826
    %v6987 = vpop.f32.mrb[0].mxu0
    %v6988 = vadd.f32 %v6856, %v6987
    %v6989 = vpop.f32.mrb[0].mxu0
    %v6990 = vpop.f32.mrb[0].mxu0
    %v6991 = vadd.f32 %v6856, %v6990
    %v6992 = vpop.f32.mrb[0].mxu0
    %6993 = vmatprep.mubr.bf16.mxu0 0
    %6994 = vmatmul.mubr.bf16.gmra.mrb[0].mxu0 %v6827
    %v6995 = vpop.f32.mrb[0].mxu0
    %v6996 = vadd.f32 %v6856, %v6995
    %v6997 = vpop.f32.mrb[0].mxu0
    %v6998 = vpop.f32.mrb[0].mxu0
    %v6999 = vadd.f32 %v6856, %v6998
    %v7000 = vpop.f32.mrb[0].mxu0
    %7001 = vmatprep.mubr.bf16.mxu0 0
    %7002 = vmatmul.mubr.bf16.gmra.mrb[0].mxu0 %v6828
    %v7003 = vpop.f32.mrb[0].mxu0
    %v7004 = vadd.f32 %v6856, %v7003
    %v7005 = vpop.f32.mrb[0].mxu0
    %v7006 = vpop.f32.mrb[0].mxu0
    %v7007 = vadd.f32 %v6856, %v7006
    %v7008 = vpop.f32.mrb[0].mxu0
    %7009 = vmatprep.mubr.bf16.mxu0 0
    %7010 = vmatmul.mubr.bf16.gmra.mrb[0].mxu0 %v6829
    %v7011 = vpop.f32.mrb[0].mxu0
    %v7012 = vadd.f32 %v6856, %v7011
    %v7013 = vpop.f32.mrb[0].mxu0
    %v7014 = vpop.f32.mrb[0].mxu0
    %v7015 = vadd.f32 %v6856, %v7014
    %v7016 = vpop.f32.mrb[0].mxu0
    %7017 = vmatprep.mubr.bf16.mxu0 0
    %7018 = vmatmul.mubr.bf16.gmra.mrb[0].mxu0 %v6830
    %v7019 = vpop.f32.mrb[0].mxu0
    %v7020 = vadd.f32 %v6856, %v7019
    %v7021 = vpop.f32.mrb[0].mxu0
    %v7022 = vpop.f32.mrb[0].mxu0
    %v7023 = vadd.f32 %v6856, %v7022
    %v7024 = vpop.f32.mrb[0].mxu0
    %7025 = vmatprep.mubr.bf16.mxu0 0
    %7026 = vmatmul.mubr.bf16.gmra.mrb[0].mxu0 %v6831
    %v7027 = vpop.f32.mrb[0].mxu0
    %v7028 = vadd.f32 %v6856, %v7027
    %v7029 = vpop.f32.mrb[0].mxu0
    %v7030 = vpop.f32.mrb[0].mxu0
    %v7031 = vadd.f32 %v6856, %v7030
    %v7032 = vpop.f32.mrb[0].mxu0
    %7033 = vmatprep.mubr.bf16.mxu0 0
    %7034 = vmatmul.mubr.bf16.gmra.mrb[0].mxu0 %v6832
    %v7035 = vpop.f32.mrb[0].mxu0
    %v7036 = vadd.f32 %v6856, %v7035
    %v7037 = vpop.f32.mrb[0].mxu0
    %v7038 = vpop.f32.mrb[0].mxu0
    %v7039 = vadd.f32 %v6856, %v7038
    %v7040 = vpop.f32.mrb[0].mxu0
    %7041 = vmatprep.mubr.bf16.mxu0 0
    %7042 = vmatmul.mubr.bf16.gmra.mrb[0].mxu0 %v6833
    %v7043 = vpop.f32.mrb[0].mxu0
    %v7044 = vadd.f32 %v6856, %v7043
    %v7045 = vpop.f32.mrb[0].mxu0
    %v7046 = vpop.f32.mrb[0].mxu0
    %v7047 = vadd.f32 %v6856, %v7046
    %v7048 = vpop.f32.mrb[0].mxu0
    %7049 = vmatprep.mubr.bf16.mxu0 0
    %7050 = vmatmul.mubr.bf16.gmra.mrb[0].mxu0 %v6834
    %v7051 = vpop.f32.mrb[0].mxu0
    %v7052 = vadd.f32 %v6856, %v7051
    %v7053 = vpop.f32.mrb[0].mxu0
    %v7054 = vpop.f32.mrb[0].mxu0
    %v7055 = vadd.f32 %v6856, %v7054
    %v7056 = vpop.f32.mrb[0].mxu0
    %7057 = vmatprep.mubr.bf16.mxu0 0
    %7058 = vmatmul.mubr.bf16.gmra.mrb[0].mxu0 %v6835
    %v7059 = vpop.f32.mrb[0].mxu0
    %v7060 = vadd.f32 %v6856, %v7059
    %v7061 = vpop.f32.mrb[0].mxu0
    %v7062 = vpop.f32.mrb[0].mxu0
    %v7063 = vadd.f32 %v6856, %v7062
    %v7064 = vpop.f32.mrb[0].mxu0
    %7065 = vdwg.mxu0
    %vm7066 = vcmask 261120
    %v7067 = vsel %vm7066, %v6940, 0.0
    %v7068 = vsel %vm7066, %v6943, 0.0
    %v7069 = vadd.f32 %v7067, %v7068
    %v7070 = vsel %vm7066, %v6948, 0.0
    %v7071 = vadd.f32 %v7069, %v7070
    %v7072 = vsel %vm7066, %v6951, 0.0
    %v7073 = vadd.f32 %v7071, %v7072
    %v7074 = vsel %vm7066, %v6956, 0.0
    %v7075 = vadd.f32 %v7073, %v7074
    %v7076 = vsel %vm7066, %v6959, 0.0
    %v7077 = vadd.f32 %v7075, %v7076
    %v7078 = vsel %vm7066, %v6964, 0.0
    %v7079 = vadd.f32 %v7077, %v7078
    %v7080 = vsel %vm7066, %v6967, 0.0
    %v7081 = vadd.f32 %v7079, %v7080
    %v7082 = vsel %vm7066, %v6972, 0.0
    %v7083 = vadd.f32 %v7081, %v7082
    %v7084 = vsel %vm7066, %v6975, 0.0
    %v7085 = vadd.f32 %v7083, %v7084
    %v7086 = vsel %vm7066, %v6980, 0.0
    %v7087 = vadd.f32 %v7085, %v7086
    %v7088 = vsel %vm7066, %v6983, 0.0
    %v7089 = vadd.f32 %v7087, %v7088
    %v7090 = vsel %vm7066, %v6988, 0.0
    %v7091 = vadd.f32 %v7089, %v7090
    %v7092 = vsel %vm7066, %v6991, 0.0
    %v7093 = vadd.f32 %v7091, %v7092
    %v7094 = vsel %vm7066, %v6996, 0.0
    %v7095 = vadd.f32 %v7093, %v7094
    %v7096 = vsel %vm7066, %v6999, 0.0
    %v7097 = vadd.f32 %v7095, %v7096
    %v7098 = vsel %vm7066, %v7004, 0.0
    %v7099 = vadd.f32 %v7097, %v7098
    %v7100 = vsel %vm7066, %v7007, 0.0
    %v7101 = vadd.f32 %v7099, %v7100
    %v7102 = vsel %vm7066, %v7012, 0.0
    %v7103 = vadd.f32 %v7101, %v7102
    %v7104 = vsel %vm7066, %v7015, 0.0
    %v7105 = vadd.f32 %v7103, %v7104
    %v7106 = vsel %vm7066, %v7020, 0.0
    %v7107 = vadd.f32 %v7105, %v7106
    %v7108 = vsel %vm7066, %v7023, 0.0
    %v7109 = vadd.f32 %v7107, %v7108
    %v7110 = vsel %vm7066, %v7028, 0.0
    %v7111 = vadd.f32 %v7109, %v7110
    %v7112 = vsel %vm7066, %v7031, 0.0
    %v7113 = vadd.f32 %v7111, %v7112
    %v7114 = vsel %vm7066, %v7036, 0.0
    %v7115 = vadd.f32 %v7113, %v7114
    %v7116 = vsel %vm7066, %v7039, 0.0
    %v7117 = vadd.f32 %v7115, %v7116
    %v7118 = vsel %vm7066, %v7044, 0.0
    %v7119 = vadd.f32 %v7117, %v7118
    %v7120 = vsel %vm7066, %v7047, 0.0
    %v7121 = vadd.f32 %v7119, %v7120
    %v7122 = vsel %vm7066, %v7052, 0.0
    %v7123 = vadd.f32 %v7121, %v7122
    %v7124 = vsel %vm7066, %v7055, 0.0
    %v7125 = vadd.f32 %v7123, %v7124
    %v7126 = vsel %vm7066, %v7060, 0.0
    %v7127 = vadd.f32 %v7125, %v7126
    %v7128 = vsel %vm7066, %v7063, 0.0
    %v7129 = vadd.f32 %v7127, %v7128
    %v7130 = vrot.slane %v7129, 4
    %v7131 = vadd.f32 %v7129, %v7130
    %v7132 = vrot.slane %v7131, 2
    %v7133 = vadd.f32 %v7131, %v7132
    %v7134 = vrot.slane %v7133, 1
    %v7135 = vadd.f32 %v7133, %v7134
    %v7136 = vmul.f32 %v7135, %v914
    %v7137 = vsub.f32 %v6940, %v7136
    %v7138 = vsub.f32 %v6943, %v7136
    %v7139 = vsub.f32 %v6948, %v7136
    %v7140 = vsub.f32 %v6951, %v7136
    %v7141 = vsub.f32 %v6956, %v7136
    %v7142 = vsub.f32 %v6959, %v7136
    %v7143 = vsub.f32 %v6964, %v7136
    %v7144 = vsub.f32 %v6967, %v7136
    %v7145 = vsub.f32 %v6972, %v7136
    %v7146 = vsub.f32 %v6975, %v7136
    %v7147 = vsub.f32 %v6980, %v7136
    %v7148 = vsub.f32 %v6983, %v7136
    %v7149 = vsub.f32 %v6988, %v7136
    %v7150 = vsub.f32 %v6991, %v7136
    %v7151 = vsub.f32 %v6996, %v7136
    %v7152 = vsub.f32 %v6999, %v7136
    %v7153 = vsub.f32 %v7004, %v7136
    %v7154 = vsub.f32 %v7007, %v7136
    %v7155 = vsub.f32 %v7012, %v7136
    %v7156 = vsub.f32 %v7015, %v7136
    %v7157 = vsub.f32 %v7020, %v7136
    %v7158 = vsub.f32 %v7023, %v7136
    %v7159 = vsub.f32 %v7028, %v7136
    %v7160 = vsub.f32 %v7031, %v7136
    %v7161 = vsub.f32 %v7036, %v7136
    %v7162 = vsub.f32 %v7039, %v7136
    %v7163 = vsub.f32 %v7044, %v7136
    %v7164 = vsub.f32 %v7047, %v7136
    %v7165 = vsub.f32 %v7052, %v7136
    %v7166 = vsub.f32 %v7055, %v7136
    %v7167 = vsub.f32 %v7060, %v7136
    %v7168 = vsub.f32 %v7063, %v7136
    %v7169 = vmul.f32 %v7137, %v7137
    %v7170 = vmul.f32 %v7138, %v7138
    %v7171 = vmul.f32 %v7139, %v7139
    %v7172 = vmul.f32 %v7140, %v7140
    %v7173 = vmul.f32 %v7141, %v7141
    %v7174 = vmul.f32 %v7142, %v7142
    %v7175 = vmul.f32 %v7143, %v7143
    %v7176 = vmul.f32 %v7144, %v7144
    %v7177 = vmul.f32 %v7145, %v7145
    %v7178 = vmul.f32 %v7146, %v7146
    %v7179 = vmul.f32 %v7147, %v7147
    %v7180 = vmul.f32 %v7148, %v7148
    %v7181 = vmul.f32 %v7149, %v7149
    %v7182 = vmul.f32 %v7150, %v7150
    %v7183 = vmul.f32 %v7151, %v7151
    %v7184 = vmul.f32 %v7152, %v7152
    %v7185 = vmul.f32 %v7153, %v7153
    %v7186 = vmul.f32 %v7154, %v7154
    %v7187 = vmul.f32 %v7155, %v7155
    %v7188 = vmul.f32 %v7156, %v7156
    %v7189 = vmul.f32 %v7157, %v7157
    %v7190 = vmul.f32 %v7158, %v7158
    %v7191 = vmul.f32 %v7159, %v7159
    %v7192 = vmul.f32 %v7160, %v7160
    %v7193 = vmul.f32 %v7161, %v7161
    %v7194 = vmul.f32 %v7162, %v7162
    %v7195 = vmul.f32 %v7163, %v7163
    %v7196 = vmul.f32 %v7164, %v7164
    %v7197 = vmul.f32 %v7165, %v7165
    %v7198 = vmul.f32 %v7166, %v7166
    %v7199 = vmul.f32 %v7167, %v7167
    %v7200 = vmul.f32 %v7168, %v7168
    %v7201 = vsel %vm7066, %v7169, 0.0
    %v7202 = vsel %vm7066, %v7170, 0.0
    %v7203 = vadd.f32 %v7201, %v7202
    %v7204 = vsel %vm7066, %v7171, 0.0
    %v7205 = vadd.f32 %v7203, %v7204
    %v7206 = vsel %vm7066, %v7172, 0.0
    %v7207 = vadd.f32 %v7205, %v7206
    %v7208 = vsel %vm7066, %v7173, 0.0
    %v7209 = vadd.f32 %v7207, %v7208
    %v7210 = vsel %vm7066, %v7174, 0.0
    %v7211 = vadd.f32 %v7209, %v7210
    %v7212 = vsel %vm7066, %v7175, 0.0
    %v7213 = vadd.f32 %v7211, %v7212
    %v7214 = vsel %vm7066, %v7176, 0.0
    %v7215 = vadd.f32 %v7213, %v7214
    %v7216 = vsel %vm7066, %v7177, 0.0
    %v7217 = vadd.f32 %v7215, %v7216
    %v7218 = vsel %vm7066, %v7178, 0.0
    %v7219 = vadd.f32 %v7217, %v7218
    %v7220 = vsel %vm7066, %v7179, 0.0
    %v7221 = vadd.f32 %v7219, %v7220
    %v7222 = vsel %vm7066, %v7180, 0.0
    %v7223 = vadd.f32 %v7221, %v7222
    %v7224 = vsel %vm7066, %v7181, 0.0
    %v7225 = vadd.f32 %v7223, %v7224
    %v7226 = vsel %vm7066, %v7182, 0.0
    %v7227 = vadd.f32 %v7225, %v7226
    %v7228 = vsel %vm7066, %v7183, 0.0
    %v7229 = vadd.f32 %v7227, %v7228
    %v7230 = vsel %vm7066, %v7184, 0.0
    %v7231 = vadd.f32 %v7229, %v7230
    %v7232 = vsel %vm7066, %v7185, 0.0
    %v7233 = vadd.f32 %v7231, %v7232
    %v7234 = vsel %vm7066, %v7186, 0.0
    %v7235 = vadd.f32 %v7233, %v7234
    %v7236 = vsel %vm7066, %v7187, 0.0
    %v7237 = vadd.f32 %v7235, %v7236
    %v7238 = vsel %vm7066, %v7188, 0.0
    %v7239 = vadd.f32 %v7237, %v7238
    %v7240 = vsel %vm7066, %v7189, 0.0
    %v7241 = vadd.f32 %v7239, %v7240
    %v7242 = vsel %vm7066, %v7190, 0.0
    %v7243 = vadd.f32 %v7241, %v7242
    %v7244 = vsel %vm7066, %v7191, 0.0
    %v7245 = vadd.f32 %v7243, %v7244
    %v7246 = vsel %vm7066, %v7192, 0.0
    %v7247 = vadd.f32 %v7245, %v7246
    %v7248 = vsel %vm7066, %v7193, 0.0
    %v7249 = vadd.f32 %v7247, %v7248
    %v7250 = vsel %vm7066, %v7194, 0.0
    %v7251 = vadd.f32 %v7249, %v7250
    %v7252 = vsel %vm7066, %v7195, 0.0
    %v7253 = vadd.f32 %v7251, %v7252
    %v7254 = vsel %vm7066, %v7196, 0.0
    %v7255 = vadd.f32 %v7253, %v7254
    %v7256 = vsel %vm7066, %v7197, 0.0
    %v7257 = vadd.f32 %v7255, %v7256
    %v7258 = vsel %vm7066, %v7198, 0.0
    %v7259 = vadd.f32 %v7257, %v7258
    %v7260 = vsel %vm7066, %v7199, 0.0
    %v7261 = vadd.f32 %v7259, %v7260
    %v7262 = vsel %vm7066, %v7200, 0.0
    %v7263 = vadd.f32 %v7261, %v7262
    %v7264 = vrot.slane %v7263, 4
    %v7265 = vadd.f32 %v7263, %v7264
    %v7266 = vrot.slane %v7265, 2
    %v7267 = vadd.f32 %v7265, %v7266
    %v7268 = vrot.slane %v7267, 1
    %v7269 = vadd.f32 %v7267, %v7268
    %v7270 = vmul.f32 %v7269, %v914
    %v7271 = vadd.f32 %v7270, 1e-05
    %v7272 = vrsqrt.pop %v7271
    %v7273 = vmul.f32 %v7137, %v7272
    %v7274 = vmul.f32 %v7138, %v7272
    %v7275 = vmul.f32 %v7139, %v7272
    %v7276 = vmul.f32 %v7140, %v7272
    %v7277 = vmul.f32 %v7141, %v7272
    %v7278 = vmul.f32 %v7142, %v7272
    %v7279 = vmul.f32 %v7143, %v7272
    %v7280 = vmul.f32 %v7144, %v7272
    %v7281 = vmul.f32 %v7145, %v7272
    %v7282 = vmul.f32 %v7146, %v7272
    %v7283 = vmul.f32 %v7147, %v7272
    %v7284 = vmul.f32 %v7148, %v7272
    %v7285 = vmul.f32 %v7149, %v7272
    %v7286 = vmul.f32 %v7150, %v7272
    %v7287 = vmul.f32 %v7151, %v7272
    %v7288 = vmul.f32 %v7152, %v7272
    %v7289 = vmul.f32 %v7153, %v7272
    %v7290 = vmul.f32 %v7154, %v7272
    %v7291 = vmul.f32 %v7155, %v7272
    %v7292 = vmul.f32 %v7156, %v7272
    %v7293 = vmul.f32 %v7157, %v7272
    %v7294 = vmul.f32 %v7158, %v7272
    %v7295 = vmul.f32 %v7159, %v7272
    %v7296 = vmul.f32 %v7160, %v7272
    %v7297 = vmul.f32 %v7161, %v7272
    %v7298 = vmul.f32 %v7162, %v7272
    %v7299 = vmul.f32 %v7163, %v7272
    %v7300 = vmul.f32 %v7164, %v7272
    %v7301 = vmul.f32 %v7165, %v7272
    %v7302 = vmul.f32 %v7166, %v7272
    %v7303 = vmul.f32 %v7167, %v7272
    %v7304 = vmul.f32 %v7168, %v7272
    %v7305 = vmax.f32 %v7273, 0.0
    %v7306 = vmax.f32 %v7274, 0.0
    %v7307 = vmax.f32 %v7275, 0.0
    %v7308 = vmax.f32 %v7276, 0.0
    %v7309 = vmax.f32 %v7277, 0.0
    %v7310 = vmax.f32 %v7278, 0.0
    %v7311 = vmax.f32 %v7279, 0.0
    %v7312 = vmax.f32 %v7280, 0.0
    %v7313 = vmax.f32 %v7281, 0.0
    %v7314 = vmax.f32 %v7282, 0.0
    %v7315 = vmax.f32 %v7283, 0.0
    %v7316 = vmax.f32 %v7284, 0.0
    %v7317 = vmax.f32 %v7285, 0.0
    %v7318 = vmax.f32 %v7286, 0.0
    %v7319 = vmax.f32 %v7287, 0.0
    %v7320 = vmax.f32 %v7288, 0.0
    %v7321 = vmax.f32 %v7289, 0.0
    %v7322 = vmax.f32 %v7290, 0.0
    %v7323 = vmax.f32 %v7291, 0.0
    %v7324 = vmax.f32 %v7292, 0.0
    %v7325 = vmax.f32 %v7293, 0.0
    %v7326 = vmax.f32 %v7294, 0.0
    %v7327 = vmax.f32 %v7295, 0.0
    %v7328 = vmax.f32 %v7296, 0.0
    %v7329 = vmax.f32 %v7297, 0.0
    %v7330 = vmax.f32 %v7298, 0.0
    %v7331 = vmax.f32 %v7299, 0.0
    %v7332 = vmax.f32 %v7300, 0.0
    %v7333 = vmax.f32 %v7301, 0.0
    %v7334 = vmax.f32 %v7302, 0.0
    %v7335 = vmax.f32 %v7303, 0.0
    %v7336 = vmax.f32 %v7304, 0.0
    %v7337 = vpack.c.bf16 %v7306, %v7305
    %v7338 = vpack.c.bf16 %v7308, %v7307
    %v7339 = vpack.c.bf16 %v7310, %v7309
    %v7340 = vpack.c.bf16 %v7312, %v7311
    %v7341 = vpack.c.bf16 %v7314, %v7313
    %v7342 = vpack.c.bf16 %v7316, %v7315
    %v7343 = vpack.c.bf16 %v7318, %v7317
    %v7344 = vpack.c.bf16 %v7320, %v7319
    %v7345 = vpack.c.bf16 %v7322, %v7321
    %v7346 = vpack.c.bf16 %v7324, %v7323
    %v7347 = vpack.c.bf16 %v7326, %v7325
    %v7348 = vpack.c.bf16 %v7328, %v7327
    %v7349 = vpack.c.bf16 %v7330, %v7329
    %v7350 = vpack.c.bf16 %v7332, %v7331
    %v7351 = vpack.c.bf16 %v7334, %v7333
    %v7352 = vpack.c.bf16 %v7336, %v7335
    %v7353 = vld [vmem:[#allocation5 + $0x448] sm:$0xf]
    %v7354 = vld [vmem:[#allocation5 + $0x44c] sm:$0xf]
    %v7355 = vld [vmem:[#allocation5 + $0x450] sm:$0xf]
    %v7356 = vld [vmem:[#allocation5 + $0x454] sm:$0xf]
    %v7357 = vld [vmem:[#allocation7 + $0xf] sm:$0x1]
    %v7358 = vlaneseq
    %v7359 = vshrl.u32 %v7358, 7
    %v7360 = vsub.s32 0, %v7359
    %v7361 = vrot.slane %v7357, %v7360
    %v7366 = vunpack.c.l.b16 %v7353
    %v7367 = vunpack.c.l.b16 %v7354
    %v7368 = vunpack.c.l.b16 %v7355
    %v7369 = vunpack.c.l.b16 %v7356
    %v7370 = vpack.c.b16 %v7367, %v7366
    %v7371 = vpack.c.b16 %v7369, %v7368
    %v7375 = vsel %vm7066, %v7337, 0
    %v7378 = vsel %vm7066, %v7338, 0
    %v7381 = vsel %vm7066, %v7339, 0
    %v7384 = vsel %vm7066, %v7340, 0
    %v7387 = vsel %vm7066, %v7341, 0
    %v7390 = vsel %vm7066, %v7342, 0
    %v7393 = vsel %vm7066, %v7343, 0
    %v7396 = vsel %vm7066, %v7344, 0
    %v7399 = vsel %vm7066, %v7345, 0
    %v7402 = vsel %vm7066, %v7346, 0
    %v7405 = vsel %vm7066, %v7347, 0
    %v7408 = vsel %vm7066, %v7348, 0
    %v7411 = vsel %vm7066, %v7349, 0
    %v7414 = vsel %vm7066, %v7350, 0
    %v7417 = vsel %vm7066, %v7351, 0
    %v7420 = vsel %vm7066, %v7352, 0
    %7422 = vmatprep.subr.bf16.mxu0 0
    %7423 = vmatpush1.bf16.msra.mxu0 %v7370
    %7424 = vmatprep.subr.bf16.mxu0 0
    %7425 = vmatpush1.bf16.msra.mxu0 %v7371
    %7426 = vmatprep.subr.bf16.mxu0 0
    %7427 = vmatpush1.bf16.msra.mxu0 0
    %7428 = vmatprep.subr.bf16.mxu0 0
    %7429 = vmatpush1.bf16.msra.mxu0 0
    %7430 = vmatprep.subr.bf16.mxu0 0
    %7431 = vmatpush1.bf16.msra.mxu0 0
    %7432 = vmatprep.subr.bf16.mxu0 0
    %7433 = vmatpush1.bf16.msra.mxu0 0
    %7434 = vmatprep.subr.bf16.mxu0 0
    %7435 = vmatpush1.bf16.msra.mxu0 0
    %7436 = vmatprep.subr.bf16.mxu0 0
    %7437 = vmatpush1.bf16.msra.mxu0 0
    %7438 = vmatprep.subr.bf16.mxu0 0
    %7439 = vmatpush1.bf16.msra.mxu0 0
    %7440 = vmatprep.subr.bf16.mxu0 0
    %7441 = vmatpush1.bf16.msra.mxu0 0
    %7442 = vmatprep.subr.bf16.mxu0 0
    %7443 = vmatpush1.bf16.msra.mxu0 0
    %7444 = vmatprep.subr.bf16.mxu0 0
    %7445 = vmatpush1.bf16.msra.mxu0 0
    %7446 = vmatprep.subr.bf16.mxu0 0
    %7447 = vmatpush1.bf16.msra.mxu0 0
    %7448 = vmatprep.subr.bf16.mxu0 0
    %7449 = vmatpush1.bf16.msra.mxu0 0
    %7450 = vmatprep.subr.bf16.mxu0 0
    %7451 = vmatpush1.bf16.msra.mxu0 0
    %7452 = vmatprep.subr.bf16.mxu0 0
    %7453 = vmatpush1.bf16.msra.mxu0 0
    %7454 = vmatprep.mubr.bf16.mxu0 0
    %7455 = vmatmul.mubr.bf16.gmra.mrb[0].mxu0 %v7375
    %v7456 = vpop.f32.mrb[0].mxu0
    %v7457 = vadd.f32 %v7361, %v7456
    %v7458 = vpop.f32.mrb[0].mxu0
    %v7459 = vpop.f32.mrb[0].mxu0
    %v7460 = vadd.f32 %v7361, %v7459
    %v7461 = vpop.f32.mrb[0].mxu0
    %7462 = vmatprep.mubr.bf16.mxu0 0
    %7463 = vmatmul.mubr.bf16.gmra.mrb[0].mxu0 %v7378
    %v7464 = vpop.f32.mrb[0].mxu0
    %v7465 = vadd.f32 %v7361, %v7464
    %v7466 = vpop.f32.mrb[0].mxu0
    %v7467 = vpop.f32.mrb[0].mxu0
    %v7468 = vadd.f32 %v7361, %v7467
    %v7469 = vpop.f32.mrb[0].mxu0
    %7470 = vmatprep.mubr.bf16.mxu0 0
    %7471 = vmatmul.mubr.bf16.gmra.mrb[0].mxu0 %v7381
    %v7472 = vpop.f32.mrb[0].mxu0
    %v7473 = vadd.f32 %v7361, %v7472
    %v7474 = vpop.f32.mrb[0].mxu0
    %v7475 = vpop.f32.mrb[0].mxu0
    %v7476 = vadd.f32 %v7361, %v7475
    %v7477 = vpop.f32.mrb[0].mxu0
    %7478 = vmatprep.mubr.bf16.mxu0 0
    %7479 = vmatmul.mubr.bf16.gmra.mrb[0].mxu0 %v7384
    %v7480 = vpop.f32.mrb[0].mxu0
    %v7481 = vadd.f32 %v7361, %v7480
    %v7482 = vpop.f32.mrb[0].mxu0
    %v7483 = vpop.f32.mrb[0].mxu0
    %v7484 = vadd.f32 %v7361, %v7483
    %v7485 = vpop.f32.mrb[0].mxu0
    %7486 = vmatprep.mubr.bf16.mxu0 0
    %7487 = vmatmul.mubr.bf16.gmra.mrb[0].mxu0 %v7387
    %v7488 = vpop.f32.mrb[0].mxu0
    %v7489 = vadd.f32 %v7361, %v7488
    %v7490 = vpop.f32.mrb[0].mxu0
    %v7491 = vpop.f32.mrb[0].mxu0
    %v7492 = vadd.f32 %v7361, %v7491
    %v7493 = vpop.f32.mrb[0].mxu0
    %7494 = vmatprep.mubr.bf16.mxu0 0
    %7495 = vmatmul.mubr.bf16.gmra.mrb[0].mxu0 %v7390
    %v7496 = vpop.f32.mrb[0].mxu0
    %v7497 = vadd.f32 %v7361, %v7496
    %v7498 = vpop.f32.mrb[0].mxu0
    %v7499 = vpop.f32.mrb[0].mxu0
    %v7500 = vadd.f32 %v7361, %v7499
    %v7501 = vpop.f32.mrb[0].mxu0
    %7502 = vmatprep.mubr.bf16.mxu0 0
    %7503 = vmatmul.mubr.bf16.gmra.mrb[0].mxu0 %v7393
    %v7504 = vpop.f32.mrb[0].mxu0
    %v7505 = vadd.f32 %v7361, %v7504
    %v7506 = vpop.f32.mrb[0].mxu0
    %v7507 = vpop.f32.mrb[0].mxu0
    %v7508 = vadd.f32 %v7361, %v7507
    %v7509 = vpop.f32.mrb[0].mxu0
    %7510 = vmatprep.mubr.bf16.mxu0 0
    %7511 = vmatmul.mubr.bf16.gmra.mrb[0].mxu0 %v7396
    %v7512 = vpop.f32.mrb[0].mxu0
    %v7513 = vadd.f32 %v7361, %v7512
    %v7514 = vpop.f32.mrb[0].mxu0
    %v7515 = vpop.f32.mrb[0].mxu0
    %v7516 = vadd.f32 %v7361, %v7515
    %v7517 = vpop.f32.mrb[0].mxu0
    %7518 = vmatprep.mubr.bf16.mxu0 0
    %7519 = vmatmul.mubr.bf16.gmra.mrb[0].mxu0 %v7399
    %v7520 = vpop.f32.mrb[0].mxu0
    %v7521 = vadd.f32 %v7361, %v7520
    %v7522 = vpop.f32.mrb[0].mxu0
    %v7523 = vpop.f32.mrb[0].mxu0
    %v7524 = vadd.f32 %v7361, %v7523
    %v7525 = vpop.f32.mrb[0].mxu0
    %7526 = vmatprep.mubr.bf16.mxu0 0
    %7527 = vmatmul.mubr.bf16.gmra.mrb[0].mxu0 %v7402
    %v7528 = vpop.f32.mrb[0].mxu0
    %v7529 = vadd.f32 %v7361, %v7528
    %v7530 = vpop.f32.mrb[0].mxu0
    %v7531 = vpop.f32.mrb[0].mxu0
    %v7532 = vadd.f32 %v7361, %v7531
    %v7533 = vpop.f32.mrb[0].mxu0
    %7534 = vmatprep.mubr.bf16.mxu0 0
    %7535 = vmatmul.mubr.bf16.gmra.mrb[0].mxu0 %v7405
    %v7536 = vpop.f32.mrb[0].mxu0
    %v7537 = vadd.f32 %v7361, %v7536
    %v7538 = vpop.f32.mrb[0].mxu0
    %v7539 = vpop.f32.mrb[0].mxu0
    %v7540 = vadd.f32 %v7361, %v7539
    %v7541 = vpop.f32.mrb[0].mxu0
    %7542 = vmatprep.mubr.bf16.mxu0 0
    %7543 = vmatmul.mubr.bf16.gmra.mrb[0].mxu0 %v7408
    %v7544 = vpop.f32.mrb[0].mxu0
    %v7545 = vadd.f32 %v7361, %v7544
    %v7546 = vpop.f32.mrb[0].mxu0
    %v7547 = vpop.f32.mrb[0].mxu0
    %v7548 = vadd.f32 %v7361, %v7547
    %v7549 = vpop.f32.mrb[0].mxu0
    %7550 = vmatprep.mubr.bf16.mxu0 0
    %7551 = vmatmul.mubr.bf16.gmra.mrb[0].mxu0 %v7411
    %v7552 = vpop.f32.mrb[0].mxu0
    %v7553 = vadd.f32 %v7361, %v7552
    %v7554 = vpop.f32.mrb[0].mxu0
    %v7555 = vpop.f32.mrb[0].mxu0
    %v7556 = vadd.f32 %v7361, %v7555
    %v7557 = vpop.f32.mrb[0].mxu0
    %7558 = vmatprep.mubr.bf16.mxu0 0
    %7559 = vmatmul.mubr.bf16.gmra.mrb[0].mxu0 %v7414
    %v7560 = vpop.f32.mrb[0].mxu0
    %v7561 = vadd.f32 %v7361, %v7560
    %v7562 = vpop.f32.mrb[0].mxu0
    %v7563 = vpop.f32.mrb[0].mxu0
    %v7564 = vadd.f32 %v7361, %v7563
    %v7565 = vpop.f32.mrb[0].mxu0
    %7566 = vmatprep.mubr.bf16.mxu0 0
    %7567 = vmatmul.mubr.bf16.gmra.mrb[0].mxu0 %v7417
    %v7568 = vpop.f32.mrb[0].mxu0
    %v7569 = vadd.f32 %v7361, %v7568
    %v7570 = vpop.f32.mrb[0].mxu0
    %v7571 = vpop.f32.mrb[0].mxu0
    %v7572 = vadd.f32 %v7361, %v7571
    %v7573 = vpop.f32.mrb[0].mxu0
    %7574 = vmatprep.mubr.bf16.mxu0 0
    %7575 = vmatmul.mubr.bf16.gmra.mrb[0].mxu0 %v7420
    %v7576 = vpop.f32.mrb[0].mxu0
    %v7577 = vadd.f32 %v7361, %v7576
    %v7578 = vpop.f32.mrb[0].mxu0
    %v7579 = vpop.f32.mrb[0].mxu0
    %v7580 = vadd.f32 %v7361, %v7579
    %v7581 = vpop.f32.mrb[0].mxu0
    %7582 = vdwg.mxu0
    %v7583 = vlaneseq
    %v7584 = vand.u32 %v7583, 127
    %vm7585 = vcmp.lt.s32.totalorder %v7584, 4
    %v7586 = vsel %vm7585, %v7457, -1e+30
    %v7587 = vsel %vm7585, %v7460, -1e+30
    %v7588 = vsel %vm7585, %v7465, -1e+30
    %v7589 = vsel %vm7585, %v7468, -1e+30
    %v7590 = vsel %vm7585, %v7473, -1e+30
    %v7591 = vsel %vm7585, %v7476, -1e+30
    %v7592 = vsel %vm7585, %v7481, -1e+30
    %v7593 = vsel %vm7585, %v7484, -1e+30
    %v7594 = vsel %vm7585, %v7489, -1e+30
    %v7595 = vsel %vm7585, %v7492, -1e+30
    %v7596 = vsel %vm7585, %v7497, -1e+30
    %v7597 = vsel %vm7585, %v7500, -1e+30
    %v7598 = vsel %vm7585, %v7505, -1e+30
    %v7599 = vsel %vm7585, %v7508, -1e+30
    %v7600 = vsel %vm7585, %v7513, -1e+30
    %v7601 = vsel %vm7585, %v7516, -1e+30
    %v7602 = vsel %vm7585, %v7521, -1e+30
    %v7603 = vsel %vm7585, %v7524, -1e+30
    %v7604 = vsel %vm7585, %v7529, -1e+30
    %v7605 = vsel %vm7585, %v7532, -1e+30
    %v7606 = vsel %vm7585, %v7537, -1e+30
    %v7607 = vsel %vm7585, %v7540, -1e+30
    %v7608 = vsel %vm7585, %v7545, -1e+30
    %v7609 = vsel %vm7585, %v7548, -1e+30
    %v7610 = vsel %vm7585, %v7553, -1e+30
    %v7611 = vsel %vm7585, %v7556, -1e+30
    %v7612 = vsel %vm7585, %v7561, -1e+30
    %v7613 = vsel %vm7585, %v7564, -1e+30
    %v7614 = vsel %vm7585, %v7569, -1e+30
    %v7615 = vsel %vm7585, %v7572, -1e+30
    %v7616 = vsel %vm7585, %v7577, -1e+30
    %v7617 = vsel %vm7585, %v7580, -1e+30
    %7618 = vmax.xlane.f32.xlu0 %v7586
    %v7619 = vpop.xlane.xlu0 %7618
    %7620 = vmax.xlane.f32.xlu0 %v7587
    %v7621 = vpop.xlane.xlu0 %7620
    %7622 = vmax.xlane.f32.xlu0 %v7588
    %v7623 = vpop.xlane.xlu0 %7622
    %7624 = vmax.xlane.f32.xlu0 %v7589
    %v7625 = vpop.xlane.xlu0 %7624
    %7626 = vmax.xlane.f32.xlu0 %v7590
    %v7627 = vpop.xlane.xlu0 %7626
    %7628 = vmax.xlane.f32.xlu0 %v7591
    %v7629 = vpop.xlane.xlu0 %7628
    %7630 = vmax.xlane.f32.xlu0 %v7592
    %v7631 = vpop.xlane.xlu0 %7630
    %7632 = vmax.xlane.f32.xlu0 %v7593
    %v7633 = vpop.xlane.xlu0 %7632
    %7634 = vmax.xlane.f32.xlu0 %v7594
    %v7635 = vpop.xlane.xlu0 %7634
    %7636 = vmax.xlane.f32.xlu0 %v7595
    %v7637 = vpop.xlane.xlu0 %7636
    %7638 = vmax.xlane.f32.xlu0 %v7596
    %v7639 = vpop.xlane.xlu0 %7638
    %7640 = vmax.xlane.f32.xlu0 %v7597
    %v7641 = vpop.xlane.xlu0 %7640
    %7642 = vmax.xlane.f32.xlu0 %v7598
    %v7643 = vpop.xlane.xlu0 %7642
    %7644 = vmax.xlane.f32.xlu0 %v7599
    %v7645 = vpop.xlane.xlu0 %7644
    %7646 = vmax.xlane.f32.xlu0 %v7600
    %v7647 = vpop.xlane.xlu0 %7646
    %7648 = vmax.xlane.f32.xlu0 %v7601
    %v7649 = vpop.xlane.xlu0 %7648
    %7650 = vmax.xlane.f32.xlu0 %v7602
    %v7651 = vpop.xlane.xlu0 %7650
    %7652 = vmax.xlane.f32.xlu0 %v7603
    %v7653 = vpop.xlane.xlu0 %7652
    %7654 = vmax.xlane.f32.xlu0 %v7604
    %v7655 = vpop.xlane.xlu0 %7654
    %7656 = vmax.xlane.f32.xlu0 %v7605
    %v7657 = vpop.xlane.xlu0 %7656
    %7658 = vmax.xlane.f32.xlu0 %v7606
    %v7659 = vpop.xlane.xlu0 %7658
    %7660 = vmax.xlane.f32.xlu0 %v7607
    %v7661 = vpop.xlane.xlu0 %7660
    %7662 = vmax.xlane.f32.xlu0 %v7608
    %v7663 = vpop.xlane.xlu0 %7662
    %7664 = vmax.xlane.f32.xlu0 %v7609
    %v7665 = vpop.xlane.xlu0 %7664
    %7666 = vmax.xlane.f32.xlu0 %v7610
    %v7667 = vpop.xlane.xlu0 %7666
    %7668 = vmax.xlane.f32.xlu0 %v7611
    %v7669 = vpop.xlane.xlu0 %7668
    %7670 = vmax.xlane.f32.xlu0 %v7612
    %v7671 = vpop.xlane.xlu0 %7670
    %7672 = vmax.xlane.f32.xlu0 %v7613
    %v7673 = vpop.xlane.xlu0 %7672
    %7674 = vmax.xlane.f32.xlu0 %v7614
    %v7675 = vpop.xlane.xlu0 %7674
    %7676 = vmax.xlane.f32.xlu0 %v7615
    %v7677 = vpop.xlane.xlu0 %7676
    %7678 = vmax.xlane.f32.xlu0 %v7616
    %v7679 = vpop.xlane.xlu0 %7678
    %7680 = vmax.xlane.f32.xlu0 %v7617
    %v7681 = vpop.xlane.xlu0 %7680
    %v7682 = vsub.f32 %v7586, %v7619
    %v7683 = vsub.f32 %v7587, %v7621
    %v7684 = vsub.f32 %v7588, %v7623
    %v7685 = vsub.f32 %v7589, %v7625
    %v7686 = vsub.f32 %v7590, %v7627
    %v7687 = vsub.f32 %v7591, %v7629
    %v7688 = vsub.f32 %v7592, %v7631
    %v7689 = vsub.f32 %v7593, %v7633
    %v7690 = vsub.f32 %v7594, %v7635
    %v7691 = vsub.f32 %v7595, %v7637
    %v7692 = vsub.f32 %v7596, %v7639
    %v7693 = vsub.f32 %v7597, %v7641
    %v7694 = vsub.f32 %v7598, %v7643
    %v7695 = vsub.f32 %v7599, %v7645
    %v7696 = vsub.f32 %v7600, %v7647
    %v7697 = vsub.f32 %v7601, %v7649
    %v7698 = vsub.f32 %v7602, %v7651
    %v7699 = vsub.f32 %v7603, %v7653
    %v7700 = vsub.f32 %v7604, %v7655
    %v7701 = vsub.f32 %v7605, %v7657
    %v7702 = vsub.f32 %v7606, %v7659
    %v7703 = vsub.f32 %v7607, %v7661
    %v7704 = vsub.f32 %v7608, %v7663
    %v7705 = vsub.f32 %v7609, %v7665
    %v7706 = vsub.f32 %v7610, %v7667
    %v7707 = vsub.f32 %v7611, %v7669
    %v7708 = vsub.f32 %v7612, %v7671
    %v7709 = vsub.f32 %v7613, %v7673
    %v7710 = vsub.f32 %v7614, %v7675
    %v7711 = vsub.f32 %v7615, %v7677
    %v7712 = vsub.f32 %v7616, %v7679
    %v7713 = vsub.f32 %v7617, %v7681
    %v7714 = vmul.f32 %v7682, 1.442695
    %v7715 = vpow.pop %v7714
    %v7716 = vmul.f32 %v7683, 1.442695
    %v7717 = vpow.pop %v7716
    %v7718 = vmul.f32 %v7684, 1.442695
    %v7719 = vpow.pop %v7718
    %v7720 = vmul.f32 %v7685, 1.442695
    %v7721 = vpow.pop %v7720
    %v7722 = vmul.f32 %v7686, 1.442695
    %v7723 = vpow.pop %v7722
    %v7724 = vmul.f32 %v7687, 1.442695
    %v7725 = vpow.pop %v7724
    %v7726 = vmul.f32 %v7688, 1.442695
    %v7727 = vpow.pop %v7726
    %v7728 = vmul.f32 %v7689, 1.442695
    %v7729 = vpow.pop %v7728
    %v7730 = vmul.f32 %v7690, 1.442695
    %v7731 = vpow.pop %v7730
    %v7732 = vmul.f32 %v7691, 1.442695
    %v7733 = vpow.pop %v7732
    %v7734 = vmul.f32 %v7692, 1.442695
    %v7735 = vpow.pop %v7734
    %v7736 = vmul.f32 %v7693, 1.442695
    %v7737 = vpow.pop %v7736
    %v7738 = vmul.f32 %v7694, 1.442695
    %v7739 = vpow.pop %v7738
    %v7740 = vmul.f32 %v7695, 1.442695
    %v7741 = vpow.pop %v7740
    %v7742 = vmul.f32 %v7696, 1.442695
    %v7743 = vpow.pop %v7742
    %v7744 = vmul.f32 %v7697, 1.442695
    %v7745 = vpow.pop %v7744
    %v7746 = vmul.f32 %v7698, 1.442695
    %v7747 = vpow.pop %v7746
    %v7748 = vmul.f32 %v7699, 1.442695
    %v7749 = vpow.pop %v7748
    %v7750 = vmul.f32 %v7700, 1.442695
    %v7751 = vpow.pop %v7750
    %v7752 = vmul.f32 %v7701, 1.442695
    %v7753 = vpow.pop %v7752
    %v7754 = vmul.f32 %v7702, 1.442695
    %v7755 = vpow.pop %v7754
    %v7756 = vmul.f32 %v7703, 1.442695
    %v7757 = vpow.pop %v7756
    %v7758 = vmul.f32 %v7704, 1.442695
    %v7759 = vpow.pop %v7758
    %v7760 = vmul.f32 %v7705, 1.442695
    %v7761 = vpow.pop %v7760
    %v7762 = vmul.f32 %v7706, 1.442695
    %v7763 = vpow.pop %v7762
    %v7764 = vmul.f32 %v7707, 1.442695
    %v7765 = vpow.pop %v7764
    %v7766 = vmul.f32 %v7708, 1.442695
    %v7767 = vpow.pop %v7766
    %v7768 = vmul.f32 %v7709, 1.442695
    %v7769 = vpow.pop %v7768
    %v7770 = vmul.f32 %v7710, 1.442695
    %v7771 = vpow.pop %v7770
    %v7772 = vmul.f32 %v7711, 1.442695
    %v7773 = vpow.pop %v7772
    %v7774 = vmul.f32 %v7712, 1.442695
    %v7775 = vpow.pop %v7774
    %v7776 = vmul.f32 %v7713, 1.442695
    %v7777 = vpow.pop %v7776
    %7778 = vadd.xlane.f32.xlu0 %v7715
    %v7779 = vpop.xlane.xlu0 %7778
    %7780 = vadd.xlane.f32.xlu0 %v7717
    %v7781 = vpop.xlane.xlu0 %7780
    %7782 = vadd.xlane.f32.xlu0 %v7719
    %v7783 = vpop.xlane.xlu0 %7782
    %7784 = vadd.xlane.f32.xlu0 %v7721
    %v7785 = vpop.xlane.xlu0 %7784
    %7786 = vadd.xlane.f32.xlu0 %v7723
    %v7787 = vpop.xlane.xlu0 %7786
    %7788 = vadd.xlane.f32.xlu0 %v7725
    %v7789 = vpop.xlane.xlu0 %7788
    %7790 = vadd.xlane.f32.xlu0 %v7727
    %v7791 = vpop.xlane.xlu0 %7790
    %7792 = vadd.xlane.f32.xlu0 %v7729
    %v7793 = vpop.xlane.xlu0 %7792
    %7794 = vadd.xlane.f32.xlu0 %v7731
    %v7795 = vpop.xlane.xlu0 %7794
    %7796 = vadd.xlane.f32.xlu0 %v7733
    %v7797 = vpop.xlane.xlu0 %7796
    %7798 = vadd.xlane.f32.xlu0 %v7735
    %v7799 = vpop.xlane.xlu0 %7798
    %7800 = vadd.xlane.f32.xlu0 %v7737
    %v7801 = vpop.xlane.xlu0 %7800
    %7802 = vadd.xlane.f32.xlu0 %v7739
    %v7803 = vpop.xlane.xlu0 %7802
    %7804 = vadd.xlane.f32.xlu0 %v7741
    %v7805 = vpop.xlane.xlu0 %7804
    %7806 = vadd.xlane.f32.xlu0 %v7743
    %v7807 = vpop.xlane.xlu0 %7806
    %7808 = vadd.xlane.f32.xlu0 %v7745
    %v7809 = vpop.xlane.xlu0 %7808
    %7810 = vadd.xlane.f32.xlu0 %v7747
    %v7811 = vpop.xlane.xlu0 %7810
    %7812 = vadd.xlane.f32.xlu0 %v7749
    %v7813 = vpop.xlane.xlu0 %7812
    %7814 = vadd.xlane.f32.xlu0 %v7751
    %v7815 = vpop.xlane.xlu0 %7814
    %7816 = vadd.xlane.f32.xlu0 %v7753
    %v7817 = vpop.xlane.xlu0 %7816
    %7818 = vadd.xlane.f32.xlu0 %v7755
    %v7819 = vpop.xlane.xlu0 %7818
    %7820 = vadd.xlane.f32.xlu0 %v7757
    %v7821 = vpop.xlane.xlu0 %7820
    %7822 = vadd.xlane.f32.xlu0 %v7759
    %v7823 = vpop.xlane.xlu0 %7822
    %7824 = vadd.xlane.f32.xlu0 %v7761
    %v7825 = vpop.xlane.xlu0 %7824
    %7826 = vadd.xlane.f32.xlu0 %v7763
    %v7827 = vpop.xlane.xlu0 %7826
    %7828 = vadd.xlane.f32.xlu0 %v7765
    %v7829 = vpop.xlane.xlu0 %7828
    %7830 = vadd.xlane.f32.xlu0 %v7767
    %v7831 = vpop.xlane.xlu0 %7830
    %7832 = vadd.xlane.f32.xlu0 %v7769
    %v7833 = vpop.xlane.xlu0 %7832
    %7834 = vadd.xlane.f32.xlu0 %v7771
    %v7835 = vpop.xlane.xlu0 %7834
    %7836 = vadd.xlane.f32.xlu0 %v7773
    %v7837 = vpop.xlane.xlu0 %7836
    %7838 = vadd.xlane.f32.xlu0 %v7775
    %v7839 = vpop.xlane.xlu0 %7838
    %7840 = vadd.xlane.f32.xlu0 %v7777
    %v7841 = vpop.xlane.xlu0 %7840
    %v7842 = vrcp.pop %v7779
    %v7843 = vmul.f32 %v7715, %v7842
    %v7844 = vrcp.pop %v7781
    %v7845 = vmul.f32 %v7717, %v7844
    %v7846 = vrcp.pop %v7783
    %v7847 = vmul.f32 %v7719, %v7846
    %v7848 = vrcp.pop %v7785
    %v7849 = vmul.f32 %v7721, %v7848
    %v7850 = vrcp.pop %v7787
    %v7851 = vmul.f32 %v7723, %v7850
    %v7852 = vrcp.pop %v7789
    %v7853 = vmul.f32 %v7725, %v7852
    %v7854 = vrcp.pop %v7791
    %v7855 = vmul.f32 %v7727, %v7854
    %v7856 = vrcp.pop %v7793
    %v7857 = vmul.f32 %v7729, %v7856
    %v7858 = vrcp.pop %v7795
    %v7859 = vmul.f32 %v7731, %v7858
    %v7860 = vrcp.pop %v7797
    %v7861 = vmul.f32 %v7733, %v7860
    %v7862 = vrcp.pop %v7799
    %v7863 = vmul.f32 %v7735, %v7862
    %v7864 = vrcp.pop %v7801
    %v7865 = vmul.f32 %v7737, %v7864
    %v7866 = vrcp.pop %v7803
    %v7867 = vmul.f32 %v7739, %v7866
    %v7868 = vrcp.pop %v7805
    %v7869 = vmul.f32 %v7741, %v7868
    %v7870 = vrcp.pop %v7807
    %v7871 = vmul.f32 %v7743, %v7870
    %v7872 = vrcp.pop %v7809
    %v7873 = vmul.f32 %v7745, %v7872
    %v7874 = vrcp.pop %v7811
    %v7875 = vmul.f32 %v7747, %v7874
    %v7876 = vrcp.pop %v7813
    %v7877 = vmul.f32 %v7749, %v7876
    %v7878 = vrcp.pop %v7815
    %v7879 = vmul.f32 %v7751, %v7878
    %v7880 = vrcp.pop %v7817
    %v7881 = vmul.f32 %v7753, %v7880
    %v7882 = vrcp.pop %v7819
    %v7883 = vmul.f32 %v7755, %v7882
    %v7884 = vrcp.pop %v7821
    %v7885 = vmul.f32 %v7757, %v7884
    %v7886 = vrcp.pop %v7823
    %v7887 = vmul.f32 %v7759, %v7886
    %v7888 = vrcp.pop %v7825
    %v7889 = vmul.f32 %v7761, %v7888
    %v7890 = vrcp.pop %v7827
    %v7891 = vmul.f32 %v7763, %v7890
    %v7892 = vrcp.pop %v7829
    %v7893 = vmul.f32 %v7765, %v7892
    %v7894 = vrcp.pop %v7831
    %v7895 = vmul.f32 %v7767, %v7894
    %v7896 = vrcp.pop %v7833
    %v7897 = vmul.f32 %v7769, %v7896
    %v7898 = vrcp.pop %v7835
    %v7899 = vmul.f32 %v7771, %v7898
    %v7900 = vrcp.pop %v7837
    %v7901 = vmul.f32 %v7773, %v7900
    %v7902 = vrcp.pop %v7839
    %v7903 = vmul.f32 %v7775, %v7902
    %v7904 = vrcp.pop %v7841
    %v7905 = vmul.f32 %v7777, %v7904
    %7906 = vst [vmem:[#allocation9] sm:$0xff] %v7843
    %7907 = vst [vmem:[#allocation9 + $0x8] sm:$0xff] %v7845
    %7908 = vst [vmem:[#allocation9 + $0x10] sm:$0xff] %v7847
    %7909 = vst [vmem:[#allocation9 + $0x18] sm:$0xff] %v7849
    %7910 = vst [vmem:[#allocation9 + $0x20] sm:$0xff] %v7851
    %7911 = vst [vmem:[#allocation9 + $0x28] sm:$0xff] %v7853
    %7912 = vst [vmem:[#allocation9 + $0x30] sm:$0xff] %v7855
    %7913 = vst [vmem:[#allocation9 + $0x38] sm:$0xff] %v7857
    %7914 = vst [vmem:[#allocation9 + $0x40] sm:$0xff] %v7859
    %7915 = vst [vmem:[#allocation9 + $0x48] sm:$0xff] %v7861
    %7916 = vst [vmem:[#allocation9 + $0x50] sm:$0xff] %v7863
    %7917 = vst [vmem:[#allocation9 + $0x58] sm:$0xff] %v7865
    %7918 = vst [vmem:[#allocation9 + $0x60] sm:$0xff] %v7867
    %7919 = vst [vmem:[#allocation9 + $0x68] sm:$0xff] %v7869
    %7920 = vst [vmem:[#allocation9 + $0x70] sm:$0xff] %v7871
    %7921 = vst [vmem:[#allocation9 + $0x78] sm:$0xff] %v7873
    %7922 = vst [vmem:[#allocation9 + $0x80] sm:$0xff] %v7875
    %7923 = vst [vmem:[#allocation9 + $0x88] sm:$0xff] %v7877
    %7924 = vst [vmem:[#allocation9 + $0x90] sm:$0xff] %v7879
    %7925 = vst [vmem:[#allocation9 + $0x98] sm:$0xff] %v7881
    %7926 = vst [vmem:[#allocation9 + $0xa0] sm:$0xff] %v7883
    %7927 = vst [vmem:[#allocation9 + $0xa8] sm:$0xff] %v7885
    %7928 = vst [vmem:[#allocation9 + $0xb0] sm:$0xff] %v7887
    %7929 = vst [vmem:[#allocation9 + $0xb8] sm:$0xff] %v7889
    %7930 = vst [vmem:[#allocation9 + $0xc0] sm:$0xff] %v7891
    %7931 = vst [vmem:[#allocation9 + $0xc8] sm:$0xff] %v7893
    %7932 = vst [vmem:[#allocation9 + $0xd0] sm:$0xff] %v7895
    %7933 = vst [vmem:[#allocation9 + $0xd8] sm:$0xff] %v7897
    %7934 = vst [vmem:[#allocation9 + $0xe0] sm:$0xff] %v7899
    %7935 = vst [vmem:[#allocation9 + $0xe8] sm:$0xff] %v7901
    %7936 = vst [vmem:[#allocation9 + $0xf0] sm:$0xff] %v7903
    %7937 = vst [vmem:[#allocation9 + $0xf8] sm:$0xff] %v7905
    // Predicated region
    $region26: #{tpu_custom_call.1} parent=1 // pred_check
      _
    $region27: #{tpu_custom_call.1} parent=1 // pred_check_branch
      %7939 = sbr.rel (0) target = $region29
    $region28: #{tpu_custom_call.1} parent=1 // pred_region
      %s7941 = ssub.s32 8192, 8192
      %7942 = vsyncadd [#allocation4], %s7941
      %s7943 = sshll.u32 [#allocation8], 4
      %s7944 = int_to_ptr.vmem [resolvable:$true] %s7943
      %7949 = dma.vmem_to_hbm [thread:$0]  %s7944, 8192, %s3, [#allocation4], 256, 256, 16
    $region29: #{tpu_custom_call.1} parent=1 // pred_fallthru
      _
    // Predicated region
    $region30: #{tpu_custom_call.1} parent=1 // pred_check
      _
    $region31: #{tpu_custom_call.1} parent=1 // pred_check_branch
      %7951 = sbr.rel (0) target = $region33
    $region32: #{tpu_custom_call.1} parent=1 // pred_region
      %s7953 = ssub.s32 4096, 4096
      %7954 = vsyncadd [#allocation10], %s7953
      %s7955 = sshll.u32 [#allocation9], 4
      %s7956 = int_to_ptr.vmem [resolvable:$true] %s7955
      %7961 = dma.vmem_to_hbm [thread:$0]  %s7956, 4096, %s4, [#allocation10], 128, 128, 8
    $region33: #{tpu_custom_call.1} parent=1 // pred_fallthru
      _
    // Predicated region
    $region34: #{tpu_custom_call.1} parent=1 // pred_check
      _
    $region35: #{tpu_custom_call.1} parent=1 // pred_check_branch
      %7963 = sbr.rel (0) target = $region37
    $region36: #{tpu_custom_call.1} parent=1 // pred_region
      %7964 = dma.done [#allocation4], 8192
    $region37: #{tpu_custom_call.1} parent=1 // pred_fallthru
      _
    // Predicated region
    $region38: #{tpu_custom_call.1} parent=1 // pred_check
      _
    $region39: #{tpu_custom_call.1} parent=1 // pred_check_branch
      %7966 = sbr.rel (0) target = $region41
    $region40: #{tpu_custom_call.1} parent=1 // pred_region
      %7967 = dma.done [#allocation10], 4096
    $region41: #{tpu_custom_call.1} parent=1 // pred_fallthru
      _
    %7968 = vsyncpa [#allocation3], 1
    %7969 = vsyncpa [#allocation6], 1
    %7970 = vsyncpa [#allocation4], 1
    %7971 = vsyncpa [#allocation10], 1

</llo_original>
